<compile_context>
chip_gen: v7x
topology: tpu7x:2x2x1
jax: 0.10.0
libtpu: 0.0.40
codegen_flags: <defaults>
</compile_context>

<pallas_src>
import functools

import jax
import jax.numpy as jnp
from jax.experimental import pallas as pl
from jax.experimental.pallas import tpu as pltpu


def node_encoder_kernel(xp_ref, rhs_ref, out_ref, onehot_ref):
    # xp_ref:     (TR, S)      int32   packed ids, xp[r, j*F+i] = x[P*r+j, i]
    # rhs_ref:    (S*VP, P*H)  float32 block-diagonal stacked embedding tables
    # out_ref:    (TR, P*H)    float32 packed output rows (lane-dense)
    # onehot_ref: (TR, S*VP)   float32 VMEM scratch for the fused-matmul LHS
    tr, s = xp_ref.shape
    k = rhs_ref.shape[0]
    vp = k // s                                   # per-segment width (128)

    ids = xp_ref[...]                             # (TR, S)
    lane = jax.lax.broadcasted_iota(jnp.int32, (tr, vp), 1)

    # Build the one-hot LHS as S lane-aligned 128-wide segments.
    for c in range(s):                            # static, unrolled (S = P*F)
        onehot_ref[:, c * vp:(c + 1) * vp] = (
            ids[:, c:c + 1] == lane).astype(jnp.float32)

    # One deep-K MXU contraction -> lane-dense (TR, P*H) output tile.
    out_ref[...] = jnp.dot(onehot_ref[...], rhs_ref[...],
                           preferred_element_type=jnp.float32)


@functools.partial(jax.jit, static_argnames=("block_n",))
def node_encoder(x, tables, block_n=512):
    """x: (N,) or (N, F) integer ids; tables: (F_total, V, H) float32."""
    if x.ndim == 1:
        x = x[:, None]
    x = x.astype(jnp.int32)
    n, f = x.shape
    f_total, v, h = tables.shape
    assert f <= f_total, "more feature columns than embedding tables"
    tables = tables[:f].astype(jnp.float32)

    # Pack P consecutive output rows into the 128-lane axis (lane-dense out).
    p = 128 // h if (h <= 128 and 128 % h == 0) else 1
    vp = 128 * pl.cdiv(v, 128)                    # vocab padded per segment
    s = p * f                                     # one-hot segments
    k = s * vp                                    # fused contraction depth

    # block_n original rows per grid step (multiple of 8*P so the packed
    # block's sublane dim is 8-aligned).
    if block_n % (8 * p) != 0:
        block_n = 8 * p * pl.cdiv(block_n, 8 * p)
    tr = block_n // p                             # packed rows per grid step

    n_pad = block_n * pl.cdiv(n, block_n)
    x_pad = jnp.pad(x, ((0, n_pad - n), (0, 0)))  # pad rows discarded at end
    xp = x_pad.reshape(n_pad // p, s)             # free row-major repack

    # Block-diagonal stacked tables: rhs[(j*F+i)*VP + v, j*H:(j+1)*H] = T[i,v].
    tpad = jnp.pad(tables, ((0, 0), (0, vp - v), (0, 0)))      # (F, VP, H)
    eye = jnp.eye(p, dtype=jnp.float32)
    rhs = jnp.einsum("fvh,jk->jfvkh", tpad, eye).reshape(k, p * h)

    grid = (n_pad // block_n,)
    flops = 2 * n_pad * k * h
    bytes_accessed = (n_pad // p) * s * 4 + k * p * h * 4 + n_pad * h * 4

    out_packed = pl.pallas_call(
        node_encoder_kernel,
        out_shape=jax.ShapeDtypeStruct((n_pad // p, p * h), jnp.float32),
        grid_spec=pltpu.PrefetchScalarGridSpec(
            num_scalar_prefetch=0,
            grid=grid,
            in_specs=[
                pl.BlockSpec((tr, s), lambda b: (b, 0)),
                # Constant index map: the stacked table is DMA'd once and
                # stays VMEM-resident across grid steps.
                pl.BlockSpec((k, p * h), lambda b: (0, 0)),
            ],
            out_specs=pl.BlockSpec((tr, p * h), lambda b: (b, 0)),
            scratch_shapes=[pltpu.VMEM((tr, k), jnp.float32)],
        ),
        compiler_params=pltpu.CompilerParams(
            dimension_semantics=("parallel",)),
        cost_estimate=pl.CostEstimate(
            flops=flops, transcendentals=0, bytes_accessed=bytes_accessed),
    )(xp, rhs)

    # Unpack lanes back to (N, H); pure metadata reshape + slice.
    return out_packed.reshape(n_pad, h)[:n]


def node_encoder_ref(x, tables):
    if x.ndim == 1:
        x = x[:, None]
    out = jnp.zeros((x.shape[0], tables.shape[-1]), dtype=jnp.float32)
    for i in range(x.shape[1]):
        out = out + jnp.take(tables[i], x[:, i].astype(jnp.int32), axis=0)
    return out


if __name__ == "__main__":
    key = jax.random.PRNGKey(0)
    k_emb, k_x = jax.random.split(key)

    # N chosen so the padded grid has 2 blocks (exercises multi-block +
    # partial-tail path; lets the parallel axis shard across v7x's 2 TCs).
    N, F, V, H = 1000, 9, 100, 32
    # PyTorch nn.Embedding default init is N(0, 1); reproduce deterministically.
    tables = jax.random.normal(k_emb, (F, V, H), dtype=jnp.float32)
    x = jax.random.randint(k_x, (N, F), 0, V, dtype=jnp.int32)

    out = jax.block_until_ready(node_encoder(x, tables))

    ref = node_encoder_ref(x, tables)
    assert out.shape == (N, H)
    assert jnp.allclose(out, ref, atol=1e-5, rtol=1e-5), "mismatch vs reference"

    # Also exercise the 1-D input path (PyTorch's x.dim() == 1 branch).
    x1 = jax.random.randint(k_x, (37,), 0, V, dtype=jnp.int32)
    out1 = jax.block_until_ready(node_encoder(x1, tables))
    assert jnp.allclose(out1, node_encoder_ref(x1, tables), atol=1e-5, rtol=1e-5)

    print("KERNEL_OK")
</pallas_src>

<mosaic_0001>
module attributes {stable_mosaic.version = 11 : i64} {
  func.func @node_encoder_kernel(%arg0: i32, %arg1: memref<128x36xi32, #tpu.memory_space<vmem>>, %arg2: memref<4608x128xf32, #tpu.memory_space<vmem>>, %arg3: memref<128x128xf32, #tpu.memory_space<vmem>>, %arg4: memref<128x4608xf32, #tpu.memory_space<vmem>>) attributes {dimension_semantics = [#tpu.dimension_semantics<parallel>], iteration_bounds = array<i64: 2>, scalar_prefetch = 0 : i64, scratch_operands = 1 : i64, tpu.core_type = #tpu.core_type<tc>, window_params = [{transform_indices = @transform_0, window_bounds = array<i64: 128, 36>}, {pipeline_mode = #tpu.pipeline_mode<synchronous>, transform_indices = @transform_1, window_bounds = array<i64: 4608, 128>}, {transform_indices = @transform_2, window_bounds = array<i64: 128, 128>}]} {
    %c0 = arith.constant 0 : index
    %c0_0 = arith.constant 0 : index
    %0 = vector.load %arg1[%c0, %c0_0] : memref<128x36xi32, #tpu.memory_space<vmem>>, vector<128x36xi32>
    %1 = tpu.iota {dimensions = array<i32: 1>} : vector<128x128xi32>
    %2 = vector.extract_strided_slice %0 {offsets = [0, 0], sizes = [128, 1], strides = [1, 1]} : vector<128x36xi32> to vector<128x1xi32>
    %3 = vector.broadcast %2 : vector<128x1xi32> to vector<128x128xi32>
    %4 = arith.cmpi eq, %3, %1 : vector<128x128xi32>
    %5 = arith.extui %4 : vector<128x128xi1> to vector<128x128xi32>
    %6 = arith.sitofp %5 : vector<128x128xi32> to vector<128x128xf32>
    %c0_1 = arith.constant 0 : index
    %c0_2 = arith.constant 0 : index
    %7 = vector.load %arg4[%c0_1, %c0_2] : memref<128x4608xf32, #tpu.memory_space<vmem>>, vector<128x128xf32>
    tpu.vector_store %arg4[%c0_1, %c0_2], %6 {strides = array<i32>} : memref<128x4608xf32, #tpu.memory_space<vmem>>, vector<128x128xf32>,
    %8 = vector.extract_strided_slice %0 {offsets = [0, 1], sizes = [128, 1], strides = [1, 1]} : vector<128x36xi32> to vector<128x1xi32>
    %9 = vector.broadcast %8 : vector<128x1xi32> to vector<128x128xi32>
    %10 = arith.cmpi eq, %9, %1 : vector<128x128xi32>
    %11 = arith.extui %10 : vector<128x128xi1> to vector<128x128xi32>
    %12 = arith.sitofp %11 : vector<128x128xi32> to vector<128x128xf32>
    %c0_3 = arith.constant 0 : index
    %c128 = arith.constant 128 : index
    %13 = vector.load %arg4[%c0_3, %c128] : memref<128x4608xf32, #tpu.memory_space<vmem>>, vector<128x128xf32>
    tpu.vector_store %arg4[%c0_3, %c128], %12 {strides = array<i32>} : memref<128x4608xf32, #tpu.memory_space<vmem>>, vector<128x128xf32>,
    %14 = vector.extract_strided_slice %0 {offsets = [0, 2], sizes = [128, 1], strides = [1, 1]} : vector<128x36xi32> to vector<128x1xi32>
    %15 = vector.broadcast %14 : vector<128x1xi32> to vector<128x128xi32>
    %16 = arith.cmpi eq, %15, %1 : vector<128x128xi32>
    %17 = arith.extui %16 : vector<128x128xi1> to vector<128x128xi32>
    %18 = arith.sitofp %17 : vector<128x128xi32> to vector<128x128xf32>
    %c0_4 = arith.constant 0 : index
    %c256 = arith.constant 256 : index
    %19 = vector.load %arg4[%c0_4, %c256] : memref<128x4608xf32, #tpu.memory_space<vmem>>, vector<128x128xf32>
    tpu.vector_store %arg4[%c0_4, %c256], %18 {strides = array<i32>} : memref<128x4608xf32, #tpu.memory_space<vmem>>, vector<128x128xf32>,
    %20 = vector.extract_strided_slice %0 {offsets = [0, 3], sizes = [128, 1], strides = [1, 1]} : vector<128x36xi32> to vector<128x1xi32>
    %21 = vector.broadcast %20 : vector<128x1xi32> to vector<128x128xi32>
    %22 = arith.cmpi eq, %21, %1 : vector<128x128xi32>
    %23 = arith.extui %22 : vector<128x128xi1> to vector<128x128xi32>
    %24 = arith.sitofp %23 : vector<128x128xi32> to vector<128x128xf32>
    %c0_5 = arith.constant 0 : index
    %c384 = arith.constant 384 : index
    %25 = vector.load %arg4[%c0_5, %c384] : memref<128x4608xf32, #tpu.memory_space<vmem>>, vector<128x128xf32>
    tpu.vector_store %arg4[%c0_5, %c384], %24 {strides = array<i32>} : memref<128x4608xf32, #tpu.memory_space<vmem>>, vector<128x128xf32>,
    %26 = vector.extract_strided_slice %0 {offsets = [0, 4], sizes = [128, 1], strides = [1, 1]} : vector<128x36xi32> to vector<128x1xi32>
    %27 = vector.broadcast %26 : vector<128x1xi32> to vector<128x128xi32>
    %28 = arith.cmpi eq, %27, %1 : vector<128x128xi32>
    %29 = arith.extui %28 : vector<128x128xi1> to vector<128x128xi32>
    %30 = arith.sitofp %29 : vector<128x128xi32> to vector<128x128xf32>
    %c0_6 = arith.constant 0 : index
    %c512 = arith.constant 512 : index
    %31 = vector.load %arg4[%c0_6, %c512] : memref<128x4608xf32, #tpu.memory_space<vmem>>, vector<128x128xf32>
    tpu.vector_store %arg4[%c0_6, %c512], %30 {strides = array<i32>} : memref<128x4608xf32, #tpu.memory_space<vmem>>, vector<128x128xf32>,
    %32 = vector.extract_strided_slice %0 {offsets = [0, 5], sizes = [128, 1], strides = [1, 1]} : vector<128x36xi32> to vector<128x1xi32>
    %33 = vector.broadcast %32 : vector<128x1xi32> to vector<128x128xi32>
    %34 = arith.cmpi eq, %33, %1 : vector<128x128xi32>
    %35 = arith.extui %34 : vector<128x128xi1> to vector<128x128xi32>
    %36 = arith.sitofp %35 : vector<128x128xi32> to vector<128x128xf32>
    %c0_7 = arith.constant 0 : index
    %c640 = arith.constant 640 : index
    %37 = vector.load %arg4[%c0_7, %c640] : memref<128x4608xf32, #tpu.memory_space<vmem>>, vector<128x128xf32>
    tpu.vector_store %arg4[%c0_7, %c640], %36 {strides = array<i32>} : memref<128x4608xf32, #tpu.memory_space<vmem>>, vector<128x128xf32>,
    %38 = vector.extract_strided_slice %0 {offsets = [0, 6], sizes = [128, 1], strides = [1, 1]} : vector<128x36xi32> to vector<128x1xi32>
    %39 = vector.broadcast %38 : vector<128x1xi32> to vector<128x128xi32>
    %40 = arith.cmpi eq, %39, %1 : vector<128x128xi32>
    %41 = arith.extui %40 : vector<128x128xi1> to vector<128x128xi32>
    %42 = arith.sitofp %41 : vector<128x128xi32> to vector<128x128xf32>
    %c0_8 = arith.constant 0 : index
    %c768 = arith.constant 768 : index
    %43 = vector.load %arg4[%c0_8, %c768] : memref<128x4608xf32, #tpu.memory_space<vmem>>, vector<128x128xf32>
    tpu.vector_store %arg4[%c0_8, %c768], %42 {strides = array<i32>} : memref<128x4608xf32, #tpu.memory_space<vmem>>, vector<128x128xf32>,
    %44 = vector.extract_strided_slice %0 {offsets = [0, 7], sizes = [128, 1], strides = [1, 1]} : vector<128x36xi32> to vector<128x1xi32>
    %45 = vector.broadcast %44 : vector<128x1xi32> to vector<128x128xi32>
    %46 = arith.cmpi eq, %45, %1 : vector<128x128xi32>
    %47 = arith.extui %46 : vector<128x128xi1> to vector<128x128xi32>
    %48 = arith.sitofp %47 : vector<128x128xi32> to vector<128x128xf32>
    %c0_9 = arith.constant 0 : index
    %c896 = arith.constant 896 : index
    %49 = vector.load %arg4[%c0_9, %c896] : memref<128x4608xf32, #tpu.memory_space<vmem>>, vector<128x128xf32>
    tpu.vector_store %arg4[%c0_9, %c896], %48 {strides = array<i32>} : memref<128x4608xf32, #tpu.memory_space<vmem>>, vector<128x128xf32>,
    %50 = vector.extract_strided_slice %0 {offsets = [0, 8], sizes = [128, 1], strides = [1, 1]} : vector<128x36xi32> to vector<128x1xi32>
    %51 = vector.broadcast %50 : vector<128x1xi32> to vector<128x128xi32>
    %52 = arith.cmpi eq, %51, %1 : vector<128x128xi32>
    %53 = arith.extui %52 : vector<128x128xi1> to vector<128x128xi32>
    %54 = arith.sitofp %53 : vector<128x128xi32> to vector<128x128xf32>
    %c0_10 = arith.constant 0 : index
    %c1024 = arith.constant 1024 : index
    %55 = vector.load %arg4[%c0_10, %c1024] : memref<128x4608xf32, #tpu.memory_space<vmem>>, vector<128x128xf32>
    tpu.vector_store %arg4[%c0_10, %c1024], %54 {strides = array<i32>} : memref<128x4608xf32, #tpu.memory_space<vmem>>, vector<128x128xf32>,
    %56 = vector.extract_strided_slice %0 {offsets = [0, 9], sizes = [128, 1], strides = [1, 1]} : vector<128x36xi32> to vector<128x1xi32>
    %57 = vector.broadcast %56 : vector<128x1xi32> to vector<128x128xi32>
    %58 = arith.cmpi eq, %57, %1 : vector<128x128xi32>
    %59 = arith.extui %58 : vector<128x128xi1> to vector<128x128xi32>
    %60 = arith.sitofp %59 : vector<128x128xi32> to vector<128x128xf32>
    %c0_11 = arith.constant 0 : index
    %c1152 = arith.constant 1152 : index
    %61 = vector.load %arg4[%c0_11, %c1152] : memref<128x4608xf32, #tpu.memory_space<vmem>>, vector<128x128xf32>
    tpu.vector_store %arg4[%c0_11, %c1152], %60 {strides = array<i32>} : memref<128x4608xf32, #tpu.memory_space<vmem>>, vector<128x128xf32>,
    %62 = vector.extract_strided_slice %0 {offsets = [0, 10], sizes = [128, 1], strides = [1, 1]} : vector<128x36xi32> to vector<128x1xi32>
    %63 = vector.broadcast %62 : vector<128x1xi32> to vector<128x128xi32>
    %64 = arith.cmpi eq, %63, %1 : vector<128x128xi32>
    %65 = arith.extui %64 : vector<128x128xi1> to vector<128x128xi32>
    %66 = arith.sitofp %65 : vector<128x128xi32> to vector<128x128xf32>
    %c0_12 = arith.constant 0 : index
    %c1280 = arith.constant 1280 : index
    %67 = vector.load %arg4[%c0_12, %c1280] : memref<128x4608xf32, #tpu.memory_space<vmem>>, vector<128x128xf32>
    tpu.vector_store %arg4[%c0_12, %c1280], %66 {strides = array<i32>} : memref<128x4608xf32, #tpu.memory_space<vmem>>, vector<128x128xf32>,
    %68 = vector.extract_strided_slice %0 {offsets = [0, 11], sizes = [128, 1], strides = [1, 1]} : vector<128x36xi32> to vector<128x1xi32>
    %69 = vector.broadcast %68 : vector<128x1xi32> to vector<128x128xi32>
    %70 = arith.cmpi eq, %69, %1 : vector<128x128xi32>
    %71 = arith.extui %70 : vector<128x128xi1> to vector<128x128xi32>
    %72 = arith.sitofp %71 : vector<128x128xi32> to vector<128x128xf32>
    %c0_13 = arith.constant 0 : index
    %c1408 = arith.constant 1408 : index
    %73 = vector.load %arg4[%c0_13, %c1408] : memref<128x4608xf32, #tpu.memory_space<vmem>>, vector<128x128xf32>
    tpu.vector_store %arg4[%c0_13, %c1408], %72 {strides = array<i32>} : memref<128x4608xf32, #tpu.memory_space<vmem>>, vector<128x128xf32>,
    %74 = vector.extract_strided_slice %0 {offsets = [0, 12], sizes = [128, 1], strides = [1, 1]} : vector<128x36xi32> to vector<128x1xi32>
    %75 = vector.broadcast %74 : vector<128x1xi32> to vector<128x128xi32>
    %76 = arith.cmpi eq, %75, %1 : vector<128x128xi32>
    %77 = arith.extui %76 : vector<128x128xi1> to vector<128x128xi32>
    %78 = arith.sitofp %77 : vector<128x128xi32> to vector<128x128xf32>
    %c0_14 = arith.constant 0 : index
    %c1536 = arith.constant 1536 : index
    %79 = vector.load %arg4[%c0_14, %c1536] : memref<128x4608xf32, #tpu.memory_space<vmem>>, vector<128x128xf32>
    tpu.vector_store %arg4[%c0_14, %c1536], %78 {strides = array<i32>} : memref<128x4608xf32, #tpu.memory_space<vmem>>, vector<128x128xf32>,
    %80 = vector.extract_strided_slice %0 {offsets = [0, 13], sizes = [128, 1], strides = [1, 1]} : vector<128x36xi32> to vector<128x1xi32>
    %81 = vector.broadcast %80 : vector<128x1xi32> to vector<128x128xi32>
    %82 = arith.cmpi eq, %81, %1 : vector<128x128xi32>
    %83 = arith.extui %82 : vector<128x128xi1> to vector<128x128xi32>
    %84 = arith.sitofp %83 : vector<128x128xi32> to vector<128x128xf32>
    %c0_15 = arith.constant 0 : index
    %c1664 = arith.constant 1664 : index
    %85 = vector.load %arg4[%c0_15, %c1664] : memref<128x4608xf32, #tpu.memory_space<vmem>>, vector<128x128xf32>
    tpu.vector_store %arg4[%c0_15, %c1664], %84 {strides = array<i32>} : memref<128x4608xf32, #tpu.memory_space<vmem>>, vector<128x128xf32>,
    %86 = vector.extract_strided_slice %0 {offsets = [0, 14], sizes = [128, 1], strides = [1, 1]} : vector<128x36xi32> to vector<128x1xi32>
    %87 = vector.broadcast %86 : vector<128x1xi32> to vector<128x128xi32>
    %88 = arith.cmpi eq, %87, %1 : vector<128x128xi32>
    %89 = arith.extui %88 : vector<128x128xi1> to vector<128x128xi32>
    %90 = arith.sitofp %89 : vector<128x128xi32> to vector<128x128xf32>
    %c0_16 = arith.constant 0 : index
    %c1792 = arith.constant 1792 : index
    %91 = vector.load %arg4[%c0_16, %c1792] : memref<128x4608xf32, #tpu.memory_space<vmem>>, vector<128x128xf32>
    tpu.vector_store %arg4[%c0_16, %c1792], %90 {strides = array<i32>} : memref<128x4608xf32, #tpu.memory_space<vmem>>, vector<128x128xf32>,
    %92 = vector.extract_strided_slice %0 {offsets = [0, 15], sizes = [128, 1], strides = [1, 1]} : vector<128x36xi32> to vector<128x1xi32>
    %93 = vector.broadcast %92 : vector<128x1xi32> to vector<128x128xi32>
    %94 = arith.cmpi eq, %93, %1 : vector<128x128xi32>
    %95 = arith.extui %94 : vector<128x128xi1> to vector<128x128xi32>
    %96 = arith.sitofp %95 : vector<128x128xi32> to vector<128x128xf32>
    %c0_17 = arith.constant 0 : index
    %c1920 = arith.constant 1920 : index
    %97 = vector.load %arg4[%c0_17, %c1920] : memref<128x4608xf32, #tpu.memory_space<vmem>>, vector<128x128xf32>
    tpu.vector_store %arg4[%c0_17, %c1920], %96 {strides = array<i32>} : memref<128x4608xf32, #tpu.memory_space<vmem>>, vector<128x128xf32>,
    %98 = vector.extract_strided_slice %0 {offsets = [0, 16], sizes = [128, 1], strides = [1, 1]} : vector<128x36xi32> to vector<128x1xi32>
    %99 = vector.broadcast %98 : vector<128x1xi32> to vector<128x128xi32>
    %100 = arith.cmpi eq, %99, %1 : vector<128x128xi32>
    %101 = arith.extui %100 : vector<128x128xi1> to vector<128x128xi32>
    %102 = arith.sitofp %101 : vector<128x128xi32> to vector<128x128xf32>
    %c0_18 = arith.constant 0 : index
    %c2048 = arith.constant 2048 : index
    %103 = vector.load %arg4[%c0_18, %c2048] : memref<128x4608xf32, #tpu.memory_space<vmem>>, vector<128x128xf32>
    tpu.vector_store %arg4[%c0_18, %c2048], %102 {strides = array<i32>} : memref<128x4608xf32, #tpu.memory_space<vmem>>, vector<128x128xf32>,
    %104 = vector.extract_strided_slice %0 {offsets = [0, 17], sizes = [128, 1], strides = [1, 1]} : vector<128x36xi32> to vector<128x1xi32>
    %105 = vector.broadcast %104 : vector<128x1xi32> to vector<128x128xi32>
    %106 = arith.cmpi eq, %105, %1 : vector<128x128xi32>
    %107 = arith.extui %106 : vector<128x128xi1> to vector<128x128xi32>
    %108 = arith.sitofp %107 : vector<128x128xi32> to vector<128x128xf32>
    %c0_19 = arith.constant 0 : index
    %c2176 = arith.constant 2176 : index
    %109 = vector.load %arg4[%c0_19, %c2176] : memref<128x4608xf32, #tpu.memory_space<vmem>>, vector<128x128xf32>
    tpu.vector_store %arg4[%c0_19, %c2176], %108 {strides = array<i32>} : memref<128x4608xf32, #tpu.memory_space<vmem>>, vector<128x128xf32>,
    %110 = vector.extract_strided_slice %0 {offsets = [0, 18], sizes = [128, 1], strides = [1, 1]} : vector<128x36xi32> to vector<128x1xi32>
    %111 = vector.broadcast %110 : vector<128x1xi32> to vector<128x128xi32>
    %112 = arith.cmpi eq, %111, %1 : vector<128x128xi32>
    %113 = arith.extui %112 : vector<128x128xi1> to vector<128x128xi32>
    %114 = arith.sitofp %113 : vector<128x128xi32> to vector<128x128xf32>
    %c0_20 = arith.constant 0 : index
    %c2304 = arith.constant 2304 : index
    %115 = vector.load %arg4[%c0_20, %c2304] : memref<128x4608xf32, #tpu.memory_space<vmem>>, vector<128x128xf32>
    tpu.vector_store %arg4[%c0_20, %c2304], %114 {strides = array<i32>} : memref<128x4608xf32, #tpu.memory_space<vmem>>, vector<128x128xf32>,
    %116 = vector.extract_strided_slice %0 {offsets = [0, 19], sizes = [128, 1], strides = [1, 1]} : vector<128x36xi32> to vector<128x1xi32>
    %117 = vector.broadcast %116 : vector<128x1xi32> to vector<128x128xi32>
    %118 = arith.cmpi eq, %117, %1 : vector<128x128xi32>
    %119 = arith.extui %118 : vector<128x128xi1> to vector<128x128xi32>
    %120 = arith.sitofp %119 : vector<128x128xi32> to vector<128x128xf32>
    %c0_21 = arith.constant 0 : index
    %c2432 = arith.constant 2432 : index
    %121 = vector.load %arg4[%c0_21, %c2432] : memref<128x4608xf32, #tpu.memory_space<vmem>>, vector<128x128xf32>
    tpu.vector_store %arg4[%c0_21, %c2432], %120 {strides = array<i32>} : memref<128x4608xf32, #tpu.memory_space<vmem>>, vector<128x128xf32>,
    %122 = vector.extract_strided_slice %0 {offsets = [0, 20], sizes = [128, 1], strides = [1, 1]} : vector<128x36xi32> to vector<128x1xi32>
    %123 = vector.broadcast %122 : vector<128x1xi32> to vector<128x128xi32>
    %124 = arith.cmpi eq, %123, %1 : vector<128x128xi32>
    %125 = arith.extui %124 : vector<128x128xi1> to vector<128x128xi32>
    %126 = arith.sitofp %125 : vector<128x128xi32> to vector<128x128xf32>
    %c0_22 = arith.constant 0 : index
    %c2560 = arith.constant 2560 : index
    %127 = vector.load %arg4[%c0_22, %c2560] : memref<128x4608xf32, #tpu.memory_space<vmem>>, vector<128x128xf32>
    tpu.vector_store %arg4[%c0_22, %c2560], %126 {strides = array<i32>} : memref<128x4608xf32, #tpu.memory_space<vmem>>, vector<128x128xf32>,
    %128 = vector.extract_strided_slice %0 {offsets = [0, 21], sizes = [128, 1], strides = [1, 1]} : vector<128x36xi32> to vector<128x1xi32>
    %129 = vector.broadcast %128 : vector<128x1xi32> to vector<128x128xi32>
    %130 = arith.cmpi eq, %129, %1 : vector<128x128xi32>
    %131 = arith.extui %130 : vector<128x128xi1> to vector<128x128xi32>
    %132 = arith.sitofp %131 : vector<128x128xi32> to vector<128x128xf32>
    %c0_23 = arith.constant 0 : index
    %c2688 = arith.constant 2688 : index
    %133 = vector.load %arg4[%c0_23, %c2688] : memref<128x4608xf32, #tpu.memory_space<vmem>>, vector<128x128xf32>
    tpu.vector_store %arg4[%c0_23, %c2688], %132 {strides = array<i32>} : memref<128x4608xf32, #tpu.memory_space<vmem>>, vector<128x128xf32>,
    %134 = vector.extract_strided_slice %0 {offsets = [0, 22], sizes = [128, 1], strides = [1, 1]} : vector<128x36xi32> to vector<128x1xi32>
    %135 = vector.broadcast %134 : vector<128x1xi32> to vector<128x128xi32>
    %136 = arith.cmpi eq, %135, %1 : vector<128x128xi32>
    %137 = arith.extui %136 : vector<128x128xi1> to vector<128x128xi32>
    %138 = arith.sitofp %137 : vector<128x128xi32> to vector<128x128xf32>
    %c0_24 = arith.constant 0 : index
    %c2816 = arith.constant 2816 : index
    %139 = vector.load %arg4[%c0_24, %c2816] : memref<128x4608xf32, #tpu.memory_space<vmem>>, vector<128x128xf32>
    tpu.vector_store %arg4[%c0_24, %c2816], %138 {strides = array<i32>} : memref<128x4608xf32, #tpu.memory_space<vmem>>, vector<128x128xf32>,
    %140 = vector.extract_strided_slice %0 {offsets = [0, 23], sizes = [128, 1], strides = [1, 1]} : vector<128x36xi32> to vector<128x1xi32>
    %141 = vector.broadcast %140 : vector<128x1xi32> to vector<128x128xi32>
    %142 = arith.cmpi eq, %141, %1 : vector<128x128xi32>
    %143 = arith.extui %142 : vector<128x128xi1> to vector<128x128xi32>
    %144 = arith.sitofp %143 : vector<128x128xi32> to vector<128x128xf32>
    %c0_25 = arith.constant 0 : index
    %c2944 = arith.constant 2944 : index
    %145 = vector.load %arg4[%c0_25, %c2944] : memref<128x4608xf32, #tpu.memory_space<vmem>>, vector<128x128xf32>
    tpu.vector_store %arg4[%c0_25, %c2944], %144 {strides = array<i32>} : memref<128x4608xf32, #tpu.memory_space<vmem>>, vector<128x128xf32>,
    %146 = vector.extract_strided_slice %0 {offsets = [0, 24], sizes = [128, 1], strides = [1, 1]} : vector<128x36xi32> to vector<128x1xi32>
    %147 = vector.broadcast %146 : vector<128x1xi32> to vector<128x128xi32>
    %148 = arith.cmpi eq, %147, %1 : vector<128x128xi32>
    %149 = arith.extui %148 : vector<128x128xi1> to vector<128x128xi32>
    %150 = arith.sitofp %149 : vector<128x128xi32> to vector<128x128xf32>
    %c0_26 = arith.constant 0 : index
    %c3072 = arith.constant 3072 : index
    %151 = vector.load %arg4[%c0_26, %c3072] : memref<128x4608xf32, #tpu.memory_space<vmem>>, vector<128x128xf32>
    tpu.vector_store %arg4[%c0_26, %c3072], %150 {strides = array<i32>} : memref<128x4608xf32, #tpu.memory_space<vmem>>, vector<128x128xf32>,
    %152 = vector.extract_strided_slice %0 {offsets = [0, 25], sizes = [128, 1], strides = [1, 1]} : vector<128x36xi32> to vector<128x1xi32>
    %153 = vector.broadcast %152 : vector<128x1xi32> to vector<128x128xi32>
    %154 = arith.cmpi eq, %153, %1 : vector<128x128xi32>
    %155 = arith.extui %154 : vector<128x128xi1> to vector<128x128xi32>
    %156 = arith.sitofp %155 : vector<128x128xi32> to vector<128x128xf32>
    %c0_27 = arith.constant 0 : index
    %c3200 = arith.constant 3200 : index
    %157 = vector.load %arg4[%c0_27, %c3200] : memref<128x4608xf32, #tpu.memory_space<vmem>>, vector<128x128xf32>
    tpu.vector_store %arg4[%c0_27, %c3200], %156 {strides = array<i32>} : memref<128x4608xf32, #tpu.memory_space<vmem>>, vector<128x128xf32>,
    %158 = vector.extract_strided_slice %0 {offsets = [0, 26], sizes = [128, 1], strides = [1, 1]} : vector<128x36xi32> to vector<128x1xi32>
    %159 = vector.broadcast %158 : vector<128x1xi32> to vector<128x128xi32>
    %160 = arith.cmpi eq, %159, %1 : vector<128x128xi32>
    %161 = arith.extui %160 : vector<128x128xi1> to vector<128x128xi32>
    %162 = arith.sitofp %161 : vector<128x128xi32> to vector<128x128xf32>
    %c0_28 = arith.constant 0 : index
    %c3328 = arith.constant 3328 : index
    %163 = vector.load %arg4[%c0_28, %c3328] : memref<128x4608xf32, #tpu.memory_space<vmem>>, vector<128x128xf32>
    tpu.vector_store %arg4[%c0_28, %c3328], %162 {strides = array<i32>} : memref<128x4608xf32, #tpu.memory_space<vmem>>, vector<128x128xf32>,
    %164 = vector.extract_strided_slice %0 {offsets = [0, 27], sizes = [128, 1], strides = [1, 1]} : vector<128x36xi32> to vector<128x1xi32>
    %165 = vector.broadcast %164 : vector<128x1xi32> to vector<128x128xi32>
    %166 = arith.cmpi eq, %165, %1 : vector<128x128xi32>
    %167 = arith.extui %166 : vector<128x128xi1> to vector<128x128xi32>
    %168 = arith.sitofp %167 : vector<128x128xi32> to vector<128x128xf32>
    %c0_29 = arith.constant 0 : index
    %c3456 = arith.constant 3456 : index
    %169 = vector.load %arg4[%c0_29, %c3456] : memref<128x4608xf32, #tpu.memory_space<vmem>>, vector<128x128xf32>
    tpu.vector_store %arg4[%c0_29, %c3456], %168 {strides = array<i32>} : memref<128x4608xf32, #tpu.memory_space<vmem>>, vector<128x128xf32>,
    %170 = vector.extract_strided_slice %0 {offsets = [0, 28], sizes = [128, 1], strides = [1, 1]} : vector<128x36xi32> to vector<128x1xi32>
    %171 = vector.broadcast %170 : vector<128x1xi32> to vector<128x128xi32>
    %172 = arith.cmpi eq, %171, %1 : vector<128x128xi32>
    %173 = arith.extui %172 : vector<128x128xi1> to vector<128x128xi32>
    %174 = arith.sitofp %173 : vector<128x128xi32> to vector<128x128xf32>
    %c0_30 = arith.constant 0 : index
    %c3584 = arith.constant 3584 : index
    %175 = vector.load %arg4[%c0_30, %c3584] : memref<128x4608xf32, #tpu.memory_space<vmem>>, vector<128x128xf32>
    tpu.vector_store %arg4[%c0_30, %c3584], %174 {strides = array<i32>} : memref<128x4608xf32, #tpu.memory_space<vmem>>, vector<128x128xf32>,
    %176 = vector.extract_strided_slice %0 {offsets = [0, 29], sizes = [128, 1], strides = [1, 1]} : vector<128x36xi32> to vector<128x1xi32>
    %177 = vector.broadcast %176 : vector<128x1xi32> to vector<128x128xi32>
    %178 = arith.cmpi eq, %177, %1 : vector<128x128xi32>
    %179 = arith.extui %178 : vector<128x128xi1> to vector<128x128xi32>
    %180 = arith.sitofp %179 : vector<128x128xi32> to vector<128x128xf32>
    %c0_31 = arith.constant 0 : index
    %c3712 = arith.constant 3712 : index
    %181 = vector.load %arg4[%c0_31, %c3712] : memref<128x4608xf32, #tpu.memory_space<vmem>>, vector<128x128xf32>
    tpu.vector_store %arg4[%c0_31, %c3712], %180 {strides = array<i32>} : memref<128x4608xf32, #tpu.memory_space<vmem>>, vector<128x128xf32>,
    %182 = vector.extract_strided_slice %0 {offsets = [0, 30], sizes = [128, 1], strides = [1, 1]} : vector<128x36xi32> to vector<128x1xi32>
    %183 = vector.broadcast %182 : vector<128x1xi32> to vector<128x128xi32>
    %184 = arith.cmpi eq, %183, %1 : vector<128x128xi32>
    %185 = arith.extui %184 : vector<128x128xi1> to vector<128x128xi32>
    %186 = arith.sitofp %185 : vector<128x128xi32> to vector<128x128xf32>
    %c0_32 = arith.constant 0 : index
    %c3840 = arith.constant 3840 : index
    %187 = vector.load %arg4[%c0_32, %c3840] : memref<128x4608xf32, #tpu.memory_space<vmem>>, vector<128x128xf32>
    tpu.vector_store %arg4[%c0_32, %c3840], %186 {strides = array<i32>} : memref<128x4608xf32, #tpu.memory_space<vmem>>, vector<128x128xf32>,
    %188 = vector.extract_strided_slice %0 {offsets = [0, 31], sizes = [128, 1], strides = [1, 1]} : vector<128x36xi32> to vector<128x1xi32>
    %189 = vector.broadcast %188 : vector<128x1xi32> to vector<128x128xi32>
    %190 = arith.cmpi eq, %189, %1 : vector<128x128xi32>
    %191 = arith.extui %190 : vector<128x128xi1> to vector<128x128xi32>
    %192 = arith.sitofp %191 : vector<128x128xi32> to vector<128x128xf32>
    %c0_33 = arith.constant 0 : index
    %c3968 = arith.constant 3968 : index
    %193 = vector.load %arg4[%c0_33, %c3968] : memref<128x4608xf32, #tpu.memory_space<vmem>>, vector<128x128xf32>
    tpu.vector_store %arg4[%c0_33, %c3968], %192 {strides = array<i32>} : memref<128x4608xf32, #tpu.memory_space<vmem>>, vector<128x128xf32>,
    %194 = vector.extract_strided_slice %0 {offsets = [0, 32], sizes = [128, 1], strides = [1, 1]} : vector<128x36xi32> to vector<128x1xi32>
    %195 = vector.broadcast %194 : vector<128x1xi32> to vector<128x128xi32>
    %196 = arith.cmpi eq, %195, %1 : vector<128x128xi32>
    %197 = arith.extui %196 : vector<128x128xi1> to vector<128x128xi32>
    %198 = arith.sitofp %197 : vector<128x128xi32> to vector<128x128xf32>
    %c0_34 = arith.constant 0 : index
    %c4096 = arith.constant 4096 : index
    %199 = vector.load %arg4[%c0_34, %c4096] : memref<128x4608xf32, #tpu.memory_space<vmem>>, vector<128x128xf32>
    tpu.vector_store %arg4[%c0_34, %c4096], %198 {strides = array<i32>} : memref<128x4608xf32, #tpu.memory_space<vmem>>, vector<128x128xf32>,
    %200 = vector.extract_strided_slice %0 {offsets = [0, 33], sizes = [128, 1], strides = [1, 1]} : vector<128x36xi32> to vector<128x1xi32>
    %201 = vector.broadcast %200 : vector<128x1xi32> to vector<128x128xi32>
    %202 = arith.cmpi eq, %201, %1 : vector<128x128xi32>
    %203 = arith.extui %202 : vector<128x128xi1> to vector<128x128xi32>
    %204 = arith.sitofp %203 : vector<128x128xi32> to vector<128x128xf32>
    %c0_35 = arith.constant 0 : index
    %c4224 = arith.constant 4224 : index
    %205 = vector.load %arg4[%c0_35, %c4224] : memref<128x4608xf32, #tpu.memory_space<vmem>>, vector<128x128xf32>
    tpu.vector_store %arg4[%c0_35, %c4224], %204 {strides = array<i32>} : memref<128x4608xf32, #tpu.memory_space<vmem>>, vector<128x128xf32>,
    %206 = vector.extract_strided_slice %0 {offsets = [0, 34], sizes = [128, 1], strides = [1, 1]} : vector<128x36xi32> to vector<128x1xi32>
    %207 = vector.broadcast %206 : vector<128x1xi32> to vector<128x128xi32>
    %208 = arith.cmpi eq, %207, %1 : vector<128x128xi32>
    %209 = arith.extui %208 : vector<128x128xi1> to vector<128x128xi32>
    %210 = arith.sitofp %209 : vector<128x128xi32> to vector<128x128xf32>
    %c0_36 = arith.constant 0 : index
    %c4352 = arith.constant 4352 : index
    %211 = vector.load %arg4[%c0_36, %c4352] : memref<128x4608xf32, #tpu.memory_space<vmem>>, vector<128x128xf32>
    tpu.vector_store %arg4[%c0_36, %c4352], %210 {strides = array<i32>} : memref<128x4608xf32, #tpu.memory_space<vmem>>, vector<128x128xf32>,
    %212 = vector.extract_strided_slice %0 {offsets = [0, 35], sizes = [128, 1], strides = [1, 1]} : vector<128x36xi32> to vector<128x1xi32>
    %213 = vector.broadcast %212 : vector<128x1xi32> to vector<128x128xi32>
    %214 = arith.cmpi eq, %213, %1 : vector<128x128xi32>
    %215 = arith.extui %214 : vector<128x128xi1> to vector<128x128xi32>
    %216 = arith.sitofp %215 : vector<128x128xi32> to vector<128x128xf32>
    %c0_37 = arith.constant 0 : index
    %c4480 = arith.constant 4480 : index
    %217 = vector.load %arg4[%c0_37, %c4480] : memref<128x4608xf32, #tpu.memory_space<vmem>>, vector<128x128xf32>
    tpu.vector_store %arg4[%c0_37, %c4480], %216 {strides = array<i32>} : memref<128x4608xf32, #tpu.memory_space<vmem>>, vector<128x128xf32>,
    %c0_38 = arith.constant 0 : index
    %c0_39 = arith.constant 0 : index
    %218 = vector.load %arg4[%c0_38, %c0_39] : memref<128x4608xf32, #tpu.memory_space<vmem>>, vector<128x4608xf32>
    %c0_40 = arith.constant 0 : index
    %c0_41 = arith.constant 0 : index
    %219 = vector.load %arg2[%c0_40, %c0_41] : memref<4608x128xf32, #tpu.memory_space<vmem>>, vector<4608x128xf32>
    %cst = arith.constant dense<0.000000e+00> : vector<128x128xf32>
    %220 = tpu.matmul %218, %219, %cst {dimension_numbers = #tpu.dot_dimension_numbers<[1], [0], [0], [1], [0, 0, 1, 1], [], []>} : vector<128x4608xf32>, vector<4608x128xf32>, vector<128x128xf32> -> vector<128x128xf32>
    %c0_42 = arith.constant 0 : index
    %c0_43 = arith.constant 0 : index
    %221 = vector.load %arg3[%c0_42, %c0_43] : memref<128x128xf32, #tpu.memory_space<vmem>>, vector<128x128xf32>
    tpu.vector_store %arg3[%c0_42, %c0_43], %220 {strides = array<i32>} : memref<128x128xf32, #tpu.memory_space<vmem>>, vector<128x128xf32>,
    return
  }
  func.func @transform_0(%arg0: i32) -> (i32, i32) {
    %c0_i32 = arith.constant 0 : i32
    %c0_i32_0 = arith.constant 0 : i32
    return %arg0, %c0_i32 : i32, i32
  }
  func.func @transform_1(%arg0: i32) -> (i32, i32) {
    %c0_i32 = arith.constant 0 : i32
    %c0_i32_0 = arith.constant 0 : i32
    %c0_i32_1 = arith.constant 0 : i32
    return %c0_i32, %c0_i32_0 : i32, i32
  }
  func.func @transform_2(%arg0: i32) -> (i32, i32) {
    %c0_i32 = arith.constant 0 : i32
    %c0_i32_0 = arith.constant 0 : i32
    return %arg0, %c0_i32 : i32, i32
  }
}

</mosaic_0001>

<llo_original>
// kernel: node_encoder.1
$region0: #{node_encoder.1}
  #allocation0 [shape = 'u32[]', space=smem, size = 0x4, offset = 0x4, fixed_abs, tag = 'smem constant byte address 0x4 - core index']
  #allocation1 [shape = 'u32[144,128]{1,0:T(1,128)}', space=vmem, size = 0x12000, scoped, tag = 'internal scratch']
  #allocation2 [shape = 'f32[128,4608]{1,0:T(8,128)}', space=vmem, size = 0x240000, scoped, tag = 'scratch operand']
  %s0 = inlined_call_operand.vmem [shape: s32[256,36], index: 0, kind: input, shape index: {}]
  %s1 = inlined_call_operand.vmem [shape: f32[4608,128], index: 1, kind: input, shape index: {}]
  %s2 = inlined_call_operand.vmem [shape: f32[256,128], index: 2, kind: output, shape index: {}]
  %s3 = sld [smem:[#allocation0]]
  $region41: #{node_encoder.1} parent=0
    _
  %s5 = ssub.s32 1, %s3
  %s6 = scalar_select 0, %s5, %s3
  loop: start=0, step=1, limit=4
  $region2: #{node_encoder.1} parent=0 // loop_pre_header
    _
  $region3: #{node_encoder.1} parent=0 // loop_header
    %s8 = sphi 0, %s12
    %p9 = scmp.ge.s32.totalorder %s8, 4
    %s18 = sphi 0, %s20
    %s21 = sphi 0, %s18
    %s22 = sphi 0, %s21
    %s38 = sphi 0, %s22
    %s42 = sphi 0, %s42
    %s44 = sphi 0, %s42
    %s45 = sphi 0, %s44
    %s59 = sphi 0, %s45
    %s65 = sphi 0, %s67
    %s68 = sphi 0, %s65
    %s69 = sphi 0, %s68
    %s85 = sphi 0, %s69
  $region4: #{node_encoder.1} parent=0 // loop_header_branch
    %11 = sbr.rel (%p9) target = $region8
  $region5: #{node_encoder.1} parent=0 // loop_body
    %s13 = ssub.s32 %s8, 1
    %s14 = ssub.s32 %s8, 2
    %s15 = sadd.s32 %s8, 1
    %s16 = ssub.s32 %s8, %s15
    %p17 = scmp.eq.s32.totalorder %s16, 0
    %s19 = sadd.s32 %s18, 1
    %s20 = scalar_select %p17, %s18, %s19
    %p23 = pneg %p17
    %p24 = scmp.eq.s32.totalorder %s8, 1
    %p25 = por %p23, %p24
    %p26 = scmp.ne.s32.totalorder %s18, %s21
    %p27 = scmp.eq.s32.totalorder %s8, 0
    %p28 = por %p26, %p27
    %p29 = scmp.ne.s32.totalorder %s18, %s21
    %p30 = scmp.eq.s32.totalorder %s13, 1
    %p31 = por %p29, %p30
    %p32 = scmp.ne.s32.totalorder %s21, %s22
    %p33 = scmp.eq.s32.totalorder %s13, 0
    %p34 = por %p32, %p33
    %p35 = scmp.ne.s32.totalorder %s21, %s22
    %p36 = scmp.eq.s32.totalorder %s14, 1
    %p37 = por %p35, %p36
    %p39 = scmp.ne.s32.totalorder %s22, %s38
    %p40 = scmp.eq.s32.totalorder %s14, 0
    %p41 = por %p39, %p40
    %s43 = sadd.s32 %s42, 1
    %p46 = scmp.eq.s32.totalorder %s8, 1
    %p47 = scmp.ne.s32.totalorder %s42, %s44
    %p48 = scmp.eq.s32.totalorder %s8, 0
    %p49 = por %p47, %p48
    %p50 = scmp.ne.s32.totalorder %s42, %s44
    %p51 = scmp.eq.s32.totalorder %s13, 1
    %p52 = por %p50, %p51
    %p53 = scmp.ne.s32.totalorder %s44, %s45
    %p54 = scmp.eq.s32.totalorder %s13, 0
    %p55 = por %p53, %p54
    %p56 = scmp.ne.s32.totalorder %s44, %s45
    %p57 = scmp.eq.s32.totalorder %s14, 1
    %p58 = por %p56, %p57
    %p60 = scmp.ne.s32.totalorder %s45, %s59
    %p61 = scmp.eq.s32.totalorder %s14, 0
    %p62 = por %p60, %p61
    %s63 = ssub.s32 %s8, %s15
    %p64 = scmp.eq.s32.totalorder %s63, 0
    %s66 = sadd.s32 %s65, 1
    %s67 = scalar_select %p64, %s65, %s66
    %p70 = pneg %p64
    %p71 = scmp.eq.s32.totalorder %s8, 1
    %p72 = por %p70, %p71
    %p73 = scmp.ne.s32.totalorder %s65, %s68
    %p74 = scmp.eq.s32.totalorder %s8, 0
    %p75 = por %p73, %p74
    %p76 = scmp.ne.s32.totalorder %s65, %s68
    %p77 = scmp.eq.s32.totalorder %s13, 1
    %p78 = por %p76, %p77
    %p79 = scmp.ne.s32.totalorder %s68, %s69
    %p80 = scmp.eq.s32.totalorder %s13, 0
    %p81 = por %p79, %p80
    %p82 = scmp.ne.s32.totalorder %s68, %s69
    %p83 = scmp.eq.s32.totalorder %s14, 1
    %p84 = por %p82, %p83
    %p86 = scmp.ne.s32.totalorder %s69, %s85
    %p87 = scmp.eq.s32.totalorder %s14, 0
    %p88 = por %p86, %p87
    %p89 = scmp.le.s32.totalorder 1, %s8
    %p90 = scmp.lt.s32.totalorder %s8, 3
    %p91 = pnand %p89, %p90
    %p92 = pneg %p91
    // Predicated region
    $region9: #{node_encoder.1} parent=5 // pred_check
      _
    $region10: #{node_encoder.1} parent=5 // pred_check_branch
      %94 = sbr.rel (%p91) target = $region12
    $region11: #{node_encoder.1} parent=5 // pred_region
      %s95 = ssub.s32 %s8, 1
      // Predicated region
      $region13: #{node_encoder.1} parent=11 // pred_check
        %p96 = pneg %p55
      $region14: #{node_encoder.1} parent=11 // pred_check_branch
        %98 = sbr.rel (%p96) target = $region16
      $region15: #{node_encoder.1} parent=11 // pred_region
        _
      $region16: #{node_encoder.1} parent=11 // pred_fallthru
        _
    $region12: #{node_encoder.1} parent=5 // pred_fallthru
      _
    %p99 = scmp.lt.s32.totalorder %s8, 2
    // Predicated region
    $region17: #{node_encoder.1} parent=5 // pred_check
      %p100 = pneg %p99
    $region18: #{node_encoder.1} parent=5 // pred_check_branch
      %102 = sbr.rel (%p100) target = $region20
    $region19: #{node_encoder.1} parent=5 // pred_region
      // Predicated region
      $region21: #{node_encoder.1} parent=19 // pred_check
        %p103 = pneg %p28
      $region22: #{node_encoder.1} parent=19 // pred_check_branch
        %105 = sbr.rel (%p103) target = $region24
      $region23: #{node_encoder.1} parent=19 // pred_region
        %s106 = smul.u32 16, %s8
        %p107 = scmp.lt.s32.totalorder %s106, 31
        %s108 = scalar_select %p107, %s106, 31
        %s109 = smul.addr %s108, 8
        %s110 = scalar_lea.vmem %s0, %s109
        %s111 = smul.u32 16, %s8
      $region24: #{node_encoder.1} parent=19 // pred_fallthru
        _
    $region20: #{node_encoder.1} parent=5 // pred_fallthru
      _
    %p112 = scmp.le.s32.totalorder 1, %s8
    %p113 = scmp.lt.s32.totalorder %s8, 3
    %p114 = pnand %p112, %p113
    %p115 = pneg %p114
    // Predicated region
    $region25: #{node_encoder.1} parent=5 // pred_check
      _
    $region26: #{node_encoder.1} parent=5 // pred_check_branch
      %117 = sbr.rel (%p114) target = $region28
    $region27: #{node_encoder.1} parent=5 // pred_region
      %s118 = ssub.s32 %s8, 1
      %s119 = smul.u32 16, %s13
      %p120 = scmp.lt.s32.totalorder %s119, 31
      %s121 = scalar_select %p120, %s119, 31
      %s122 = smul.addr %s121, 8
      %s123 = scalar_lea.vmem %s0, %s122
      %p124 = pneg %p34
      %p125 = pneg %p31
      %p126 = pneg %p55
      %p127 = pneg %p52
      %p128 = pneg %p81
      %p129 = pneg %p78
      %s130 = smul.u32 16, %s13
      %p131 = scmp.lt.s32.totalorder %s130, 31
      %s132 = scalar_select %p131, %s130, 31
      %s133 = smul.addr %s132, 8
      %s134 = scalar_lea.vmem %s2, %s133
      %s135 = smul.u32 16, %s13
      %p136 = scmp.lt.s32.totalorder %s135, 31
      %s137 = scalar_select %p136, %s135, 31
      %s138 = smul.addr %s137, 8
      %s139 = scalar_lea.vmem %s0, %s138
      %s140 = smul.u32 16, %s13
      %s141 = smul.u32 16, %s13
      %p142 = scmp.lt.s32.totalorder %s141, 31
      %s143 = scalar_select %p142, %s141, 31
      %s144 = smul.addr %s143, 8
      %s145 = scalar_lea.vmem %s2, %s144
      %s146 = smul.u32 16, %s13
      %v147 = vld [vmem:[%s139] sm:$0xff]
      %v148 = vld [vmem:[%s139 + $0x8] sm:$0xff]
      %v149 = vld [vmem:[%s139 + $0x10] sm:$0xff]
      %v150 = vld [vmem:[%s139 + $0x18] sm:$0xff]
      %v151 = vld [vmem:[%s139 + $0x20] sm:$0xff]
      %v152 = vld [vmem:[%s139 + $0x28] sm:$0xff]
      %v153 = vld [vmem:[%s139 + $0x30] sm:$0xff]
      %v154 = vld [vmem:[%s139 + $0x38] sm:$0xff]
      %v155 = vld [vmem:[%s139 + $0x40] sm:$0xff]
      %v156 = vld [vmem:[%s139 + $0x48] sm:$0xff]
      %v157 = vld [vmem:[%s139 + $0x50] sm:$0xff]
      %v158 = vld [vmem:[%s139 + $0x58] sm:$0xff]
      %v159 = vld [vmem:[%s139 + $0x60] sm:$0xff]
      %v160 = vld [vmem:[%s139 + $0x68] sm:$0xff]
      %v161 = vld [vmem:[%s139 + $0x70] sm:$0xff]
      %v162 = vld [vmem:[%s139 + $0x78] sm:$0xff]
      %v163 = vlaneseq
      %v164 = vand.u32 %v163, 127
      %165 = vset.pattern.permute.xlu0 0
      %166 = vperm.xlu0 %165, %v147
      %v167 = vpop.permute.xlu0 %166
      %168 = vset.pattern.permute.xlu0 0
      %169 = vperm.xlu0 %168, %v148
      %v170 = vpop.permute.xlu0 %169
      %171 = vset.pattern.permute.xlu0 0
      %172 = vperm.xlu0 %171, %v149
      %v173 = vpop.permute.xlu0 %172
      %174 = vset.pattern.permute.xlu0 0
      %175 = vperm.xlu0 %174, %v150
      %v176 = vpop.permute.xlu0 %175
      %177 = vset.pattern.permute.xlu0 0
      %178 = vperm.xlu0 %177, %v151
      %v179 = vpop.permute.xlu0 %178
      %180 = vset.pattern.permute.xlu0 0
      %181 = vperm.xlu0 %180, %v152
      %v182 = vpop.permute.xlu0 %181
      %183 = vset.pattern.permute.xlu0 0
      %184 = vperm.xlu0 %183, %v153
      %v185 = vpop.permute.xlu0 %184
      %186 = vset.pattern.permute.xlu0 0
      %187 = vperm.xlu0 %186, %v154
      %v188 = vpop.permute.xlu0 %187
      %189 = vset.pattern.permute.xlu0 0
      %190 = vperm.xlu0 %189, %v155
      %v191 = vpop.permute.xlu0 %190
      %192 = vset.pattern.permute.xlu0 0
      %193 = vperm.xlu0 %192, %v156
      %v194 = vpop.permute.xlu0 %193
      %195 = vset.pattern.permute.xlu0 0
      %196 = vperm.xlu0 %195, %v157
      %v197 = vpop.permute.xlu0 %196
      %198 = vset.pattern.permute.xlu0 0
      %199 = vperm.xlu0 %198, %v158
      %v200 = vpop.permute.xlu0 %199
      %201 = vset.pattern.permute.xlu0 0
      %202 = vperm.xlu0 %201, %v159
      %v203 = vpop.permute.xlu0 %202
      %204 = vset.pattern.permute.xlu0 0
      %205 = vperm.xlu0 %204, %v160
      %v206 = vpop.permute.xlu0 %205
      %207 = vset.pattern.permute.xlu0 0
      %208 = vperm.xlu0 %207, %v161
      %v209 = vpop.permute.xlu0 %208
      %210 = vset.pattern.permute.xlu0 0
      %211 = vperm.xlu0 %210, %v162
      %v212 = vpop.permute.xlu0 %211
      %vm213 = vcmp.eq.s32.totalorder %v167, %v164
      %vm214 = vcmp.eq.s32.totalorder %v170, %v164
      %vm215 = vcmp.eq.s32.totalorder %v173, %v164
      %vm216 = vcmp.eq.s32.totalorder %v176, %v164
      %vm217 = vcmp.eq.s32.totalorder %v179, %v164
      %vm218 = vcmp.eq.s32.totalorder %v182, %v164
      %vm219 = vcmp.eq.s32.totalorder %v185, %v164
      %vm220 = vcmp.eq.s32.totalorder %v188, %v164
      %vm221 = vcmp.eq.s32.totalorder %v191, %v164
      %vm222 = vcmp.eq.s32.totalorder %v194, %v164
      %vm223 = vcmp.eq.s32.totalorder %v197, %v164
      %vm224 = vcmp.eq.s32.totalorder %v200, %v164
      %vm225 = vcmp.eq.s32.totalorder %v203, %v164
      %vm226 = vcmp.eq.s32.totalorder %v206, %v164
      %vm227 = vcmp.eq.s32.totalorder %v209, %v164
      %vm228 = vcmp.eq.s32.totalorder %v212, %v164
      %v229 = vsel %vm213, 1, 0
      %v230 = vsel %vm214, 1, 0
      %v231 = vsel %vm215, 1, 0
      %v232 = vsel %vm216, 1, 0
      %v233 = vsel %vm217, 1, 0
      %v234 = vsel %vm218, 1, 0
      %v235 = vsel %vm219, 1, 0
      %v236 = vsel %vm220, 1, 0
      %v237 = vsel %vm221, 1, 0
      %v238 = vsel %vm222, 1, 0
      %v239 = vsel %vm223, 1, 0
      %v240 = vsel %vm224, 1, 0
      %v241 = vsel %vm225, 1, 0
      %v242 = vsel %vm226, 1, 0
      %v243 = vsel %vm227, 1, 0
      %v244 = vsel %vm228, 1, 0
      %v245 = vcvt.s32.f32 %v229
      %v246 = vcvt.s32.f32 %v230
      %v247 = vcvt.s32.f32 %v231
      %v248 = vcvt.s32.f32 %v232
      %v249 = vcvt.s32.f32 %v233
      %v250 = vcvt.s32.f32 %v234
      %v251 = vcvt.s32.f32 %v235
      %v252 = vcvt.s32.f32 %v236
      %v253 = vcvt.s32.f32 %v237
      %v254 = vcvt.s32.f32 %v238
      %v255 = vcvt.s32.f32 %v239
      %v256 = vcvt.s32.f32 %v240
      %v257 = vcvt.s32.f32 %v241
      %v258 = vcvt.s32.f32 %v242
      %v259 = vcvt.s32.f32 %v243
      %v260 = vcvt.s32.f32 %v244
      %261 = vst [vmem:[#allocation2] sm:$0xff] %v245
      %262 = vst [vmem:[#allocation2 + $0x120] sm:$0xff] %v246
      %263 = vst [vmem:[#allocation2 + $0x240] sm:$0xff] %v247
      %264 = vst [vmem:[#allocation2 + $0x360] sm:$0xff] %v248
      %265 = vst [vmem:[#allocation2 + $0x480] sm:$0xff] %v249
      %266 = vst [vmem:[#allocation2 + $0x5a0] sm:$0xff] %v250
      %267 = vst [vmem:[#allocation2 + $0x6c0] sm:$0xff] %v251
      %268 = vst [vmem:[#allocation2 + $0x7e0] sm:$0xff] %v252
      %269 = vst [vmem:[#allocation2 + $0x900] sm:$0xff] %v253
      %270 = vst [vmem:[#allocation2 + $0xa20] sm:$0xff] %v254
      %271 = vst [vmem:[#allocation2 + $0xb40] sm:$0xff] %v255
      %272 = vst [vmem:[#allocation2 + $0xc60] sm:$0xff] %v256
      %273 = vst [vmem:[#allocation2 + $0xd80] sm:$0xff] %v257
      %274 = vst [vmem:[#allocation2 + $0xea0] sm:$0xff] %v258
      %275 = vst [vmem:[#allocation2 + $0xfc0] sm:$0xff] %v259
      %276 = vst [vmem:[#allocation2 + $0x10e0] sm:$0xff] %v260
      %277 = vset.pattern.permute.xlu0 1
      %278 = vperm.xlu0 %277, %v147
      %v279 = vpop.permute.xlu0 %278
      %280 = vset.pattern.permute.xlu0 1
      %281 = vperm.xlu0 %280, %v148
      %v282 = vpop.permute.xlu0 %281
      %283 = vset.pattern.permute.xlu0 1
      %284 = vperm.xlu0 %283, %v149
      %v285 = vpop.permute.xlu0 %284
      %286 = vset.pattern.permute.xlu0 1
      %287 = vperm.xlu0 %286, %v150
      %v288 = vpop.permute.xlu0 %287
      %289 = vset.pattern.permute.xlu0 1
      %290 = vperm.xlu0 %289, %v151
      %v291 = vpop.permute.xlu0 %290
      %292 = vset.pattern.permute.xlu0 1
      %293 = vperm.xlu0 %292, %v152
      %v294 = vpop.permute.xlu0 %293
      %295 = vset.pattern.permute.xlu0 1
      %296 = vperm.xlu0 %295, %v153
      %v297 = vpop.permute.xlu0 %296
      %298 = vset.pattern.permute.xlu0 1
      %299 = vperm.xlu0 %298, %v154
      %v300 = vpop.permute.xlu0 %299
      %301 = vset.pattern.permute.xlu0 1
      %302 = vperm.xlu0 %301, %v155
      %v303 = vpop.permute.xlu0 %302
      %304 = vset.pattern.permute.xlu0 1
      %305 = vperm.xlu0 %304, %v156
      %v306 = vpop.permute.xlu0 %305
      %307 = vset.pattern.permute.xlu0 1
      %308 = vperm.xlu0 %307, %v157
      %v309 = vpop.permute.xlu0 %308
      %310 = vset.pattern.permute.xlu0 1
      %311 = vperm.xlu0 %310, %v158
      %v312 = vpop.permute.xlu0 %311
      %313 = vset.pattern.permute.xlu0 1
      %314 = vperm.xlu0 %313, %v159
      %v315 = vpop.permute.xlu0 %314
      %316 = vset.pattern.permute.xlu0 1
      %317 = vperm.xlu0 %316, %v160
      %v318 = vpop.permute.xlu0 %317
      %319 = vset.pattern.permute.xlu0 1
      %320 = vperm.xlu0 %319, %v161
      %v321 = vpop.permute.xlu0 %320
      %322 = vset.pattern.permute.xlu0 1
      %323 = vperm.xlu0 %322, %v162
      %v324 = vpop.permute.xlu0 %323
      %vm325 = vcmp.eq.s32.totalorder %v279, %v164
      %vm326 = vcmp.eq.s32.totalorder %v282, %v164
      %vm327 = vcmp.eq.s32.totalorder %v285, %v164
      %vm328 = vcmp.eq.s32.totalorder %v288, %v164
      %vm329 = vcmp.eq.s32.totalorder %v291, %v164
      %vm330 = vcmp.eq.s32.totalorder %v294, %v164
      %vm331 = vcmp.eq.s32.totalorder %v297, %v164
      %vm332 = vcmp.eq.s32.totalorder %v300, %v164
      %vm333 = vcmp.eq.s32.totalorder %v303, %v164
      %vm334 = vcmp.eq.s32.totalorder %v306, %v164
      %vm335 = vcmp.eq.s32.totalorder %v309, %v164
      %vm336 = vcmp.eq.s32.totalorder %v312, %v164
      %vm337 = vcmp.eq.s32.totalorder %v315, %v164
      %vm338 = vcmp.eq.s32.totalorder %v318, %v164
      %vm339 = vcmp.eq.s32.totalorder %v321, %v164
      %vm340 = vcmp.eq.s32.totalorder %v324, %v164
      %v341 = vsel %vm325, 1, 0
      %v342 = vsel %vm326, 1, 0
      %v343 = vsel %vm327, 1, 0
      %v344 = vsel %vm328, 1, 0
      %v345 = vsel %vm329, 1, 0
      %v346 = vsel %vm330, 1, 0
      %v347 = vsel %vm331, 1, 0
      %v348 = vsel %vm332, 1, 0
      %v349 = vsel %vm333, 1, 0
      %v350 = vsel %vm334, 1, 0
      %v351 = vsel %vm335, 1, 0
      %v352 = vsel %vm336, 1, 0
      %v353 = vsel %vm337, 1, 0
      %v354 = vsel %vm338, 1, 0
      %v355 = vsel %vm339, 1, 0
      %v356 = vsel %vm340, 1, 0
      %v357 = vcvt.s32.f32 %v341
      %v358 = vcvt.s32.f32 %v342
      %v359 = vcvt.s32.f32 %v343
      %v360 = vcvt.s32.f32 %v344
      %v361 = vcvt.s32.f32 %v345
      %v362 = vcvt.s32.f32 %v346
      %v363 = vcvt.s32.f32 %v347
      %v364 = vcvt.s32.f32 %v348
      %v365 = vcvt.s32.f32 %v349
      %v366 = vcvt.s32.f32 %v350
      %v367 = vcvt.s32.f32 %v351
      %v368 = vcvt.s32.f32 %v352
      %v369 = vcvt.s32.f32 %v353
      %v370 = vcvt.s32.f32 %v354
      %v371 = vcvt.s32.f32 %v355
      %v372 = vcvt.s32.f32 %v356
      %373 = vst [vmem:[#allocation2 + $0x8] sm:$0xff] %v357
      %374 = vst [vmem:[#allocation2 + $0x128] sm:$0xff] %v358
      %375 = vst [vmem:[#allocation2 + $0x248] sm:$0xff] %v359
      %376 = vst [vmem:[#allocation2 + $0x368] sm:$0xff] %v360
      %377 = vst [vmem:[#allocation2 + $0x488] sm:$0xff] %v361
      %378 = vst [vmem:[#allocation2 + $0x5a8] sm:$0xff] %v362
      %379 = vst [vmem:[#allocation2 + $0x6c8] sm:$0xff] %v363
      %380 = vst [vmem:[#allocation2 + $0x7e8] sm:$0xff] %v364
      %381 = vst [vmem:[#allocation2 + $0x908] sm:$0xff] %v365
      %382 = vst [vmem:[#allocation2 + $0xa28] sm:$0xff] %v366
      %383 = vst [vmem:[#allocation2 + $0xb48] sm:$0xff] %v367
      %384 = vst [vmem:[#allocation2 + $0xc68] sm:$0xff] %v368
      %385 = vst [vmem:[#allocation2 + $0xd88] sm:$0xff] %v369
      %386 = vst [vmem:[#allocation2 + $0xea8] sm:$0xff] %v370
      %387 = vst [vmem:[#allocation2 + $0xfc8] sm:$0xff] %v371
      %388 = vst [vmem:[#allocation2 + $0x10e8] sm:$0xff] %v372
      %389 = vset.pattern.permute.xlu0 2
      %390 = vperm.xlu0 %389, %v147
      %v391 = vpop.permute.xlu0 %390
      %392 = vset.pattern.permute.xlu0 2
      %393 = vperm.xlu0 %392, %v148
      %v394 = vpop.permute.xlu0 %393
      %395 = vset.pattern.permute.xlu0 2
      %396 = vperm.xlu0 %395, %v149
      %v397 = vpop.permute.xlu0 %396
      %398 = vset.pattern.permute.xlu0 2
      %399 = vperm.xlu0 %398, %v150
      %v400 = vpop.permute.xlu0 %399
      %401 = vset.pattern.permute.xlu0 2
      %402 = vperm.xlu0 %401, %v151
      %v403 = vpop.permute.xlu0 %402
      %404 = vset.pattern.permute.xlu0 2
      %405 = vperm.xlu0 %404, %v152
      %v406 = vpop.permute.xlu0 %405
      %407 = vset.pattern.permute.xlu0 2
      %408 = vperm.xlu0 %407, %v153
      %v409 = vpop.permute.xlu0 %408
      %410 = vset.pattern.permute.xlu0 2
      %411 = vperm.xlu0 %410, %v154
      %v412 = vpop.permute.xlu0 %411
      %413 = vset.pattern.permute.xlu0 2
      %414 = vperm.xlu0 %413, %v155
      %v415 = vpop.permute.xlu0 %414
      %416 = vset.pattern.permute.xlu0 2
      %417 = vperm.xlu0 %416, %v156
      %v418 = vpop.permute.xlu0 %417
      %419 = vset.pattern.permute.xlu0 2
      %420 = vperm.xlu0 %419, %v157
      %v421 = vpop.permute.xlu0 %420
      %422 = vset.pattern.permute.xlu0 2
      %423 = vperm.xlu0 %422, %v158
      %v424 = vpop.permute.xlu0 %423
      %425 = vset.pattern.permute.xlu0 2
      %426 = vperm.xlu0 %425, %v159
      %v427 = vpop.permute.xlu0 %426
      %428 = vset.pattern.permute.xlu0 2
      %429 = vperm.xlu0 %428, %v160
      %v430 = vpop.permute.xlu0 %429
      %431 = vset.pattern.permute.xlu0 2
      %432 = vperm.xlu0 %431, %v161
      %v433 = vpop.permute.xlu0 %432
      %434 = vset.pattern.permute.xlu0 2
      %435 = vperm.xlu0 %434, %v162
      %v436 = vpop.permute.xlu0 %435
      %vm437 = vcmp.eq.s32.totalorder %v391, %v164
      %vm438 = vcmp.eq.s32.totalorder %v394, %v164
      %vm439 = vcmp.eq.s32.totalorder %v397, %v164
      %vm440 = vcmp.eq.s32.totalorder %v400, %v164
      %vm441 = vcmp.eq.s32.totalorder %v403, %v164
      %vm442 = vcmp.eq.s32.totalorder %v406, %v164
      %vm443 = vcmp.eq.s32.totalorder %v409, %v164
      %vm444 = vcmp.eq.s32.totalorder %v412, %v164
      %vm445 = vcmp.eq.s32.totalorder %v415, %v164
      %vm446 = vcmp.eq.s32.totalorder %v418, %v164
      %vm447 = vcmp.eq.s32.totalorder %v421, %v164
      %vm448 = vcmp.eq.s32.totalorder %v424, %v164
      %vm449 = vcmp.eq.s32.totalorder %v427, %v164
      %vm450 = vcmp.eq.s32.totalorder %v430, %v164
      %vm451 = vcmp.eq.s32.totalorder %v433, %v164
      %vm452 = vcmp.eq.s32.totalorder %v436, %v164
      %v453 = vsel %vm437, 1, 0
      %v454 = vsel %vm438, 1, 0
      %v455 = vsel %vm439, 1, 0
      %v456 = vsel %vm440, 1, 0
      %v457 = vsel %vm441, 1, 0
      %v458 = vsel %vm442, 1, 0
      %v459 = vsel %vm443, 1, 0
      %v460 = vsel %vm444, 1, 0
      %v461 = vsel %vm445, 1, 0
      %v462 = vsel %vm446, 1, 0
      %v463 = vsel %vm447, 1, 0
      %v464 = vsel %vm448, 1, 0
      %v465 = vsel %vm449, 1, 0
      %v466 = vsel %vm450, 1, 0
      %v467 = vsel %vm451, 1, 0
      %v468 = vsel %vm452, 1, 0
      %v469 = vcvt.s32.f32 %v453
      %v470 = vcvt.s32.f32 %v454
      %v471 = vcvt.s32.f32 %v455
      %v472 = vcvt.s32.f32 %v456
      %v473 = vcvt.s32.f32 %v457
      %v474 = vcvt.s32.f32 %v458
      %v475 = vcvt.s32.f32 %v459
      %v476 = vcvt.s32.f32 %v460
      %v477 = vcvt.s32.f32 %v461
      %v478 = vcvt.s32.f32 %v462
      %v479 = vcvt.s32.f32 %v463
      %v480 = vcvt.s32.f32 %v464
      %v481 = vcvt.s32.f32 %v465
      %v482 = vcvt.s32.f32 %v466
      %v483 = vcvt.s32.f32 %v467
      %v484 = vcvt.s32.f32 %v468
      %485 = vst [vmem:[#allocation2 + $0x10] sm:$0xff] %v469
      %486 = vst [vmem:[#allocation2 + $0x130] sm:$0xff] %v470
      %487 = vst [vmem:[#allocation2 + $0x250] sm:$0xff] %v471
      %488 = vst [vmem:[#allocation2 + $0x370] sm:$0xff] %v472
      %489 = vst [vmem:[#allocation2 + $0x490] sm:$0xff] %v473
      %490 = vst [vmem:[#allocation2 + $0x5b0] sm:$0xff] %v474
      %491 = vst [vmem:[#allocation2 + $0x6d0] sm:$0xff] %v475
      %492 = vst [vmem:[#allocation2 + $0x7f0] sm:$0xff] %v476
      %493 = vst [vmem:[#allocation2 + $0x910] sm:$0xff] %v477
      %494 = vst [vmem:[#allocation2 + $0xa30] sm:$0xff] %v478
      %495 = vst [vmem:[#allocation2 + $0xb50] sm:$0xff] %v479
      %496 = vst [vmem:[#allocation2 + $0xc70] sm:$0xff] %v480
      %497 = vst [vmem:[#allocation2 + $0xd90] sm:$0xff] %v481
      %498 = vst [vmem:[#allocation2 + $0xeb0] sm:$0xff] %v482
      %499 = vst [vmem:[#allocation2 + $0xfd0] sm:$0xff] %v483
      %500 = vst [vmem:[#allocation2 + $0x10f0] sm:$0xff] %v484
      %501 = vset.pattern.permute.xlu0 3
      %502 = vperm.xlu0 %501, %v147
      %v503 = vpop.permute.xlu0 %502
      %504 = vset.pattern.permute.xlu0 3
      %505 = vperm.xlu0 %504, %v148
      %v506 = vpop.permute.xlu0 %505
      %507 = vset.pattern.permute.xlu0 3
      %508 = vperm.xlu0 %507, %v149
      %v509 = vpop.permute.xlu0 %508
      %510 = vset.pattern.permute.xlu0 3
      %511 = vperm.xlu0 %510, %v150
      %v512 = vpop.permute.xlu0 %511
      %513 = vset.pattern.permute.xlu0 3
      %514 = vperm.xlu0 %513, %v151
      %v515 = vpop.permute.xlu0 %514
      %516 = vset.pattern.permute.xlu0 3
      %517 = vperm.xlu0 %516, %v152
      %v518 = vpop.permute.xlu0 %517
      %519 = vset.pattern.permute.xlu0 3
      %520 = vperm.xlu0 %519, %v153
      %v521 = vpop.permute.xlu0 %520
      %522 = vset.pattern.permute.xlu0 3
      %523 = vperm.xlu0 %522, %v154
      %v524 = vpop.permute.xlu0 %523
      %525 = vset.pattern.permute.xlu0 3
      %526 = vperm.xlu0 %525, %v155
      %v527 = vpop.permute.xlu0 %526
      %528 = vset.pattern.permute.xlu0 3
      %529 = vperm.xlu0 %528, %v156
      %v530 = vpop.permute.xlu0 %529
      %531 = vset.pattern.permute.xlu0 3
      %532 = vperm.xlu0 %531, %v157
      %v533 = vpop.permute.xlu0 %532
      %534 = vset.pattern.permute.xlu0 3
      %535 = vperm.xlu0 %534, %v158
      %v536 = vpop.permute.xlu0 %535
      %537 = vset.pattern.permute.xlu0 3
      %538 = vperm.xlu0 %537, %v159
      %v539 = vpop.permute.xlu0 %538
      %540 = vset.pattern.permute.xlu0 3
      %541 = vperm.xlu0 %540, %v160
      %v542 = vpop.permute.xlu0 %541
      %543 = vset.pattern.permute.xlu0 3
      %544 = vperm.xlu0 %543, %v161
      %v545 = vpop.permute.xlu0 %544
      %546 = vset.pattern.permute.xlu0 3
      %547 = vperm.xlu0 %546, %v162
      %v548 = vpop.permute.xlu0 %547
      %vm549 = vcmp.eq.s32.totalorder %v503, %v164
      %vm550 = vcmp.eq.s32.totalorder %v506, %v164
      %vm551 = vcmp.eq.s32.totalorder %v509, %v164
      %vm552 = vcmp.eq.s32.totalorder %v512, %v164
      %vm553 = vcmp.eq.s32.totalorder %v515, %v164
      %vm554 = vcmp.eq.s32.totalorder %v518, %v164
      %vm555 = vcmp.eq.s32.totalorder %v521, %v164
      %vm556 = vcmp.eq.s32.totalorder %v524, %v164
      %vm557 = vcmp.eq.s32.totalorder %v527, %v164
      %vm558 = vcmp.eq.s32.totalorder %v530, %v164
      %vm559 = vcmp.eq.s32.totalorder %v533, %v164
      %vm560 = vcmp.eq.s32.totalorder %v536, %v164
      %vm561 = vcmp.eq.s32.totalorder %v539, %v164
      %vm562 = vcmp.eq.s32.totalorder %v542, %v164
      %vm563 = vcmp.eq.s32.totalorder %v545, %v164
      %vm564 = vcmp.eq.s32.totalorder %v548, %v164
      %v565 = vsel %vm549, 1, 0
      %v566 = vsel %vm550, 1, 0
      %v567 = vsel %vm551, 1, 0
      %v568 = vsel %vm552, 1, 0
      %v569 = vsel %vm553, 1, 0
      %v570 = vsel %vm554, 1, 0
      %v571 = vsel %vm555, 1, 0
      %v572 = vsel %vm556, 1, 0
      %v573 = vsel %vm557, 1, 0
      %v574 = vsel %vm558, 1, 0
      %v575 = vsel %vm559, 1, 0
      %v576 = vsel %vm560, 1, 0
      %v577 = vsel %vm561, 1, 0
      %v578 = vsel %vm562, 1, 0
      %v579 = vsel %vm563, 1, 0
      %v580 = vsel %vm564, 1, 0
      %v581 = vcvt.s32.f32 %v565
      %v582 = vcvt.s32.f32 %v566
      %v583 = vcvt.s32.f32 %v567
      %v584 = vcvt.s32.f32 %v568
      %v585 = vcvt.s32.f32 %v569
      %v586 = vcvt.s32.f32 %v570
      %v587 = vcvt.s32.f32 %v571
      %v588 = vcvt.s32.f32 %v572
      %v589 = vcvt.s32.f32 %v573
      %v590 = vcvt.s32.f32 %v574
      %v591 = vcvt.s32.f32 %v575
      %v592 = vcvt.s32.f32 %v576
      %v593 = vcvt.s32.f32 %v577
      %v594 = vcvt.s32.f32 %v578
      %v595 = vcvt.s32.f32 %v579
      %v596 = vcvt.s32.f32 %v580
      %597 = vst [vmem:[#allocation2 + $0x18] sm:$0xff] %v581
      %598 = vst [vmem:[#allocation2 + $0x138] sm:$0xff] %v582
      %599 = vst [vmem:[#allocation2 + $0x258] sm:$0xff] %v583
      %600 = vst [vmem:[#allocation2 + $0x378] sm:$0xff] %v584
      %601 = vst [vmem:[#allocation2 + $0x498] sm:$0xff] %v585
      %602 = vst [vmem:[#allocation2 + $0x5b8] sm:$0xff] %v586
      %603 = vst [vmem:[#allocation2 + $0x6d8] sm:$0xff] %v587
      %604 = vst [vmem:[#allocation2 + $0x7f8] sm:$0xff] %v588
      %605 = vst [vmem:[#allocation2 + $0x918] sm:$0xff] %v589
      %606 = vst [vmem:[#allocation2 + $0xa38] sm:$0xff] %v590
      %607 = vst [vmem:[#allocation2 + $0xb58] sm:$0xff] %v591
      %608 = vst [vmem:[#allocation2 + $0xc78] sm:$0xff] %v592
      %609 = vst [vmem:[#allocation2 + $0xd98] sm:$0xff] %v593
      %610 = vst [vmem:[#allocation2 + $0xeb8] sm:$0xff] %v594
      %611 = vst [vmem:[#allocation2 + $0xfd8] sm:$0xff] %v595
      %612 = vst [vmem:[#allocation2 + $0x10f8] sm:$0xff] %v596
      %613 = vset.pattern.permute.xlu0 4
      %614 = vperm.xlu0 %613, %v147
      %v615 = vpop.permute.xlu0 %614
      %616 = vset.pattern.permute.xlu0 4
      %617 = vperm.xlu0 %616, %v148
      %v618 = vpop.permute.xlu0 %617
      %619 = vset.pattern.permute.xlu0 4
      %620 = vperm.xlu0 %619, %v149
      %v621 = vpop.permute.xlu0 %620
      %622 = vset.pattern.permute.xlu0 4
      %623 = vperm.xlu0 %622, %v150
      %v624 = vpop.permute.xlu0 %623
      %625 = vset.pattern.permute.xlu0 4
      %626 = vperm.xlu0 %625, %v151
      %v627 = vpop.permute.xlu0 %626
      %628 = vset.pattern.permute.xlu0 4
      %629 = vperm.xlu0 %628, %v152
      %v630 = vpop.permute.xlu0 %629
      %631 = vset.pattern.permute.xlu0 4
      %632 = vperm.xlu0 %631, %v153
      %v633 = vpop.permute.xlu0 %632
      %634 = vset.pattern.permute.xlu0 4
      %635 = vperm.xlu0 %634, %v154
      %v636 = vpop.permute.xlu0 %635
      %637 = vset.pattern.permute.xlu0 4
      %638 = vperm.xlu0 %637, %v155
      %v639 = vpop.permute.xlu0 %638
      %640 = vset.pattern.permute.xlu0 4
      %641 = vperm.xlu0 %640, %v156
      %v642 = vpop.permute.xlu0 %641
      %643 = vset.pattern.permute.xlu0 4
      %644 = vperm.xlu0 %643, %v157
      %v645 = vpop.permute.xlu0 %644
      %646 = vset.pattern.permute.xlu0 4
      %647 = vperm.xlu0 %646, %v158
      %v648 = vpop.permute.xlu0 %647
      %649 = vset.pattern.permute.xlu0 4
      %650 = vperm.xlu0 %649, %v159
      %v651 = vpop.permute.xlu0 %650
      %652 = vset.pattern.permute.xlu0 4
      %653 = vperm.xlu0 %652, %v160
      %v654 = vpop.permute.xlu0 %653
      %655 = vset.pattern.permute.xlu0 4
      %656 = vperm.xlu0 %655, %v161
      %v657 = vpop.permute.xlu0 %656
      %658 = vset.pattern.permute.xlu0 4
      %659 = vperm.xlu0 %658, %v162
      %v660 = vpop.permute.xlu0 %659
      %vm661 = vcmp.eq.s32.totalorder %v615, %v164
      %vm662 = vcmp.eq.s32.totalorder %v618, %v164
      %vm663 = vcmp.eq.s32.totalorder %v621, %v164
      %vm664 = vcmp.eq.s32.totalorder %v624, %v164
      %vm665 = vcmp.eq.s32.totalorder %v627, %v164
      %vm666 = vcmp.eq.s32.totalorder %v630, %v164
      %vm667 = vcmp.eq.s32.totalorder %v633, %v164
      %vm668 = vcmp.eq.s32.totalorder %v636, %v164
      %vm669 = vcmp.eq.s32.totalorder %v639, %v164
      %vm670 = vcmp.eq.s32.totalorder %v642, %v164
      %vm671 = vcmp.eq.s32.totalorder %v645, %v164
      %vm672 = vcmp.eq.s32.totalorder %v648, %v164
      %vm673 = vcmp.eq.s32.totalorder %v651, %v164
      %vm674 = vcmp.eq.s32.totalorder %v654, %v164
      %vm675 = vcmp.eq.s32.totalorder %v657, %v164
      %vm676 = vcmp.eq.s32.totalorder %v660, %v164
      %v677 = vsel %vm661, 1, 0
      %v678 = vsel %vm662, 1, 0
      %v679 = vsel %vm663, 1, 0
      %v680 = vsel %vm664, 1, 0
      %v681 = vsel %vm665, 1, 0
      %v682 = vsel %vm666, 1, 0
      %v683 = vsel %vm667, 1, 0
      %v684 = vsel %vm668, 1, 0
      %v685 = vsel %vm669, 1, 0
      %v686 = vsel %vm670, 1, 0
      %v687 = vsel %vm671, 1, 0
      %v688 = vsel %vm672, 1, 0
      %v689 = vsel %vm673, 1, 0
      %v690 = vsel %vm674, 1, 0
      %v691 = vsel %vm675, 1, 0
      %v692 = vsel %vm676, 1, 0
      %v693 = vcvt.s32.f32 %v677
      %v694 = vcvt.s32.f32 %v678
      %v695 = vcvt.s32.f32 %v679
      %v696 = vcvt.s32.f32 %v680
      %v697 = vcvt.s32.f32 %v681
      %v698 = vcvt.s32.f32 %v682
      %v699 = vcvt.s32.f32 %v683
      %v700 = vcvt.s32.f32 %v684
      %v701 = vcvt.s32.f32 %v685
      %v702 = vcvt.s32.f32 %v686
      %v703 = vcvt.s32.f32 %v687
      %v704 = vcvt.s32.f32 %v688
      %v705 = vcvt.s32.f32 %v689
      %v706 = vcvt.s32.f32 %v690
      %v707 = vcvt.s32.f32 %v691
      %v708 = vcvt.s32.f32 %v692
      %709 = vst [vmem:[#allocation2 + $0x20] sm:$0xff] %v693
      %710 = vst [vmem:[#allocation2 + $0x140] sm:$0xff] %v694
      %711 = vst [vmem:[#allocation2 + $0x260] sm:$0xff] %v695
      %712 = vst [vmem:[#allocation2 + $0x380] sm:$0xff] %v696
      %713 = vst [vmem:[#allocation2 + $0x4a0] sm:$0xff] %v697
      %714 = vst [vmem:[#allocation2 + $0x5c0] sm:$0xff] %v698
      %715 = vst [vmem:[#allocation2 + $0x6e0] sm:$0xff] %v699
      %716 = vst [vmem:[#allocation2 + $0x800] sm:$0xff] %v700
      %717 = vst [vmem:[#allocation2 + $0x920] sm:$0xff] %v701
      %718 = vst [vmem:[#allocation2 + $0xa40] sm:$0xff] %v702
      %719 = vst [vmem:[#allocation2 + $0xb60] sm:$0xff] %v703
      %720 = vst [vmem:[#allocation2 + $0xc80] sm:$0xff] %v704
      %721 = vst [vmem:[#allocation2 + $0xda0] sm:$0xff] %v705
      %722 = vst [vmem:[#allocation2 + $0xec0] sm:$0xff] %v706
      %723 = vst [vmem:[#allocation2 + $0xfe0] sm:$0xff] %v707
      %724 = vst [vmem:[#allocation2 + $0x1100] sm:$0xff] %v708
      %725 = vset.pattern.permute.xlu0 5
      %726 = vperm.xlu0 %725, %v147
      %v727 = vpop.permute.xlu0 %726
      %728 = vset.pattern.permute.xlu0 5
      %729 = vperm.xlu0 %728, %v148
      %v730 = vpop.permute.xlu0 %729
      %731 = vset.pattern.permute.xlu0 5
      %732 = vperm.xlu0 %731, %v149
      %v733 = vpop.permute.xlu0 %732
      %734 = vset.pattern.permute.xlu0 5
      %735 = vperm.xlu0 %734, %v150
      %v736 = vpop.permute.xlu0 %735
      %737 = vset.pattern.permute.xlu0 5
      %738 = vperm.xlu0 %737, %v151
      %v739 = vpop.permute.xlu0 %738
      %740 = vset.pattern.permute.xlu0 5
      %741 = vperm.xlu0 %740, %v152
      %v742 = vpop.permute.xlu0 %741
      %743 = vset.pattern.permute.xlu0 5
      %744 = vperm.xlu0 %743, %v153
      %v745 = vpop.permute.xlu0 %744
      %746 = vset.pattern.permute.xlu0 5
      %747 = vperm.xlu0 %746, %v154
      %v748 = vpop.permute.xlu0 %747
      %749 = vset.pattern.permute.xlu0 5
      %750 = vperm.xlu0 %749, %v155
      %v751 = vpop.permute.xlu0 %750
      %752 = vset.pattern.permute.xlu0 5
      %753 = vperm.xlu0 %752, %v156
      %v754 = vpop.permute.xlu0 %753
      %755 = vset.pattern.permute.xlu0 5
      %756 = vperm.xlu0 %755, %v157
      %v757 = vpop.permute.xlu0 %756
      %758 = vset.pattern.permute.xlu0 5
      %759 = vperm.xlu0 %758, %v158
      %v760 = vpop.permute.xlu0 %759
      %761 = vset.pattern.permute.xlu0 5
      %762 = vperm.xlu0 %761, %v159
      %v763 = vpop.permute.xlu0 %762
      %764 = vset.pattern.permute.xlu0 5
      %765 = vperm.xlu0 %764, %v160
      %v766 = vpop.permute.xlu0 %765
      %767 = vset.pattern.permute.xlu0 5
      %768 = vperm.xlu0 %767, %v161
      %v769 = vpop.permute.xlu0 %768
      %770 = vset.pattern.permute.xlu0 5
      %771 = vperm.xlu0 %770, %v162
      %v772 = vpop.permute.xlu0 %771
      %vm773 = vcmp.eq.s32.totalorder %v727, %v164
      %vm774 = vcmp.eq.s32.totalorder %v730, %v164
      %vm775 = vcmp.eq.s32.totalorder %v733, %v164
      %vm776 = vcmp.eq.s32.totalorder %v736, %v164
      %vm777 = vcmp.eq.s32.totalorder %v739, %v164
      %vm778 = vcmp.eq.s32.totalorder %v742, %v164
      %vm779 = vcmp.eq.s32.totalorder %v745, %v164
      %vm780 = vcmp.eq.s32.totalorder %v748, %v164
      %vm781 = vcmp.eq.s32.totalorder %v751, %v164
      %vm782 = vcmp.eq.s32.totalorder %v754, %v164
      %vm783 = vcmp.eq.s32.totalorder %v757, %v164
      %vm784 = vcmp.eq.s32.totalorder %v760, %v164
      %vm785 = vcmp.eq.s32.totalorder %v763, %v164
      %vm786 = vcmp.eq.s32.totalorder %v766, %v164
      %vm787 = vcmp.eq.s32.totalorder %v769, %v164
      %vm788 = vcmp.eq.s32.totalorder %v772, %v164
      %v789 = vsel %vm773, 1, 0
      %v790 = vsel %vm774, 1, 0
      %v791 = vsel %vm775, 1, 0
      %v792 = vsel %vm776, 1, 0
      %v793 = vsel %vm777, 1, 0
      %v794 = vsel %vm778, 1, 0
      %v795 = vsel %vm779, 1, 0
      %v796 = vsel %vm780, 1, 0
      %v797 = vsel %vm781, 1, 0
      %v798 = vsel %vm782, 1, 0
      %v799 = vsel %vm783, 1, 0
      %v800 = vsel %vm784, 1, 0
      %v801 = vsel %vm785, 1, 0
      %v802 = vsel %vm786, 1, 0
      %v803 = vsel %vm787, 1, 0
      %v804 = vsel %vm788, 1, 0
      %v805 = vcvt.s32.f32 %v789
      %v806 = vcvt.s32.f32 %v790
      %v807 = vcvt.s32.f32 %v791
      %v808 = vcvt.s32.f32 %v792
      %v809 = vcvt.s32.f32 %v793
      %v810 = vcvt.s32.f32 %v794
      %v811 = vcvt.s32.f32 %v795
      %v812 = vcvt.s32.f32 %v796
      %v813 = vcvt.s32.f32 %v797
      %v814 = vcvt.s32.f32 %v798
      %v815 = vcvt.s32.f32 %v799
      %v816 = vcvt.s32.f32 %v800
      %v817 = vcvt.s32.f32 %v801
      %v818 = vcvt.s32.f32 %v802
      %v819 = vcvt.s32.f32 %v803
      %v820 = vcvt.s32.f32 %v804
      %821 = vst [vmem:[#allocation2 + $0x28] sm:$0xff] %v805
      %822 = vst [vmem:[#allocation2 + $0x148] sm:$0xff] %v806
      %823 = vst [vmem:[#allocation2 + $0x268] sm:$0xff] %v807
      %824 = vst [vmem:[#allocation2 + $0x388] sm:$0xff] %v808
      %825 = vst [vmem:[#allocation2 + $0x4a8] sm:$0xff] %v809
      %826 = vst [vmem:[#allocation2 + $0x5c8] sm:$0xff] %v810
      %827 = vst [vmem:[#allocation2 + $0x6e8] sm:$0xff] %v811
      %828 = vst [vmem:[#allocation2 + $0x808] sm:$0xff] %v812
      %829 = vst [vmem:[#allocation2 + $0x928] sm:$0xff] %v813
      %830 = vst [vmem:[#allocation2 + $0xa48] sm:$0xff] %v814
      %831 = vst [vmem:[#allocation2 + $0xb68] sm:$0xff] %v815
      %832 = vst [vmem:[#allocation2 + $0xc88] sm:$0xff] %v816
      %833 = vst [vmem:[#allocation2 + $0xda8] sm:$0xff] %v817
      %834 = vst [vmem:[#allocation2 + $0xec8] sm:$0xff] %v818
      %835 = vst [vmem:[#allocation2 + $0xfe8] sm:$0xff] %v819
      %836 = vst [vmem:[#allocation2 + $0x1108] sm:$0xff] %v820
      %837 = vset.pattern.permute.xlu0 6
      %838 = vperm.xlu0 %837, %v147
      %v839 = vpop.permute.xlu0 %838
      %840 = vset.pattern.permute.xlu0 6
      %841 = vperm.xlu0 %840, %v148
      %v842 = vpop.permute.xlu0 %841
      %843 = vset.pattern.permute.xlu0 6
      %844 = vperm.xlu0 %843, %v149
      %v845 = vpop.permute.xlu0 %844
      %846 = vset.pattern.permute.xlu0 6
      %847 = vperm.xlu0 %846, %v150
      %v848 = vpop.permute.xlu0 %847
      %849 = vset.pattern.permute.xlu0 6
      %850 = vperm.xlu0 %849, %v151
      %v851 = vpop.permute.xlu0 %850
      %852 = vset.pattern.permute.xlu0 6
      %853 = vperm.xlu0 %852, %v152
      %v854 = vpop.permute.xlu0 %853
      %855 = vset.pattern.permute.xlu0 6
      %856 = vperm.xlu0 %855, %v153
      %v857 = vpop.permute.xlu0 %856
      %858 = vset.pattern.permute.xlu0 6
      %859 = vperm.xlu0 %858, %v154
      %v860 = vpop.permute.xlu0 %859
      %861 = vset.pattern.permute.xlu0 6
      %862 = vperm.xlu0 %861, %v155
      %v863 = vpop.permute.xlu0 %862
      %864 = vset.pattern.permute.xlu0 6
      %865 = vperm.xlu0 %864, %v156
      %v866 = vpop.permute.xlu0 %865
      %867 = vset.pattern.permute.xlu0 6
      %868 = vperm.xlu0 %867, %v157
      %v869 = vpop.permute.xlu0 %868
      %870 = vset.pattern.permute.xlu0 6
      %871 = vperm.xlu0 %870, %v158
      %v872 = vpop.permute.xlu0 %871
      %873 = vset.pattern.permute.xlu0 6
      %874 = vperm.xlu0 %873, %v159
      %v875 = vpop.permute.xlu0 %874
      %876 = vset.pattern.permute.xlu0 6
      %877 = vperm.xlu0 %876, %v160
      %v878 = vpop.permute.xlu0 %877
      %879 = vset.pattern.permute.xlu0 6
      %880 = vperm.xlu0 %879, %v161
      %v881 = vpop.permute.xlu0 %880
      %882 = vset.pattern.permute.xlu0 6
      %883 = vperm.xlu0 %882, %v162
      %v884 = vpop.permute.xlu0 %883
      %vm885 = vcmp.eq.s32.totalorder %v839, %v164
      %vm886 = vcmp.eq.s32.totalorder %v842, %v164
      %vm887 = vcmp.eq.s32.totalorder %v845, %v164
      %vm888 = vcmp.eq.s32.totalorder %v848, %v164
      %vm889 = vcmp.eq.s32.totalorder %v851, %v164
      %vm890 = vcmp.eq.s32.totalorder %v854, %v164
      %vm891 = vcmp.eq.s32.totalorder %v857, %v164
      %vm892 = vcmp.eq.s32.totalorder %v860, %v164
      %vm893 = vcmp.eq.s32.totalorder %v863, %v164
      %vm894 = vcmp.eq.s32.totalorder %v866, %v164
      %vm895 = vcmp.eq.s32.totalorder %v869, %v164
      %vm896 = vcmp.eq.s32.totalorder %v872, %v164
      %vm897 = vcmp.eq.s32.totalorder %v875, %v164
      %vm898 = vcmp.eq.s32.totalorder %v878, %v164
      %vm899 = vcmp.eq.s32.totalorder %v881, %v164
      %vm900 = vcmp.eq.s32.totalorder %v884, %v164
      %v901 = vsel %vm885, 1, 0
      %v902 = vsel %vm886, 1, 0
      %v903 = vsel %vm887, 1, 0
      %v904 = vsel %vm888, 1, 0
      %v905 = vsel %vm889, 1, 0
      %v906 = vsel %vm890, 1, 0
      %v907 = vsel %vm891, 1, 0
      %v908 = vsel %vm892, 1, 0
      %v909 = vsel %vm893, 1, 0
      %v910 = vsel %vm894, 1, 0
      %v911 = vsel %vm895, 1, 0
      %v912 = vsel %vm896, 1, 0
      %v913 = vsel %vm897, 1, 0
      %v914 = vsel %vm898, 1, 0
      %v915 = vsel %vm899, 1, 0
      %v916 = vsel %vm900, 1, 0
      %v917 = vcvt.s32.f32 %v901
      %v918 = vcvt.s32.f32 %v902
      %v919 = vcvt.s32.f32 %v903
      %v920 = vcvt.s32.f32 %v904
      %v921 = vcvt.s32.f32 %v905
      %v922 = vcvt.s32.f32 %v906
      %v923 = vcvt.s32.f32 %v907
      %v924 = vcvt.s32.f32 %v908
      %v925 = vcvt.s32.f32 %v909
      %v926 = vcvt.s32.f32 %v910
      %v927 = vcvt.s32.f32 %v911
      %v928 = vcvt.s32.f32 %v912
      %v929 = vcvt.s32.f32 %v913
      %v930 = vcvt.s32.f32 %v914
      %v931 = vcvt.s32.f32 %v915
      %v932 = vcvt.s32.f32 %v916
      %933 = vst [vmem:[#allocation2 + $0x30] sm:$0xff] %v917
      %934 = vst [vmem:[#allocation2 + $0x150] sm:$0xff] %v918
      %935 = vst [vmem:[#allocation2 + $0x270] sm:$0xff] %v919
      %936 = vst [vmem:[#allocation2 + $0x390] sm:$0xff] %v920
      %937 = vst [vmem:[#allocation2 + $0x4b0] sm:$0xff] %v921
      %938 = vst [vmem:[#allocation2 + $0x5d0] sm:$0xff] %v922
      %939 = vst [vmem:[#allocation2 + $0x6f0] sm:$0xff] %v923
      %940 = vst [vmem:[#allocation2 + $0x810] sm:$0xff] %v924
      %941 = vst [vmem:[#allocation2 + $0x930] sm:$0xff] %v925
      %942 = vst [vmem:[#allocation2 + $0xa50] sm:$0xff] %v926
      %943 = vst [vmem:[#allocation2 + $0xb70] sm:$0xff] %v927
      %944 = vst [vmem:[#allocation2 + $0xc90] sm:$0xff] %v928
      %945 = vst [vmem:[#allocation2 + $0xdb0] sm:$0xff] %v929
      %946 = vst [vmem:[#allocation2 + $0xed0] sm:$0xff] %v930
      %947 = vst [vmem:[#allocation2 + $0xff0] sm:$0xff] %v931
      %948 = vst [vmem:[#allocation2 + $0x1110] sm:$0xff] %v932
      %949 = vset.pattern.permute.xlu0 7
      %950 = vperm.xlu0 %949, %v147
      %v951 = vpop.permute.xlu0 %950
      %952 = vset.pattern.permute.xlu0 7
      %953 = vperm.xlu0 %952, %v148
      %v954 = vpop.permute.xlu0 %953
      %955 = vset.pattern.permute.xlu0 7
      %956 = vperm.xlu0 %955, %v149
      %v957 = vpop.permute.xlu0 %956
      %958 = vset.pattern.permute.xlu0 7
      %959 = vperm.xlu0 %958, %v150
      %v960 = vpop.permute.xlu0 %959
      %961 = vset.pattern.permute.xlu0 7
      %962 = vperm.xlu0 %961, %v151
      %v963 = vpop.permute.xlu0 %962
      %964 = vset.pattern.permute.xlu0 7
      %965 = vperm.xlu0 %964, %v152
      %v966 = vpop.permute.xlu0 %965
      %967 = vset.pattern.permute.xlu0 7
      %968 = vperm.xlu0 %967, %v153
      %v969 = vpop.permute.xlu0 %968
      %970 = vset.pattern.permute.xlu0 7
      %971 = vperm.xlu0 %970, %v154
      %v972 = vpop.permute.xlu0 %971
      %973 = vset.pattern.permute.xlu0 7
      %974 = vperm.xlu0 %973, %v155
      %v975 = vpop.permute.xlu0 %974
      %976 = vset.pattern.permute.xlu0 7
      %977 = vperm.xlu0 %976, %v156
      %v978 = vpop.permute.xlu0 %977
      %979 = vset.pattern.permute.xlu0 7
      %980 = vperm.xlu0 %979, %v157
      %v981 = vpop.permute.xlu0 %980
      %982 = vset.pattern.permute.xlu0 7
      %983 = vperm.xlu0 %982, %v158
      %v984 = vpop.permute.xlu0 %983
      %985 = vset.pattern.permute.xlu0 7
      %986 = vperm.xlu0 %985, %v159
      %v987 = vpop.permute.xlu0 %986
      %988 = vset.pattern.permute.xlu0 7
      %989 = vperm.xlu0 %988, %v160
      %v990 = vpop.permute.xlu0 %989
      %991 = vset.pattern.permute.xlu0 7
      %992 = vperm.xlu0 %991, %v161
      %v993 = vpop.permute.xlu0 %992
      %994 = vset.pattern.permute.xlu0 7
      %995 = vperm.xlu0 %994, %v162
      %v996 = vpop.permute.xlu0 %995
      %vm997 = vcmp.eq.s32.totalorder %v951, %v164
      %vm998 = vcmp.eq.s32.totalorder %v954, %v164
      %vm999 = vcmp.eq.s32.totalorder %v957, %v164
      %vm1000 = vcmp.eq.s32.totalorder %v960, %v164
      %vm1001 = vcmp.eq.s32.totalorder %v963, %v164
      %vm1002 = vcmp.eq.s32.totalorder %v966, %v164
      %vm1003 = vcmp.eq.s32.totalorder %v969, %v164
      %vm1004 = vcmp.eq.s32.totalorder %v972, %v164
      %vm1005 = vcmp.eq.s32.totalorder %v975, %v164
      %vm1006 = vcmp.eq.s32.totalorder %v978, %v164
      %vm1007 = vcmp.eq.s32.totalorder %v981, %v164
      %vm1008 = vcmp.eq.s32.totalorder %v984, %v164
      %vm1009 = vcmp.eq.s32.totalorder %v987, %v164
      %vm1010 = vcmp.eq.s32.totalorder %v990, %v164
      %vm1011 = vcmp.eq.s32.totalorder %v993, %v164
      %vm1012 = vcmp.eq.s32.totalorder %v996, %v164
      %v1013 = vsel %vm997, 1, 0
      %v1014 = vsel %vm998, 1, 0
      %v1015 = vsel %vm999, 1, 0
      %v1016 = vsel %vm1000, 1, 0
      %v1017 = vsel %vm1001, 1, 0
      %v1018 = vsel %vm1002, 1, 0
      %v1019 = vsel %vm1003, 1, 0
      %v1020 = vsel %vm1004, 1, 0
      %v1021 = vsel %vm1005, 1, 0
      %v1022 = vsel %vm1006, 1, 0
      %v1023 = vsel %vm1007, 1, 0
      %v1024 = vsel %vm1008, 1, 0
      %v1025 = vsel %vm1009, 1, 0
      %v1026 = vsel %vm1010, 1, 0
      %v1027 = vsel %vm1011, 1, 0
      %v1028 = vsel %vm1012, 1, 0
      %v1029 = vcvt.s32.f32 %v1013
      %v1030 = vcvt.s32.f32 %v1014
      %v1031 = vcvt.s32.f32 %v1015
      %v1032 = vcvt.s32.f32 %v1016
      %v1033 = vcvt.s32.f32 %v1017
      %v1034 = vcvt.s32.f32 %v1018
      %v1035 = vcvt.s32.f32 %v1019
      %v1036 = vcvt.s32.f32 %v1020
      %v1037 = vcvt.s32.f32 %v1021
      %v1038 = vcvt.s32.f32 %v1022
      %v1039 = vcvt.s32.f32 %v1023
      %v1040 = vcvt.s32.f32 %v1024
      %v1041 = vcvt.s32.f32 %v1025
      %v1042 = vcvt.s32.f32 %v1026
      %v1043 = vcvt.s32.f32 %v1027
      %v1044 = vcvt.s32.f32 %v1028
      %1045 = vst [vmem:[#allocation2 + $0x38] sm:$0xff] %v1029
      %1046 = vst [vmem:[#allocation2 + $0x158] sm:$0xff] %v1030
      %1047 = vst [vmem:[#allocation2 + $0x278] sm:$0xff] %v1031
      %1048 = vst [vmem:[#allocation2 + $0x398] sm:$0xff] %v1032
      %1049 = vst [vmem:[#allocation2 + $0x4b8] sm:$0xff] %v1033
      %1050 = vst [vmem:[#allocation2 + $0x5d8] sm:$0xff] %v1034
      %1051 = vst [vmem:[#allocation2 + $0x6f8] sm:$0xff] %v1035
      %1052 = vst [vmem:[#allocation2 + $0x818] sm:$0xff] %v1036
      %1053 = vst [vmem:[#allocation2 + $0x938] sm:$0xff] %v1037
      %1054 = vst [vmem:[#allocation2 + $0xa58] sm:$0xff] %v1038
      %1055 = vst [vmem:[#allocation2 + $0xb78] sm:$0xff] %v1039
      %1056 = vst [vmem:[#allocation2 + $0xc98] sm:$0xff] %v1040
      %1057 = vst [vmem:[#allocation2 + $0xdb8] sm:$0xff] %v1041
      %1058 = vst [vmem:[#allocation2 + $0xed8] sm:$0xff] %v1042
      %1059 = vst [vmem:[#allocation2 + $0xff8] sm:$0xff] %v1043
      %1060 = vst [vmem:[#allocation2 + $0x1118] sm:$0xff] %v1044
      %1061 = vset.pattern.permute.xlu0 8
      %1062 = vperm.xlu0 %1061, %v147
      %v1063 = vpop.permute.xlu0 %1062
      %1064 = vset.pattern.permute.xlu0 8
      %1065 = vperm.xlu0 %1064, %v148
      %v1066 = vpop.permute.xlu0 %1065
      %1067 = vset.pattern.permute.xlu0 8
      %1068 = vperm.xlu0 %1067, %v149
      %v1069 = vpop.permute.xlu0 %1068
      %1070 = vset.pattern.permute.xlu0 8
      %1071 = vperm.xlu0 %1070, %v150
      %v1072 = vpop.permute.xlu0 %1071
      %1073 = vset.pattern.permute.xlu0 8
      %1074 = vperm.xlu0 %1073, %v151
      %v1075 = vpop.permute.xlu0 %1074
      %1076 = vset.pattern.permute.xlu0 8
      %1077 = vperm.xlu0 %1076, %v152
      %v1078 = vpop.permute.xlu0 %1077
      %1079 = vset.pattern.permute.xlu0 8
      %1080 = vperm.xlu0 %1079, %v153
      %v1081 = vpop.permute.xlu0 %1080
      %1082 = vset.pattern.permute.xlu0 8
      %1083 = vperm.xlu0 %1082, %v154
      %v1084 = vpop.permute.xlu0 %1083
      %1085 = vset.pattern.permute.xlu0 8
      %1086 = vperm.xlu0 %1085, %v155
      %v1087 = vpop.permute.xlu0 %1086
      %1088 = vset.pattern.permute.xlu0 8
      %1089 = vperm.xlu0 %1088, %v156
      %v1090 = vpop.permute.xlu0 %1089
      %1091 = vset.pattern.permute.xlu0 8
      %1092 = vperm.xlu0 %1091, %v157
      %v1093 = vpop.permute.xlu0 %1092
      %1094 = vset.pattern.permute.xlu0 8
      %1095 = vperm.xlu0 %1094, %v158
      %v1096 = vpop.permute.xlu0 %1095
      %1097 = vset.pattern.permute.xlu0 8
      %1098 = vperm.xlu0 %1097, %v159
      %v1099 = vpop.permute.xlu0 %1098
      %1100 = vset.pattern.permute.xlu0 8
      %1101 = vperm.xlu0 %1100, %v160
      %v1102 = vpop.permute.xlu0 %1101
      %1103 = vset.pattern.permute.xlu0 8
      %1104 = vperm.xlu0 %1103, %v161
      %v1105 = vpop.permute.xlu0 %1104
      %1106 = vset.pattern.permute.xlu0 8
      %1107 = vperm.xlu0 %1106, %v162
      %v1108 = vpop.permute.xlu0 %1107
      %vm1109 = vcmp.eq.s32.totalorder %v1063, %v164
      %vm1110 = vcmp.eq.s32.totalorder %v1066, %v164
      %vm1111 = vcmp.eq.s32.totalorder %v1069, %v164
      %vm1112 = vcmp.eq.s32.totalorder %v1072, %v164
      %vm1113 = vcmp.eq.s32.totalorder %v1075, %v164
      %vm1114 = vcmp.eq.s32.totalorder %v1078, %v164
      %vm1115 = vcmp.eq.s32.totalorder %v1081, %v164
      %vm1116 = vcmp.eq.s32.totalorder %v1084, %v164
      %vm1117 = vcmp.eq.s32.totalorder %v1087, %v164
      %vm1118 = vcmp.eq.s32.totalorder %v1090, %v164
      %vm1119 = vcmp.eq.s32.totalorder %v1093, %v164
      %vm1120 = vcmp.eq.s32.totalorder %v1096, %v164
      %vm1121 = vcmp.eq.s32.totalorder %v1099, %v164
      %vm1122 = vcmp.eq.s32.totalorder %v1102, %v164
      %vm1123 = vcmp.eq.s32.totalorder %v1105, %v164
      %vm1124 = vcmp.eq.s32.totalorder %v1108, %v164
      %v1125 = vsel %vm1109, 1, 0
      %v1126 = vsel %vm1110, 1, 0
      %v1127 = vsel %vm1111, 1, 0
      %v1128 = vsel %vm1112, 1, 0
      %v1129 = vsel %vm1113, 1, 0
      %v1130 = vsel %vm1114, 1, 0
      %v1131 = vsel %vm1115, 1, 0
      %v1132 = vsel %vm1116, 1, 0
      %v1133 = vsel %vm1117, 1, 0
      %v1134 = vsel %vm1118, 1, 0
      %v1135 = vsel %vm1119, 1, 0
      %v1136 = vsel %vm1120, 1, 0
      %v1137 = vsel %vm1121, 1, 0
      %v1138 = vsel %vm1122, 1, 0
      %v1139 = vsel %vm1123, 1, 0
      %v1140 = vsel %vm1124, 1, 0
      %v1141 = vcvt.s32.f32 %v1125
      %v1142 = vcvt.s32.f32 %v1126
      %v1143 = vcvt.s32.f32 %v1127
      %v1144 = vcvt.s32.f32 %v1128
      %v1145 = vcvt.s32.f32 %v1129
      %v1146 = vcvt.s32.f32 %v1130
      %v1147 = vcvt.s32.f32 %v1131
      %v1148 = vcvt.s32.f32 %v1132
      %v1149 = vcvt.s32.f32 %v1133
      %v1150 = vcvt.s32.f32 %v1134
      %v1151 = vcvt.s32.f32 %v1135
      %v1152 = vcvt.s32.f32 %v1136
      %v1153 = vcvt.s32.f32 %v1137
      %v1154 = vcvt.s32.f32 %v1138
      %v1155 = vcvt.s32.f32 %v1139
      %v1156 = vcvt.s32.f32 %v1140
      %1157 = vst [vmem:[#allocation2 + $0x40] sm:$0xff] %v1141
      %1158 = vst [vmem:[#allocation2 + $0x160] sm:$0xff] %v1142
      %1159 = vst [vmem:[#allocation2 + $0x280] sm:$0xff] %v1143
      %1160 = vst [vmem:[#allocation2 + $0x3a0] sm:$0xff] %v1144
      %1161 = vst [vmem:[#allocation2 + $0x4c0] sm:$0xff] %v1145
      %1162 = vst [vmem:[#allocation2 + $0x5e0] sm:$0xff] %v1146
      %1163 = vst [vmem:[#allocation2 + $0x700] sm:$0xff] %v1147
      %1164 = vst [vmem:[#allocation2 + $0x820] sm:$0xff] %v1148
      %1165 = vst [vmem:[#allocation2 + $0x940] sm:$0xff] %v1149
      %1166 = vst [vmem:[#allocation2 + $0xa60] sm:$0xff] %v1150
      %1167 = vst [vmem:[#allocation2 + $0xb80] sm:$0xff] %v1151
      %1168 = vst [vmem:[#allocation2 + $0xca0] sm:$0xff] %v1152
      %1169 = vst [vmem:[#allocation2 + $0xdc0] sm:$0xff] %v1153
      %1170 = vst [vmem:[#allocation2 + $0xee0] sm:$0xff] %v1154
      %1171 = vst [vmem:[#allocation2 + $0x1000] sm:$0xff] %v1155
      %1172 = vst [vmem:[#allocation2 + $0x1120] sm:$0xff] %v1156
      %1173 = vset.pattern.permute.xlu0 9
      %1174 = vperm.xlu0 %1173, %v147
      %v1175 = vpop.permute.xlu0 %1174
      %1176 = vset.pattern.permute.xlu0 9
      %1177 = vperm.xlu0 %1176, %v148
      %v1178 = vpop.permute.xlu0 %1177
      %1179 = vset.pattern.permute.xlu0 9
      %1180 = vperm.xlu0 %1179, %v149
      %v1181 = vpop.permute.xlu0 %1180
      %1182 = vset.pattern.permute.xlu0 9
      %1183 = vperm.xlu0 %1182, %v150
      %v1184 = vpop.permute.xlu0 %1183
      %1185 = vset.pattern.permute.xlu0 9
      %1186 = vperm.xlu0 %1185, %v151
      %v1187 = vpop.permute.xlu0 %1186
      %1188 = vset.pattern.permute.xlu0 9
      %1189 = vperm.xlu0 %1188, %v152
      %v1190 = vpop.permute.xlu0 %1189
      %1191 = vset.pattern.permute.xlu0 9
      %1192 = vperm.xlu0 %1191, %v153
      %v1193 = vpop.permute.xlu0 %1192
      %1194 = vset.pattern.permute.xlu0 9
      %1195 = vperm.xlu0 %1194, %v154
      %v1196 = vpop.permute.xlu0 %1195
      %1197 = vset.pattern.permute.xlu0 9
      %1198 = vperm.xlu0 %1197, %v155
      %v1199 = vpop.permute.xlu0 %1198
      %1200 = vset.pattern.permute.xlu0 9
      %1201 = vperm.xlu0 %1200, %v156
      %v1202 = vpop.permute.xlu0 %1201
      %1203 = vset.pattern.permute.xlu0 9
      %1204 = vperm.xlu0 %1203, %v157
      %v1205 = vpop.permute.xlu0 %1204
      %1206 = vset.pattern.permute.xlu0 9
      %1207 = vperm.xlu0 %1206, %v158
      %v1208 = vpop.permute.xlu0 %1207
      %1209 = vset.pattern.permute.xlu0 9
      %1210 = vperm.xlu0 %1209, %v159
      %v1211 = vpop.permute.xlu0 %1210
      %1212 = vset.pattern.permute.xlu0 9
      %1213 = vperm.xlu0 %1212, %v160
      %v1214 = vpop.permute.xlu0 %1213
      %1215 = vset.pattern.permute.xlu0 9
      %1216 = vperm.xlu0 %1215, %v161
      %v1217 = vpop.permute.xlu0 %1216
      %1218 = vset.pattern.permute.xlu0 9
      %1219 = vperm.xlu0 %1218, %v162
      %v1220 = vpop.permute.xlu0 %1219
      %vm1221 = vcmp.eq.s32.totalorder %v1175, %v164
      %vm1222 = vcmp.eq.s32.totalorder %v1178, %v164
      %vm1223 = vcmp.eq.s32.totalorder %v1181, %v164
      %vm1224 = vcmp.eq.s32.totalorder %v1184, %v164
      %vm1225 = vcmp.eq.s32.totalorder %v1187, %v164
      %vm1226 = vcmp.eq.s32.totalorder %v1190, %v164
      %vm1227 = vcmp.eq.s32.totalorder %v1193, %v164
      %vm1228 = vcmp.eq.s32.totalorder %v1196, %v164
      %vm1229 = vcmp.eq.s32.totalorder %v1199, %v164
      %vm1230 = vcmp.eq.s32.totalorder %v1202, %v164
      %vm1231 = vcmp.eq.s32.totalorder %v1205, %v164
      %vm1232 = vcmp.eq.s32.totalorder %v1208, %v164
      %vm1233 = vcmp.eq.s32.totalorder %v1211, %v164
      %vm1234 = vcmp.eq.s32.totalorder %v1214, %v164
      %vm1235 = vcmp.eq.s32.totalorder %v1217, %v164
      %vm1236 = vcmp.eq.s32.totalorder %v1220, %v164
      %v1237 = vsel %vm1221, 1, 0
      %v1238 = vsel %vm1222, 1, 0
      %v1239 = vsel %vm1223, 1, 0
      %v1240 = vsel %vm1224, 1, 0
      %v1241 = vsel %vm1225, 1, 0
      %v1242 = vsel %vm1226, 1, 0
      %v1243 = vsel %vm1227, 1, 0
      %v1244 = vsel %vm1228, 1, 0
      %v1245 = vsel %vm1229, 1, 0
      %v1246 = vsel %vm1230, 1, 0
      %v1247 = vsel %vm1231, 1, 0
      %v1248 = vsel %vm1232, 1, 0
      %v1249 = vsel %vm1233, 1, 0
      %v1250 = vsel %vm1234, 1, 0
      %v1251 = vsel %vm1235, 1, 0
      %v1252 = vsel %vm1236, 1, 0
      %v1253 = vcvt.s32.f32 %v1237
      %v1254 = vcvt.s32.f32 %v1238
      %v1255 = vcvt.s32.f32 %v1239
      %v1256 = vcvt.s32.f32 %v1240
      %v1257 = vcvt.s32.f32 %v1241
      %v1258 = vcvt.s32.f32 %v1242
      %v1259 = vcvt.s32.f32 %v1243
      %v1260 = vcvt.s32.f32 %v1244
      %v1261 = vcvt.s32.f32 %v1245
      %v1262 = vcvt.s32.f32 %v1246
      %v1263 = vcvt.s32.f32 %v1247
      %v1264 = vcvt.s32.f32 %v1248
      %v1265 = vcvt.s32.f32 %v1249
      %v1266 = vcvt.s32.f32 %v1250
      %v1267 = vcvt.s32.f32 %v1251
      %v1268 = vcvt.s32.f32 %v1252
      %1269 = vst [vmem:[#allocation2 + $0x48] sm:$0xff] %v1253
      %1270 = vst [vmem:[#allocation2 + $0x168] sm:$0xff] %v1254
      %1271 = vst [vmem:[#allocation2 + $0x288] sm:$0xff] %v1255
      %1272 = vst [vmem:[#allocation2 + $0x3a8] sm:$0xff] %v1256
      %1273 = vst [vmem:[#allocation2 + $0x4c8] sm:$0xff] %v1257
      %1274 = vst [vmem:[#allocation2 + $0x5e8] sm:$0xff] %v1258
      %1275 = vst [vmem:[#allocation2 + $0x708] sm:$0xff] %v1259
      %1276 = vst [vmem:[#allocation2 + $0x828] sm:$0xff] %v1260
      %1277 = vst [vmem:[#allocation2 + $0x948] sm:$0xff] %v1261
      %1278 = vst [vmem:[#allocation2 + $0xa68] sm:$0xff] %v1262
      %1279 = vst [vmem:[#allocation2 + $0xb88] sm:$0xff] %v1263
      %1280 = vst [vmem:[#allocation2 + $0xca8] sm:$0xff] %v1264
      %1281 = vst [vmem:[#allocation2 + $0xdc8] sm:$0xff] %v1265
      %1282 = vst [vmem:[#allocation2 + $0xee8] sm:$0xff] %v1266
      %1283 = vst [vmem:[#allocation2 + $0x1008] sm:$0xff] %v1267
      %1284 = vst [vmem:[#allocation2 + $0x1128] sm:$0xff] %v1268
      %1285 = vset.pattern.permute.xlu0 10
      %1286 = vperm.xlu0 %1285, %v147
      %v1287 = vpop.permute.xlu0 %1286
      %1288 = vset.pattern.permute.xlu0 10
      %1289 = vperm.xlu0 %1288, %v148
      %v1290 = vpop.permute.xlu0 %1289
      %1291 = vset.pattern.permute.xlu0 10
      %1292 = vperm.xlu0 %1291, %v149
      %v1293 = vpop.permute.xlu0 %1292
      %1294 = vset.pattern.permute.xlu0 10
      %1295 = vperm.xlu0 %1294, %v150
      %v1296 = vpop.permute.xlu0 %1295
      %1297 = vset.pattern.permute.xlu0 10
      %1298 = vperm.xlu0 %1297, %v151
      %v1299 = vpop.permute.xlu0 %1298
      %1300 = vset.pattern.permute.xlu0 10
      %1301 = vperm.xlu0 %1300, %v152
      %v1302 = vpop.permute.xlu0 %1301
      %1303 = vset.pattern.permute.xlu0 10
      %1304 = vperm.xlu0 %1303, %v153
      %v1305 = vpop.permute.xlu0 %1304
      %1306 = vset.pattern.permute.xlu0 10
      %1307 = vperm.xlu0 %1306, %v154
      %v1308 = vpop.permute.xlu0 %1307
      %1309 = vset.pattern.permute.xlu0 10
      %1310 = vperm.xlu0 %1309, %v155
      %v1311 = vpop.permute.xlu0 %1310
      %1312 = vset.pattern.permute.xlu0 10
      %1313 = vperm.xlu0 %1312, %v156
      %v1314 = vpop.permute.xlu0 %1313
      %1315 = vset.pattern.permute.xlu0 10
      %1316 = vperm.xlu0 %1315, %v157
      %v1317 = vpop.permute.xlu0 %1316
      %1318 = vset.pattern.permute.xlu0 10
      %1319 = vperm.xlu0 %1318, %v158
      %v1320 = vpop.permute.xlu0 %1319
      %1321 = vset.pattern.permute.xlu0 10
      %1322 = vperm.xlu0 %1321, %v159
      %v1323 = vpop.permute.xlu0 %1322
      %1324 = vset.pattern.permute.xlu0 10
      %1325 = vperm.xlu0 %1324, %v160
      %v1326 = vpop.permute.xlu0 %1325
      %1327 = vset.pattern.permute.xlu0 10
      %1328 = vperm.xlu0 %1327, %v161
      %v1329 = vpop.permute.xlu0 %1328
      %1330 = vset.pattern.permute.xlu0 10
      %1331 = vperm.xlu0 %1330, %v162
      %v1332 = vpop.permute.xlu0 %1331
      %vm1333 = vcmp.eq.s32.totalorder %v1287, %v164
      %vm1334 = vcmp.eq.s32.totalorder %v1290, %v164
      %vm1335 = vcmp.eq.s32.totalorder %v1293, %v164
      %vm1336 = vcmp.eq.s32.totalorder %v1296, %v164
      %vm1337 = vcmp.eq.s32.totalorder %v1299, %v164
      %vm1338 = vcmp.eq.s32.totalorder %v1302, %v164
      %vm1339 = vcmp.eq.s32.totalorder %v1305, %v164
      %vm1340 = vcmp.eq.s32.totalorder %v1308, %v164
      %vm1341 = vcmp.eq.s32.totalorder %v1311, %v164
      %vm1342 = vcmp.eq.s32.totalorder %v1314, %v164
      %vm1343 = vcmp.eq.s32.totalorder %v1317, %v164
      %vm1344 = vcmp.eq.s32.totalorder %v1320, %v164
      %vm1345 = vcmp.eq.s32.totalorder %v1323, %v164
      %vm1346 = vcmp.eq.s32.totalorder %v1326, %v164
      %vm1347 = vcmp.eq.s32.totalorder %v1329, %v164
      %vm1348 = vcmp.eq.s32.totalorder %v1332, %v164
      %v1349 = vsel %vm1333, 1, 0
      %v1350 = vsel %vm1334, 1, 0
      %v1351 = vsel %vm1335, 1, 0
      %v1352 = vsel %vm1336, 1, 0
      %v1353 = vsel %vm1337, 1, 0
      %v1354 = vsel %vm1338, 1, 0
      %v1355 = vsel %vm1339, 1, 0
      %v1356 = vsel %vm1340, 1, 0
      %v1357 = vsel %vm1341, 1, 0
      %v1358 = vsel %vm1342, 1, 0
      %v1359 = vsel %vm1343, 1, 0
      %v1360 = vsel %vm1344, 1, 0
      %v1361 = vsel %vm1345, 1, 0
      %v1362 = vsel %vm1346, 1, 0
      %v1363 = vsel %vm1347, 1, 0
      %v1364 = vsel %vm1348, 1, 0
      %v1365 = vcvt.s32.f32 %v1349
      %v1366 = vcvt.s32.f32 %v1350
      %v1367 = vcvt.s32.f32 %v1351
      %v1368 = vcvt.s32.f32 %v1352
      %v1369 = vcvt.s32.f32 %v1353
      %v1370 = vcvt.s32.f32 %v1354
      %v1371 = vcvt.s32.f32 %v1355
      %v1372 = vcvt.s32.f32 %v1356
      %v1373 = vcvt.s32.f32 %v1357
      %v1374 = vcvt.s32.f32 %v1358
      %v1375 = vcvt.s32.f32 %v1359
      %v1376 = vcvt.s32.f32 %v1360
      %v1377 = vcvt.s32.f32 %v1361
      %v1378 = vcvt.s32.f32 %v1362
      %v1379 = vcvt.s32.f32 %v1363
      %v1380 = vcvt.s32.f32 %v1364
      %1381 = vst [vmem:[#allocation2 + $0x50] sm:$0xff] %v1365
      %1382 = vst [vmem:[#allocation2 + $0x170] sm:$0xff] %v1366
      %1383 = vst [vmem:[#allocation2 + $0x290] sm:$0xff] %v1367
      %1384 = vst [vmem:[#allocation2 + $0x3b0] sm:$0xff] %v1368
      %1385 = vst [vmem:[#allocation2 + $0x4d0] sm:$0xff] %v1369
      %1386 = vst [vmem:[#allocation2 + $0x5f0] sm:$0xff] %v1370
      %1387 = vst [vmem:[#allocation2 + $0x710] sm:$0xff] %v1371
      %1388 = vst [vmem:[#allocation2 + $0x830] sm:$0xff] %v1372
      %1389 = vst [vmem:[#allocation2 + $0x950] sm:$0xff] %v1373
      %1390 = vst [vmem:[#allocation2 + $0xa70] sm:$0xff] %v1374
      %1391 = vst [vmem:[#allocation2 + $0xb90] sm:$0xff] %v1375
      %1392 = vst [vmem:[#allocation2 + $0xcb0] sm:$0xff] %v1376
      %1393 = vst [vmem:[#allocation2 + $0xdd0] sm:$0xff] %v1377
      %1394 = vst [vmem:[#allocation2 + $0xef0] sm:$0xff] %v1378
      %1395 = vst [vmem:[#allocation2 + $0x1010] sm:$0xff] %v1379
      %1396 = vst [vmem:[#allocation2 + $0x1130] sm:$0xff] %v1380
      %1397 = vset.pattern.permute.xlu0 11
      %1398 = vperm.xlu0 %1397, %v147
      %v1399 = vpop.permute.xlu0 %1398
      %1400 = vset.pattern.permute.xlu0 11
      %1401 = vperm.xlu0 %1400, %v148
      %v1402 = vpop.permute.xlu0 %1401
      %1403 = vset.pattern.permute.xlu0 11
      %1404 = vperm.xlu0 %1403, %v149
      %v1405 = vpop.permute.xlu0 %1404
      %1406 = vset.pattern.permute.xlu0 11
      %1407 = vperm.xlu0 %1406, %v150
      %v1408 = vpop.permute.xlu0 %1407
      %1409 = vset.pattern.permute.xlu0 11
      %1410 = vperm.xlu0 %1409, %v151
      %v1411 = vpop.permute.xlu0 %1410
      %1412 = vset.pattern.permute.xlu0 11
      %1413 = vperm.xlu0 %1412, %v152
      %v1414 = vpop.permute.xlu0 %1413
      %1415 = vset.pattern.permute.xlu0 11
      %1416 = vperm.xlu0 %1415, %v153
      %v1417 = vpop.permute.xlu0 %1416
      %1418 = vset.pattern.permute.xlu0 11
      %1419 = vperm.xlu0 %1418, %v154
      %v1420 = vpop.permute.xlu0 %1419
      %1421 = vset.pattern.permute.xlu0 11
      %1422 = vperm.xlu0 %1421, %v155
      %v1423 = vpop.permute.xlu0 %1422
      %1424 = vset.pattern.permute.xlu0 11
      %1425 = vperm.xlu0 %1424, %v156
      %v1426 = vpop.permute.xlu0 %1425
      %1427 = vset.pattern.permute.xlu0 11
      %1428 = vperm.xlu0 %1427, %v157
      %v1429 = vpop.permute.xlu0 %1428
      %1430 = vset.pattern.permute.xlu0 11
      %1431 = vperm.xlu0 %1430, %v158
      %v1432 = vpop.permute.xlu0 %1431
      %1433 = vset.pattern.permute.xlu0 11
      %1434 = vperm.xlu0 %1433, %v159
      %v1435 = vpop.permute.xlu0 %1434
      %1436 = vset.pattern.permute.xlu0 11
      %1437 = vperm.xlu0 %1436, %v160
      %v1438 = vpop.permute.xlu0 %1437
      %1439 = vset.pattern.permute.xlu0 11
      %1440 = vperm.xlu0 %1439, %v161
      %v1441 = vpop.permute.xlu0 %1440
      %1442 = vset.pattern.permute.xlu0 11
      %1443 = vperm.xlu0 %1442, %v162
      %v1444 = vpop.permute.xlu0 %1443
      %vm1445 = vcmp.eq.s32.totalorder %v1399, %v164
      %vm1446 = vcmp.eq.s32.totalorder %v1402, %v164
      %vm1447 = vcmp.eq.s32.totalorder %v1405, %v164
      %vm1448 = vcmp.eq.s32.totalorder %v1408, %v164
      %vm1449 = vcmp.eq.s32.totalorder %v1411, %v164
      %vm1450 = vcmp.eq.s32.totalorder %v1414, %v164
      %vm1451 = vcmp.eq.s32.totalorder %v1417, %v164
      %vm1452 = vcmp.eq.s32.totalorder %v1420, %v164
      %vm1453 = vcmp.eq.s32.totalorder %v1423, %v164
      %vm1454 = vcmp.eq.s32.totalorder %v1426, %v164
      %vm1455 = vcmp.eq.s32.totalorder %v1429, %v164
      %vm1456 = vcmp.eq.s32.totalorder %v1432, %v164
      %vm1457 = vcmp.eq.s32.totalorder %v1435, %v164
      %vm1458 = vcmp.eq.s32.totalorder %v1438, %v164
      %vm1459 = vcmp.eq.s32.totalorder %v1441, %v164
      %vm1460 = vcmp.eq.s32.totalorder %v1444, %v164
      %v1461 = vsel %vm1445, 1, 0
      %v1462 = vsel %vm1446, 1, 0
      %v1463 = vsel %vm1447, 1, 0
      %v1464 = vsel %vm1448, 1, 0
      %v1465 = vsel %vm1449, 1, 0
      %v1466 = vsel %vm1450, 1, 0
      %v1467 = vsel %vm1451, 1, 0
      %v1468 = vsel %vm1452, 1, 0
      %v1469 = vsel %vm1453, 1, 0
      %v1470 = vsel %vm1454, 1, 0
      %v1471 = vsel %vm1455, 1, 0
      %v1472 = vsel %vm1456, 1, 0
      %v1473 = vsel %vm1457, 1, 0
      %v1474 = vsel %vm1458, 1, 0
      %v1475 = vsel %vm1459, 1, 0
      %v1476 = vsel %vm1460, 1, 0
      %v1477 = vcvt.s32.f32 %v1461
      %v1478 = vcvt.s32.f32 %v1462
      %v1479 = vcvt.s32.f32 %v1463
      %v1480 = vcvt.s32.f32 %v1464
      %v1481 = vcvt.s32.f32 %v1465
      %v1482 = vcvt.s32.f32 %v1466
      %v1483 = vcvt.s32.f32 %v1467
      %v1484 = vcvt.s32.f32 %v1468
      %v1485 = vcvt.s32.f32 %v1469
      %v1486 = vcvt.s32.f32 %v1470
      %v1487 = vcvt.s32.f32 %v1471
      %v1488 = vcvt.s32.f32 %v1472
      %v1489 = vcvt.s32.f32 %v1473
      %v1490 = vcvt.s32.f32 %v1474
      %v1491 = vcvt.s32.f32 %v1475
      %v1492 = vcvt.s32.f32 %v1476
      %1493 = vst [vmem:[#allocation2 + $0x58] sm:$0xff] %v1477
      %1494 = vst [vmem:[#allocation2 + $0x178] sm:$0xff] %v1478
      %1495 = vst [vmem:[#allocation2 + $0x298] sm:$0xff] %v1479
      %1496 = vst [vmem:[#allocation2 + $0x3b8] sm:$0xff] %v1480
      %1497 = vst [vmem:[#allocation2 + $0x4d8] sm:$0xff] %v1481
      %1498 = vst [vmem:[#allocation2 + $0x5f8] sm:$0xff] %v1482
      %1499 = vst [vmem:[#allocation2 + $0x718] sm:$0xff] %v1483
      %1500 = vst [vmem:[#allocation2 + $0x838] sm:$0xff] %v1484
      %1501 = vst [vmem:[#allocation2 + $0x958] sm:$0xff] %v1485
      %1502 = vst [vmem:[#allocation2 + $0xa78] sm:$0xff] %v1486
      %1503 = vst [vmem:[#allocation2 + $0xb98] sm:$0xff] %v1487
      %1504 = vst [vmem:[#allocation2 + $0xcb8] sm:$0xff] %v1488
      %1505 = vst [vmem:[#allocation2 + $0xdd8] sm:$0xff] %v1489
      %1506 = vst [vmem:[#allocation2 + $0xef8] sm:$0xff] %v1490
      %1507 = vst [vmem:[#allocation2 + $0x1018] sm:$0xff] %v1491
      %1508 = vst [vmem:[#allocation2 + $0x1138] sm:$0xff] %v1492
      %1509 = vset.pattern.permute.xlu0 12
      %1510 = vperm.xlu0 %1509, %v147
      %v1511 = vpop.permute.xlu0 %1510
      %1512 = vset.pattern.permute.xlu0 12
      %1513 = vperm.xlu0 %1512, %v148
      %v1514 = vpop.permute.xlu0 %1513
      %1515 = vset.pattern.permute.xlu0 12
      %1516 = vperm.xlu0 %1515, %v149
      %v1517 = vpop.permute.xlu0 %1516
      %1518 = vset.pattern.permute.xlu0 12
      %1519 = vperm.xlu0 %1518, %v150
      %v1520 = vpop.permute.xlu0 %1519
      %1521 = vset.pattern.permute.xlu0 12
      %1522 = vperm.xlu0 %1521, %v151
      %v1523 = vpop.permute.xlu0 %1522
      %1524 = vset.pattern.permute.xlu0 12
      %1525 = vperm.xlu0 %1524, %v152
      %v1526 = vpop.permute.xlu0 %1525
      %1527 = vset.pattern.permute.xlu0 12
      %1528 = vperm.xlu0 %1527, %v153
      %v1529 = vpop.permute.xlu0 %1528
      %1530 = vset.pattern.permute.xlu0 12
      %1531 = vperm.xlu0 %1530, %v154
      %v1532 = vpop.permute.xlu0 %1531
      %1533 = vset.pattern.permute.xlu0 12
      %1534 = vperm.xlu0 %1533, %v155
      %v1535 = vpop.permute.xlu0 %1534
      %1536 = vset.pattern.permute.xlu0 12
      %1537 = vperm.xlu0 %1536, %v156
      %v1538 = vpop.permute.xlu0 %1537
      %1539 = vset.pattern.permute.xlu0 12
      %1540 = vperm.xlu0 %1539, %v157
      %v1541 = vpop.permute.xlu0 %1540
      %1542 = vset.pattern.permute.xlu0 12
      %1543 = vperm.xlu0 %1542, %v158
      %v1544 = vpop.permute.xlu0 %1543
      %1545 = vset.pattern.permute.xlu0 12
      %1546 = vperm.xlu0 %1545, %v159
      %v1547 = vpop.permute.xlu0 %1546
      %1548 = vset.pattern.permute.xlu0 12
      %1549 = vperm.xlu0 %1548, %v160
      %v1550 = vpop.permute.xlu0 %1549
      %1551 = vset.pattern.permute.xlu0 12
      %1552 = vperm.xlu0 %1551, %v161
      %v1553 = vpop.permute.xlu0 %1552
      %1554 = vset.pattern.permute.xlu0 12
      %1555 = vperm.xlu0 %1554, %v162
      %v1556 = vpop.permute.xlu0 %1555
      %vm1557 = vcmp.eq.s32.totalorder %v1511, %v164
      %vm1558 = vcmp.eq.s32.totalorder %v1514, %v164
      %vm1559 = vcmp.eq.s32.totalorder %v1517, %v164
      %vm1560 = vcmp.eq.s32.totalorder %v1520, %v164
      %vm1561 = vcmp.eq.s32.totalorder %v1523, %v164
      %vm1562 = vcmp.eq.s32.totalorder %v1526, %v164
      %vm1563 = vcmp.eq.s32.totalorder %v1529, %v164
      %vm1564 = vcmp.eq.s32.totalorder %v1532, %v164
      %vm1565 = vcmp.eq.s32.totalorder %v1535, %v164
      %vm1566 = vcmp.eq.s32.totalorder %v1538, %v164
      %vm1567 = vcmp.eq.s32.totalorder %v1541, %v164
      %vm1568 = vcmp.eq.s32.totalorder %v1544, %v164
      %vm1569 = vcmp.eq.s32.totalorder %v1547, %v164
      %vm1570 = vcmp.eq.s32.totalorder %v1550, %v164
      %vm1571 = vcmp.eq.s32.totalorder %v1553, %v164
      %vm1572 = vcmp.eq.s32.totalorder %v1556, %v164
      %v1573 = vsel %vm1557, 1, 0
      %v1574 = vsel %vm1558, 1, 0
      %v1575 = vsel %vm1559, 1, 0
      %v1576 = vsel %vm1560, 1, 0
      %v1577 = vsel %vm1561, 1, 0
      %v1578 = vsel %vm1562, 1, 0
      %v1579 = vsel %vm1563, 1, 0
      %v1580 = vsel %vm1564, 1, 0
      %v1581 = vsel %vm1565, 1, 0
      %v1582 = vsel %vm1566, 1, 0
      %v1583 = vsel %vm1567, 1, 0
      %v1584 = vsel %vm1568, 1, 0
      %v1585 = vsel %vm1569, 1, 0
      %v1586 = vsel %vm1570, 1, 0
      %v1587 = vsel %vm1571, 1, 0
      %v1588 = vsel %vm1572, 1, 0
      %v1589 = vcvt.s32.f32 %v1573
      %v1590 = vcvt.s32.f32 %v1574
      %v1591 = vcvt.s32.f32 %v1575
      %v1592 = vcvt.s32.f32 %v1576
      %v1593 = vcvt.s32.f32 %v1577
      %v1594 = vcvt.s32.f32 %v1578
      %v1595 = vcvt.s32.f32 %v1579
      %v1596 = vcvt.s32.f32 %v1580
      %v1597 = vcvt.s32.f32 %v1581
      %v1598 = vcvt.s32.f32 %v1582
      %v1599 = vcvt.s32.f32 %v1583
      %v1600 = vcvt.s32.f32 %v1584
      %v1601 = vcvt.s32.f32 %v1585
      %v1602 = vcvt.s32.f32 %v1586
      %v1603 = vcvt.s32.f32 %v1587
      %v1604 = vcvt.s32.f32 %v1588
      %1605 = vst [vmem:[#allocation2 + $0x60] sm:$0xff] %v1589
      %1606 = vst [vmem:[#allocation2 + $0x180] sm:$0xff] %v1590
      %1607 = vst [vmem:[#allocation2 + $0x2a0] sm:$0xff] %v1591
      %1608 = vst [vmem:[#allocation2 + $0x3c0] sm:$0xff] %v1592
      %1609 = vst [vmem:[#allocation2 + $0x4e0] sm:$0xff] %v1593
      %1610 = vst [vmem:[#allocation2 + $0x600] sm:$0xff] %v1594
      %1611 = vst [vmem:[#allocation2 + $0x720] sm:$0xff] %v1595
      %1612 = vst [vmem:[#allocation2 + $0x840] sm:$0xff] %v1596
      %1613 = vst [vmem:[#allocation2 + $0x960] sm:$0xff] %v1597
      %1614 = vst [vmem:[#allocation2 + $0xa80] sm:$0xff] %v1598
      %1615 = vst [vmem:[#allocation2 + $0xba0] sm:$0xff] %v1599
      %1616 = vst [vmem:[#allocation2 + $0xcc0] sm:$0xff] %v1600
      %1617 = vst [vmem:[#allocation2 + $0xde0] sm:$0xff] %v1601
      %1618 = vst [vmem:[#allocation2 + $0xf00] sm:$0xff] %v1602
      %1619 = vst [vmem:[#allocation2 + $0x1020] sm:$0xff] %v1603
      %1620 = vst [vmem:[#allocation2 + $0x1140] sm:$0xff] %v1604
      %1621 = vset.pattern.permute.xlu0 13
      %1622 = vperm.xlu0 %1621, %v147
      %v1623 = vpop.permute.xlu0 %1622
      %1624 = vset.pattern.permute.xlu0 13
      %1625 = vperm.xlu0 %1624, %v148
      %v1626 = vpop.permute.xlu0 %1625
      %1627 = vset.pattern.permute.xlu0 13
      %1628 = vperm.xlu0 %1627, %v149
      %v1629 = vpop.permute.xlu0 %1628
      %1630 = vset.pattern.permute.xlu0 13
      %1631 = vperm.xlu0 %1630, %v150
      %v1632 = vpop.permute.xlu0 %1631
      %1633 = vset.pattern.permute.xlu0 13
      %1634 = vperm.xlu0 %1633, %v151
      %v1635 = vpop.permute.xlu0 %1634
      %1636 = vset.pattern.permute.xlu0 13
      %1637 = vperm.xlu0 %1636, %v152
      %v1638 = vpop.permute.xlu0 %1637
      %1639 = vset.pattern.permute.xlu0 13
      %1640 = vperm.xlu0 %1639, %v153
      %v1641 = vpop.permute.xlu0 %1640
      %1642 = vset.pattern.permute.xlu0 13
      %1643 = vperm.xlu0 %1642, %v154
      %v1644 = vpop.permute.xlu0 %1643
      %1645 = vset.pattern.permute.xlu0 13
      %1646 = vperm.xlu0 %1645, %v155
      %v1647 = vpop.permute.xlu0 %1646
      %1648 = vset.pattern.permute.xlu0 13
      %1649 = vperm.xlu0 %1648, %v156
      %v1650 = vpop.permute.xlu0 %1649
      %1651 = vset.pattern.permute.xlu0 13
      %1652 = vperm.xlu0 %1651, %v157
      %v1653 = vpop.permute.xlu0 %1652
      %1654 = vset.pattern.permute.xlu0 13
      %1655 = vperm.xlu0 %1654, %v158
      %v1656 = vpop.permute.xlu0 %1655
      %1657 = vset.pattern.permute.xlu0 13
      %1658 = vperm.xlu0 %1657, %v159
      %v1659 = vpop.permute.xlu0 %1658
      %1660 = vset.pattern.permute.xlu0 13
      %1661 = vperm.xlu0 %1660, %v160
      %v1662 = vpop.permute.xlu0 %1661
      %1663 = vset.pattern.permute.xlu0 13
      %1664 = vperm.xlu0 %1663, %v161
      %v1665 = vpop.permute.xlu0 %1664
      %1666 = vset.pattern.permute.xlu0 13
      %1667 = vperm.xlu0 %1666, %v162
      %v1668 = vpop.permute.xlu0 %1667
      %vm1669 = vcmp.eq.s32.totalorder %v1623, %v164
      %vm1670 = vcmp.eq.s32.totalorder %v1626, %v164
      %vm1671 = vcmp.eq.s32.totalorder %v1629, %v164
      %vm1672 = vcmp.eq.s32.totalorder %v1632, %v164
      %vm1673 = vcmp.eq.s32.totalorder %v1635, %v164
      %vm1674 = vcmp.eq.s32.totalorder %v1638, %v164
      %vm1675 = vcmp.eq.s32.totalorder %v1641, %v164
      %vm1676 = vcmp.eq.s32.totalorder %v1644, %v164
      %vm1677 = vcmp.eq.s32.totalorder %v1647, %v164
      %vm1678 = vcmp.eq.s32.totalorder %v1650, %v164
      %vm1679 = vcmp.eq.s32.totalorder %v1653, %v164
      %vm1680 = vcmp.eq.s32.totalorder %v1656, %v164
      %vm1681 = vcmp.eq.s32.totalorder %v1659, %v164
      %vm1682 = vcmp.eq.s32.totalorder %v1662, %v164
      %vm1683 = vcmp.eq.s32.totalorder %v1665, %v164
      %vm1684 = vcmp.eq.s32.totalorder %v1668, %v164
      %v1685 = vsel %vm1669, 1, 0
      %v1686 = vsel %vm1670, 1, 0
      %v1687 = vsel %vm1671, 1, 0
      %v1688 = vsel %vm1672, 1, 0
      %v1689 = vsel %vm1673, 1, 0
      %v1690 = vsel %vm1674, 1, 0
      %v1691 = vsel %vm1675, 1, 0
      %v1692 = vsel %vm1676, 1, 0
      %v1693 = vsel %vm1677, 1, 0
      %v1694 = vsel %vm1678, 1, 0
      %v1695 = vsel %vm1679, 1, 0
      %v1696 = vsel %vm1680, 1, 0
      %v1697 = vsel %vm1681, 1, 0
      %v1698 = vsel %vm1682, 1, 0
      %v1699 = vsel %vm1683, 1, 0
      %v1700 = vsel %vm1684, 1, 0
      %v1701 = vcvt.s32.f32 %v1685
      %v1702 = vcvt.s32.f32 %v1686
      %v1703 = vcvt.s32.f32 %v1687
      %v1704 = vcvt.s32.f32 %v1688
      %v1705 = vcvt.s32.f32 %v1689
      %v1706 = vcvt.s32.f32 %v1690
      %v1707 = vcvt.s32.f32 %v1691
      %v1708 = vcvt.s32.f32 %v1692
      %v1709 = vcvt.s32.f32 %v1693
      %v1710 = vcvt.s32.f32 %v1694
      %v1711 = vcvt.s32.f32 %v1695
      %v1712 = vcvt.s32.f32 %v1696
      %v1713 = vcvt.s32.f32 %v1697
      %v1714 = vcvt.s32.f32 %v1698
      %v1715 = vcvt.s32.f32 %v1699
      %v1716 = vcvt.s32.f32 %v1700
      %1717 = vst [vmem:[#allocation2 + $0x68] sm:$0xff] %v1701
      %1718 = vst [vmem:[#allocation2 + $0x188] sm:$0xff] %v1702
      %1719 = vst [vmem:[#allocation2 + $0x2a8] sm:$0xff] %v1703
      %1720 = vst [vmem:[#allocation2 + $0x3c8] sm:$0xff] %v1704
      %1721 = vst [vmem:[#allocation2 + $0x4e8] sm:$0xff] %v1705
      %1722 = vst [vmem:[#allocation2 + $0x608] sm:$0xff] %v1706
      %1723 = vst [vmem:[#allocation2 + $0x728] sm:$0xff] %v1707
      %1724 = vst [vmem:[#allocation2 + $0x848] sm:$0xff] %v1708
      %1725 = vst [vmem:[#allocation2 + $0x968] sm:$0xff] %v1709
      %1726 = vst [vmem:[#allocation2 + $0xa88] sm:$0xff] %v1710
      %1727 = vst [vmem:[#allocation2 + $0xba8] sm:$0xff] %v1711
      %1728 = vst [vmem:[#allocation2 + $0xcc8] sm:$0xff] %v1712
      %1729 = vst [vmem:[#allocation2 + $0xde8] sm:$0xff] %v1713
      %1730 = vst [vmem:[#allocation2 + $0xf08] sm:$0xff] %v1714
      %1731 = vst [vmem:[#allocation2 + $0x1028] sm:$0xff] %v1715
      %1732 = vst [vmem:[#allocation2 + $0x1148] sm:$0xff] %v1716
      %1733 = vset.pattern.permute.xlu0 14
      %1734 = vperm.xlu0 %1733, %v147
      %v1735 = vpop.permute.xlu0 %1734
      %1736 = vset.pattern.permute.xlu0 14
      %1737 = vperm.xlu0 %1736, %v148
      %v1738 = vpop.permute.xlu0 %1737
      %1739 = vset.pattern.permute.xlu0 14
      %1740 = vperm.xlu0 %1739, %v149
      %v1741 = vpop.permute.xlu0 %1740
      %1742 = vset.pattern.permute.xlu0 14
      %1743 = vperm.xlu0 %1742, %v150
      %v1744 = vpop.permute.xlu0 %1743
      %1745 = vset.pattern.permute.xlu0 14
      %1746 = vperm.xlu0 %1745, %v151
      %v1747 = vpop.permute.xlu0 %1746
      %1748 = vset.pattern.permute.xlu0 14
      %1749 = vperm.xlu0 %1748, %v152
      %v1750 = vpop.permute.xlu0 %1749
      %1751 = vset.pattern.permute.xlu0 14
      %1752 = vperm.xlu0 %1751, %v153
      %v1753 = vpop.permute.xlu0 %1752
      %1754 = vset.pattern.permute.xlu0 14
      %1755 = vperm.xlu0 %1754, %v154
      %v1756 = vpop.permute.xlu0 %1755
      %1757 = vset.pattern.permute.xlu0 14
      %1758 = vperm.xlu0 %1757, %v155
      %v1759 = vpop.permute.xlu0 %1758
      %1760 = vset.pattern.permute.xlu0 14
      %1761 = vperm.xlu0 %1760, %v156
      %v1762 = vpop.permute.xlu0 %1761
      %1763 = vset.pattern.permute.xlu0 14
      %1764 = vperm.xlu0 %1763, %v157
      %v1765 = vpop.permute.xlu0 %1764
      %1766 = vset.pattern.permute.xlu0 14
      %1767 = vperm.xlu0 %1766, %v158
      %v1768 = vpop.permute.xlu0 %1767
      %1769 = vset.pattern.permute.xlu0 14
      %1770 = vperm.xlu0 %1769, %v159
      %v1771 = vpop.permute.xlu0 %1770
      %1772 = vset.pattern.permute.xlu0 14
      %1773 = vperm.xlu0 %1772, %v160
      %v1774 = vpop.permute.xlu0 %1773
      %1775 = vset.pattern.permute.xlu0 14
      %1776 = vperm.xlu0 %1775, %v161
      %v1777 = vpop.permute.xlu0 %1776
      %1778 = vset.pattern.permute.xlu0 14
      %1779 = vperm.xlu0 %1778, %v162
      %v1780 = vpop.permute.xlu0 %1779
      %vm1781 = vcmp.eq.s32.totalorder %v1735, %v164
      %vm1782 = vcmp.eq.s32.totalorder %v1738, %v164
      %vm1783 = vcmp.eq.s32.totalorder %v1741, %v164
      %vm1784 = vcmp.eq.s32.totalorder %v1744, %v164
      %vm1785 = vcmp.eq.s32.totalorder %v1747, %v164
      %vm1786 = vcmp.eq.s32.totalorder %v1750, %v164
      %vm1787 = vcmp.eq.s32.totalorder %v1753, %v164
      %vm1788 = vcmp.eq.s32.totalorder %v1756, %v164
      %vm1789 = vcmp.eq.s32.totalorder %v1759, %v164
      %vm1790 = vcmp.eq.s32.totalorder %v1762, %v164
      %vm1791 = vcmp.eq.s32.totalorder %v1765, %v164
      %vm1792 = vcmp.eq.s32.totalorder %v1768, %v164
      %vm1793 = vcmp.eq.s32.totalorder %v1771, %v164
      %vm1794 = vcmp.eq.s32.totalorder %v1774, %v164
      %vm1795 = vcmp.eq.s32.totalorder %v1777, %v164
      %vm1796 = vcmp.eq.s32.totalorder %v1780, %v164
      %v1797 = vsel %vm1781, 1, 0
      %v1798 = vsel %vm1782, 1, 0
      %v1799 = vsel %vm1783, 1, 0
      %v1800 = vsel %vm1784, 1, 0
      %v1801 = vsel %vm1785, 1, 0
      %v1802 = vsel %vm1786, 1, 0
      %v1803 = vsel %vm1787, 1, 0
      %v1804 = vsel %vm1788, 1, 0
      %v1805 = vsel %vm1789, 1, 0
      %v1806 = vsel %vm1790, 1, 0
      %v1807 = vsel %vm1791, 1, 0
      %v1808 = vsel %vm1792, 1, 0
      %v1809 = vsel %vm1793, 1, 0
      %v1810 = vsel %vm1794, 1, 0
      %v1811 = vsel %vm1795, 1, 0
      %v1812 = vsel %vm1796, 1, 0
      %v1813 = vcvt.s32.f32 %v1797
      %v1814 = vcvt.s32.f32 %v1798
      %v1815 = vcvt.s32.f32 %v1799
      %v1816 = vcvt.s32.f32 %v1800
      %v1817 = vcvt.s32.f32 %v1801
      %v1818 = vcvt.s32.f32 %v1802
      %v1819 = vcvt.s32.f32 %v1803
      %v1820 = vcvt.s32.f32 %v1804
      %v1821 = vcvt.s32.f32 %v1805
      %v1822 = vcvt.s32.f32 %v1806
      %v1823 = vcvt.s32.f32 %v1807
      %v1824 = vcvt.s32.f32 %v1808
      %v1825 = vcvt.s32.f32 %v1809
      %v1826 = vcvt.s32.f32 %v1810
      %v1827 = vcvt.s32.f32 %v1811
      %v1828 = vcvt.s32.f32 %v1812
      %1829 = vst [vmem:[#allocation2 + $0x70] sm:$0xff] %v1813
      %1830 = vst [vmem:[#allocation2 + $0x190] sm:$0xff] %v1814
      %1831 = vst [vmem:[#allocation2 + $0x2b0] sm:$0xff] %v1815
      %1832 = vst [vmem:[#allocation2 + $0x3d0] sm:$0xff] %v1816
      %1833 = vst [vmem:[#allocation2 + $0x4f0] sm:$0xff] %v1817
      %1834 = vst [vmem:[#allocation2 + $0x610] sm:$0xff] %v1818
      %1835 = vst [vmem:[#allocation2 + $0x730] sm:$0xff] %v1819
      %1836 = vst [vmem:[#allocation2 + $0x850] sm:$0xff] %v1820
      %1837 = vst [vmem:[#allocation2 + $0x970] sm:$0xff] %v1821
      %1838 = vst [vmem:[#allocation2 + $0xa90] sm:$0xff] %v1822
      %1839 = vst [vmem:[#allocation2 + $0xbb0] sm:$0xff] %v1823
      %1840 = vst [vmem:[#allocation2 + $0xcd0] sm:$0xff] %v1824
      %1841 = vst [vmem:[#allocation2 + $0xdf0] sm:$0xff] %v1825
      %1842 = vst [vmem:[#allocation2 + $0xf10] sm:$0xff] %v1826
      %1843 = vst [vmem:[#allocation2 + $0x1030] sm:$0xff] %v1827
      %1844 = vst [vmem:[#allocation2 + $0x1150] sm:$0xff] %v1828
      %1845 = vset.pattern.permute.xlu0 15
      %1846 = vperm.xlu0 %1845, %v147
      %v1847 = vpop.permute.xlu0 %1846
      %1848 = vset.pattern.permute.xlu0 15
      %1849 = vperm.xlu0 %1848, %v148
      %v1850 = vpop.permute.xlu0 %1849
      %1851 = vset.pattern.permute.xlu0 15
      %1852 = vperm.xlu0 %1851, %v149
      %v1853 = vpop.permute.xlu0 %1852
      %1854 = vset.pattern.permute.xlu0 15
      %1855 = vperm.xlu0 %1854, %v150
      %v1856 = vpop.permute.xlu0 %1855
      %1857 = vset.pattern.permute.xlu0 15
      %1858 = vperm.xlu0 %1857, %v151
      %v1859 = vpop.permute.xlu0 %1858
      %1860 = vset.pattern.permute.xlu0 15
      %1861 = vperm.xlu0 %1860, %v152
      %v1862 = vpop.permute.xlu0 %1861
      %1863 = vset.pattern.permute.xlu0 15
      %1864 = vperm.xlu0 %1863, %v153
      %v1865 = vpop.permute.xlu0 %1864
      %1866 = vset.pattern.permute.xlu0 15
      %1867 = vperm.xlu0 %1866, %v154
      %v1868 = vpop.permute.xlu0 %1867
      %1869 = vset.pattern.permute.xlu0 15
      %1870 = vperm.xlu0 %1869, %v155
      %v1871 = vpop.permute.xlu0 %1870
      %1872 = vset.pattern.permute.xlu0 15
      %1873 = vperm.xlu0 %1872, %v156
      %v1874 = vpop.permute.xlu0 %1873
      %1875 = vset.pattern.permute.xlu0 15
      %1876 = vperm.xlu0 %1875, %v157
      %v1877 = vpop.permute.xlu0 %1876
      %1878 = vset.pattern.permute.xlu0 15
      %1879 = vperm.xlu0 %1878, %v158
      %v1880 = vpop.permute.xlu0 %1879
      %1881 = vset.pattern.permute.xlu0 15
      %1882 = vperm.xlu0 %1881, %v159
      %v1883 = vpop.permute.xlu0 %1882
      %1884 = vset.pattern.permute.xlu0 15
      %1885 = vperm.xlu0 %1884, %v160
      %v1886 = vpop.permute.xlu0 %1885
      %1887 = vset.pattern.permute.xlu0 15
      %1888 = vperm.xlu0 %1887, %v161
      %v1889 = vpop.permute.xlu0 %1888
      %1890 = vset.pattern.permute.xlu0 15
      %1891 = vperm.xlu0 %1890, %v162
      %v1892 = vpop.permute.xlu0 %1891
      %vm1893 = vcmp.eq.s32.totalorder %v1847, %v164
      %vm1894 = vcmp.eq.s32.totalorder %v1850, %v164
      %vm1895 = vcmp.eq.s32.totalorder %v1853, %v164
      %vm1896 = vcmp.eq.s32.totalorder %v1856, %v164
      %vm1897 = vcmp.eq.s32.totalorder %v1859, %v164
      %vm1898 = vcmp.eq.s32.totalorder %v1862, %v164
      %vm1899 = vcmp.eq.s32.totalorder %v1865, %v164
      %vm1900 = vcmp.eq.s32.totalorder %v1868, %v164
      %vm1901 = vcmp.eq.s32.totalorder %v1871, %v164
      %vm1902 = vcmp.eq.s32.totalorder %v1874, %v164
      %vm1903 = vcmp.eq.s32.totalorder %v1877, %v164
      %vm1904 = vcmp.eq.s32.totalorder %v1880, %v164
      %vm1905 = vcmp.eq.s32.totalorder %v1883, %v164
      %vm1906 = vcmp.eq.s32.totalorder %v1886, %v164
      %vm1907 = vcmp.eq.s32.totalorder %v1889, %v164
      %vm1908 = vcmp.eq.s32.totalorder %v1892, %v164
      %v1909 = vsel %vm1893, 1, 0
      %v1910 = vsel %vm1894, 1, 0
      %v1911 = vsel %vm1895, 1, 0
      %v1912 = vsel %vm1896, 1, 0
      %v1913 = vsel %vm1897, 1, 0
      %v1914 = vsel %vm1898, 1, 0
      %v1915 = vsel %vm1899, 1, 0
      %v1916 = vsel %vm1900, 1, 0
      %v1917 = vsel %vm1901, 1, 0
      %v1918 = vsel %vm1902, 1, 0
      %v1919 = vsel %vm1903, 1, 0
      %v1920 = vsel %vm1904, 1, 0
      %v1921 = vsel %vm1905, 1, 0
      %v1922 = vsel %vm1906, 1, 0
      %v1923 = vsel %vm1907, 1, 0
      %v1924 = vsel %vm1908, 1, 0
      %v1925 = vcvt.s32.f32 %v1909
      %v1926 = vcvt.s32.f32 %v1910
      %v1927 = vcvt.s32.f32 %v1911
      %v1928 = vcvt.s32.f32 %v1912
      %v1929 = vcvt.s32.f32 %v1913
      %v1930 = vcvt.s32.f32 %v1914
      %v1931 = vcvt.s32.f32 %v1915
      %v1932 = vcvt.s32.f32 %v1916
      %v1933 = vcvt.s32.f32 %v1917
      %v1934 = vcvt.s32.f32 %v1918
      %v1935 = vcvt.s32.f32 %v1919
      %v1936 = vcvt.s32.f32 %v1920
      %v1937 = vcvt.s32.f32 %v1921
      %v1938 = vcvt.s32.f32 %v1922
      %v1939 = vcvt.s32.f32 %v1923
      %v1940 = vcvt.s32.f32 %v1924
      %1941 = vst [vmem:[#allocation2 + $0x78] sm:$0xff] %v1925
      %1942 = vst [vmem:[#allocation2 + $0x198] sm:$0xff] %v1926
      %1943 = vst [vmem:[#allocation2 + $0x2b8] sm:$0xff] %v1927
      %1944 = vst [vmem:[#allocation2 + $0x3d8] sm:$0xff] %v1928
      %1945 = vst [vmem:[#allocation2 + $0x4f8] sm:$0xff] %v1929
      %1946 = vst [vmem:[#allocation2 + $0x618] sm:$0xff] %v1930
      %1947 = vst [vmem:[#allocation2 + $0x738] sm:$0xff] %v1931
      %1948 = vst [vmem:[#allocation2 + $0x858] sm:$0xff] %v1932
      %1949 = vst [vmem:[#allocation2 + $0x978] sm:$0xff] %v1933
      %1950 = vst [vmem:[#allocation2 + $0xa98] sm:$0xff] %v1934
      %1951 = vst [vmem:[#allocation2 + $0xbb8] sm:$0xff] %v1935
      %1952 = vst [vmem:[#allocation2 + $0xcd8] sm:$0xff] %v1936
      %1953 = vst [vmem:[#allocation2 + $0xdf8] sm:$0xff] %v1937
      %1954 = vst [vmem:[#allocation2 + $0xf18] sm:$0xff] %v1938
      %1955 = vst [vmem:[#allocation2 + $0x1038] sm:$0xff] %v1939
      %1956 = vst [vmem:[#allocation2 + $0x1158] sm:$0xff] %v1940
      %1957 = vset.pattern.permute.xlu0 16
      %1958 = vperm.xlu0 %1957, %v147
      %v1959 = vpop.permute.xlu0 %1958
      %1960 = vset.pattern.permute.xlu0 16
      %1961 = vperm.xlu0 %1960, %v148
      %v1962 = vpop.permute.xlu0 %1961
      %1963 = vset.pattern.permute.xlu0 16
      %1964 = vperm.xlu0 %1963, %v149
      %v1965 = vpop.permute.xlu0 %1964
      %1966 = vset.pattern.permute.xlu0 16
      %1967 = vperm.xlu0 %1966, %v150
      %v1968 = vpop.permute.xlu0 %1967
      %1969 = vset.pattern.permute.xlu0 16
      %1970 = vperm.xlu0 %1969, %v151
      %v1971 = vpop.permute.xlu0 %1970
      %1972 = vset.pattern.permute.xlu0 16
      %1973 = vperm.xlu0 %1972, %v152
      %v1974 = vpop.permute.xlu0 %1973
      %1975 = vset.pattern.permute.xlu0 16
      %1976 = vperm.xlu0 %1975, %v153
      %v1977 = vpop.permute.xlu0 %1976
      %1978 = vset.pattern.permute.xlu0 16
      %1979 = vperm.xlu0 %1978, %v154
      %v1980 = vpop.permute.xlu0 %1979
      %1981 = vset.pattern.permute.xlu0 16
      %1982 = vperm.xlu0 %1981, %v155
      %v1983 = vpop.permute.xlu0 %1982
      %1984 = vset.pattern.permute.xlu0 16
      %1985 = vperm.xlu0 %1984, %v156
      %v1986 = vpop.permute.xlu0 %1985
      %1987 = vset.pattern.permute.xlu0 16
      %1988 = vperm.xlu0 %1987, %v157
      %v1989 = vpop.permute.xlu0 %1988
      %1990 = vset.pattern.permute.xlu0 16
      %1991 = vperm.xlu0 %1990, %v158
      %v1992 = vpop.permute.xlu0 %1991
      %1993 = vset.pattern.permute.xlu0 16
      %1994 = vperm.xlu0 %1993, %v159
      %v1995 = vpop.permute.xlu0 %1994
      %1996 = vset.pattern.permute.xlu0 16
      %1997 = vperm.xlu0 %1996, %v160
      %v1998 = vpop.permute.xlu0 %1997
      %1999 = vset.pattern.permute.xlu0 16
      %2000 = vperm.xlu0 %1999, %v161
      %v2001 = vpop.permute.xlu0 %2000
      %2002 = vset.pattern.permute.xlu0 16
      %2003 = vperm.xlu0 %2002, %v162
      %v2004 = vpop.permute.xlu0 %2003
      %vm2005 = vcmp.eq.s32.totalorder %v1959, %v164
      %vm2006 = vcmp.eq.s32.totalorder %v1962, %v164
      %vm2007 = vcmp.eq.s32.totalorder %v1965, %v164
      %vm2008 = vcmp.eq.s32.totalorder %v1968, %v164
      %vm2009 = vcmp.eq.s32.totalorder %v1971, %v164
      %vm2010 = vcmp.eq.s32.totalorder %v1974, %v164
      %vm2011 = vcmp.eq.s32.totalorder %v1977, %v164
      %vm2012 = vcmp.eq.s32.totalorder %v1980, %v164
      %vm2013 = vcmp.eq.s32.totalorder %v1983, %v164
      %vm2014 = vcmp.eq.s32.totalorder %v1986, %v164
      %vm2015 = vcmp.eq.s32.totalorder %v1989, %v164
      %vm2016 = vcmp.eq.s32.totalorder %v1992, %v164
      %vm2017 = vcmp.eq.s32.totalorder %v1995, %v164
      %vm2018 = vcmp.eq.s32.totalorder %v1998, %v164
      %vm2019 = vcmp.eq.s32.totalorder %v2001, %v164
      %vm2020 = vcmp.eq.s32.totalorder %v2004, %v164
      %v2021 = vsel %vm2005, 1, 0
      %v2022 = vsel %vm2006, 1, 0
      %v2023 = vsel %vm2007, 1, 0
      %v2024 = vsel %vm2008, 1, 0
      %v2025 = vsel %vm2009, 1, 0
      %v2026 = vsel %vm2010, 1, 0
      %v2027 = vsel %vm2011, 1, 0
      %v2028 = vsel %vm2012, 1, 0
      %v2029 = vsel %vm2013, 1, 0
      %v2030 = vsel %vm2014, 1, 0
      %v2031 = vsel %vm2015, 1, 0
      %v2032 = vsel %vm2016, 1, 0
      %v2033 = vsel %vm2017, 1, 0
      %v2034 = vsel %vm2018, 1, 0
      %v2035 = vsel %vm2019, 1, 0
      %v2036 = vsel %vm2020, 1, 0
      %v2037 = vcvt.s32.f32 %v2021
      %v2038 = vcvt.s32.f32 %v2022
      %v2039 = vcvt.s32.f32 %v2023
      %v2040 = vcvt.s32.f32 %v2024
      %v2041 = vcvt.s32.f32 %v2025
      %v2042 = vcvt.s32.f32 %v2026
      %v2043 = vcvt.s32.f32 %v2027
      %v2044 = vcvt.s32.f32 %v2028
      %v2045 = vcvt.s32.f32 %v2029
      %v2046 = vcvt.s32.f32 %v2030
      %v2047 = vcvt.s32.f32 %v2031
      %v2048 = vcvt.s32.f32 %v2032
      %v2049 = vcvt.s32.f32 %v2033
      %v2050 = vcvt.s32.f32 %v2034
      %v2051 = vcvt.s32.f32 %v2035
      %v2052 = vcvt.s32.f32 %v2036
      %2053 = vst [vmem:[#allocation2 + $0x80] sm:$0xff] %v2037
      %2054 = vst [vmem:[#allocation2 + $0x1a0] sm:$0xff] %v2038
      %2055 = vst [vmem:[#allocation2 + $0x2c0] sm:$0xff] %v2039
      %2056 = vst [vmem:[#allocation2 + $0x3e0] sm:$0xff] %v2040
      %2057 = vst [vmem:[#allocation2 + $0x500] sm:$0xff] %v2041
      %2058 = vst [vmem:[#allocation2 + $0x620] sm:$0xff] %v2042
      %2059 = vst [vmem:[#allocation2 + $0x740] sm:$0xff] %v2043
      %2060 = vst [vmem:[#allocation2 + $0x860] sm:$0xff] %v2044
      %2061 = vst [vmem:[#allocation2 + $0x980] sm:$0xff] %v2045
      %2062 = vst [vmem:[#allocation2 + $0xaa0] sm:$0xff] %v2046
      %2063 = vst [vmem:[#allocation2 + $0xbc0] sm:$0xff] %v2047
      %2064 = vst [vmem:[#allocation2 + $0xce0] sm:$0xff] %v2048
      %2065 = vst [vmem:[#allocation2 + $0xe00] sm:$0xff] %v2049
      %2066 = vst [vmem:[#allocation2 + $0xf20] sm:$0xff] %v2050
      %2067 = vst [vmem:[#allocation2 + $0x1040] sm:$0xff] %v2051
      %2068 = vst [vmem:[#allocation2 + $0x1160] sm:$0xff] %v2052
      %2069 = vset.pattern.permute.xlu0 17
      %2070 = vperm.xlu0 %2069, %v147
      %v2071 = vpop.permute.xlu0 %2070
      %2072 = vset.pattern.permute.xlu0 17
      %2073 = vperm.xlu0 %2072, %v148
      %v2074 = vpop.permute.xlu0 %2073
      %2075 = vset.pattern.permute.xlu0 17
      %2076 = vperm.xlu0 %2075, %v149
      %v2077 = vpop.permute.xlu0 %2076
      %2078 = vset.pattern.permute.xlu0 17
      %2079 = vperm.xlu0 %2078, %v150
      %v2080 = vpop.permute.xlu0 %2079
      %2081 = vset.pattern.permute.xlu0 17
      %2082 = vperm.xlu0 %2081, %v151
      %v2083 = vpop.permute.xlu0 %2082
      %2084 = vset.pattern.permute.xlu0 17
      %2085 = vperm.xlu0 %2084, %v152
      %v2086 = vpop.permute.xlu0 %2085
      %2087 = vset.pattern.permute.xlu0 17
      %2088 = vperm.xlu0 %2087, %v153
      %v2089 = vpop.permute.xlu0 %2088
      %2090 = vset.pattern.permute.xlu0 17
      %2091 = vperm.xlu0 %2090, %v154
      %v2092 = vpop.permute.xlu0 %2091
      %2093 = vset.pattern.permute.xlu0 17
      %2094 = vperm.xlu0 %2093, %v155
      %v2095 = vpop.permute.xlu0 %2094
      %2096 = vset.pattern.permute.xlu0 17
      %2097 = vperm.xlu0 %2096, %v156
      %v2098 = vpop.permute.xlu0 %2097
      %2099 = vset.pattern.permute.xlu0 17
      %2100 = vperm.xlu0 %2099, %v157
      %v2101 = vpop.permute.xlu0 %2100
      %2102 = vset.pattern.permute.xlu0 17
      %2103 = vperm.xlu0 %2102, %v158
      %v2104 = vpop.permute.xlu0 %2103
      %2105 = vset.pattern.permute.xlu0 17
      %2106 = vperm.xlu0 %2105, %v159
      %v2107 = vpop.permute.xlu0 %2106
      %2108 = vset.pattern.permute.xlu0 17
      %2109 = vperm.xlu0 %2108, %v160
      %v2110 = vpop.permute.xlu0 %2109
      %2111 = vset.pattern.permute.xlu0 17
      %2112 = vperm.xlu0 %2111, %v161
      %v2113 = vpop.permute.xlu0 %2112
      %2114 = vset.pattern.permute.xlu0 17
      %2115 = vperm.xlu0 %2114, %v162
      %v2116 = vpop.permute.xlu0 %2115
      %vm2117 = vcmp.eq.s32.totalorder %v2071, %v164
      %vm2118 = vcmp.eq.s32.totalorder %v2074, %v164
      %vm2119 = vcmp.eq.s32.totalorder %v2077, %v164
      %vm2120 = vcmp.eq.s32.totalorder %v2080, %v164
      %vm2121 = vcmp.eq.s32.totalorder %v2083, %v164
      %vm2122 = vcmp.eq.s32.totalorder %v2086, %v164
      %vm2123 = vcmp.eq.s32.totalorder %v2089, %v164
      %vm2124 = vcmp.eq.s32.totalorder %v2092, %v164
      %vm2125 = vcmp.eq.s32.totalorder %v2095, %v164
      %vm2126 = vcmp.eq.s32.totalorder %v2098, %v164
      %vm2127 = vcmp.eq.s32.totalorder %v2101, %v164
      %vm2128 = vcmp.eq.s32.totalorder %v2104, %v164
      %vm2129 = vcmp.eq.s32.totalorder %v2107, %v164
      %vm2130 = vcmp.eq.s32.totalorder %v2110, %v164
      %vm2131 = vcmp.eq.s32.totalorder %v2113, %v164
      %vm2132 = vcmp.eq.s32.totalorder %v2116, %v164
      %v2133 = vsel %vm2117, 1, 0
      %v2134 = vsel %vm2118, 1, 0
      %v2135 = vsel %vm2119, 1, 0
      %v2136 = vsel %vm2120, 1, 0
      %v2137 = vsel %vm2121, 1, 0
      %v2138 = vsel %vm2122, 1, 0
      %v2139 = vsel %vm2123, 1, 0
      %v2140 = vsel %vm2124, 1, 0
      %v2141 = vsel %vm2125, 1, 0
      %v2142 = vsel %vm2126, 1, 0
      %v2143 = vsel %vm2127, 1, 0
      %v2144 = vsel %vm2128, 1, 0
      %v2145 = vsel %vm2129, 1, 0
      %v2146 = vsel %vm2130, 1, 0
      %v2147 = vsel %vm2131, 1, 0
      %v2148 = vsel %vm2132, 1, 0
      %v2149 = vcvt.s32.f32 %v2133
      %v2150 = vcvt.s32.f32 %v2134
      %v2151 = vcvt.s32.f32 %v2135
      %v2152 = vcvt.s32.f32 %v2136
      %v2153 = vcvt.s32.f32 %v2137
      %v2154 = vcvt.s32.f32 %v2138
      %v2155 = vcvt.s32.f32 %v2139
      %v2156 = vcvt.s32.f32 %v2140
      %v2157 = vcvt.s32.f32 %v2141
      %v2158 = vcvt.s32.f32 %v2142
      %v2159 = vcvt.s32.f32 %v2143
      %v2160 = vcvt.s32.f32 %v2144
      %v2161 = vcvt.s32.f32 %v2145
      %v2162 = vcvt.s32.f32 %v2146
      %v2163 = vcvt.s32.f32 %v2147
      %v2164 = vcvt.s32.f32 %v2148
      %2165 = vst [vmem:[#allocation2 + $0x88] sm:$0xff] %v2149
      %2166 = vst [vmem:[#allocation2 + $0x1a8] sm:$0xff] %v2150
      %2167 = vst [vmem:[#allocation2 + $0x2c8] sm:$0xff] %v2151
      %2168 = vst [vmem:[#allocation2 + $0x3e8] sm:$0xff] %v2152
      %2169 = vst [vmem:[#allocation2 + $0x508] sm:$0xff] %v2153
      %2170 = vst [vmem:[#allocation2 + $0x628] sm:$0xff] %v2154
      %2171 = vst [vmem:[#allocation2 + $0x748] sm:$0xff] %v2155
      %2172 = vst [vmem:[#allocation2 + $0x868] sm:$0xff] %v2156
      %2173 = vst [vmem:[#allocation2 + $0x988] sm:$0xff] %v2157
      %2174 = vst [vmem:[#allocation2 + $0xaa8] sm:$0xff] %v2158
      %2175 = vst [vmem:[#allocation2 + $0xbc8] sm:$0xff] %v2159
      %2176 = vst [vmem:[#allocation2 + $0xce8] sm:$0xff] %v2160
      %2177 = vst [vmem:[#allocation2 + $0xe08] sm:$0xff] %v2161
      %2178 = vst [vmem:[#allocation2 + $0xf28] sm:$0xff] %v2162
      %2179 = vst [vmem:[#allocation2 + $0x1048] sm:$0xff] %v2163
      %2180 = vst [vmem:[#allocation2 + $0x1168] sm:$0xff] %v2164
      %2181 = vset.pattern.permute.xlu0 18
      %2182 = vperm.xlu0 %2181, %v147
      %v2183 = vpop.permute.xlu0 %2182
      %2184 = vset.pattern.permute.xlu0 18
      %2185 = vperm.xlu0 %2184, %v148
      %v2186 = vpop.permute.xlu0 %2185
      %2187 = vset.pattern.permute.xlu0 18
      %2188 = vperm.xlu0 %2187, %v149
      %v2189 = vpop.permute.xlu0 %2188
      %2190 = vset.pattern.permute.xlu0 18
      %2191 = vperm.xlu0 %2190, %v150
      %v2192 = vpop.permute.xlu0 %2191
      %2193 = vset.pattern.permute.xlu0 18
      %2194 = vperm.xlu0 %2193, %v151
      %v2195 = vpop.permute.xlu0 %2194
      %2196 = vset.pattern.permute.xlu0 18
      %2197 = vperm.xlu0 %2196, %v152
      %v2198 = vpop.permute.xlu0 %2197
      %2199 = vset.pattern.permute.xlu0 18
      %2200 = vperm.xlu0 %2199, %v153
      %v2201 = vpop.permute.xlu0 %2200
      %2202 = vset.pattern.permute.xlu0 18
      %2203 = vperm.xlu0 %2202, %v154
      %v2204 = vpop.permute.xlu0 %2203
      %2205 = vset.pattern.permute.xlu0 18
      %2206 = vperm.xlu0 %2205, %v155
      %v2207 = vpop.permute.xlu0 %2206
      %2208 = vset.pattern.permute.xlu0 18
      %2209 = vperm.xlu0 %2208, %v156
      %v2210 = vpop.permute.xlu0 %2209
      %2211 = vset.pattern.permute.xlu0 18
      %2212 = vperm.xlu0 %2211, %v157
      %v2213 = vpop.permute.xlu0 %2212
      %2214 = vset.pattern.permute.xlu0 18
      %2215 = vperm.xlu0 %2214, %v158
      %v2216 = vpop.permute.xlu0 %2215
      %2217 = vset.pattern.permute.xlu0 18
      %2218 = vperm.xlu0 %2217, %v159
      %v2219 = vpop.permute.xlu0 %2218
      %2220 = vset.pattern.permute.xlu0 18
      %2221 = vperm.xlu0 %2220, %v160
      %v2222 = vpop.permute.xlu0 %2221
      %2223 = vset.pattern.permute.xlu0 18
      %2224 = vperm.xlu0 %2223, %v161
      %v2225 = vpop.permute.xlu0 %2224
      %2226 = vset.pattern.permute.xlu0 18
      %2227 = vperm.xlu0 %2226, %v162
      %v2228 = vpop.permute.xlu0 %2227
      %vm2229 = vcmp.eq.s32.totalorder %v2183, %v164
      %vm2230 = vcmp.eq.s32.totalorder %v2186, %v164
      %vm2231 = vcmp.eq.s32.totalorder %v2189, %v164
      %vm2232 = vcmp.eq.s32.totalorder %v2192, %v164
      %vm2233 = vcmp.eq.s32.totalorder %v2195, %v164
      %vm2234 = vcmp.eq.s32.totalorder %v2198, %v164
      %vm2235 = vcmp.eq.s32.totalorder %v2201, %v164
      %vm2236 = vcmp.eq.s32.totalorder %v2204, %v164
      %vm2237 = vcmp.eq.s32.totalorder %v2207, %v164
      %vm2238 = vcmp.eq.s32.totalorder %v2210, %v164
      %vm2239 = vcmp.eq.s32.totalorder %v2213, %v164
      %vm2240 = vcmp.eq.s32.totalorder %v2216, %v164
      %vm2241 = vcmp.eq.s32.totalorder %v2219, %v164
      %vm2242 = vcmp.eq.s32.totalorder %v2222, %v164
      %vm2243 = vcmp.eq.s32.totalorder %v2225, %v164
      %vm2244 = vcmp.eq.s32.totalorder %v2228, %v164
      %v2245 = vsel %vm2229, 1, 0
      %v2246 = vsel %vm2230, 1, 0
      %v2247 = vsel %vm2231, 1, 0
      %v2248 = vsel %vm2232, 1, 0
      %v2249 = vsel %vm2233, 1, 0
      %v2250 = vsel %vm2234, 1, 0
      %v2251 = vsel %vm2235, 1, 0
      %v2252 = vsel %vm2236, 1, 0
      %v2253 = vsel %vm2237, 1, 0
      %v2254 = vsel %vm2238, 1, 0
      %v2255 = vsel %vm2239, 1, 0
      %v2256 = vsel %vm2240, 1, 0
      %v2257 = vsel %vm2241, 1, 0
      %v2258 = vsel %vm2242, 1, 0
      %v2259 = vsel %vm2243, 1, 0
      %v2260 = vsel %vm2244, 1, 0
      %v2261 = vcvt.s32.f32 %v2245
      %v2262 = vcvt.s32.f32 %v2246
      %v2263 = vcvt.s32.f32 %v2247
      %v2264 = vcvt.s32.f32 %v2248
      %v2265 = vcvt.s32.f32 %v2249
      %v2266 = vcvt.s32.f32 %v2250
      %v2267 = vcvt.s32.f32 %v2251
      %v2268 = vcvt.s32.f32 %v2252
      %v2269 = vcvt.s32.f32 %v2253
      %v2270 = vcvt.s32.f32 %v2254
      %v2271 = vcvt.s32.f32 %v2255
      %v2272 = vcvt.s32.f32 %v2256
      %v2273 = vcvt.s32.f32 %v2257
      %v2274 = vcvt.s32.f32 %v2258
      %v2275 = vcvt.s32.f32 %v2259
      %v2276 = vcvt.s32.f32 %v2260
      %2277 = vst [vmem:[#allocation2 + $0x90] sm:$0xff] %v2261
      %2278 = vst [vmem:[#allocation2 + $0x1b0] sm:$0xff] %v2262
      %2279 = vst [vmem:[#allocation2 + $0x2d0] sm:$0xff] %v2263
      %2280 = vst [vmem:[#allocation2 + $0x3f0] sm:$0xff] %v2264
      %2281 = vst [vmem:[#allocation2 + $0x510] sm:$0xff] %v2265
      %2282 = vst [vmem:[#allocation2 + $0x630] sm:$0xff] %v2266
      %2283 = vst [vmem:[#allocation2 + $0x750] sm:$0xff] %v2267
      %2284 = vst [vmem:[#allocation2 + $0x870] sm:$0xff] %v2268
      %2285 = vst [vmem:[#allocation2 + $0x990] sm:$0xff] %v2269
      %2286 = vst [vmem:[#allocation2 + $0xab0] sm:$0xff] %v2270
      %2287 = vst [vmem:[#allocation2 + $0xbd0] sm:$0xff] %v2271
      %2288 = vst [vmem:[#allocation2 + $0xcf0] sm:$0xff] %v2272
      %2289 = vst [vmem:[#allocation2 + $0xe10] sm:$0xff] %v2273
      %2290 = vst [vmem:[#allocation2 + $0xf30] sm:$0xff] %v2274
      %2291 = vst [vmem:[#allocation2 + $0x1050] sm:$0xff] %v2275
      %2292 = vst [vmem:[#allocation2 + $0x1170] sm:$0xff] %v2276
      %2293 = vset.pattern.permute.xlu0 19
      %2294 = vperm.xlu0 %2293, %v147
      %v2295 = vpop.permute.xlu0 %2294
      %2296 = vset.pattern.permute.xlu0 19
      %2297 = vperm.xlu0 %2296, %v148
      %v2298 = vpop.permute.xlu0 %2297
      %2299 = vset.pattern.permute.xlu0 19
      %2300 = vperm.xlu0 %2299, %v149
      %v2301 = vpop.permute.xlu0 %2300
      %2302 = vset.pattern.permute.xlu0 19
      %2303 = vperm.xlu0 %2302, %v150
      %v2304 = vpop.permute.xlu0 %2303
      %2305 = vset.pattern.permute.xlu0 19
      %2306 = vperm.xlu0 %2305, %v151
      %v2307 = vpop.permute.xlu0 %2306
      %2308 = vset.pattern.permute.xlu0 19
      %2309 = vperm.xlu0 %2308, %v152
      %v2310 = vpop.permute.xlu0 %2309
      %2311 = vset.pattern.permute.xlu0 19
      %2312 = vperm.xlu0 %2311, %v153
      %v2313 = vpop.permute.xlu0 %2312
      %2314 = vset.pattern.permute.xlu0 19
      %2315 = vperm.xlu0 %2314, %v154
      %v2316 = vpop.permute.xlu0 %2315
      %2317 = vset.pattern.permute.xlu0 19
      %2318 = vperm.xlu0 %2317, %v155
      %v2319 = vpop.permute.xlu0 %2318
      %2320 = vset.pattern.permute.xlu0 19
      %2321 = vperm.xlu0 %2320, %v156
      %v2322 = vpop.permute.xlu0 %2321
      %2323 = vset.pattern.permute.xlu0 19
      %2324 = vperm.xlu0 %2323, %v157
      %v2325 = vpop.permute.xlu0 %2324
      %2326 = vset.pattern.permute.xlu0 19
      %2327 = vperm.xlu0 %2326, %v158
      %v2328 = vpop.permute.xlu0 %2327
      %2329 = vset.pattern.permute.xlu0 19
      %2330 = vperm.xlu0 %2329, %v159
      %v2331 = vpop.permute.xlu0 %2330
      %2332 = vset.pattern.permute.xlu0 19
      %2333 = vperm.xlu0 %2332, %v160
      %v2334 = vpop.permute.xlu0 %2333
      %2335 = vset.pattern.permute.xlu0 19
      %2336 = vperm.xlu0 %2335, %v161
      %v2337 = vpop.permute.xlu0 %2336
      %2338 = vset.pattern.permute.xlu0 19
      %2339 = vperm.xlu0 %2338, %v162
      %v2340 = vpop.permute.xlu0 %2339
      %vm2341 = vcmp.eq.s32.totalorder %v2295, %v164
      %vm2342 = vcmp.eq.s32.totalorder %v2298, %v164
      %vm2343 = vcmp.eq.s32.totalorder %v2301, %v164
      %vm2344 = vcmp.eq.s32.totalorder %v2304, %v164
      %vm2345 = vcmp.eq.s32.totalorder %v2307, %v164
      %vm2346 = vcmp.eq.s32.totalorder %v2310, %v164
      %vm2347 = vcmp.eq.s32.totalorder %v2313, %v164
      %vm2348 = vcmp.eq.s32.totalorder %v2316, %v164
      %vm2349 = vcmp.eq.s32.totalorder %v2319, %v164
      %vm2350 = vcmp.eq.s32.totalorder %v2322, %v164
      %vm2351 = vcmp.eq.s32.totalorder %v2325, %v164
      %vm2352 = vcmp.eq.s32.totalorder %v2328, %v164
      %vm2353 = vcmp.eq.s32.totalorder %v2331, %v164
      %vm2354 = vcmp.eq.s32.totalorder %v2334, %v164
      %vm2355 = vcmp.eq.s32.totalorder %v2337, %v164
      %vm2356 = vcmp.eq.s32.totalorder %v2340, %v164
      %v2357 = vsel %vm2341, 1, 0
      %v2358 = vsel %vm2342, 1, 0
      %v2359 = vsel %vm2343, 1, 0
      %v2360 = vsel %vm2344, 1, 0
      %v2361 = vsel %vm2345, 1, 0
      %v2362 = vsel %vm2346, 1, 0
      %v2363 = vsel %vm2347, 1, 0
      %v2364 = vsel %vm2348, 1, 0
      %v2365 = vsel %vm2349, 1, 0
      %v2366 = vsel %vm2350, 1, 0
      %v2367 = vsel %vm2351, 1, 0
      %v2368 = vsel %vm2352, 1, 0
      %v2369 = vsel %vm2353, 1, 0
      %v2370 = vsel %vm2354, 1, 0
      %v2371 = vsel %vm2355, 1, 0
      %v2372 = vsel %vm2356, 1, 0
      %v2373 = vcvt.s32.f32 %v2357
      %v2374 = vcvt.s32.f32 %v2358
      %v2375 = vcvt.s32.f32 %v2359
      %v2376 = vcvt.s32.f32 %v2360
      %v2377 = vcvt.s32.f32 %v2361
      %v2378 = vcvt.s32.f32 %v2362
      %v2379 = vcvt.s32.f32 %v2363
      %v2380 = vcvt.s32.f32 %v2364
      %v2381 = vcvt.s32.f32 %v2365
      %v2382 = vcvt.s32.f32 %v2366
      %v2383 = vcvt.s32.f32 %v2367
      %v2384 = vcvt.s32.f32 %v2368
      %v2385 = vcvt.s32.f32 %v2369
      %v2386 = vcvt.s32.f32 %v2370
      %v2387 = vcvt.s32.f32 %v2371
      %v2388 = vcvt.s32.f32 %v2372
      %2389 = vst [vmem:[#allocation2 + $0x98] sm:$0xff] %v2373
      %2390 = vst [vmem:[#allocation2 + $0x1b8] sm:$0xff] %v2374
      %2391 = vst [vmem:[#allocation2 + $0x2d8] sm:$0xff] %v2375
      %2392 = vst [vmem:[#allocation2 + $0x3f8] sm:$0xff] %v2376
      %2393 = vst [vmem:[#allocation2 + $0x518] sm:$0xff] %v2377
      %2394 = vst [vmem:[#allocation2 + $0x638] sm:$0xff] %v2378
      %2395 = vst [vmem:[#allocation2 + $0x758] sm:$0xff] %v2379
      %2396 = vst [vmem:[#allocation2 + $0x878] sm:$0xff] %v2380
      %2397 = vst [vmem:[#allocation2 + $0x998] sm:$0xff] %v2381
      %2398 = vst [vmem:[#allocation2 + $0xab8] sm:$0xff] %v2382
      %2399 = vst [vmem:[#allocation2 + $0xbd8] sm:$0xff] %v2383
      %2400 = vst [vmem:[#allocation2 + $0xcf8] sm:$0xff] %v2384
      %2401 = vst [vmem:[#allocation2 + $0xe18] sm:$0xff] %v2385
      %2402 = vst [vmem:[#allocation2 + $0xf38] sm:$0xff] %v2386
      %2403 = vst [vmem:[#allocation2 + $0x1058] sm:$0xff] %v2387
      %2404 = vst [vmem:[#allocation2 + $0x1178] sm:$0xff] %v2388
      %2405 = vset.pattern.permute.xlu0 20
      %2406 = vperm.xlu0 %2405, %v147
      %v2407 = vpop.permute.xlu0 %2406
      %2408 = vset.pattern.permute.xlu0 20
      %2409 = vperm.xlu0 %2408, %v148
      %v2410 = vpop.permute.xlu0 %2409
      %2411 = vset.pattern.permute.xlu0 20
      %2412 = vperm.xlu0 %2411, %v149
      %v2413 = vpop.permute.xlu0 %2412
      %2414 = vset.pattern.permute.xlu0 20
      %2415 = vperm.xlu0 %2414, %v150
      %v2416 = vpop.permute.xlu0 %2415
      %2417 = vset.pattern.permute.xlu0 20
      %2418 = vperm.xlu0 %2417, %v151
      %v2419 = vpop.permute.xlu0 %2418
      %2420 = vset.pattern.permute.xlu0 20
      %2421 = vperm.xlu0 %2420, %v152
      %v2422 = vpop.permute.xlu0 %2421
      %2423 = vset.pattern.permute.xlu0 20
      %2424 = vperm.xlu0 %2423, %v153
      %v2425 = vpop.permute.xlu0 %2424
      %2426 = vset.pattern.permute.xlu0 20
      %2427 = vperm.xlu0 %2426, %v154
      %v2428 = vpop.permute.xlu0 %2427
      %2429 = vset.pattern.permute.xlu0 20
      %2430 = vperm.xlu0 %2429, %v155
      %v2431 = vpop.permute.xlu0 %2430
      %2432 = vset.pattern.permute.xlu0 20
      %2433 = vperm.xlu0 %2432, %v156
      %v2434 = vpop.permute.xlu0 %2433
      %2435 = vset.pattern.permute.xlu0 20
      %2436 = vperm.xlu0 %2435, %v157
      %v2437 = vpop.permute.xlu0 %2436
      %2438 = vset.pattern.permute.xlu0 20
      %2439 = vperm.xlu0 %2438, %v158
      %v2440 = vpop.permute.xlu0 %2439
      %2441 = vset.pattern.permute.xlu0 20
      %2442 = vperm.xlu0 %2441, %v159
      %v2443 = vpop.permute.xlu0 %2442
      %2444 = vset.pattern.permute.xlu0 20
      %2445 = vperm.xlu0 %2444, %v160
      %v2446 = vpop.permute.xlu0 %2445
      %2447 = vset.pattern.permute.xlu0 20
      %2448 = vperm.xlu0 %2447, %v161
      %v2449 = vpop.permute.xlu0 %2448
      %2450 = vset.pattern.permute.xlu0 20
      %2451 = vperm.xlu0 %2450, %v162
      %v2452 = vpop.permute.xlu0 %2451
      %vm2453 = vcmp.eq.s32.totalorder %v2407, %v164
      %vm2454 = vcmp.eq.s32.totalorder %v2410, %v164
      %vm2455 = vcmp.eq.s32.totalorder %v2413, %v164
      %vm2456 = vcmp.eq.s32.totalorder %v2416, %v164
      %vm2457 = vcmp.eq.s32.totalorder %v2419, %v164
      %vm2458 = vcmp.eq.s32.totalorder %v2422, %v164
      %vm2459 = vcmp.eq.s32.totalorder %v2425, %v164
      %vm2460 = vcmp.eq.s32.totalorder %v2428, %v164
      %vm2461 = vcmp.eq.s32.totalorder %v2431, %v164
      %vm2462 = vcmp.eq.s32.totalorder %v2434, %v164
      %vm2463 = vcmp.eq.s32.totalorder %v2437, %v164
      %vm2464 = vcmp.eq.s32.totalorder %v2440, %v164
      %vm2465 = vcmp.eq.s32.totalorder %v2443, %v164
      %vm2466 = vcmp.eq.s32.totalorder %v2446, %v164
      %vm2467 = vcmp.eq.s32.totalorder %v2449, %v164
      %vm2468 = vcmp.eq.s32.totalorder %v2452, %v164
      %v2469 = vsel %vm2453, 1, 0
      %v2470 = vsel %vm2454, 1, 0
      %v2471 = vsel %vm2455, 1, 0
      %v2472 = vsel %vm2456, 1, 0
      %v2473 = vsel %vm2457, 1, 0
      %v2474 = vsel %vm2458, 1, 0
      %v2475 = vsel %vm2459, 1, 0
      %v2476 = vsel %vm2460, 1, 0
      %v2477 = vsel %vm2461, 1, 0
      %v2478 = vsel %vm2462, 1, 0
      %v2479 = vsel %vm2463, 1, 0
      %v2480 = vsel %vm2464, 1, 0
      %v2481 = vsel %vm2465, 1, 0
      %v2482 = vsel %vm2466, 1, 0
      %v2483 = vsel %vm2467, 1, 0
      %v2484 = vsel %vm2468, 1, 0
      %v2485 = vcvt.s32.f32 %v2469
      %v2486 = vcvt.s32.f32 %v2470
      %v2487 = vcvt.s32.f32 %v2471
      %v2488 = vcvt.s32.f32 %v2472
      %v2489 = vcvt.s32.f32 %v2473
      %v2490 = vcvt.s32.f32 %v2474
      %v2491 = vcvt.s32.f32 %v2475
      %v2492 = vcvt.s32.f32 %v2476
      %v2493 = vcvt.s32.f32 %v2477
      %v2494 = vcvt.s32.f32 %v2478
      %v2495 = vcvt.s32.f32 %v2479
      %v2496 = vcvt.s32.f32 %v2480
      %v2497 = vcvt.s32.f32 %v2481
      %v2498 = vcvt.s32.f32 %v2482
      %v2499 = vcvt.s32.f32 %v2483
      %v2500 = vcvt.s32.f32 %v2484
      %2501 = vst [vmem:[#allocation2 + $0xa0] sm:$0xff] %v2485
      %2502 = vst [vmem:[#allocation2 + $0x1c0] sm:$0xff] %v2486
      %2503 = vst [vmem:[#allocation2 + $0x2e0] sm:$0xff] %v2487
      %2504 = vst [vmem:[#allocation2 + $0x400] sm:$0xff] %v2488
      %2505 = vst [vmem:[#allocation2 + $0x520] sm:$0xff] %v2489
      %2506 = vst [vmem:[#allocation2 + $0x640] sm:$0xff] %v2490
      %2507 = vst [vmem:[#allocation2 + $0x760] sm:$0xff] %v2491
      %2508 = vst [vmem:[#allocation2 + $0x880] sm:$0xff] %v2492
      %2509 = vst [vmem:[#allocation2 + $0x9a0] sm:$0xff] %v2493
      %2510 = vst [vmem:[#allocation2 + $0xac0] sm:$0xff] %v2494
      %2511 = vst [vmem:[#allocation2 + $0xbe0] sm:$0xff] %v2495
      %2512 = vst [vmem:[#allocation2 + $0xd00] sm:$0xff] %v2496
      %2513 = vst [vmem:[#allocation2 + $0xe20] sm:$0xff] %v2497
      %2514 = vst [vmem:[#allocation2 + $0xf40] sm:$0xff] %v2498
      %2515 = vst [vmem:[#allocation2 + $0x1060] sm:$0xff] %v2499
      %2516 = vst [vmem:[#allocation2 + $0x1180] sm:$0xff] %v2500
      %2517 = vset.pattern.permute.xlu0 21
      %2518 = vperm.xlu0 %2517, %v147
      %v2519 = vpop.permute.xlu0 %2518
      %2520 = vset.pattern.permute.xlu0 21
      %2521 = vperm.xlu0 %2520, %v148
      %v2522 = vpop.permute.xlu0 %2521
      %2523 = vset.pattern.permute.xlu0 21
      %2524 = vperm.xlu0 %2523, %v149
      %v2525 = vpop.permute.xlu0 %2524
      %2526 = vset.pattern.permute.xlu0 21
      %2527 = vperm.xlu0 %2526, %v150
      %v2528 = vpop.permute.xlu0 %2527
      %2529 = vset.pattern.permute.xlu0 21
      %2530 = vperm.xlu0 %2529, %v151
      %v2531 = vpop.permute.xlu0 %2530
      %2532 = vset.pattern.permute.xlu0 21
      %2533 = vperm.xlu0 %2532, %v152
      %v2534 = vpop.permute.xlu0 %2533
      %2535 = vset.pattern.permute.xlu0 21
      %2536 = vperm.xlu0 %2535, %v153
      %v2537 = vpop.permute.xlu0 %2536
      %2538 = vset.pattern.permute.xlu0 21
      %2539 = vperm.xlu0 %2538, %v154
      %v2540 = vpop.permute.xlu0 %2539
      %2541 = vset.pattern.permute.xlu0 21
      %2542 = vperm.xlu0 %2541, %v155
      %v2543 = vpop.permute.xlu0 %2542
      %2544 = vset.pattern.permute.xlu0 21
      %2545 = vperm.xlu0 %2544, %v156
      %v2546 = vpop.permute.xlu0 %2545
      %2547 = vset.pattern.permute.xlu0 21
      %2548 = vperm.xlu0 %2547, %v157
      %v2549 = vpop.permute.xlu0 %2548
      %2550 = vset.pattern.permute.xlu0 21
      %2551 = vperm.xlu0 %2550, %v158
      %v2552 = vpop.permute.xlu0 %2551
      %2553 = vset.pattern.permute.xlu0 21
      %2554 = vperm.xlu0 %2553, %v159
      %v2555 = vpop.permute.xlu0 %2554
      %2556 = vset.pattern.permute.xlu0 21
      %2557 = vperm.xlu0 %2556, %v160
      %v2558 = vpop.permute.xlu0 %2557
      %2559 = vset.pattern.permute.xlu0 21
      %2560 = vperm.xlu0 %2559, %v161
      %v2561 = vpop.permute.xlu0 %2560
      %2562 = vset.pattern.permute.xlu0 21
      %2563 = vperm.xlu0 %2562, %v162
      %v2564 = vpop.permute.xlu0 %2563
      %vm2565 = vcmp.eq.s32.totalorder %v2519, %v164
      %vm2566 = vcmp.eq.s32.totalorder %v2522, %v164
      %vm2567 = vcmp.eq.s32.totalorder %v2525, %v164
      %vm2568 = vcmp.eq.s32.totalorder %v2528, %v164
      %vm2569 = vcmp.eq.s32.totalorder %v2531, %v164
      %vm2570 = vcmp.eq.s32.totalorder %v2534, %v164
      %vm2571 = vcmp.eq.s32.totalorder %v2537, %v164
      %vm2572 = vcmp.eq.s32.totalorder %v2540, %v164
      %vm2573 = vcmp.eq.s32.totalorder %v2543, %v164
      %vm2574 = vcmp.eq.s32.totalorder %v2546, %v164
      %vm2575 = vcmp.eq.s32.totalorder %v2549, %v164
      %vm2576 = vcmp.eq.s32.totalorder %v2552, %v164
      %vm2577 = vcmp.eq.s32.totalorder %v2555, %v164
      %vm2578 = vcmp.eq.s32.totalorder %v2558, %v164
      %vm2579 = vcmp.eq.s32.totalorder %v2561, %v164
      %vm2580 = vcmp.eq.s32.totalorder %v2564, %v164
      %v2581 = vsel %vm2565, 1, 0
      %v2582 = vsel %vm2566, 1, 0
      %v2583 = vsel %vm2567, 1, 0
      %v2584 = vsel %vm2568, 1, 0
      %v2585 = vsel %vm2569, 1, 0
      %v2586 = vsel %vm2570, 1, 0
      %v2587 = vsel %vm2571, 1, 0
      %v2588 = vsel %vm2572, 1, 0
      %v2589 = vsel %vm2573, 1, 0
      %v2590 = vsel %vm2574, 1, 0
      %v2591 = vsel %vm2575, 1, 0
      %v2592 = vsel %vm2576, 1, 0
      %v2593 = vsel %vm2577, 1, 0
      %v2594 = vsel %vm2578, 1, 0
      %v2595 = vsel %vm2579, 1, 0
      %v2596 = vsel %vm2580, 1, 0
      %v2597 = vcvt.s32.f32 %v2581
      %v2598 = vcvt.s32.f32 %v2582
      %v2599 = vcvt.s32.f32 %v2583
      %v2600 = vcvt.s32.f32 %v2584
      %v2601 = vcvt.s32.f32 %v2585
      %v2602 = vcvt.s32.f32 %v2586
      %v2603 = vcvt.s32.f32 %v2587
      %v2604 = vcvt.s32.f32 %v2588
      %v2605 = vcvt.s32.f32 %v2589
      %v2606 = vcvt.s32.f32 %v2590
      %v2607 = vcvt.s32.f32 %v2591
      %v2608 = vcvt.s32.f32 %v2592
      %v2609 = vcvt.s32.f32 %v2593
      %v2610 = vcvt.s32.f32 %v2594
      %v2611 = vcvt.s32.f32 %v2595
      %v2612 = vcvt.s32.f32 %v2596
      %2613 = vst [vmem:[#allocation2 + $0xa8] sm:$0xff] %v2597
      %2614 = vst [vmem:[#allocation2 + $0x1c8] sm:$0xff] %v2598
      %2615 = vst [vmem:[#allocation2 + $0x2e8] sm:$0xff] %v2599
      %2616 = vst [vmem:[#allocation2 + $0x408] sm:$0xff] %v2600
      %2617 = vst [vmem:[#allocation2 + $0x528] sm:$0xff] %v2601
      %2618 = vst [vmem:[#allocation2 + $0x648] sm:$0xff] %v2602
      %2619 = vst [vmem:[#allocation2 + $0x768] sm:$0xff] %v2603
      %2620 = vst [vmem:[#allocation2 + $0x888] sm:$0xff] %v2604
      %2621 = vst [vmem:[#allocation2 + $0x9a8] sm:$0xff] %v2605
      %2622 = vst [vmem:[#allocation2 + $0xac8] sm:$0xff] %v2606
      %2623 = vst [vmem:[#allocation2 + $0xbe8] sm:$0xff] %v2607
      %2624 = vst [vmem:[#allocation2 + $0xd08] sm:$0xff] %v2608
      %2625 = vst [vmem:[#allocation2 + $0xe28] sm:$0xff] %v2609
      %2626 = vst [vmem:[#allocation2 + $0xf48] sm:$0xff] %v2610
      %2627 = vst [vmem:[#allocation2 + $0x1068] sm:$0xff] %v2611
      %2628 = vst [vmem:[#allocation2 + $0x1188] sm:$0xff] %v2612
      %2629 = vset.pattern.permute.xlu0 22
      %2630 = vperm.xlu0 %2629, %v147
      %v2631 = vpop.permute.xlu0 %2630
      %2632 = vset.pattern.permute.xlu0 22
      %2633 = vperm.xlu0 %2632, %v148
      %v2634 = vpop.permute.xlu0 %2633
      %2635 = vset.pattern.permute.xlu0 22
      %2636 = vperm.xlu0 %2635, %v149
      %v2637 = vpop.permute.xlu0 %2636
      %2638 = vset.pattern.permute.xlu0 22
      %2639 = vperm.xlu0 %2638, %v150
      %v2640 = vpop.permute.xlu0 %2639
      %2641 = vset.pattern.permute.xlu0 22
      %2642 = vperm.xlu0 %2641, %v151
      %v2643 = vpop.permute.xlu0 %2642
      %2644 = vset.pattern.permute.xlu0 22
      %2645 = vperm.xlu0 %2644, %v152
      %v2646 = vpop.permute.xlu0 %2645
      %2647 = vset.pattern.permute.xlu0 22
      %2648 = vperm.xlu0 %2647, %v153
      %v2649 = vpop.permute.xlu0 %2648
      %2650 = vset.pattern.permute.xlu0 22
      %2651 = vperm.xlu0 %2650, %v154
      %v2652 = vpop.permute.xlu0 %2651
      %2653 = vset.pattern.permute.xlu0 22
      %2654 = vperm.xlu0 %2653, %v155
      %v2655 = vpop.permute.xlu0 %2654
      %2656 = vset.pattern.permute.xlu0 22
      %2657 = vperm.xlu0 %2656, %v156
      %v2658 = vpop.permute.xlu0 %2657
      %2659 = vset.pattern.permute.xlu0 22
      %2660 = vperm.xlu0 %2659, %v157
      %v2661 = vpop.permute.xlu0 %2660
      %2662 = vset.pattern.permute.xlu0 22
      %2663 = vperm.xlu0 %2662, %v158
      %v2664 = vpop.permute.xlu0 %2663
      %2665 = vset.pattern.permute.xlu0 22
      %2666 = vperm.xlu0 %2665, %v159
      %v2667 = vpop.permute.xlu0 %2666
      %2668 = vset.pattern.permute.xlu0 22
      %2669 = vperm.xlu0 %2668, %v160
      %v2670 = vpop.permute.xlu0 %2669
      %2671 = vset.pattern.permute.xlu0 22
      %2672 = vperm.xlu0 %2671, %v161
      %v2673 = vpop.permute.xlu0 %2672
      %2674 = vset.pattern.permute.xlu0 22
      %2675 = vperm.xlu0 %2674, %v162
      %v2676 = vpop.permute.xlu0 %2675
      %vm2677 = vcmp.eq.s32.totalorder %v2631, %v164
      %vm2678 = vcmp.eq.s32.totalorder %v2634, %v164
      %vm2679 = vcmp.eq.s32.totalorder %v2637, %v164
      %vm2680 = vcmp.eq.s32.totalorder %v2640, %v164
      %vm2681 = vcmp.eq.s32.totalorder %v2643, %v164
      %vm2682 = vcmp.eq.s32.totalorder %v2646, %v164
      %vm2683 = vcmp.eq.s32.totalorder %v2649, %v164
      %vm2684 = vcmp.eq.s32.totalorder %v2652, %v164
      %vm2685 = vcmp.eq.s32.totalorder %v2655, %v164
      %vm2686 = vcmp.eq.s32.totalorder %v2658, %v164
      %vm2687 = vcmp.eq.s32.totalorder %v2661, %v164
      %vm2688 = vcmp.eq.s32.totalorder %v2664, %v164
      %vm2689 = vcmp.eq.s32.totalorder %v2667, %v164
      %vm2690 = vcmp.eq.s32.totalorder %v2670, %v164
      %vm2691 = vcmp.eq.s32.totalorder %v2673, %v164
      %vm2692 = vcmp.eq.s32.totalorder %v2676, %v164
      %v2693 = vsel %vm2677, 1, 0
      %v2694 = vsel %vm2678, 1, 0
      %v2695 = vsel %vm2679, 1, 0
      %v2696 = vsel %vm2680, 1, 0
      %v2697 = vsel %vm2681, 1, 0
      %v2698 = vsel %vm2682, 1, 0
      %v2699 = vsel %vm2683, 1, 0
      %v2700 = vsel %vm2684, 1, 0
      %v2701 = vsel %vm2685, 1, 0
      %v2702 = vsel %vm2686, 1, 0
      %v2703 = vsel %vm2687, 1, 0
      %v2704 = vsel %vm2688, 1, 0
      %v2705 = vsel %vm2689, 1, 0
      %v2706 = vsel %vm2690, 1, 0
      %v2707 = vsel %vm2691, 1, 0
      %v2708 = vsel %vm2692, 1, 0
      %v2709 = vcvt.s32.f32 %v2693
      %v2710 = vcvt.s32.f32 %v2694
      %v2711 = vcvt.s32.f32 %v2695
      %v2712 = vcvt.s32.f32 %v2696
      %v2713 = vcvt.s32.f32 %v2697
      %v2714 = vcvt.s32.f32 %v2698
      %v2715 = vcvt.s32.f32 %v2699
      %v2716 = vcvt.s32.f32 %v2700
      %v2717 = vcvt.s32.f32 %v2701
      %v2718 = vcvt.s32.f32 %v2702
      %v2719 = vcvt.s32.f32 %v2703
      %v2720 = vcvt.s32.f32 %v2704
      %v2721 = vcvt.s32.f32 %v2705
      %v2722 = vcvt.s32.f32 %v2706
      %v2723 = vcvt.s32.f32 %v2707
      %v2724 = vcvt.s32.f32 %v2708
      %2725 = vst [vmem:[#allocation2 + $0xb0] sm:$0xff] %v2709
      %2726 = vst [vmem:[#allocation2 + $0x1d0] sm:$0xff] %v2710
      %2727 = vst [vmem:[#allocation2 + $0x2f0] sm:$0xff] %v2711
      %2728 = vst [vmem:[#allocation2 + $0x410] sm:$0xff] %v2712
      %2729 = vst [vmem:[#allocation2 + $0x530] sm:$0xff] %v2713
      %2730 = vst [vmem:[#allocation2 + $0x650] sm:$0xff] %v2714
      %2731 = vst [vmem:[#allocation2 + $0x770] sm:$0xff] %v2715
      %2732 = vst [vmem:[#allocation2 + $0x890] sm:$0xff] %v2716
      %2733 = vst [vmem:[#allocation2 + $0x9b0] sm:$0xff] %v2717
      %2734 = vst [vmem:[#allocation2 + $0xad0] sm:$0xff] %v2718
      %2735 = vst [vmem:[#allocation2 + $0xbf0] sm:$0xff] %v2719
      %2736 = vst [vmem:[#allocation2 + $0xd10] sm:$0xff] %v2720
      %2737 = vst [vmem:[#allocation2 + $0xe30] sm:$0xff] %v2721
      %2738 = vst [vmem:[#allocation2 + $0xf50] sm:$0xff] %v2722
      %2739 = vst [vmem:[#allocation2 + $0x1070] sm:$0xff] %v2723
      %2740 = vst [vmem:[#allocation2 + $0x1190] sm:$0xff] %v2724
      %2741 = vset.pattern.permute.xlu0 23
      %2742 = vperm.xlu0 %2741, %v147
      %v2743 = vpop.permute.xlu0 %2742
      %2744 = vset.pattern.permute.xlu0 23
      %2745 = vperm.xlu0 %2744, %v148
      %v2746 = vpop.permute.xlu0 %2745
      %2747 = vset.pattern.permute.xlu0 23
      %2748 = vperm.xlu0 %2747, %v149
      %v2749 = vpop.permute.xlu0 %2748
      %2750 = vset.pattern.permute.xlu0 23
      %2751 = vperm.xlu0 %2750, %v150
      %v2752 = vpop.permute.xlu0 %2751
      %2753 = vset.pattern.permute.xlu0 23
      %2754 = vperm.xlu0 %2753, %v151
      %v2755 = vpop.permute.xlu0 %2754
      %2756 = vset.pattern.permute.xlu0 23
      %2757 = vperm.xlu0 %2756, %v152
      %v2758 = vpop.permute.xlu0 %2757
      %2759 = vset.pattern.permute.xlu0 23
      %2760 = vperm.xlu0 %2759, %v153
      %v2761 = vpop.permute.xlu0 %2760
      %2762 = vset.pattern.permute.xlu0 23
      %2763 = vperm.xlu0 %2762, %v154
      %v2764 = vpop.permute.xlu0 %2763
      %2765 = vset.pattern.permute.xlu0 23
      %2766 = vperm.xlu0 %2765, %v155
      %v2767 = vpop.permute.xlu0 %2766
      %2768 = vset.pattern.permute.xlu0 23
      %2769 = vperm.xlu0 %2768, %v156
      %v2770 = vpop.permute.xlu0 %2769
      %2771 = vset.pattern.permute.xlu0 23
      %2772 = vperm.xlu0 %2771, %v157
      %v2773 = vpop.permute.xlu0 %2772
      %2774 = vset.pattern.permute.xlu0 23
      %2775 = vperm.xlu0 %2774, %v158
      %v2776 = vpop.permute.xlu0 %2775
      %2777 = vset.pattern.permute.xlu0 23
      %2778 = vperm.xlu0 %2777, %v159
      %v2779 = vpop.permute.xlu0 %2778
      %2780 = vset.pattern.permute.xlu0 23
      %2781 = vperm.xlu0 %2780, %v160
      %v2782 = vpop.permute.xlu0 %2781
      %2783 = vset.pattern.permute.xlu0 23
      %2784 = vperm.xlu0 %2783, %v161
      %v2785 = vpop.permute.xlu0 %2784
      %2786 = vset.pattern.permute.xlu0 23
      %2787 = vperm.xlu0 %2786, %v162
      %v2788 = vpop.permute.xlu0 %2787
      %vm2789 = vcmp.eq.s32.totalorder %v2743, %v164
      %vm2790 = vcmp.eq.s32.totalorder %v2746, %v164
      %vm2791 = vcmp.eq.s32.totalorder %v2749, %v164
      %vm2792 = vcmp.eq.s32.totalorder %v2752, %v164
      %vm2793 = vcmp.eq.s32.totalorder %v2755, %v164
      %vm2794 = vcmp.eq.s32.totalorder %v2758, %v164
      %vm2795 = vcmp.eq.s32.totalorder %v2761, %v164
      %vm2796 = vcmp.eq.s32.totalorder %v2764, %v164
      %vm2797 = vcmp.eq.s32.totalorder %v2767, %v164
      %vm2798 = vcmp.eq.s32.totalorder %v2770, %v164
      %vm2799 = vcmp.eq.s32.totalorder %v2773, %v164
      %vm2800 = vcmp.eq.s32.totalorder %v2776, %v164
      %vm2801 = vcmp.eq.s32.totalorder %v2779, %v164
      %vm2802 = vcmp.eq.s32.totalorder %v2782, %v164
      %vm2803 = vcmp.eq.s32.totalorder %v2785, %v164
      %vm2804 = vcmp.eq.s32.totalorder %v2788, %v164
      %v2805 = vsel %vm2789, 1, 0
      %v2806 = vsel %vm2790, 1, 0
      %v2807 = vsel %vm2791, 1, 0
      %v2808 = vsel %vm2792, 1, 0
      %v2809 = vsel %vm2793, 1, 0
      %v2810 = vsel %vm2794, 1, 0
      %v2811 = vsel %vm2795, 1, 0
      %v2812 = vsel %vm2796, 1, 0
      %v2813 = vsel %vm2797, 1, 0
      %v2814 = vsel %vm2798, 1, 0
      %v2815 = vsel %vm2799, 1, 0
      %v2816 = vsel %vm2800, 1, 0
      %v2817 = vsel %vm2801, 1, 0
      %v2818 = vsel %vm2802, 1, 0
      %v2819 = vsel %vm2803, 1, 0
      %v2820 = vsel %vm2804, 1, 0
      %v2821 = vcvt.s32.f32 %v2805
      %v2822 = vcvt.s32.f32 %v2806
      %v2823 = vcvt.s32.f32 %v2807
      %v2824 = vcvt.s32.f32 %v2808
      %v2825 = vcvt.s32.f32 %v2809
      %v2826 = vcvt.s32.f32 %v2810
      %v2827 = vcvt.s32.f32 %v2811
      %v2828 = vcvt.s32.f32 %v2812
      %v2829 = vcvt.s32.f32 %v2813
      %v2830 = vcvt.s32.f32 %v2814
      %v2831 = vcvt.s32.f32 %v2815
      %v2832 = vcvt.s32.f32 %v2816
      %v2833 = vcvt.s32.f32 %v2817
      %v2834 = vcvt.s32.f32 %v2818
      %v2835 = vcvt.s32.f32 %v2819
      %v2836 = vcvt.s32.f32 %v2820
      %2837 = vst [vmem:[#allocation2 + $0xb8] sm:$0xff] %v2821
      %2838 = vst [vmem:[#allocation2 + $0x1d8] sm:$0xff] %v2822
      %2839 = vst [vmem:[#allocation2 + $0x2f8] sm:$0xff] %v2823
      %2840 = vst [vmem:[#allocation2 + $0x418] sm:$0xff] %v2824
      %2841 = vst [vmem:[#allocation2 + $0x538] sm:$0xff] %v2825
      %2842 = vst [vmem:[#allocation2 + $0x658] sm:$0xff] %v2826
      %2843 = vst [vmem:[#allocation2 + $0x778] sm:$0xff] %v2827
      %2844 = vst [vmem:[#allocation2 + $0x898] sm:$0xff] %v2828
      %2845 = vst [vmem:[#allocation2 + $0x9b8] sm:$0xff] %v2829
      %2846 = vst [vmem:[#allocation2 + $0xad8] sm:$0xff] %v2830
      %2847 = vst [vmem:[#allocation2 + $0xbf8] sm:$0xff] %v2831
      %2848 = vst [vmem:[#allocation2 + $0xd18] sm:$0xff] %v2832
      %2849 = vst [vmem:[#allocation2 + $0xe38] sm:$0xff] %v2833
      %2850 = vst [vmem:[#allocation2 + $0xf58] sm:$0xff] %v2834
      %2851 = vst [vmem:[#allocation2 + $0x1078] sm:$0xff] %v2835
      %2852 = vst [vmem:[#allocation2 + $0x1198] sm:$0xff] %v2836
      %2853 = vset.pattern.permute.xlu0 24
      %2854 = vperm.xlu0 %2853, %v147
      %v2855 = vpop.permute.xlu0 %2854
      %2856 = vset.pattern.permute.xlu0 24
      %2857 = vperm.xlu0 %2856, %v148
      %v2858 = vpop.permute.xlu0 %2857
      %2859 = vset.pattern.permute.xlu0 24
      %2860 = vperm.xlu0 %2859, %v149
      %v2861 = vpop.permute.xlu0 %2860
      %2862 = vset.pattern.permute.xlu0 24
      %2863 = vperm.xlu0 %2862, %v150
      %v2864 = vpop.permute.xlu0 %2863
      %2865 = vset.pattern.permute.xlu0 24
      %2866 = vperm.xlu0 %2865, %v151
      %v2867 = vpop.permute.xlu0 %2866
      %2868 = vset.pattern.permute.xlu0 24
      %2869 = vperm.xlu0 %2868, %v152
      %v2870 = vpop.permute.xlu0 %2869
      %2871 = vset.pattern.permute.xlu0 24
      %2872 = vperm.xlu0 %2871, %v153
      %v2873 = vpop.permute.xlu0 %2872
      %2874 = vset.pattern.permute.xlu0 24
      %2875 = vperm.xlu0 %2874, %v154
      %v2876 = vpop.permute.xlu0 %2875
      %2877 = vset.pattern.permute.xlu0 24
      %2878 = vperm.xlu0 %2877, %v155
      %v2879 = vpop.permute.xlu0 %2878
      %2880 = vset.pattern.permute.xlu0 24
      %2881 = vperm.xlu0 %2880, %v156
      %v2882 = vpop.permute.xlu0 %2881
      %2883 = vset.pattern.permute.xlu0 24
      %2884 = vperm.xlu0 %2883, %v157
      %v2885 = vpop.permute.xlu0 %2884
      %2886 = vset.pattern.permute.xlu0 24
      %2887 = vperm.xlu0 %2886, %v158
      %v2888 = vpop.permute.xlu0 %2887
      %2889 = vset.pattern.permute.xlu0 24
      %2890 = vperm.xlu0 %2889, %v159
      %v2891 = vpop.permute.xlu0 %2890
      %2892 = vset.pattern.permute.xlu0 24
      %2893 = vperm.xlu0 %2892, %v160
      %v2894 = vpop.permute.xlu0 %2893
      %2895 = vset.pattern.permute.xlu0 24
      %2896 = vperm.xlu0 %2895, %v161
      %v2897 = vpop.permute.xlu0 %2896
      %2898 = vset.pattern.permute.xlu0 24
      %2899 = vperm.xlu0 %2898, %v162
      %v2900 = vpop.permute.xlu0 %2899
      %vm2901 = vcmp.eq.s32.totalorder %v2855, %v164
      %vm2902 = vcmp.eq.s32.totalorder %v2858, %v164
      %vm2903 = vcmp.eq.s32.totalorder %v2861, %v164
      %vm2904 = vcmp.eq.s32.totalorder %v2864, %v164
      %vm2905 = vcmp.eq.s32.totalorder %v2867, %v164
      %vm2906 = vcmp.eq.s32.totalorder %v2870, %v164
      %vm2907 = vcmp.eq.s32.totalorder %v2873, %v164
      %vm2908 = vcmp.eq.s32.totalorder %v2876, %v164
      %vm2909 = vcmp.eq.s32.totalorder %v2879, %v164
      %vm2910 = vcmp.eq.s32.totalorder %v2882, %v164
      %vm2911 = vcmp.eq.s32.totalorder %v2885, %v164
      %vm2912 = vcmp.eq.s32.totalorder %v2888, %v164
      %vm2913 = vcmp.eq.s32.totalorder %v2891, %v164
      %vm2914 = vcmp.eq.s32.totalorder %v2894, %v164
      %vm2915 = vcmp.eq.s32.totalorder %v2897, %v164
      %vm2916 = vcmp.eq.s32.totalorder %v2900, %v164
      %v2917 = vsel %vm2901, 1, 0
      %v2918 = vsel %vm2902, 1, 0
      %v2919 = vsel %vm2903, 1, 0
      %v2920 = vsel %vm2904, 1, 0
      %v2921 = vsel %vm2905, 1, 0
      %v2922 = vsel %vm2906, 1, 0
      %v2923 = vsel %vm2907, 1, 0
      %v2924 = vsel %vm2908, 1, 0
      %v2925 = vsel %vm2909, 1, 0
      %v2926 = vsel %vm2910, 1, 0
      %v2927 = vsel %vm2911, 1, 0
      %v2928 = vsel %vm2912, 1, 0
      %v2929 = vsel %vm2913, 1, 0
      %v2930 = vsel %vm2914, 1, 0
      %v2931 = vsel %vm2915, 1, 0
      %v2932 = vsel %vm2916, 1, 0
      %v2933 = vcvt.s32.f32 %v2917
      %v2934 = vcvt.s32.f32 %v2918
      %v2935 = vcvt.s32.f32 %v2919
      %v2936 = vcvt.s32.f32 %v2920
      %v2937 = vcvt.s32.f32 %v2921
      %v2938 = vcvt.s32.f32 %v2922
      %v2939 = vcvt.s32.f32 %v2923
      %v2940 = vcvt.s32.f32 %v2924
      %v2941 = vcvt.s32.f32 %v2925
      %v2942 = vcvt.s32.f32 %v2926
      %v2943 = vcvt.s32.f32 %v2927
      %v2944 = vcvt.s32.f32 %v2928
      %v2945 = vcvt.s32.f32 %v2929
      %v2946 = vcvt.s32.f32 %v2930
      %v2947 = vcvt.s32.f32 %v2931
      %v2948 = vcvt.s32.f32 %v2932
      %2949 = vst [vmem:[#allocation2 + $0xc0] sm:$0xff] %v2933
      %2950 = vst [vmem:[#allocation2 + $0x1e0] sm:$0xff] %v2934
      %2951 = vst [vmem:[#allocation2 + $0x300] sm:$0xff] %v2935
      %2952 = vst [vmem:[#allocation2 + $0x420] sm:$0xff] %v2936
      %2953 = vst [vmem:[#allocation2 + $0x540] sm:$0xff] %v2937
      %2954 = vst [vmem:[#allocation2 + $0x660] sm:$0xff] %v2938
      %2955 = vst [vmem:[#allocation2 + $0x780] sm:$0xff] %v2939
      %2956 = vst [vmem:[#allocation2 + $0x8a0] sm:$0xff] %v2940
      %2957 = vst [vmem:[#allocation2 + $0x9c0] sm:$0xff] %v2941
      %2958 = vst [vmem:[#allocation2 + $0xae0] sm:$0xff] %v2942
      %2959 = vst [vmem:[#allocation2 + $0xc00] sm:$0xff] %v2943
      %2960 = vst [vmem:[#allocation2 + $0xd20] sm:$0xff] %v2944
      %2961 = vst [vmem:[#allocation2 + $0xe40] sm:$0xff] %v2945
      %2962 = vst [vmem:[#allocation2 + $0xf60] sm:$0xff] %v2946
      %2963 = vst [vmem:[#allocation2 + $0x1080] sm:$0xff] %v2947
      %2964 = vst [vmem:[#allocation2 + $0x11a0] sm:$0xff] %v2948
      %2965 = vset.pattern.permute.xlu0 25
      %2966 = vperm.xlu0 %2965, %v147
      %v2967 = vpop.permute.xlu0 %2966
      %2968 = vset.pattern.permute.xlu0 25
      %2969 = vperm.xlu0 %2968, %v148
      %v2970 = vpop.permute.xlu0 %2969
      %2971 = vset.pattern.permute.xlu0 25
      %2972 = vperm.xlu0 %2971, %v149
      %v2973 = vpop.permute.xlu0 %2972
      %2974 = vset.pattern.permute.xlu0 25
      %2975 = vperm.xlu0 %2974, %v150
      %v2976 = vpop.permute.xlu0 %2975
      %2977 = vset.pattern.permute.xlu0 25
      %2978 = vperm.xlu0 %2977, %v151
      %v2979 = vpop.permute.xlu0 %2978
      %2980 = vset.pattern.permute.xlu0 25
      %2981 = vperm.xlu0 %2980, %v152
      %v2982 = vpop.permute.xlu0 %2981
      %2983 = vset.pattern.permute.xlu0 25
      %2984 = vperm.xlu0 %2983, %v153
      %v2985 = vpop.permute.xlu0 %2984
      %2986 = vset.pattern.permute.xlu0 25
      %2987 = vperm.xlu0 %2986, %v154
      %v2988 = vpop.permute.xlu0 %2987
      %2989 = vset.pattern.permute.xlu0 25
      %2990 = vperm.xlu0 %2989, %v155
      %v2991 = vpop.permute.xlu0 %2990
      %2992 = vset.pattern.permute.xlu0 25
      %2993 = vperm.xlu0 %2992, %v156
      %v2994 = vpop.permute.xlu0 %2993
      %2995 = vset.pattern.permute.xlu0 25
      %2996 = vperm.xlu0 %2995, %v157
      %v2997 = vpop.permute.xlu0 %2996
      %2998 = vset.pattern.permute.xlu0 25
      %2999 = vperm.xlu0 %2998, %v158
      %v3000 = vpop.permute.xlu0 %2999
      %3001 = vset.pattern.permute.xlu0 25
      %3002 = vperm.xlu0 %3001, %v159
      %v3003 = vpop.permute.xlu0 %3002
      %3004 = vset.pattern.permute.xlu0 25
      %3005 = vperm.xlu0 %3004, %v160
      %v3006 = vpop.permute.xlu0 %3005
      %3007 = vset.pattern.permute.xlu0 25
      %3008 = vperm.xlu0 %3007, %v161
      %v3009 = vpop.permute.xlu0 %3008
      %3010 = vset.pattern.permute.xlu0 25
      %3011 = vperm.xlu0 %3010, %v162
      %v3012 = vpop.permute.xlu0 %3011
      %vm3013 = vcmp.eq.s32.totalorder %v2967, %v164
      %vm3014 = vcmp.eq.s32.totalorder %v2970, %v164
      %vm3015 = vcmp.eq.s32.totalorder %v2973, %v164
      %vm3016 = vcmp.eq.s32.totalorder %v2976, %v164
      %vm3017 = vcmp.eq.s32.totalorder %v2979, %v164
      %vm3018 = vcmp.eq.s32.totalorder %v2982, %v164
      %vm3019 = vcmp.eq.s32.totalorder %v2985, %v164
      %vm3020 = vcmp.eq.s32.totalorder %v2988, %v164
      %vm3021 = vcmp.eq.s32.totalorder %v2991, %v164
      %vm3022 = vcmp.eq.s32.totalorder %v2994, %v164
      %vm3023 = vcmp.eq.s32.totalorder %v2997, %v164
      %vm3024 = vcmp.eq.s32.totalorder %v3000, %v164
      %vm3025 = vcmp.eq.s32.totalorder %v3003, %v164
      %vm3026 = vcmp.eq.s32.totalorder %v3006, %v164
      %vm3027 = vcmp.eq.s32.totalorder %v3009, %v164
      %vm3028 = vcmp.eq.s32.totalorder %v3012, %v164
      %v3029 = vsel %vm3013, 1, 0
      %v3030 = vsel %vm3014, 1, 0
      %v3031 = vsel %vm3015, 1, 0
      %v3032 = vsel %vm3016, 1, 0
      %v3033 = vsel %vm3017, 1, 0
      %v3034 = vsel %vm3018, 1, 0
      %v3035 = vsel %vm3019, 1, 0
      %v3036 = vsel %vm3020, 1, 0
      %v3037 = vsel %vm3021, 1, 0
      %v3038 = vsel %vm3022, 1, 0
      %v3039 = vsel %vm3023, 1, 0
      %v3040 = vsel %vm3024, 1, 0
      %v3041 = vsel %vm3025, 1, 0
      %v3042 = vsel %vm3026, 1, 0
      %v3043 = vsel %vm3027, 1, 0
      %v3044 = vsel %vm3028, 1, 0
      %v3045 = vcvt.s32.f32 %v3029
      %v3046 = vcvt.s32.f32 %v3030
      %v3047 = vcvt.s32.f32 %v3031
      %v3048 = vcvt.s32.f32 %v3032
      %v3049 = vcvt.s32.f32 %v3033
      %v3050 = vcvt.s32.f32 %v3034
      %v3051 = vcvt.s32.f32 %v3035
      %v3052 = vcvt.s32.f32 %v3036
      %v3053 = vcvt.s32.f32 %v3037
      %v3054 = vcvt.s32.f32 %v3038
      %v3055 = vcvt.s32.f32 %v3039
      %v3056 = vcvt.s32.f32 %v3040
      %v3057 = vcvt.s32.f32 %v3041
      %v3058 = vcvt.s32.f32 %v3042
      %v3059 = vcvt.s32.f32 %v3043
      %v3060 = vcvt.s32.f32 %v3044
      %3061 = vst [vmem:[#allocation2 + $0xc8] sm:$0xff] %v3045
      %3062 = vst [vmem:[#allocation2 + $0x1e8] sm:$0xff] %v3046
      %3063 = vst [vmem:[#allocation2 + $0x308] sm:$0xff] %v3047
      %3064 = vst [vmem:[#allocation2 + $0x428] sm:$0xff] %v3048
      %3065 = vst [vmem:[#allocation2 + $0x548] sm:$0xff] %v3049
      %3066 = vst [vmem:[#allocation2 + $0x668] sm:$0xff] %v3050
      %3067 = vst [vmem:[#allocation2 + $0x788] sm:$0xff] %v3051
      %3068 = vst [vmem:[#allocation2 + $0x8a8] sm:$0xff] %v3052
      %3069 = vst [vmem:[#allocation2 + $0x9c8] sm:$0xff] %v3053
      %3070 = vst [vmem:[#allocation2 + $0xae8] sm:$0xff] %v3054
      %3071 = vst [vmem:[#allocation2 + $0xc08] sm:$0xff] %v3055
      %3072 = vst [vmem:[#allocation2 + $0xd28] sm:$0xff] %v3056
      %3073 = vst [vmem:[#allocation2 + $0xe48] sm:$0xff] %v3057
      %3074 = vst [vmem:[#allocation2 + $0xf68] sm:$0xff] %v3058
      %3075 = vst [vmem:[#allocation2 + $0x1088] sm:$0xff] %v3059
      %3076 = vst [vmem:[#allocation2 + $0x11a8] sm:$0xff] %v3060
      %3077 = vset.pattern.permute.xlu0 26
      %3078 = vperm.xlu0 %3077, %v147
      %v3079 = vpop.permute.xlu0 %3078
      %3080 = vset.pattern.permute.xlu0 26
      %3081 = vperm.xlu0 %3080, %v148
      %v3082 = vpop.permute.xlu0 %3081
      %3083 = vset.pattern.permute.xlu0 26
      %3084 = vperm.xlu0 %3083, %v149
      %v3085 = vpop.permute.xlu0 %3084
      %3086 = vset.pattern.permute.xlu0 26
      %3087 = vperm.xlu0 %3086, %v150
      %v3088 = vpop.permute.xlu0 %3087
      %3089 = vset.pattern.permute.xlu0 26
      %3090 = vperm.xlu0 %3089, %v151
      %v3091 = vpop.permute.xlu0 %3090
      %3092 = vset.pattern.permute.xlu0 26
      %3093 = vperm.xlu0 %3092, %v152
      %v3094 = vpop.permute.xlu0 %3093
      %3095 = vset.pattern.permute.xlu0 26
      %3096 = vperm.xlu0 %3095, %v153
      %v3097 = vpop.permute.xlu0 %3096
      %3098 = vset.pattern.permute.xlu0 26
      %3099 = vperm.xlu0 %3098, %v154
      %v3100 = vpop.permute.xlu0 %3099
      %3101 = vset.pattern.permute.xlu0 26
      %3102 = vperm.xlu0 %3101, %v155
      %v3103 = vpop.permute.xlu0 %3102
      %3104 = vset.pattern.permute.xlu0 26
      %3105 = vperm.xlu0 %3104, %v156
      %v3106 = vpop.permute.xlu0 %3105
      %3107 = vset.pattern.permute.xlu0 26
      %3108 = vperm.xlu0 %3107, %v157
      %v3109 = vpop.permute.xlu0 %3108
      %3110 = vset.pattern.permute.xlu0 26
      %3111 = vperm.xlu0 %3110, %v158
      %v3112 = vpop.permute.xlu0 %3111
      %3113 = vset.pattern.permute.xlu0 26
      %3114 = vperm.xlu0 %3113, %v159
      %v3115 = vpop.permute.xlu0 %3114
      %3116 = vset.pattern.permute.xlu0 26
      %3117 = vperm.xlu0 %3116, %v160
      %v3118 = vpop.permute.xlu0 %3117
      %3119 = vset.pattern.permute.xlu0 26
      %3120 = vperm.xlu0 %3119, %v161
      %v3121 = vpop.permute.xlu0 %3120
      %3122 = vset.pattern.permute.xlu0 26
      %3123 = vperm.xlu0 %3122, %v162
      %v3124 = vpop.permute.xlu0 %3123
      %vm3125 = vcmp.eq.s32.totalorder %v3079, %v164
      %vm3126 = vcmp.eq.s32.totalorder %v3082, %v164
      %vm3127 = vcmp.eq.s32.totalorder %v3085, %v164
      %vm3128 = vcmp.eq.s32.totalorder %v3088, %v164
      %vm3129 = vcmp.eq.s32.totalorder %v3091, %v164
      %vm3130 = vcmp.eq.s32.totalorder %v3094, %v164
      %vm3131 = vcmp.eq.s32.totalorder %v3097, %v164
      %vm3132 = vcmp.eq.s32.totalorder %v3100, %v164
      %vm3133 = vcmp.eq.s32.totalorder %v3103, %v164
      %vm3134 = vcmp.eq.s32.totalorder %v3106, %v164
      %vm3135 = vcmp.eq.s32.totalorder %v3109, %v164
      %vm3136 = vcmp.eq.s32.totalorder %v3112, %v164
      %vm3137 = vcmp.eq.s32.totalorder %v3115, %v164
      %vm3138 = vcmp.eq.s32.totalorder %v3118, %v164
      %vm3139 = vcmp.eq.s32.totalorder %v3121, %v164
      %vm3140 = vcmp.eq.s32.totalorder %v3124, %v164
      %v3141 = vsel %vm3125, 1, 0
      %v3142 = vsel %vm3126, 1, 0
      %v3143 = vsel %vm3127, 1, 0
      %v3144 = vsel %vm3128, 1, 0
      %v3145 = vsel %vm3129, 1, 0
      %v3146 = vsel %vm3130, 1, 0
      %v3147 = vsel %vm3131, 1, 0
      %v3148 = vsel %vm3132, 1, 0
      %v3149 = vsel %vm3133, 1, 0
      %v3150 = vsel %vm3134, 1, 0
      %v3151 = vsel %vm3135, 1, 0
      %v3152 = vsel %vm3136, 1, 0
      %v3153 = vsel %vm3137, 1, 0
      %v3154 = vsel %vm3138, 1, 0
      %v3155 = vsel %vm3139, 1, 0
      %v3156 = vsel %vm3140, 1, 0
      %v3157 = vcvt.s32.f32 %v3141
      %v3158 = vcvt.s32.f32 %v3142
      %v3159 = vcvt.s32.f32 %v3143
      %v3160 = vcvt.s32.f32 %v3144
      %v3161 = vcvt.s32.f32 %v3145
      %v3162 = vcvt.s32.f32 %v3146
      %v3163 = vcvt.s32.f32 %v3147
      %v3164 = vcvt.s32.f32 %v3148
      %v3165 = vcvt.s32.f32 %v3149
      %v3166 = vcvt.s32.f32 %v3150
      %v3167 = vcvt.s32.f32 %v3151
      %v3168 = vcvt.s32.f32 %v3152
      %v3169 = vcvt.s32.f32 %v3153
      %v3170 = vcvt.s32.f32 %v3154
      %v3171 = vcvt.s32.f32 %v3155
      %v3172 = vcvt.s32.f32 %v3156
      %3173 = vst [vmem:[#allocation2 + $0xd0] sm:$0xff] %v3157
      %3174 = vst [vmem:[#allocation2 + $0x1f0] sm:$0xff] %v3158
      %3175 = vst [vmem:[#allocation2 + $0x310] sm:$0xff] %v3159
      %3176 = vst [vmem:[#allocation2 + $0x430] sm:$0xff] %v3160
      %3177 = vst [vmem:[#allocation2 + $0x550] sm:$0xff] %v3161
      %3178 = vst [vmem:[#allocation2 + $0x670] sm:$0xff] %v3162
      %3179 = vst [vmem:[#allocation2 + $0x790] sm:$0xff] %v3163
      %3180 = vst [vmem:[#allocation2 + $0x8b0] sm:$0xff] %v3164
      %3181 = vst [vmem:[#allocation2 + $0x9d0] sm:$0xff] %v3165
      %3182 = vst [vmem:[#allocation2 + $0xaf0] sm:$0xff] %v3166
      %3183 = vst [vmem:[#allocation2 + $0xc10] sm:$0xff] %v3167
      %3184 = vst [vmem:[#allocation2 + $0xd30] sm:$0xff] %v3168
      %3185 = vst [vmem:[#allocation2 + $0xe50] sm:$0xff] %v3169
      %3186 = vst [vmem:[#allocation2 + $0xf70] sm:$0xff] %v3170
      %3187 = vst [vmem:[#allocation2 + $0x1090] sm:$0xff] %v3171
      %3188 = vst [vmem:[#allocation2 + $0x11b0] sm:$0xff] %v3172
      %3189 = vset.pattern.permute.xlu0 27
      %3190 = vperm.xlu0 %3189, %v147
      %v3191 = vpop.permute.xlu0 %3190
      %3192 = vset.pattern.permute.xlu0 27
      %3193 = vperm.xlu0 %3192, %v148
      %v3194 = vpop.permute.xlu0 %3193
      %3195 = vset.pattern.permute.xlu0 27
      %3196 = vperm.xlu0 %3195, %v149
      %v3197 = vpop.permute.xlu0 %3196
      %3198 = vset.pattern.permute.xlu0 27
      %3199 = vperm.xlu0 %3198, %v150
      %v3200 = vpop.permute.xlu0 %3199
      %3201 = vset.pattern.permute.xlu0 27
      %3202 = vperm.xlu0 %3201, %v151
      %v3203 = vpop.permute.xlu0 %3202
      %3204 = vset.pattern.permute.xlu0 27
      %3205 = vperm.xlu0 %3204, %v152
      %v3206 = vpop.permute.xlu0 %3205
      %3207 = vset.pattern.permute.xlu0 27
      %3208 = vperm.xlu0 %3207, %v153
      %v3209 = vpop.permute.xlu0 %3208
      %3210 = vset.pattern.permute.xlu0 27
      %3211 = vperm.xlu0 %3210, %v154
      %v3212 = vpop.permute.xlu0 %3211
      %3213 = vset.pattern.permute.xlu0 27
      %3214 = vperm.xlu0 %3213, %v155
      %v3215 = vpop.permute.xlu0 %3214
      %3216 = vset.pattern.permute.xlu0 27
      %3217 = vperm.xlu0 %3216, %v156
      %v3218 = vpop.permute.xlu0 %3217
      %3219 = vset.pattern.permute.xlu0 27
      %3220 = vperm.xlu0 %3219, %v157
      %v3221 = vpop.permute.xlu0 %3220
      %3222 = vset.pattern.permute.xlu0 27
      %3223 = vperm.xlu0 %3222, %v158
      %v3224 = vpop.permute.xlu0 %3223
      %3225 = vset.pattern.permute.xlu0 27
      %3226 = vperm.xlu0 %3225, %v159
      %v3227 = vpop.permute.xlu0 %3226
      %3228 = vset.pattern.permute.xlu0 27
      %3229 = vperm.xlu0 %3228, %v160
      %v3230 = vpop.permute.xlu0 %3229
      %3231 = vset.pattern.permute.xlu0 27
      %3232 = vperm.xlu0 %3231, %v161
      %v3233 = vpop.permute.xlu0 %3232
      %3234 = vset.pattern.permute.xlu0 27
      %3235 = vperm.xlu0 %3234, %v162
      %v3236 = vpop.permute.xlu0 %3235
      %vm3237 = vcmp.eq.s32.totalorder %v3191, %v164
      %vm3238 = vcmp.eq.s32.totalorder %v3194, %v164
      %vm3239 = vcmp.eq.s32.totalorder %v3197, %v164
      %vm3240 = vcmp.eq.s32.totalorder %v3200, %v164
      %vm3241 = vcmp.eq.s32.totalorder %v3203, %v164
      %vm3242 = vcmp.eq.s32.totalorder %v3206, %v164
      %vm3243 = vcmp.eq.s32.totalorder %v3209, %v164
      %vm3244 = vcmp.eq.s32.totalorder %v3212, %v164
      %vm3245 = vcmp.eq.s32.totalorder %v3215, %v164
      %vm3246 = vcmp.eq.s32.totalorder %v3218, %v164
      %vm3247 = vcmp.eq.s32.totalorder %v3221, %v164
      %vm3248 = vcmp.eq.s32.totalorder %v3224, %v164
      %vm3249 = vcmp.eq.s32.totalorder %v3227, %v164
      %vm3250 = vcmp.eq.s32.totalorder %v3230, %v164
      %vm3251 = vcmp.eq.s32.totalorder %v3233, %v164
      %vm3252 = vcmp.eq.s32.totalorder %v3236, %v164
      %v3253 = vsel %vm3237, 1, 0
      %v3254 = vsel %vm3238, 1, 0
      %v3255 = vsel %vm3239, 1, 0
      %v3256 = vsel %vm3240, 1, 0
      %v3257 = vsel %vm3241, 1, 0
      %v3258 = vsel %vm3242, 1, 0
      %v3259 = vsel %vm3243, 1, 0
      %v3260 = vsel %vm3244, 1, 0
      %v3261 = vsel %vm3245, 1, 0
      %v3262 = vsel %vm3246, 1, 0
      %v3263 = vsel %vm3247, 1, 0
      %v3264 = vsel %vm3248, 1, 0
      %v3265 = vsel %vm3249, 1, 0
      %v3266 = vsel %vm3250, 1, 0
      %v3267 = vsel %vm3251, 1, 0
      %v3268 = vsel %vm3252, 1, 0
      %v3269 = vcvt.s32.f32 %v3253
      %v3270 = vcvt.s32.f32 %v3254
      %v3271 = vcvt.s32.f32 %v3255
      %v3272 = vcvt.s32.f32 %v3256
      %v3273 = vcvt.s32.f32 %v3257
      %v3274 = vcvt.s32.f32 %v3258
      %v3275 = vcvt.s32.f32 %v3259
      %v3276 = vcvt.s32.f32 %v3260
      %v3277 = vcvt.s32.f32 %v3261
      %v3278 = vcvt.s32.f32 %v3262
      %v3279 = vcvt.s32.f32 %v3263
      %v3280 = vcvt.s32.f32 %v3264
      %v3281 = vcvt.s32.f32 %v3265
      %v3282 = vcvt.s32.f32 %v3266
      %v3283 = vcvt.s32.f32 %v3267
      %v3284 = vcvt.s32.f32 %v3268
      %3285 = vst [vmem:[#allocation2 + $0xd8] sm:$0xff] %v3269
      %3286 = vst [vmem:[#allocation2 + $0x1f8] sm:$0xff] %v3270
      %3287 = vst [vmem:[#allocation2 + $0x318] sm:$0xff] %v3271
      %3288 = vst [vmem:[#allocation2 + $0x438] sm:$0xff] %v3272
      %3289 = vst [vmem:[#allocation2 + $0x558] sm:$0xff] %v3273
      %3290 = vst [vmem:[#allocation2 + $0x678] sm:$0xff] %v3274
      %3291 = vst [vmem:[#allocation2 + $0x798] sm:$0xff] %v3275
      %3292 = vst [vmem:[#allocation2 + $0x8b8] sm:$0xff] %v3276
      %3293 = vst [vmem:[#allocation2 + $0x9d8] sm:$0xff] %v3277
      %3294 = vst [vmem:[#allocation2 + $0xaf8] sm:$0xff] %v3278
      %3295 = vst [vmem:[#allocation2 + $0xc18] sm:$0xff] %v3279
      %3296 = vst [vmem:[#allocation2 + $0xd38] sm:$0xff] %v3280
      %3297 = vst [vmem:[#allocation2 + $0xe58] sm:$0xff] %v3281
      %3298 = vst [vmem:[#allocation2 + $0xf78] sm:$0xff] %v3282
      %3299 = vst [vmem:[#allocation2 + $0x1098] sm:$0xff] %v3283
      %3300 = vst [vmem:[#allocation2 + $0x11b8] sm:$0xff] %v3284
      %3301 = vset.pattern.permute.xlu0 28
      %3302 = vperm.xlu0 %3301, %v147
      %v3303 = vpop.permute.xlu0 %3302
      %3304 = vset.pattern.permute.xlu0 28
      %3305 = vperm.xlu0 %3304, %v148
      %v3306 = vpop.permute.xlu0 %3305
      %3307 = vset.pattern.permute.xlu0 28
      %3308 = vperm.xlu0 %3307, %v149
      %v3309 = vpop.permute.xlu0 %3308
      %3310 = vset.pattern.permute.xlu0 28
      %3311 = vperm.xlu0 %3310, %v150
      %v3312 = vpop.permute.xlu0 %3311
      %3313 = vset.pattern.permute.xlu0 28
      %3314 = vperm.xlu0 %3313, %v151
      %v3315 = vpop.permute.xlu0 %3314
      %3316 = vset.pattern.permute.xlu0 28
      %3317 = vperm.xlu0 %3316, %v152
      %v3318 = vpop.permute.xlu0 %3317
      %3319 = vset.pattern.permute.xlu0 28
      %3320 = vperm.xlu0 %3319, %v153
      %v3321 = vpop.permute.xlu0 %3320
      %3322 = vset.pattern.permute.xlu0 28
      %3323 = vperm.xlu0 %3322, %v154
      %v3324 = vpop.permute.xlu0 %3323
      %3325 = vset.pattern.permute.xlu0 28
      %3326 = vperm.xlu0 %3325, %v155
      %v3327 = vpop.permute.xlu0 %3326
      %3328 = vset.pattern.permute.xlu0 28
      %3329 = vperm.xlu0 %3328, %v156
      %v3330 = vpop.permute.xlu0 %3329
      %3331 = vset.pattern.permute.xlu0 28
      %3332 = vperm.xlu0 %3331, %v157
      %v3333 = vpop.permute.xlu0 %3332
      %3334 = vset.pattern.permute.xlu0 28
      %3335 = vperm.xlu0 %3334, %v158
      %v3336 = vpop.permute.xlu0 %3335
      %3337 = vset.pattern.permute.xlu0 28
      %3338 = vperm.xlu0 %3337, %v159
      %v3339 = vpop.permute.xlu0 %3338
      %3340 = vset.pattern.permute.xlu0 28
      %3341 = vperm.xlu0 %3340, %v160
      %v3342 = vpop.permute.xlu0 %3341
      %3343 = vset.pattern.permute.xlu0 28
      %3344 = vperm.xlu0 %3343, %v161
      %v3345 = vpop.permute.xlu0 %3344
      %3346 = vset.pattern.permute.xlu0 28
      %3347 = vperm.xlu0 %3346, %v162
      %v3348 = vpop.permute.xlu0 %3347
      %vm3349 = vcmp.eq.s32.totalorder %v3303, %v164
      %vm3350 = vcmp.eq.s32.totalorder %v3306, %v164
      %vm3351 = vcmp.eq.s32.totalorder %v3309, %v164
      %vm3352 = vcmp.eq.s32.totalorder %v3312, %v164
      %vm3353 = vcmp.eq.s32.totalorder %v3315, %v164
      %vm3354 = vcmp.eq.s32.totalorder %v3318, %v164
      %vm3355 = vcmp.eq.s32.totalorder %v3321, %v164
      %vm3356 = vcmp.eq.s32.totalorder %v3324, %v164
      %vm3357 = vcmp.eq.s32.totalorder %v3327, %v164
      %vm3358 = vcmp.eq.s32.totalorder %v3330, %v164
      %vm3359 = vcmp.eq.s32.totalorder %v3333, %v164
      %vm3360 = vcmp.eq.s32.totalorder %v3336, %v164
      %vm3361 = vcmp.eq.s32.totalorder %v3339, %v164
      %vm3362 = vcmp.eq.s32.totalorder %v3342, %v164
      %vm3363 = vcmp.eq.s32.totalorder %v3345, %v164
      %vm3364 = vcmp.eq.s32.totalorder %v3348, %v164
      %v3365 = vsel %vm3349, 1, 0
      %v3366 = vsel %vm3350, 1, 0
      %v3367 = vsel %vm3351, 1, 0
      %v3368 = vsel %vm3352, 1, 0
      %v3369 = vsel %vm3353, 1, 0
      %v3370 = vsel %vm3354, 1, 0
      %v3371 = vsel %vm3355, 1, 0
      %v3372 = vsel %vm3356, 1, 0
      %v3373 = vsel %vm3357, 1, 0
      %v3374 = vsel %vm3358, 1, 0
      %v3375 = vsel %vm3359, 1, 0
      %v3376 = vsel %vm3360, 1, 0
      %v3377 = vsel %vm3361, 1, 0
      %v3378 = vsel %vm3362, 1, 0
      %v3379 = vsel %vm3363, 1, 0
      %v3380 = vsel %vm3364, 1, 0
      %v3381 = vcvt.s32.f32 %v3365
      %v3382 = vcvt.s32.f32 %v3366
      %v3383 = vcvt.s32.f32 %v3367
      %v3384 = vcvt.s32.f32 %v3368
      %v3385 = vcvt.s32.f32 %v3369
      %v3386 = vcvt.s32.f32 %v3370
      %v3387 = vcvt.s32.f32 %v3371
      %v3388 = vcvt.s32.f32 %v3372
      %v3389 = vcvt.s32.f32 %v3373
      %v3390 = vcvt.s32.f32 %v3374
      %v3391 = vcvt.s32.f32 %v3375
      %v3392 = vcvt.s32.f32 %v3376
      %v3393 = vcvt.s32.f32 %v3377
      %v3394 = vcvt.s32.f32 %v3378
      %v3395 = vcvt.s32.f32 %v3379
      %v3396 = vcvt.s32.f32 %v3380
      %3397 = vst [vmem:[#allocation2 + $0xe0] sm:$0xff] %v3381
      %3398 = vst [vmem:[#allocation2 + $0x200] sm:$0xff] %v3382
      %3399 = vst [vmem:[#allocation2 + $0x320] sm:$0xff] %v3383
      %3400 = vst [vmem:[#allocation2 + $0x440] sm:$0xff] %v3384
      %3401 = vst [vmem:[#allocation2 + $0x560] sm:$0xff] %v3385
      %3402 = vst [vmem:[#allocation2 + $0x680] sm:$0xff] %v3386
      %3403 = vst [vmem:[#allocation2 + $0x7a0] sm:$0xff] %v3387
      %3404 = vst [vmem:[#allocation2 + $0x8c0] sm:$0xff] %v3388
      %3405 = vst [vmem:[#allocation2 + $0x9e0] sm:$0xff] %v3389
      %3406 = vst [vmem:[#allocation2 + $0xb00] sm:$0xff] %v3390
      %3407 = vst [vmem:[#allocation2 + $0xc20] sm:$0xff] %v3391
      %3408 = vst [vmem:[#allocation2 + $0xd40] sm:$0xff] %v3392
      %3409 = vst [vmem:[#allocation2 + $0xe60] sm:$0xff] %v3393
      %3410 = vst [vmem:[#allocation2 + $0xf80] sm:$0xff] %v3394
      %3411 = vst [vmem:[#allocation2 + $0x10a0] sm:$0xff] %v3395
      %3412 = vst [vmem:[#allocation2 + $0x11c0] sm:$0xff] %v3396
      %3413 = vset.pattern.permute.xlu0 29
      %3414 = vperm.xlu0 %3413, %v147
      %v3415 = vpop.permute.xlu0 %3414
      %3416 = vset.pattern.permute.xlu0 29
      %3417 = vperm.xlu0 %3416, %v148
      %v3418 = vpop.permute.xlu0 %3417
      %3419 = vset.pattern.permute.xlu0 29
      %3420 = vperm.xlu0 %3419, %v149
      %v3421 = vpop.permute.xlu0 %3420
      %3422 = vset.pattern.permute.xlu0 29
      %3423 = vperm.xlu0 %3422, %v150
      %v3424 = vpop.permute.xlu0 %3423
      %3425 = vset.pattern.permute.xlu0 29
      %3426 = vperm.xlu0 %3425, %v151
      %v3427 = vpop.permute.xlu0 %3426
      %3428 = vset.pattern.permute.xlu0 29
      %3429 = vperm.xlu0 %3428, %v152
      %v3430 = vpop.permute.xlu0 %3429
      %3431 = vset.pattern.permute.xlu0 29
      %3432 = vperm.xlu0 %3431, %v153
      %v3433 = vpop.permute.xlu0 %3432
      %3434 = vset.pattern.permute.xlu0 29
      %3435 = vperm.xlu0 %3434, %v154
      %v3436 = vpop.permute.xlu0 %3435
      %3437 = vset.pattern.permute.xlu0 29
      %3438 = vperm.xlu0 %3437, %v155
      %v3439 = vpop.permute.xlu0 %3438
      %3440 = vset.pattern.permute.xlu0 29
      %3441 = vperm.xlu0 %3440, %v156
      %v3442 = vpop.permute.xlu0 %3441
      %3443 = vset.pattern.permute.xlu0 29
      %3444 = vperm.xlu0 %3443, %v157
      %v3445 = vpop.permute.xlu0 %3444
      %3446 = vset.pattern.permute.xlu0 29
      %3447 = vperm.xlu0 %3446, %v158
      %v3448 = vpop.permute.xlu0 %3447
      %3449 = vset.pattern.permute.xlu0 29
      %3450 = vperm.xlu0 %3449, %v159
      %v3451 = vpop.permute.xlu0 %3450
      %3452 = vset.pattern.permute.xlu0 29
      %3453 = vperm.xlu0 %3452, %v160
      %v3454 = vpop.permute.xlu0 %3453
      %3455 = vset.pattern.permute.xlu0 29
      %3456 = vperm.xlu0 %3455, %v161
      %v3457 = vpop.permute.xlu0 %3456
      %3458 = vset.pattern.permute.xlu0 29
      %3459 = vperm.xlu0 %3458, %v162
      %v3460 = vpop.permute.xlu0 %3459
      %vm3461 = vcmp.eq.s32.totalorder %v3415, %v164
      %vm3462 = vcmp.eq.s32.totalorder %v3418, %v164
      %vm3463 = vcmp.eq.s32.totalorder %v3421, %v164
      %vm3464 = vcmp.eq.s32.totalorder %v3424, %v164
      %vm3465 = vcmp.eq.s32.totalorder %v3427, %v164
      %vm3466 = vcmp.eq.s32.totalorder %v3430, %v164
      %vm3467 = vcmp.eq.s32.totalorder %v3433, %v164
      %vm3468 = vcmp.eq.s32.totalorder %v3436, %v164
      %vm3469 = vcmp.eq.s32.totalorder %v3439, %v164
      %vm3470 = vcmp.eq.s32.totalorder %v3442, %v164
      %vm3471 = vcmp.eq.s32.totalorder %v3445, %v164
      %vm3472 = vcmp.eq.s32.totalorder %v3448, %v164
      %vm3473 = vcmp.eq.s32.totalorder %v3451, %v164
      %vm3474 = vcmp.eq.s32.totalorder %v3454, %v164
      %vm3475 = vcmp.eq.s32.totalorder %v3457, %v164
      %vm3476 = vcmp.eq.s32.totalorder %v3460, %v164
      %v3477 = vsel %vm3461, 1, 0
      %v3478 = vsel %vm3462, 1, 0
      %v3479 = vsel %vm3463, 1, 0
      %v3480 = vsel %vm3464, 1, 0
      %v3481 = vsel %vm3465, 1, 0
      %v3482 = vsel %vm3466, 1, 0
      %v3483 = vsel %vm3467, 1, 0
      %v3484 = vsel %vm3468, 1, 0
      %v3485 = vsel %vm3469, 1, 0
      %v3486 = vsel %vm3470, 1, 0
      %v3487 = vsel %vm3471, 1, 0
      %v3488 = vsel %vm3472, 1, 0
      %v3489 = vsel %vm3473, 1, 0
      %v3490 = vsel %vm3474, 1, 0
      %v3491 = vsel %vm3475, 1, 0
      %v3492 = vsel %vm3476, 1, 0
      %v3493 = vcvt.s32.f32 %v3477
      %v3494 = vcvt.s32.f32 %v3478
      %v3495 = vcvt.s32.f32 %v3479
      %v3496 = vcvt.s32.f32 %v3480
      %v3497 = vcvt.s32.f32 %v3481
      %v3498 = vcvt.s32.f32 %v3482
      %v3499 = vcvt.s32.f32 %v3483
      %v3500 = vcvt.s32.f32 %v3484
      %v3501 = vcvt.s32.f32 %v3485
      %v3502 = vcvt.s32.f32 %v3486
      %v3503 = vcvt.s32.f32 %v3487
      %v3504 = vcvt.s32.f32 %v3488
      %v3505 = vcvt.s32.f32 %v3489
      %v3506 = vcvt.s32.f32 %v3490
      %v3507 = vcvt.s32.f32 %v3491
      %v3508 = vcvt.s32.f32 %v3492
      %3509 = vst [vmem:[#allocation2 + $0xe8] sm:$0xff] %v3493
      %3510 = vst [vmem:[#allocation2 + $0x208] sm:$0xff] %v3494
      %3511 = vst [vmem:[#allocation2 + $0x328] sm:$0xff] %v3495
      %3512 = vst [vmem:[#allocation2 + $0x448] sm:$0xff] %v3496
      %3513 = vst [vmem:[#allocation2 + $0x568] sm:$0xff] %v3497
      %3514 = vst [vmem:[#allocation2 + $0x688] sm:$0xff] %v3498
      %3515 = vst [vmem:[#allocation2 + $0x7a8] sm:$0xff] %v3499
      %3516 = vst [vmem:[#allocation2 + $0x8c8] sm:$0xff] %v3500
      %3517 = vst [vmem:[#allocation2 + $0x9e8] sm:$0xff] %v3501
      %3518 = vst [vmem:[#allocation2 + $0xb08] sm:$0xff] %v3502
      %3519 = vst [vmem:[#allocation2 + $0xc28] sm:$0xff] %v3503
      %3520 = vst [vmem:[#allocation2 + $0xd48] sm:$0xff] %v3504
      %3521 = vst [vmem:[#allocation2 + $0xe68] sm:$0xff] %v3505
      %3522 = vst [vmem:[#allocation2 + $0xf88] sm:$0xff] %v3506
      %3523 = vst [vmem:[#allocation2 + $0x10a8] sm:$0xff] %v3507
      %3524 = vst [vmem:[#allocation2 + $0x11c8] sm:$0xff] %v3508
      %3525 = vset.pattern.permute.xlu0 30
      %3526 = vperm.xlu0 %3525, %v147
      %v3527 = vpop.permute.xlu0 %3526
      %3528 = vset.pattern.permute.xlu0 30
      %3529 = vperm.xlu0 %3528, %v148
      %v3530 = vpop.permute.xlu0 %3529
      %3531 = vset.pattern.permute.xlu0 30
      %3532 = vperm.xlu0 %3531, %v149
      %v3533 = vpop.permute.xlu0 %3532
      %3534 = vset.pattern.permute.xlu0 30
      %3535 = vperm.xlu0 %3534, %v150
      %v3536 = vpop.permute.xlu0 %3535
      %3537 = vset.pattern.permute.xlu0 30
      %3538 = vperm.xlu0 %3537, %v151
      %v3539 = vpop.permute.xlu0 %3538
      %3540 = vset.pattern.permute.xlu0 30
      %3541 = vperm.xlu0 %3540, %v152
      %v3542 = vpop.permute.xlu0 %3541
      %3543 = vset.pattern.permute.xlu0 30
      %3544 = vperm.xlu0 %3543, %v153
      %v3545 = vpop.permute.xlu0 %3544
      %3546 = vset.pattern.permute.xlu0 30
      %3547 = vperm.xlu0 %3546, %v154
      %v3548 = vpop.permute.xlu0 %3547
      %3549 = vset.pattern.permute.xlu0 30
      %3550 = vperm.xlu0 %3549, %v155
      %v3551 = vpop.permute.xlu0 %3550
      %3552 = vset.pattern.permute.xlu0 30
      %3553 = vperm.xlu0 %3552, %v156
      %v3554 = vpop.permute.xlu0 %3553
      %3555 = vset.pattern.permute.xlu0 30
      %3556 = vperm.xlu0 %3555, %v157
      %v3557 = vpop.permute.xlu0 %3556
      %3558 = vset.pattern.permute.xlu0 30
      %3559 = vperm.xlu0 %3558, %v158
      %v3560 = vpop.permute.xlu0 %3559
      %3561 = vset.pattern.permute.xlu0 30
      %3562 = vperm.xlu0 %3561, %v159
      %v3563 = vpop.permute.xlu0 %3562
      %3564 = vset.pattern.permute.xlu0 30
      %3565 = vperm.xlu0 %3564, %v160
      %v3566 = vpop.permute.xlu0 %3565
      %3567 = vset.pattern.permute.xlu0 30
      %3568 = vperm.xlu0 %3567, %v161
      %v3569 = vpop.permute.xlu0 %3568
      %3570 = vset.pattern.permute.xlu0 30
      %3571 = vperm.xlu0 %3570, %v162
      %v3572 = vpop.permute.xlu0 %3571
      %vm3573 = vcmp.eq.s32.totalorder %v3527, %v164
      %vm3574 = vcmp.eq.s32.totalorder %v3530, %v164
      %vm3575 = vcmp.eq.s32.totalorder %v3533, %v164
      %vm3576 = vcmp.eq.s32.totalorder %v3536, %v164
      %vm3577 = vcmp.eq.s32.totalorder %v3539, %v164
      %vm3578 = vcmp.eq.s32.totalorder %v3542, %v164
      %vm3579 = vcmp.eq.s32.totalorder %v3545, %v164
      %vm3580 = vcmp.eq.s32.totalorder %v3548, %v164
      %vm3581 = vcmp.eq.s32.totalorder %v3551, %v164
      %vm3582 = vcmp.eq.s32.totalorder %v3554, %v164
      %vm3583 = vcmp.eq.s32.totalorder %v3557, %v164
      %vm3584 = vcmp.eq.s32.totalorder %v3560, %v164
      %vm3585 = vcmp.eq.s32.totalorder %v3563, %v164
      %vm3586 = vcmp.eq.s32.totalorder %v3566, %v164
      %vm3587 = vcmp.eq.s32.totalorder %v3569, %v164
      %vm3588 = vcmp.eq.s32.totalorder %v3572, %v164
      %v3589 = vsel %vm3573, 1, 0
      %v3590 = vsel %vm3574, 1, 0
      %v3591 = vsel %vm3575, 1, 0
      %v3592 = vsel %vm3576, 1, 0
      %v3593 = vsel %vm3577, 1, 0
      %v3594 = vsel %vm3578, 1, 0
      %v3595 = vsel %vm3579, 1, 0
      %v3596 = vsel %vm3580, 1, 0
      %v3597 = vsel %vm3581, 1, 0
      %v3598 = vsel %vm3582, 1, 0
      %v3599 = vsel %vm3583, 1, 0
      %v3600 = vsel %vm3584, 1, 0
      %v3601 = vsel %vm3585, 1, 0
      %v3602 = vsel %vm3586, 1, 0
      %v3603 = vsel %vm3587, 1, 0
      %v3604 = vsel %vm3588, 1, 0
      %v3605 = vcvt.s32.f32 %v3589
      %v3606 = vcvt.s32.f32 %v3590
      %v3607 = vcvt.s32.f32 %v3591
      %v3608 = vcvt.s32.f32 %v3592
      %v3609 = vcvt.s32.f32 %v3593
      %v3610 = vcvt.s32.f32 %v3594
      %v3611 = vcvt.s32.f32 %v3595
      %v3612 = vcvt.s32.f32 %v3596
      %v3613 = vcvt.s32.f32 %v3597
      %v3614 = vcvt.s32.f32 %v3598
      %v3615 = vcvt.s32.f32 %v3599
      %v3616 = vcvt.s32.f32 %v3600
      %v3617 = vcvt.s32.f32 %v3601
      %v3618 = vcvt.s32.f32 %v3602
      %v3619 = vcvt.s32.f32 %v3603
      %v3620 = vcvt.s32.f32 %v3604
      %3621 = vst [vmem:[#allocation2 + $0xf0] sm:$0xff] %v3605
      %3622 = vst [vmem:[#allocation2 + $0x210] sm:$0xff] %v3606
      %3623 = vst [vmem:[#allocation2 + $0x330] sm:$0xff] %v3607
      %3624 = vst [vmem:[#allocation2 + $0x450] sm:$0xff] %v3608
      %3625 = vst [vmem:[#allocation2 + $0x570] sm:$0xff] %v3609
      %3626 = vst [vmem:[#allocation2 + $0x690] sm:$0xff] %v3610
      %3627 = vst [vmem:[#allocation2 + $0x7b0] sm:$0xff] %v3611
      %3628 = vst [vmem:[#allocation2 + $0x8d0] sm:$0xff] %v3612
      %3629 = vst [vmem:[#allocation2 + $0x9f0] sm:$0xff] %v3613
      %3630 = vst [vmem:[#allocation2 + $0xb10] sm:$0xff] %v3614
      %3631 = vst [vmem:[#allocation2 + $0xc30] sm:$0xff] %v3615
      %3632 = vst [vmem:[#allocation2 + $0xd50] sm:$0xff] %v3616
      %3633 = vst [vmem:[#allocation2 + $0xe70] sm:$0xff] %v3617
      %3634 = vst [vmem:[#allocation2 + $0xf90] sm:$0xff] %v3618
      %3635 = vst [vmem:[#allocation2 + $0x10b0] sm:$0xff] %v3619
      %3636 = vst [vmem:[#allocation2 + $0x11d0] sm:$0xff] %v3620
      %3637 = vset.pattern.permute.xlu0 31
      %3638 = vperm.xlu0 %3637, %v147
      %v3639 = vpop.permute.xlu0 %3638
      %3640 = vset.pattern.permute.xlu0 31
      %3641 = vperm.xlu0 %3640, %v148
      %v3642 = vpop.permute.xlu0 %3641
      %3643 = vset.pattern.permute.xlu0 31
      %3644 = vperm.xlu0 %3643, %v149
      %v3645 = vpop.permute.xlu0 %3644
      %3646 = vset.pattern.permute.xlu0 31
      %3647 = vperm.xlu0 %3646, %v150
      %v3648 = vpop.permute.xlu0 %3647
      %3649 = vset.pattern.permute.xlu0 31
      %3650 = vperm.xlu0 %3649, %v151
      %v3651 = vpop.permute.xlu0 %3650
      %3652 = vset.pattern.permute.xlu0 31
      %3653 = vperm.xlu0 %3652, %v152
      %v3654 = vpop.permute.xlu0 %3653
      %3655 = vset.pattern.permute.xlu0 31
      %3656 = vperm.xlu0 %3655, %v153
      %v3657 = vpop.permute.xlu0 %3656
      %3658 = vset.pattern.permute.xlu0 31
      %3659 = vperm.xlu0 %3658, %v154
      %v3660 = vpop.permute.xlu0 %3659
      %3661 = vset.pattern.permute.xlu0 31
      %3662 = vperm.xlu0 %3661, %v155
      %v3663 = vpop.permute.xlu0 %3662
      %3664 = vset.pattern.permute.xlu0 31
      %3665 = vperm.xlu0 %3664, %v156
      %v3666 = vpop.permute.xlu0 %3665
      %3667 = vset.pattern.permute.xlu0 31
      %3668 = vperm.xlu0 %3667, %v157
      %v3669 = vpop.permute.xlu0 %3668
      %3670 = vset.pattern.permute.xlu0 31
      %3671 = vperm.xlu0 %3670, %v158
      %v3672 = vpop.permute.xlu0 %3671
      %3673 = vset.pattern.permute.xlu0 31
      %3674 = vperm.xlu0 %3673, %v159
      %v3675 = vpop.permute.xlu0 %3674
      %3676 = vset.pattern.permute.xlu0 31
      %3677 = vperm.xlu0 %3676, %v160
      %v3678 = vpop.permute.xlu0 %3677
      %3679 = vset.pattern.permute.xlu0 31
      %3680 = vperm.xlu0 %3679, %v161
      %v3681 = vpop.permute.xlu0 %3680
      %3682 = vset.pattern.permute.xlu0 31
      %3683 = vperm.xlu0 %3682, %v162
      %v3684 = vpop.permute.xlu0 %3683
      %vm3685 = vcmp.eq.s32.totalorder %v3639, %v164
      %vm3686 = vcmp.eq.s32.totalorder %v3642, %v164
      %vm3687 = vcmp.eq.s32.totalorder %v3645, %v164
      %vm3688 = vcmp.eq.s32.totalorder %v3648, %v164
      %vm3689 = vcmp.eq.s32.totalorder %v3651, %v164
      %vm3690 = vcmp.eq.s32.totalorder %v3654, %v164
      %vm3691 = vcmp.eq.s32.totalorder %v3657, %v164
      %vm3692 = vcmp.eq.s32.totalorder %v3660, %v164
      %vm3693 = vcmp.eq.s32.totalorder %v3663, %v164
      %vm3694 = vcmp.eq.s32.totalorder %v3666, %v164
      %vm3695 = vcmp.eq.s32.totalorder %v3669, %v164
      %vm3696 = vcmp.eq.s32.totalorder %v3672, %v164
      %vm3697 = vcmp.eq.s32.totalorder %v3675, %v164
      %vm3698 = vcmp.eq.s32.totalorder %v3678, %v164
      %vm3699 = vcmp.eq.s32.totalorder %v3681, %v164
      %vm3700 = vcmp.eq.s32.totalorder %v3684, %v164
      %v3701 = vsel %vm3685, 1, 0
      %v3702 = vsel %vm3686, 1, 0
      %v3703 = vsel %vm3687, 1, 0
      %v3704 = vsel %vm3688, 1, 0
      %v3705 = vsel %vm3689, 1, 0
      %v3706 = vsel %vm3690, 1, 0
      %v3707 = vsel %vm3691, 1, 0
      %v3708 = vsel %vm3692, 1, 0
      %v3709 = vsel %vm3693, 1, 0
      %v3710 = vsel %vm3694, 1, 0
      %v3711 = vsel %vm3695, 1, 0
      %v3712 = vsel %vm3696, 1, 0
      %v3713 = vsel %vm3697, 1, 0
      %v3714 = vsel %vm3698, 1, 0
      %v3715 = vsel %vm3699, 1, 0
      %v3716 = vsel %vm3700, 1, 0
      %v3717 = vcvt.s32.f32 %v3701
      %v3718 = vcvt.s32.f32 %v3702
      %v3719 = vcvt.s32.f32 %v3703
      %v3720 = vcvt.s32.f32 %v3704
      %v3721 = vcvt.s32.f32 %v3705
      %v3722 = vcvt.s32.f32 %v3706
      %v3723 = vcvt.s32.f32 %v3707
      %v3724 = vcvt.s32.f32 %v3708
      %v3725 = vcvt.s32.f32 %v3709
      %v3726 = vcvt.s32.f32 %v3710
      %v3727 = vcvt.s32.f32 %v3711
      %v3728 = vcvt.s32.f32 %v3712
      %v3729 = vcvt.s32.f32 %v3713
      %v3730 = vcvt.s32.f32 %v3714
      %v3731 = vcvt.s32.f32 %v3715
      %v3732 = vcvt.s32.f32 %v3716
      %3733 = vst [vmem:[#allocation2 + $0xf8] sm:$0xff] %v3717
      %3734 = vst [vmem:[#allocation2 + $0x218] sm:$0xff] %v3718
      %3735 = vst [vmem:[#allocation2 + $0x338] sm:$0xff] %v3719
      %3736 = vst [vmem:[#allocation2 + $0x458] sm:$0xff] %v3720
      %3737 = vst [vmem:[#allocation2 + $0x578] sm:$0xff] %v3721
      %3738 = vst [vmem:[#allocation2 + $0x698] sm:$0xff] %v3722
      %3739 = vst [vmem:[#allocation2 + $0x7b8] sm:$0xff] %v3723
      %3740 = vst [vmem:[#allocation2 + $0x8d8] sm:$0xff] %v3724
      %3741 = vst [vmem:[#allocation2 + $0x9f8] sm:$0xff] %v3725
      %3742 = vst [vmem:[#allocation2 + $0xb18] sm:$0xff] %v3726
      %3743 = vst [vmem:[#allocation2 + $0xc38] sm:$0xff] %v3727
      %3744 = vst [vmem:[#allocation2 + $0xd58] sm:$0xff] %v3728
      %3745 = vst [vmem:[#allocation2 + $0xe78] sm:$0xff] %v3729
      %3746 = vst [vmem:[#allocation2 + $0xf98] sm:$0xff] %v3730
      %3747 = vst [vmem:[#allocation2 + $0x10b8] sm:$0xff] %v3731
      %3748 = vst [vmem:[#allocation2 + $0x11d8] sm:$0xff] %v3732
      %3749 = vset.pattern.permute.xlu0 32
      %3750 = vperm.xlu0 %3749, %v147
      %v3751 = vpop.permute.xlu0 %3750
      %3752 = vset.pattern.permute.xlu0 32
      %3753 = vperm.xlu0 %3752, %v148
      %v3754 = vpop.permute.xlu0 %3753
      %3755 = vset.pattern.permute.xlu0 32
      %3756 = vperm.xlu0 %3755, %v149
      %v3757 = vpop.permute.xlu0 %3756
      %3758 = vset.pattern.permute.xlu0 32
      %3759 = vperm.xlu0 %3758, %v150
      %v3760 = vpop.permute.xlu0 %3759
      %3761 = vset.pattern.permute.xlu0 32
      %3762 = vperm.xlu0 %3761, %v151
      %v3763 = vpop.permute.xlu0 %3762
      %3764 = vset.pattern.permute.xlu0 32
      %3765 = vperm.xlu0 %3764, %v152
      %v3766 = vpop.permute.xlu0 %3765
      %3767 = vset.pattern.permute.xlu0 32
      %3768 = vperm.xlu0 %3767, %v153
      %v3769 = vpop.permute.xlu0 %3768
      %3770 = vset.pattern.permute.xlu0 32
      %3771 = vperm.xlu0 %3770, %v154
      %v3772 = vpop.permute.xlu0 %3771
      %3773 = vset.pattern.permute.xlu0 32
      %3774 = vperm.xlu0 %3773, %v155
      %v3775 = vpop.permute.xlu0 %3774
      %3776 = vset.pattern.permute.xlu0 32
      %3777 = vperm.xlu0 %3776, %v156
      %v3778 = vpop.permute.xlu0 %3777
      %3779 = vset.pattern.permute.xlu0 32
      %3780 = vperm.xlu0 %3779, %v157
      %v3781 = vpop.permute.xlu0 %3780
      %3782 = vset.pattern.permute.xlu0 32
      %3783 = vperm.xlu0 %3782, %v158
      %v3784 = vpop.permute.xlu0 %3783
      %3785 = vset.pattern.permute.xlu0 32
      %3786 = vperm.xlu0 %3785, %v159
      %v3787 = vpop.permute.xlu0 %3786
      %3788 = vset.pattern.permute.xlu0 32
      %3789 = vperm.xlu0 %3788, %v160
      %v3790 = vpop.permute.xlu0 %3789
      %3791 = vset.pattern.permute.xlu0 32
      %3792 = vperm.xlu0 %3791, %v161
      %v3793 = vpop.permute.xlu0 %3792
      %3794 = vset.pattern.permute.xlu0 32
      %3795 = vperm.xlu0 %3794, %v162
      %v3796 = vpop.permute.xlu0 %3795
      %vm3797 = vcmp.eq.s32.totalorder %v3751, %v164
      %vm3798 = vcmp.eq.s32.totalorder %v3754, %v164
      %vm3799 = vcmp.eq.s32.totalorder %v3757, %v164
      %vm3800 = vcmp.eq.s32.totalorder %v3760, %v164
      %vm3801 = vcmp.eq.s32.totalorder %v3763, %v164
      %vm3802 = vcmp.eq.s32.totalorder %v3766, %v164
      %vm3803 = vcmp.eq.s32.totalorder %v3769, %v164
      %vm3804 = vcmp.eq.s32.totalorder %v3772, %v164
      %vm3805 = vcmp.eq.s32.totalorder %v3775, %v164
      %vm3806 = vcmp.eq.s32.totalorder %v3778, %v164
      %vm3807 = vcmp.eq.s32.totalorder %v3781, %v164
      %vm3808 = vcmp.eq.s32.totalorder %v3784, %v164
      %vm3809 = vcmp.eq.s32.totalorder %v3787, %v164
      %vm3810 = vcmp.eq.s32.totalorder %v3790, %v164
      %vm3811 = vcmp.eq.s32.totalorder %v3793, %v164
      %vm3812 = vcmp.eq.s32.totalorder %v3796, %v164
      %v3813 = vsel %vm3797, 1, 0
      %v3814 = vsel %vm3798, 1, 0
      %v3815 = vsel %vm3799, 1, 0
      %v3816 = vsel %vm3800, 1, 0
      %v3817 = vsel %vm3801, 1, 0
      %v3818 = vsel %vm3802, 1, 0
      %v3819 = vsel %vm3803, 1, 0
      %v3820 = vsel %vm3804, 1, 0
      %v3821 = vsel %vm3805, 1, 0
      %v3822 = vsel %vm3806, 1, 0
      %v3823 = vsel %vm3807, 1, 0
      %v3824 = vsel %vm3808, 1, 0
      %v3825 = vsel %vm3809, 1, 0
      %v3826 = vsel %vm3810, 1, 0
      %v3827 = vsel %vm3811, 1, 0
      %v3828 = vsel %vm3812, 1, 0
      %v3829 = vcvt.s32.f32 %v3813
      %v3830 = vcvt.s32.f32 %v3814
      %v3831 = vcvt.s32.f32 %v3815
      %v3832 = vcvt.s32.f32 %v3816
      %v3833 = vcvt.s32.f32 %v3817
      %v3834 = vcvt.s32.f32 %v3818
      %v3835 = vcvt.s32.f32 %v3819
      %v3836 = vcvt.s32.f32 %v3820
      %v3837 = vcvt.s32.f32 %v3821
      %v3838 = vcvt.s32.f32 %v3822
      %v3839 = vcvt.s32.f32 %v3823
      %v3840 = vcvt.s32.f32 %v3824
      %v3841 = vcvt.s32.f32 %v3825
      %v3842 = vcvt.s32.f32 %v3826
      %v3843 = vcvt.s32.f32 %v3827
      %v3844 = vcvt.s32.f32 %v3828
      %3845 = vst [vmem:[#allocation2 + $0x100] sm:$0xff] %v3829
      %3846 = vst [vmem:[#allocation2 + $0x220] sm:$0xff] %v3830
      %3847 = vst [vmem:[#allocation2 + $0x340] sm:$0xff] %v3831
      %3848 = vst [vmem:[#allocation2 + $0x460] sm:$0xff] %v3832
      %3849 = vst [vmem:[#allocation2 + $0x580] sm:$0xff] %v3833
      %3850 = vst [vmem:[#allocation2 + $0x6a0] sm:$0xff] %v3834
      %3851 = vst [vmem:[#allocation2 + $0x7c0] sm:$0xff] %v3835
      %3852 = vst [vmem:[#allocation2 + $0x8e0] sm:$0xff] %v3836
      %3853 = vst [vmem:[#allocation2 + $0xa00] sm:$0xff] %v3837
      %3854 = vst [vmem:[#allocation2 + $0xb20] sm:$0xff] %v3838
      %3855 = vst [vmem:[#allocation2 + $0xc40] sm:$0xff] %v3839
      %3856 = vst [vmem:[#allocation2 + $0xd60] sm:$0xff] %v3840
      %3857 = vst [vmem:[#allocation2 + $0xe80] sm:$0xff] %v3841
      %3858 = vst [vmem:[#allocation2 + $0xfa0] sm:$0xff] %v3842
      %3859 = vst [vmem:[#allocation2 + $0x10c0] sm:$0xff] %v3843
      %3860 = vst [vmem:[#allocation2 + $0x11e0] sm:$0xff] %v3844
      %3861 = vset.pattern.permute.xlu0 33
      %3862 = vperm.xlu0 %3861, %v147
      %v3863 = vpop.permute.xlu0 %3862
      %3864 = vset.pattern.permute.xlu0 33
      %3865 = vperm.xlu0 %3864, %v148
      %v3866 = vpop.permute.xlu0 %3865
      %3867 = vset.pattern.permute.xlu0 33
      %3868 = vperm.xlu0 %3867, %v149
      %v3869 = vpop.permute.xlu0 %3868
      %3870 = vset.pattern.permute.xlu0 33
      %3871 = vperm.xlu0 %3870, %v150
      %v3872 = vpop.permute.xlu0 %3871
      %3873 = vset.pattern.permute.xlu0 33
      %3874 = vperm.xlu0 %3873, %v151
      %v3875 = vpop.permute.xlu0 %3874
      %3876 = vset.pattern.permute.xlu0 33
      %3877 = vperm.xlu0 %3876, %v152
      %v3878 = vpop.permute.xlu0 %3877
      %3879 = vset.pattern.permute.xlu0 33
      %3880 = vperm.xlu0 %3879, %v153
      %v3881 = vpop.permute.xlu0 %3880
      %3882 = vset.pattern.permute.xlu0 33
      %3883 = vperm.xlu0 %3882, %v154
      %v3884 = vpop.permute.xlu0 %3883
      %3885 = vset.pattern.permute.xlu0 33
      %3886 = vperm.xlu0 %3885, %v155
      %v3887 = vpop.permute.xlu0 %3886
      %3888 = vset.pattern.permute.xlu0 33
      %3889 = vperm.xlu0 %3888, %v156
      %v3890 = vpop.permute.xlu0 %3889
      %3891 = vset.pattern.permute.xlu0 33
      %3892 = vperm.xlu0 %3891, %v157
      %v3893 = vpop.permute.xlu0 %3892
      %3894 = vset.pattern.permute.xlu0 33
      %3895 = vperm.xlu0 %3894, %v158
      %v3896 = vpop.permute.xlu0 %3895
      %3897 = vset.pattern.permute.xlu0 33
      %3898 = vperm.xlu0 %3897, %v159
      %v3899 = vpop.permute.xlu0 %3898
      %3900 = vset.pattern.permute.xlu0 33
      %3901 = vperm.xlu0 %3900, %v160
      %v3902 = vpop.permute.xlu0 %3901
      %3903 = vset.pattern.permute.xlu0 33
      %3904 = vperm.xlu0 %3903, %v161
      %v3905 = vpop.permute.xlu0 %3904
      %3906 = vset.pattern.permute.xlu0 33
      %3907 = vperm.xlu0 %3906, %v162
      %v3908 = vpop.permute.xlu0 %3907
      %vm3909 = vcmp.eq.s32.totalorder %v3863, %v164
      %vm3910 = vcmp.eq.s32.totalorder %v3866, %v164
      %vm3911 = vcmp.eq.s32.totalorder %v3869, %v164
      %vm3912 = vcmp.eq.s32.totalorder %v3872, %v164
      %vm3913 = vcmp.eq.s32.totalorder %v3875, %v164
      %vm3914 = vcmp.eq.s32.totalorder %v3878, %v164
      %vm3915 = vcmp.eq.s32.totalorder %v3881, %v164
      %vm3916 = vcmp.eq.s32.totalorder %v3884, %v164
      %vm3917 = vcmp.eq.s32.totalorder %v3887, %v164
      %vm3918 = vcmp.eq.s32.totalorder %v3890, %v164
      %vm3919 = vcmp.eq.s32.totalorder %v3893, %v164
      %vm3920 = vcmp.eq.s32.totalorder %v3896, %v164
      %vm3921 = vcmp.eq.s32.totalorder %v3899, %v164
      %vm3922 = vcmp.eq.s32.totalorder %v3902, %v164
      %vm3923 = vcmp.eq.s32.totalorder %v3905, %v164
      %vm3924 = vcmp.eq.s32.totalorder %v3908, %v164
      %v3925 = vsel %vm3909, 1, 0
      %v3926 = vsel %vm3910, 1, 0
      %v3927 = vsel %vm3911, 1, 0
      %v3928 = vsel %vm3912, 1, 0
      %v3929 = vsel %vm3913, 1, 0
      %v3930 = vsel %vm3914, 1, 0
      %v3931 = vsel %vm3915, 1, 0
      %v3932 = vsel %vm3916, 1, 0
      %v3933 = vsel %vm3917, 1, 0
      %v3934 = vsel %vm3918, 1, 0
      %v3935 = vsel %vm3919, 1, 0
      %v3936 = vsel %vm3920, 1, 0
      %v3937 = vsel %vm3921, 1, 0
      %v3938 = vsel %vm3922, 1, 0
      %v3939 = vsel %vm3923, 1, 0
      %v3940 = vsel %vm3924, 1, 0
      %v3941 = vcvt.s32.f32 %v3925
      %v3942 = vcvt.s32.f32 %v3926
      %v3943 = vcvt.s32.f32 %v3927
      %v3944 = vcvt.s32.f32 %v3928
      %v3945 = vcvt.s32.f32 %v3929
      %v3946 = vcvt.s32.f32 %v3930
      %v3947 = vcvt.s32.f32 %v3931
      %v3948 = vcvt.s32.f32 %v3932
      %v3949 = vcvt.s32.f32 %v3933
      %v3950 = vcvt.s32.f32 %v3934
      %v3951 = vcvt.s32.f32 %v3935
      %v3952 = vcvt.s32.f32 %v3936
      %v3953 = vcvt.s32.f32 %v3937
      %v3954 = vcvt.s32.f32 %v3938
      %v3955 = vcvt.s32.f32 %v3939
      %v3956 = vcvt.s32.f32 %v3940
      %3957 = vst [vmem:[#allocation2 + $0x108] sm:$0xff] %v3941
      %3958 = vst [vmem:[#allocation2 + $0x228] sm:$0xff] %v3942
      %3959 = vst [vmem:[#allocation2 + $0x348] sm:$0xff] %v3943
      %3960 = vst [vmem:[#allocation2 + $0x468] sm:$0xff] %v3944
      %3961 = vst [vmem:[#allocation2 + $0x588] sm:$0xff] %v3945
      %3962 = vst [vmem:[#allocation2 + $0x6a8] sm:$0xff] %v3946
      %3963 = vst [vmem:[#allocation2 + $0x7c8] sm:$0xff] %v3947
      %3964 = vst [vmem:[#allocation2 + $0x8e8] sm:$0xff] %v3948
      %3965 = vst [vmem:[#allocation2 + $0xa08] sm:$0xff] %v3949
      %3966 = vst [vmem:[#allocation2 + $0xb28] sm:$0xff] %v3950
      %3967 = vst [vmem:[#allocation2 + $0xc48] sm:$0xff] %v3951
      %3968 = vst [vmem:[#allocation2 + $0xd68] sm:$0xff] %v3952
      %3969 = vst [vmem:[#allocation2 + $0xe88] sm:$0xff] %v3953
      %3970 = vst [vmem:[#allocation2 + $0xfa8] sm:$0xff] %v3954
      %3971 = vst [vmem:[#allocation2 + $0x10c8] sm:$0xff] %v3955
      %3972 = vst [vmem:[#allocation2 + $0x11e8] sm:$0xff] %v3956
      %3973 = vset.pattern.permute.xlu0 34
      %3974 = vperm.xlu0 %3973, %v147
      %v3975 = vpop.permute.xlu0 %3974
      %3976 = vset.pattern.permute.xlu0 34
      %3977 = vperm.xlu0 %3976, %v148
      %v3978 = vpop.permute.xlu0 %3977
      %3979 = vset.pattern.permute.xlu0 34
      %3980 = vperm.xlu0 %3979, %v149
      %v3981 = vpop.permute.xlu0 %3980
      %3982 = vset.pattern.permute.xlu0 34
      %3983 = vperm.xlu0 %3982, %v150
      %v3984 = vpop.permute.xlu0 %3983
      %3985 = vset.pattern.permute.xlu0 34
      %3986 = vperm.xlu0 %3985, %v151
      %v3987 = vpop.permute.xlu0 %3986
      %3988 = vset.pattern.permute.xlu0 34
      %3989 = vperm.xlu0 %3988, %v152
      %v3990 = vpop.permute.xlu0 %3989
      %3991 = vset.pattern.permute.xlu0 34
      %3992 = vperm.xlu0 %3991, %v153
      %v3993 = vpop.permute.xlu0 %3992
      %3994 = vset.pattern.permute.xlu0 34
      %3995 = vperm.xlu0 %3994, %v154
      %v3996 = vpop.permute.xlu0 %3995
      %3997 = vset.pattern.permute.xlu0 34
      %3998 = vperm.xlu0 %3997, %v155
      %v3999 = vpop.permute.xlu0 %3998
      %4000 = vset.pattern.permute.xlu0 34
      %4001 = vperm.xlu0 %4000, %v156
      %v4002 = vpop.permute.xlu0 %4001
      %4003 = vset.pattern.permute.xlu0 34
      %4004 = vperm.xlu0 %4003, %v157
      %v4005 = vpop.permute.xlu0 %4004
      %4006 = vset.pattern.permute.xlu0 34
      %4007 = vperm.xlu0 %4006, %v158
      %v4008 = vpop.permute.xlu0 %4007
      %4009 = vset.pattern.permute.xlu0 34
      %4010 = vperm.xlu0 %4009, %v159
      %v4011 = vpop.permute.xlu0 %4010
      %4012 = vset.pattern.permute.xlu0 34
      %4013 = vperm.xlu0 %4012, %v160
      %v4014 = vpop.permute.xlu0 %4013
      %4015 = vset.pattern.permute.xlu0 34
      %4016 = vperm.xlu0 %4015, %v161
      %v4017 = vpop.permute.xlu0 %4016
      %4018 = vset.pattern.permute.xlu0 34
      %4019 = vperm.xlu0 %4018, %v162
      %v4020 = vpop.permute.xlu0 %4019
      %vm4021 = vcmp.eq.s32.totalorder %v3975, %v164
      %vm4022 = vcmp.eq.s32.totalorder %v3978, %v164
      %vm4023 = vcmp.eq.s32.totalorder %v3981, %v164
      %vm4024 = vcmp.eq.s32.totalorder %v3984, %v164
      %vm4025 = vcmp.eq.s32.totalorder %v3987, %v164
      %vm4026 = vcmp.eq.s32.totalorder %v3990, %v164
      %vm4027 = vcmp.eq.s32.totalorder %v3993, %v164
      %vm4028 = vcmp.eq.s32.totalorder %v3996, %v164
      %vm4029 = vcmp.eq.s32.totalorder %v3999, %v164
      %vm4030 = vcmp.eq.s32.totalorder %v4002, %v164
      %vm4031 = vcmp.eq.s32.totalorder %v4005, %v164
      %vm4032 = vcmp.eq.s32.totalorder %v4008, %v164
      %vm4033 = vcmp.eq.s32.totalorder %v4011, %v164
      %vm4034 = vcmp.eq.s32.totalorder %v4014, %v164
      %vm4035 = vcmp.eq.s32.totalorder %v4017, %v164
      %vm4036 = vcmp.eq.s32.totalorder %v4020, %v164
      %v4037 = vsel %vm4021, 1, 0
      %v4038 = vsel %vm4022, 1, 0
      %v4039 = vsel %vm4023, 1, 0
      %v4040 = vsel %vm4024, 1, 0
      %v4041 = vsel %vm4025, 1, 0
      %v4042 = vsel %vm4026, 1, 0
      %v4043 = vsel %vm4027, 1, 0
      %v4044 = vsel %vm4028, 1, 0
      %v4045 = vsel %vm4029, 1, 0
      %v4046 = vsel %vm4030, 1, 0
      %v4047 = vsel %vm4031, 1, 0
      %v4048 = vsel %vm4032, 1, 0
      %v4049 = vsel %vm4033, 1, 0
      %v4050 = vsel %vm4034, 1, 0
      %v4051 = vsel %vm4035, 1, 0
      %v4052 = vsel %vm4036, 1, 0
      %v4053 = vcvt.s32.f32 %v4037
      %v4054 = vcvt.s32.f32 %v4038
      %v4055 = vcvt.s32.f32 %v4039
      %v4056 = vcvt.s32.f32 %v4040
      %v4057 = vcvt.s32.f32 %v4041
      %v4058 = vcvt.s32.f32 %v4042
      %v4059 = vcvt.s32.f32 %v4043
      %v4060 = vcvt.s32.f32 %v4044
      %v4061 = vcvt.s32.f32 %v4045
      %v4062 = vcvt.s32.f32 %v4046
      %v4063 = vcvt.s32.f32 %v4047
      %v4064 = vcvt.s32.f32 %v4048
      %v4065 = vcvt.s32.f32 %v4049
      %v4066 = vcvt.s32.f32 %v4050
      %v4067 = vcvt.s32.f32 %v4051
      %v4068 = vcvt.s32.f32 %v4052
      %4069 = vst [vmem:[#allocation2 + $0x110] sm:$0xff] %v4053
      %4070 = vst [vmem:[#allocation2 + $0x230] sm:$0xff] %v4054
      %4071 = vst [vmem:[#allocation2 + $0x350] sm:$0xff] %v4055
      %4072 = vst [vmem:[#allocation2 + $0x470] sm:$0xff] %v4056
      %4073 = vst [vmem:[#allocation2 + $0x590] sm:$0xff] %v4057
      %4074 = vst [vmem:[#allocation2 + $0x6b0] sm:$0xff] %v4058
      %4075 = vst [vmem:[#allocation2 + $0x7d0] sm:$0xff] %v4059
      %4076 = vst [vmem:[#allocation2 + $0x8f0] sm:$0xff] %v4060
      %4077 = vst [vmem:[#allocation2 + $0xa10] sm:$0xff] %v4061
      %4078 = vst [vmem:[#allocation2 + $0xb30] sm:$0xff] %v4062
      %4079 = vst [vmem:[#allocation2 + $0xc50] sm:$0xff] %v4063
      %4080 = vst [vmem:[#allocation2 + $0xd70] sm:$0xff] %v4064
      %4081 = vst [vmem:[#allocation2 + $0xe90] sm:$0xff] %v4065
      %4082 = vst [vmem:[#allocation2 + $0xfb0] sm:$0xff] %v4066
      %4083 = vst [vmem:[#allocation2 + $0x10d0] sm:$0xff] %v4067
      %4084 = vst [vmem:[#allocation2 + $0x11f0] sm:$0xff] %v4068
      %4085 = vset.pattern.permute.xlu0 35
      %4086 = vperm.xlu0 %4085, %v147
      %v4087 = vpop.permute.xlu0 %4086
      %4088 = vset.pattern.permute.xlu0 35
      %4089 = vperm.xlu0 %4088, %v148
      %v4090 = vpop.permute.xlu0 %4089
      %4091 = vset.pattern.permute.xlu0 35
      %4092 = vperm.xlu0 %4091, %v149
      %v4093 = vpop.permute.xlu0 %4092
      %4094 = vset.pattern.permute.xlu0 35
      %4095 = vperm.xlu0 %4094, %v150
      %v4096 = vpop.permute.xlu0 %4095
      %4097 = vset.pattern.permute.xlu0 35
      %4098 = vperm.xlu0 %4097, %v151
      %v4099 = vpop.permute.xlu0 %4098
      %4100 = vset.pattern.permute.xlu0 35
      %4101 = vperm.xlu0 %4100, %v152
      %v4102 = vpop.permute.xlu0 %4101
      %4103 = vset.pattern.permute.xlu0 35
      %4104 = vperm.xlu0 %4103, %v153
      %v4105 = vpop.permute.xlu0 %4104
      %4106 = vset.pattern.permute.xlu0 35
      %4107 = vperm.xlu0 %4106, %v154
      %v4108 = vpop.permute.xlu0 %4107
      %4109 = vset.pattern.permute.xlu0 35
      %4110 = vperm.xlu0 %4109, %v155
      %v4111 = vpop.permute.xlu0 %4110
      %4112 = vset.pattern.permute.xlu0 35
      %4113 = vperm.xlu0 %4112, %v156
      %v4114 = vpop.permute.xlu0 %4113
      %4115 = vset.pattern.permute.xlu0 35
      %4116 = vperm.xlu0 %4115, %v157
      %v4117 = vpop.permute.xlu0 %4116
      %4118 = vset.pattern.permute.xlu0 35
      %4119 = vperm.xlu0 %4118, %v158
      %v4120 = vpop.permute.xlu0 %4119
      %4121 = vset.pattern.permute.xlu0 35
      %4122 = vperm.xlu0 %4121, %v159
      %v4123 = vpop.permute.xlu0 %4122
      %4124 = vset.pattern.permute.xlu0 35
      %4125 = vperm.xlu0 %4124, %v160
      %v4126 = vpop.permute.xlu0 %4125
      %4127 = vset.pattern.permute.xlu0 35
      %4128 = vperm.xlu0 %4127, %v161
      %v4129 = vpop.permute.xlu0 %4128
      %4130 = vset.pattern.permute.xlu0 35
      %4131 = vperm.xlu0 %4130, %v162
      %v4132 = vpop.permute.xlu0 %4131
      %vm4133 = vcmp.eq.s32.totalorder %v4087, %v164
      %vm4134 = vcmp.eq.s32.totalorder %v4090, %v164
      %vm4135 = vcmp.eq.s32.totalorder %v4093, %v164
      %vm4136 = vcmp.eq.s32.totalorder %v4096, %v164
      %vm4137 = vcmp.eq.s32.totalorder %v4099, %v164
      %vm4138 = vcmp.eq.s32.totalorder %v4102, %v164
      %vm4139 = vcmp.eq.s32.totalorder %v4105, %v164
      %vm4140 = vcmp.eq.s32.totalorder %v4108, %v164
      %vm4141 = vcmp.eq.s32.totalorder %v4111, %v164
      %vm4142 = vcmp.eq.s32.totalorder %v4114, %v164
      %vm4143 = vcmp.eq.s32.totalorder %v4117, %v164
      %vm4144 = vcmp.eq.s32.totalorder %v4120, %v164
      %vm4145 = vcmp.eq.s32.totalorder %v4123, %v164
      %vm4146 = vcmp.eq.s32.totalorder %v4126, %v164
      %vm4147 = vcmp.eq.s32.totalorder %v4129, %v164
      %vm4148 = vcmp.eq.s32.totalorder %v4132, %v164
      %v4149 = vsel %vm4133, 1, 0
      %v4150 = vsel %vm4134, 1, 0
      %v4151 = vsel %vm4135, 1, 0
      %v4152 = vsel %vm4136, 1, 0
      %v4153 = vsel %vm4137, 1, 0
      %v4154 = vsel %vm4138, 1, 0
      %v4155 = vsel %vm4139, 1, 0
      %v4156 = vsel %vm4140, 1, 0
      %v4157 = vsel %vm4141, 1, 0
      %v4158 = vsel %vm4142, 1, 0
      %v4159 = vsel %vm4143, 1, 0
      %v4160 = vsel %vm4144, 1, 0
      %v4161 = vsel %vm4145, 1, 0
      %v4162 = vsel %vm4146, 1, 0
      %v4163 = vsel %vm4147, 1, 0
      %v4164 = vsel %vm4148, 1, 0
      %v4165 = vcvt.s32.f32 %v4149
      %v4166 = vcvt.s32.f32 %v4150
      %v4167 = vcvt.s32.f32 %v4151
      %v4168 = vcvt.s32.f32 %v4152
      %v4169 = vcvt.s32.f32 %v4153
      %v4170 = vcvt.s32.f32 %v4154
      %v4171 = vcvt.s32.f32 %v4155
      %v4172 = vcvt.s32.f32 %v4156
      %v4173 = vcvt.s32.f32 %v4157
      %v4174 = vcvt.s32.f32 %v4158
      %v4175 = vcvt.s32.f32 %v4159
      %v4176 = vcvt.s32.f32 %v4160
      %v4177 = vcvt.s32.f32 %v4161
      %v4178 = vcvt.s32.f32 %v4162
      %v4179 = vcvt.s32.f32 %v4163
      %v4180 = vcvt.s32.f32 %v4164
      %4181 = vst [vmem:[#allocation2 + $0x118] sm:$0xff] %v4165
      %4182 = vst [vmem:[#allocation2 + $0x238] sm:$0xff] %v4166
      %4183 = vst [vmem:[#allocation2 + $0x358] sm:$0xff] %v4167
      %4184 = vst [vmem:[#allocation2 + $0x478] sm:$0xff] %v4168
      %4185 = vst [vmem:[#allocation2 + $0x598] sm:$0xff] %v4169
      %4186 = vst [vmem:[#allocation2 + $0x6b8] sm:$0xff] %v4170
      %4187 = vst [vmem:[#allocation2 + $0x7d8] sm:$0xff] %v4171
      %4188 = vst [vmem:[#allocation2 + $0x8f8] sm:$0xff] %v4172
      %4189 = vst [vmem:[#allocation2 + $0xa18] sm:$0xff] %v4173
      %4190 = vst [vmem:[#allocation2 + $0xb38] sm:$0xff] %v4174
      %4191 = vst [vmem:[#allocation2 + $0xc58] sm:$0xff] %v4175
      %4192 = vst [vmem:[#allocation2 + $0xd78] sm:$0xff] %v4176
      %4193 = vst [vmem:[#allocation2 + $0xe98] sm:$0xff] %v4177
      %4194 = vst [vmem:[#allocation2 + $0xfb8] sm:$0xff] %v4178
      %4195 = vst [vmem:[#allocation2 + $0x10d8] sm:$0xff] %v4179
      %4196 = vst [vmem:[#allocation2 + $0x11f8] sm:$0xff] %v4180
      %v4197 = vld [vmem:[#allocation2] sm:$0xff]
      %v4198 = vld [vmem:[#allocation2 + $0x8] sm:$0xff]
      %v4199 = vld [vmem:[#allocation2 + $0x10] sm:$0xff]
      %v4200 = vld [vmem:[#allocation2 + $0x18] sm:$0xff]
      %v4201 = vld [vmem:[#allocation2 + $0x20] sm:$0xff]
      %v4202 = vld [vmem:[#allocation2 + $0x28] sm:$0xff]
      %v4203 = vld [vmem:[#allocation2 + $0x30] sm:$0xff]
      %v4204 = vld [vmem:[#allocation2 + $0x38] sm:$0xff]
      %v4205 = vld [vmem:[#allocation2 + $0x40] sm:$0xff]
      %v4206 = vld [vmem:[#allocation2 + $0x48] sm:$0xff]
      %v4207 = vld [vmem:[#allocation2 + $0x50] sm:$0xff]
      %v4208 = vld [vmem:[#allocation2 + $0x58] sm:$0xff]
      %v4209 = vld [vmem:[#allocation2 + $0x60] sm:$0xff]
      %v4210 = vld [vmem:[#allocation2 + $0x68] sm:$0xff]
      %v4211 = vld [vmem:[#allocation2 + $0x70] sm:$0xff]
      %v4212 = vld [vmem:[#allocation2 + $0x78] sm:$0xff]
      %v4213 = vld [vmem:[#allocation2 + $0x80] sm:$0xff]
      %v4214 = vld [vmem:[#allocation2 + $0x88] sm:$0xff]
      %v4215 = vld [vmem:[#allocation2 + $0x90] sm:$0xff]
      %v4216 = vld [vmem:[#allocation2 + $0x98] sm:$0xff]
      %v4217 = vld [vmem:[#allocation2 + $0xa0] sm:$0xff]
      %v4218 = vld [vmem:[#allocation2 + $0xa8] sm:$0xff]
      %v4219 = vld [vmem:[#allocation2 + $0xb0] sm:$0xff]
      %v4220 = vld [vmem:[#allocation2 + $0xb8] sm:$0xff]
      %v4221 = vld [vmem:[#allocation2 + $0xc0] sm:$0xff]
      %v4222 = vld [vmem:[#allocation2 + $0xc8] sm:$0xff]
      %v4223 = vld [vmem:[#allocation2 + $0xd0] sm:$0xff]
      %v4224 = vld [vmem:[#allocation2 + $0xd8] sm:$0xff]
      %v4225 = vld [vmem:[#allocation2 + $0xe0] sm:$0xff]
      %v4226 = vld [vmem:[#allocation2 + $0xe8] sm:$0xff]
      %v4227 = vld [vmem:[#allocation2 + $0xf0] sm:$0xff]
      %v4228 = vld [vmem:[#allocation2 + $0xf8] sm:$0xff]
      %v4229 = vld [vmem:[#allocation2 + $0x100] sm:$0xff]
      %v4230 = vld [vmem:[#allocation2 + $0x108] sm:$0xff]
      %v4231 = vld [vmem:[#allocation2 + $0x110] sm:$0xff]
      %v4232 = vld [vmem:[#allocation2 + $0x118] sm:$0xff]
      %v4233 = vld [vmem:[#allocation2 + $0x120] sm:$0xff]
      %v4234 = vld [vmem:[#allocation2 + $0x128] sm:$0xff]
      %v4235 = vld [vmem:[#allocation2 + $0x130] sm:$0xff]
      %v4236 = vld [vmem:[#allocation2 + $0x138] sm:$0xff]
      %v4237 = vld [vmem:[#allocation2 + $0x140] sm:$0xff]
      %v4238 = vld [vmem:[#allocation2 + $0x148] sm:$0xff]
      %v4239 = vld [vmem:[#allocation2 + $0x150] sm:$0xff]
      %v4240 = vld [vmem:[#allocation2 + $0x158] sm:$0xff]
      %v4241 = vld [vmem:[#allocation2 + $0x160] sm:$0xff]
      %v4242 = vld [vmem:[#allocation2 + $0x168] sm:$0xff]
      %v4243 = vld [vmem:[#allocation2 + $0x170] sm:$0xff]
      %v4244 = vld [vmem:[#allocation2 + $0x178] sm:$0xff]
      %v4245 = vld [vmem:[#allocation2 + $0x180] sm:$0xff]
      %v4246 = vld [vmem:[#allocation2 + $0x188] sm:$0xff]
      %v4247 = vld [vmem:[#allocation2 + $0x190] sm:$0xff]
      %v4248 = vld [vmem:[#allocation2 + $0x198] sm:$0xff]
      %v4249 = vld [vmem:[#allocation2 + $0x1a0] sm:$0xff]
      %v4250 = vld [vmem:[#allocation2 + $0x1a8] sm:$0xff]
      %v4251 = vld [vmem:[#allocation2 + $0x1b0] sm:$0xff]
      %v4252 = vld [vmem:[#allocation2 + $0x1b8] sm:$0xff]
      %v4253 = vld [vmem:[#allocation2 + $0x1c0] sm:$0xff]
      %v4254 = vld [vmem:[#allocation2 + $0x1c8] sm:$0xff]
      %v4255 = vld [vmem:[#allocation2 + $0x1d0] sm:$0xff]
      %v4256 = vld [vmem:[#allocation2 + $0x1d8] sm:$0xff]
      %v4257 = vld [vmem:[#allocation2 + $0x1e0] sm:$0xff]
      %v4258 = vld [vmem:[#allocation2 + $0x1e8] sm:$0xff]
      %v4259 = vld [vmem:[#allocation2 + $0x1f0] sm:$0xff]
      %v4260 = vld [vmem:[#allocation2 + $0x1f8] sm:$0xff]
      %v4261 = vld [vmem:[#allocation2 + $0x200] sm:$0xff]
      %v4262 = vld [vmem:[#allocation2 + $0x208] sm:$0xff]
      %v4263 = vld [vmem:[#allocation2 + $0x210] sm:$0xff]
      %v4264 = vld [vmem:[#allocation2 + $0x218] sm:$0xff]
      %v4265 = vld [vmem:[#allocation2 + $0x220] sm:$0xff]
      %v4266 = vld [vmem:[#allocation2 + $0x228] sm:$0xff]
      %v4267 = vld [vmem:[#allocation2 + $0x230] sm:$0xff]
      %v4268 = vld [vmem:[#allocation2 + $0x238] sm:$0xff]
      %v4269 = vld [vmem:[#allocation2 + $0x240] sm:$0xff]
      %v4270 = vld [vmem:[#allocation2 + $0x248] sm:$0xff]
      %v4271 = vld [vmem:[#allocation2 + $0x250] sm:$0xff]
      %v4272 = vld [vmem:[#allocation2 + $0x258] sm:$0xff]
      %v4273 = vld [vmem:[#allocation2 + $0x260] sm:$0xff]
      %v4274 = vld [vmem:[#allocation2 + $0x268] sm:$0xff]
      %v4275 = vld [vmem:[#allocation2 + $0x270] sm:$0xff]
      %v4276 = vld [vmem:[#allocation2 + $0x278] sm:$0xff]
      %v4277 = vld [vmem:[#allocation2 + $0x280] sm:$0xff]
      %v4278 = vld [vmem:[#allocation2 + $0x288] sm:$0xff]
      %v4279 = vld [vmem:[#allocation2 + $0x290] sm:$0xff]
      %v4280 = vld [vmem:[#allocation2 + $0x298] sm:$0xff]
      %v4281 = vld [vmem:[#allocation2 + $0x2a0] sm:$0xff]
      %v4282 = vld [vmem:[#allocation2 + $0x2a8] sm:$0xff]
      %v4283 = vld [vmem:[#allocation2 + $0x2b0] sm:$0xff]
      %v4284 = vld [vmem:[#allocation2 + $0x2b8] sm:$0xff]
      %v4285 = vld [vmem:[#allocation2 + $0x2c0] sm:$0xff]
      %v4286 = vld [vmem:[#allocation2 + $0x2c8] sm:$0xff]
      %v4287 = vld [vmem:[#allocation2 + $0x2d0] sm:$0xff]
      %v4288 = vld [vmem:[#allocation2 + $0x2d8] sm:$0xff]
      %v4289 = vld [vmem:[#allocation2 + $0x2e0] sm:$0xff]
      %v4290 = vld [vmem:[#allocation2 + $0x2e8] sm:$0xff]
      %v4291 = vld [vmem:[#allocation2 + $0x2f0] sm:$0xff]
      %v4292 = vld [vmem:[#allocation2 + $0x2f8] sm:$0xff]
      %v4293 = vld [vmem:[#allocation2 + $0x300] sm:$0xff]
      %v4294 = vld [vmem:[#allocation2 + $0x308] sm:$0xff]
      %v4295 = vld [vmem:[#allocation2 + $0x310] sm:$0xff]
      %v4296 = vld [vmem:[#allocation2 + $0x318] sm:$0xff]
      %v4297 = vld [vmem:[#allocation2 + $0x320] sm:$0xff]
      %v4298 = vld [vmem:[#allocation2 + $0x328] sm:$0xff]
      %v4299 = vld [vmem:[#allocation2 + $0x330] sm:$0xff]
      %v4300 = vld [vmem:[#allocation2 + $0x338] sm:$0xff]
      %v4301 = vld [vmem:[#allocation2 + $0x340] sm:$0xff]
      %v4302 = vld [vmem:[#allocation2 + $0x348] sm:$0xff]
      %v4303 = vld [vmem:[#allocation2 + $0x350] sm:$0xff]
      %v4304 = vld [vmem:[#allocation2 + $0x358] sm:$0xff]
      %v4305 = vld [vmem:[#allocation2 + $0x360] sm:$0xff]
      %v4306 = vld [vmem:[#allocation2 + $0x368] sm:$0xff]
      %v4307 = vld [vmem:[#allocation2 + $0x370] sm:$0xff]
      %v4308 = vld [vmem:[#allocation2 + $0x378] sm:$0xff]
      %v4309 = vld [vmem:[#allocation2 + $0x380] sm:$0xff]
      %v4310 = vld [vmem:[#allocation2 + $0x388] sm:$0xff]
      %v4311 = vld [vmem:[#allocation2 + $0x390] sm:$0xff]
      %v4312 = vld [vmem:[#allocation2 + $0x398] sm:$0xff]
      %v4313 = vld [vmem:[#allocation2 + $0x3a0] sm:$0xff]
      %v4314 = vld [vmem:[#allocation2 + $0x3a8] sm:$0xff]
      %v4315 = vld [vmem:[#allocation2 + $0x3b0] sm:$0xff]
      %v4316 = vld [vmem:[#allocation2 + $0x3b8] sm:$0xff]
      %v4317 = vld [vmem:[#allocation2 + $0x3c0] sm:$0xff]
      %v4318 = vld [vmem:[#allocation2 + $0x3c8] sm:$0xff]
      %v4319 = vld [vmem:[#allocation2 + $0x3d0] sm:$0xff]
      %v4320 = vld [vmem:[#allocation2 + $0x3d8] sm:$0xff]
      %v4321 = vld [vmem:[#allocation2 + $0x3e0] sm:$0xff]
      %v4322 = vld [vmem:[#allocation2 + $0x3e8] sm:$0xff]
      %v4323 = vld [vmem:[#allocation2 + $0x3f0] sm:$0xff]
      %v4324 = vld [vmem:[#allocation2 + $0x3f8] sm:$0xff]
      %v4325 = vld [vmem:[#allocation2 + $0x400] sm:$0xff]
      %v4326 = vld [vmem:[#allocation2 + $0x408] sm:$0xff]
      %v4327 = vld [vmem:[#allocation2 + $0x410] sm:$0xff]
      %v4328 = vld [vmem:[#allocation2 + $0x418] sm:$0xff]
      %v4329 = vld [vmem:[#allocation2 + $0x420] sm:$0xff]
      %v4330 = vld [vmem:[#allocation2 + $0x428] sm:$0xff]
      %v4331 = vld [vmem:[#allocation2 + $0x430] sm:$0xff]
      %v4332 = vld [vmem:[#allocation2 + $0x438] sm:$0xff]
      %v4333 = vld [vmem:[#allocation2 + $0x440] sm:$0xff]
      %v4334 = vld [vmem:[#allocation2 + $0x448] sm:$0xff]
      %v4335 = vld [vmem:[#allocation2 + $0x450] sm:$0xff]
      %v4336 = vld [vmem:[#allocation2 + $0x458] sm:$0xff]
      %v4337 = vld [vmem:[#allocation2 + $0x460] sm:$0xff]
      %v4338 = vld [vmem:[#allocation2 + $0x468] sm:$0xff]
      %v4339 = vld [vmem:[#allocation2 + $0x470] sm:$0xff]
      %v4340 = vld [vmem:[#allocation2 + $0x478] sm:$0xff]
      %v4341 = vld [vmem:[#allocation2 + $0x480] sm:$0xff]
      %v4342 = vld [vmem:[#allocation2 + $0x488] sm:$0xff]
      %v4343 = vld [vmem:[#allocation2 + $0x490] sm:$0xff]
      %v4344 = vld [vmem:[#allocation2 + $0x498] sm:$0xff]
      %v4345 = vld [vmem:[#allocation2 + $0x4a0] sm:$0xff]
      %v4346 = vld [vmem:[#allocation2 + $0x4a8] sm:$0xff]
      %v4347 = vld [vmem:[#allocation2 + $0x4b0] sm:$0xff]
      %v4348 = vld [vmem:[#allocation2 + $0x4b8] sm:$0xff]
      %v4349 = vld [vmem:[#allocation2 + $0x4c0] sm:$0xff]
      %v4350 = vld [vmem:[#allocation2 + $0x4c8] sm:$0xff]
      %v4351 = vld [vmem:[#allocation2 + $0x4d0] sm:$0xff]
      %v4352 = vld [vmem:[#allocation2 + $0x4d8] sm:$0xff]
      %v4353 = vld [vmem:[#allocation2 + $0x4e0] sm:$0xff]
      %v4354 = vld [vmem:[#allocation2 + $0x4e8] sm:$0xff]
      %v4355 = vld [vmem:[#allocation2 + $0x4f0] sm:$0xff]
      %v4356 = vld [vmem:[#allocation2 + $0x4f8] sm:$0xff]
      %v4357 = vld [vmem:[#allocation2 + $0x500] sm:$0xff]
      %v4358 = vld [vmem:[#allocation2 + $0x508] sm:$0xff]
      %v4359 = vld [vmem:[#allocation2 + $0x510] sm:$0xff]
      %v4360 = vld [vmem:[#allocation2 + $0x518] sm:$0xff]
      %v4361 = vld [vmem:[#allocation2 + $0x520] sm:$0xff]
      %v4362 = vld [vmem:[#allocation2 + $0x528] sm:$0xff]
      %v4363 = vld [vmem:[#allocation2 + $0x530] sm:$0xff]
      %v4364 = vld [vmem:[#allocation2 + $0x538] sm:$0xff]
      %v4365 = vld [vmem:[#allocation2 + $0x540] sm:$0xff]
      %v4366 = vld [vmem:[#allocation2 + $0x548] sm:$0xff]
      %v4367 = vld [vmem:[#allocation2 + $0x550] sm:$0xff]
      %v4368 = vld [vmem:[#allocation2 + $0x558] sm:$0xff]
      %v4369 = vld [vmem:[#allocation2 + $0x560] sm:$0xff]
      %v4370 = vld [vmem:[#allocation2 + $0x568] sm:$0xff]
      %v4371 = vld [vmem:[#allocation2 + $0x570] sm:$0xff]
      %v4372 = vld [vmem:[#allocation2 + $0x578] sm:$0xff]
      %v4373 = vld [vmem:[#allocation2 + $0x580] sm:$0xff]
      %v4374 = vld [vmem:[#allocation2 + $0x588] sm:$0xff]
      %v4375 = vld [vmem:[#allocation2 + $0x590] sm:$0xff]
      %v4376 = vld [vmem:[#allocation2 + $0x598] sm:$0xff]
      %v4377 = vld [vmem:[#allocation2 + $0x5a0] sm:$0xff]
      %v4378 = vld [vmem:[#allocation2 + $0x5a8] sm:$0xff]
      %v4379 = vld [vmem:[#allocation2 + $0x5b0] sm:$0xff]
      %v4380 = vld [vmem:[#allocation2 + $0x5b8] sm:$0xff]
      %v4381 = vld [vmem:[#allocation2 + $0x5c0] sm:$0xff]
      %v4382 = vld [vmem:[#allocation2 + $0x5c8] sm:$0xff]
      %v4383 = vld [vmem:[#allocation2 + $0x5d0] sm:$0xff]
      %v4384 = vld [vmem:[#allocation2 + $0x5d8] sm:$0xff]
      %v4385 = vld [vmem:[#allocation2 + $0x5e0] sm:$0xff]
      %v4386 = vld [vmem:[#allocation2 + $0x5e8] sm:$0xff]
      %v4387 = vld [vmem:[#allocation2 + $0x5f0] sm:$0xff]
      %v4388 = vld [vmem:[#allocation2 + $0x5f8] sm:$0xff]
      %v4389 = vld [vmem:[#allocation2 + $0x600] sm:$0xff]
      %v4390 = vld [vmem:[#allocation2 + $0x608] sm:$0xff]
      %v4391 = vld [vmem:[#allocation2 + $0x610] sm:$0xff]
      %v4392 = vld [vmem:[#allocation2 + $0x618] sm:$0xff]
      %v4393 = vld [vmem:[#allocation2 + $0x620] sm:$0xff]
      %v4394 = vld [vmem:[#allocation2 + $0x628] sm:$0xff]
      %v4395 = vld [vmem:[#allocation2 + $0x630] sm:$0xff]
      %v4396 = vld [vmem:[#allocation2 + $0x638] sm:$0xff]
      %v4397 = vld [vmem:[#allocation2 + $0x640] sm:$0xff]
      %v4398 = vld [vmem:[#allocation2 + $0x648] sm:$0xff]
      %v4399 = vld [vmem:[#allocation2 + $0x650] sm:$0xff]
      %v4400 = vld [vmem:[#allocation2 + $0x658] sm:$0xff]
      %v4401 = vld [vmem:[#allocation2 + $0x660] sm:$0xff]
      %v4402 = vld [vmem:[#allocation2 + $0x668] sm:$0xff]
      %v4403 = vld [vmem:[#allocation2 + $0x670] sm:$0xff]
      %v4404 = vld [vmem:[#allocation2 + $0x678] sm:$0xff]
      %v4405 = vld [vmem:[#allocation2 + $0x680] sm:$0xff]
      %v4406 = vld [vmem:[#allocation2 + $0x688] sm:$0xff]
      %v4407 = vld [vmem:[#allocation2 + $0x690] sm:$0xff]
      %v4408 = vld [vmem:[#allocation2 + $0x698] sm:$0xff]
      %v4409 = vld [vmem:[#allocation2 + $0x6a0] sm:$0xff]
      %v4410 = vld [vmem:[#allocation2 + $0x6a8] sm:$0xff]
      %v4411 = vld [vmem:[#allocation2 + $0x6b0] sm:$0xff]
      %v4412 = vld [vmem:[#allocation2 + $0x6b8] sm:$0xff]
      %v4413 = vld [vmem:[#allocation2 + $0x6c0] sm:$0xff]
      %v4414 = vld [vmem:[#allocation2 + $0x6c8] sm:$0xff]
      %v4415 = vld [vmem:[#allocation2 + $0x6d0] sm:$0xff]
      %v4416 = vld [vmem:[#allocation2 + $0x6d8] sm:$0xff]
      %v4417 = vld [vmem:[#allocation2 + $0x6e0] sm:$0xff]
      %v4418 = vld [vmem:[#allocation2 + $0x6e8] sm:$0xff]
      %v4419 = vld [vmem:[#allocation2 + $0x6f0] sm:$0xff]
      %v4420 = vld [vmem:[#allocation2 + $0x6f8] sm:$0xff]
      %v4421 = vld [vmem:[#allocation2 + $0x700] sm:$0xff]
      %v4422 = vld [vmem:[#allocation2 + $0x708] sm:$0xff]
      %v4423 = vld [vmem:[#allocation2 + $0x710] sm:$0xff]
      %v4424 = vld [vmem:[#allocation2 + $0x718] sm:$0xff]
      %v4425 = vld [vmem:[#allocation2 + $0x720] sm:$0xff]
      %v4426 = vld [vmem:[#allocation2 + $0x728] sm:$0xff]
      %v4427 = vld [vmem:[#allocation2 + $0x730] sm:$0xff]
      %v4428 = vld [vmem:[#allocation2 + $0x738] sm:$0xff]
      %v4429 = vld [vmem:[#allocation2 + $0x740] sm:$0xff]
      %v4430 = vld [vmem:[#allocation2 + $0x748] sm:$0xff]
      %v4431 = vld [vmem:[#allocation2 + $0x750] sm:$0xff]
      %v4432 = vld [vmem:[#allocation2 + $0x758] sm:$0xff]
      %v4433 = vld [vmem:[#allocation2 + $0x760] sm:$0xff]
      %v4434 = vld [vmem:[#allocation2 + $0x768] sm:$0xff]
      %v4435 = vld [vmem:[#allocation2 + $0x770] sm:$0xff]
      %v4436 = vld [vmem:[#allocation2 + $0x778] sm:$0xff]
      %v4437 = vld [vmem:[#allocation2 + $0x780] sm:$0xff]
      %v4438 = vld [vmem:[#allocation2 + $0x788] sm:$0xff]
      %v4439 = vld [vmem:[#allocation2 + $0x790] sm:$0xff]
      %v4440 = vld [vmem:[#allocation2 + $0x798] sm:$0xff]
      %v4441 = vld [vmem:[#allocation2 + $0x7a0] sm:$0xff]
      %v4442 = vld [vmem:[#allocation2 + $0x7a8] sm:$0xff]
      %v4443 = vld [vmem:[#allocation2 + $0x7b0] sm:$0xff]
      %v4444 = vld [vmem:[#allocation2 + $0x7b8] sm:$0xff]
      %v4445 = vld [vmem:[#allocation2 + $0x7c0] sm:$0xff]
      %v4446 = vld [vmem:[#allocation2 + $0x7c8] sm:$0xff]
      %v4447 = vld [vmem:[#allocation2 + $0x7d0] sm:$0xff]
      %v4448 = vld [vmem:[#allocation2 + $0x7d8] sm:$0xff]
      %v4449 = vld [vmem:[#allocation2 + $0x7e0] sm:$0xff]
      %v4450 = vld [vmem:[#allocation2 + $0x7e8] sm:$0xff]
      %v4451 = vld [vmem:[#allocation2 + $0x7f0] sm:$0xff]
      %v4452 = vld [vmem:[#allocation2 + $0x7f8] sm:$0xff]
      %v4453 = vld [vmem:[#allocation2 + $0x800] sm:$0xff]
      %v4454 = vld [vmem:[#allocation2 + $0x808] sm:$0xff]
      %v4455 = vld [vmem:[#allocation2 + $0x810] sm:$0xff]
      %v4456 = vld [vmem:[#allocation2 + $0x818] sm:$0xff]
      %v4457 = vld [vmem:[#allocation2 + $0x820] sm:$0xff]
      %v4458 = vld [vmem:[#allocation2 + $0x828] sm:$0xff]
      %v4459 = vld [vmem:[#allocation2 + $0x830] sm:$0xff]
      %v4460 = vld [vmem:[#allocation2 + $0x838] sm:$0xff]
      %v4461 = vld [vmem:[#allocation2 + $0x840] sm:$0xff]
      %v4462 = vld [vmem:[#allocation2 + $0x848] sm:$0xff]
      %v4463 = vld [vmem:[#allocation2 + $0x850] sm:$0xff]
      %v4464 = vld [vmem:[#allocation2 + $0x858] sm:$0xff]
      %v4465 = vld [vmem:[#allocation2 + $0x860] sm:$0xff]
      %v4466 = vld [vmem:[#allocation2 + $0x868] sm:$0xff]
      %v4467 = vld [vmem:[#allocation2 + $0x870] sm:$0xff]
      %v4468 = vld [vmem:[#allocation2 + $0x878] sm:$0xff]
      %v4469 = vld [vmem:[#allocation2 + $0x880] sm:$0xff]
      %v4470 = vld [vmem:[#allocation2 + $0x888] sm:$0xff]
      %v4471 = vld [vmem:[#allocation2 + $0x890] sm:$0xff]
      %v4472 = vld [vmem:[#allocation2 + $0x898] sm:$0xff]
      %v4473 = vld [vmem:[#allocation2 + $0x8a0] sm:$0xff]
      %v4474 = vld [vmem:[#allocation2 + $0x8a8] sm:$0xff]
      %v4475 = vld [vmem:[#allocation2 + $0x8b0] sm:$0xff]
      %v4476 = vld [vmem:[#allocation2 + $0x8b8] sm:$0xff]
      %v4477 = vld [vmem:[#allocation2 + $0x8c0] sm:$0xff]
      %v4478 = vld [vmem:[#allocation2 + $0x8c8] sm:$0xff]
      %v4479 = vld [vmem:[#allocation2 + $0x8d0] sm:$0xff]
      %v4480 = vld [vmem:[#allocation2 + $0x8d8] sm:$0xff]
      %v4481 = vld [vmem:[#allocation2 + $0x8e0] sm:$0xff]
      %v4482 = vld [vmem:[#allocation2 + $0x8e8] sm:$0xff]
      %v4483 = vld [vmem:[#allocation2 + $0x8f0] sm:$0xff]
      %v4484 = vld [vmem:[#allocation2 + $0x8f8] sm:$0xff]
      %v4485 = vld [vmem:[#allocation2 + $0x900] sm:$0xff]
      %v4486 = vld [vmem:[#allocation2 + $0x908] sm:$0xff]
      %v4487 = vld [vmem:[#allocation2 + $0x910] sm:$0xff]
      %v4488 = vld [vmem:[#allocation2 + $0x918] sm:$0xff]
      %v4489 = vld [vmem:[#allocation2 + $0x920] sm:$0xff]
      %v4490 = vld [vmem:[#allocation2 + $0x928] sm:$0xff]
      %v4491 = vld [vmem:[#allocation2 + $0x930] sm:$0xff]
      %v4492 = vld [vmem:[#allocation2 + $0x938] sm:$0xff]
      %v4493 = vld [vmem:[#allocation2 + $0x940] sm:$0xff]
      %v4494 = vld [vmem:[#allocation2 + $0x948] sm:$0xff]
      %v4495 = vld [vmem:[#allocation2 + $0x950] sm:$0xff]
      %v4496 = vld [vmem:[#allocation2 + $0x958] sm:$0xff]
      %v4497 = vld [vmem:[#allocation2 + $0x960] sm:$0xff]
      %v4498 = vld [vmem:[#allocation2 + $0x968] sm:$0xff]
      %v4499 = vld [vmem:[#allocation2 + $0x970] sm:$0xff]
      %v4500 = vld [vmem:[#allocation2 + $0x978] sm:$0xff]
      %v4501 = vld [vmem:[#allocation2 + $0x980] sm:$0xff]
      %v4502 = vld [vmem:[#allocation2 + $0x988] sm:$0xff]
      %v4503 = vld [vmem:[#allocation2 + $0x990] sm:$0xff]
      %v4504 = vld [vmem:[#allocation2 + $0x998] sm:$0xff]
      %v4505 = vld [vmem:[#allocation2 + $0x9a0] sm:$0xff]
      %v4506 = vld [vmem:[#allocation2 + $0x9a8] sm:$0xff]
      %v4507 = vld [vmem:[#allocation2 + $0x9b0] sm:$0xff]
      %v4508 = vld [vmem:[#allocation2 + $0x9b8] sm:$0xff]
      %v4509 = vld [vmem:[#allocation2 + $0x9c0] sm:$0xff]
      %v4510 = vld [vmem:[#allocation2 + $0x9c8] sm:$0xff]
      %v4511 = vld [vmem:[#allocation2 + $0x9d0] sm:$0xff]
      %v4512 = vld [vmem:[#allocation2 + $0x9d8] sm:$0xff]
      %v4513 = vld [vmem:[#allocation2 + $0x9e0] sm:$0xff]
      %v4514 = vld [vmem:[#allocation2 + $0x9e8] sm:$0xff]
      %v4515 = vld [vmem:[#allocation2 + $0x9f0] sm:$0xff]
      %v4516 = vld [vmem:[#allocation2 + $0x9f8] sm:$0xff]
      %v4517 = vld [vmem:[#allocation2 + $0xa00] sm:$0xff]
      %v4518 = vld [vmem:[#allocation2 + $0xa08] sm:$0xff]
      %v4519 = vld [vmem:[#allocation2 + $0xa10] sm:$0xff]
      %v4520 = vld [vmem:[#allocation2 + $0xa18] sm:$0xff]
      %v4521 = vld [vmem:[#allocation2 + $0xa20] sm:$0xff]
      %v4522 = vld [vmem:[#allocation2 + $0xa28] sm:$0xff]
      %v4523 = vld [vmem:[#allocation2 + $0xa30] sm:$0xff]
      %v4524 = vld [vmem:[#allocation2 + $0xa38] sm:$0xff]
      %v4525 = vld [vmem:[#allocation2 + $0xa40] sm:$0xff]
      %v4526 = vld [vmem:[#allocation2 + $0xa48] sm:$0xff]
      %v4527 = vld [vmem:[#allocation2 + $0xa50] sm:$0xff]
      %v4528 = vld [vmem:[#allocation2 + $0xa58] sm:$0xff]
      %v4529 = vld [vmem:[#allocation2 + $0xa60] sm:$0xff]
      %v4530 = vld [vmem:[#allocation2 + $0xa68] sm:$0xff]
      %v4531 = vld [vmem:[#allocation2 + $0xa70] sm:$0xff]
      %v4532 = vld [vmem:[#allocation2 + $0xa78] sm:$0xff]
      %v4533 = vld [vmem:[#allocation2 + $0xa80] sm:$0xff]
      %v4534 = vld [vmem:[#allocation2 + $0xa88] sm:$0xff]
      %v4535 = vld [vmem:[#allocation2 + $0xa90] sm:$0xff]
      %v4536 = vld [vmem:[#allocation2 + $0xa98] sm:$0xff]
      %v4537 = vld [vmem:[#allocation2 + $0xaa0] sm:$0xff]
      %v4538 = vld [vmem:[#allocation2 + $0xaa8] sm:$0xff]
      %v4539 = vld [vmem:[#allocation2 + $0xab0] sm:$0xff]
      %v4540 = vld [vmem:[#allocation2 + $0xab8] sm:$0xff]
      %v4541 = vld [vmem:[#allocation2 + $0xac0] sm:$0xff]
      %v4542 = vld [vmem:[#allocation2 + $0xac8] sm:$0xff]
      %v4543 = vld [vmem:[#allocation2 + $0xad0] sm:$0xff]
      %v4544 = vld [vmem:[#allocation2 + $0xad8] sm:$0xff]
      %v4545 = vld [vmem:[#allocation2 + $0xae0] sm:$0xff]
      %v4546 = vld [vmem:[#allocation2 + $0xae8] sm:$0xff]
      %v4547 = vld [vmem:[#allocation2 + $0xaf0] sm:$0xff]
      %v4548 = vld [vmem:[#allocation2 + $0xaf8] sm:$0xff]
      %v4549 = vld [vmem:[#allocation2 + $0xb00] sm:$0xff]
      %v4550 = vld [vmem:[#allocation2 + $0xb08] sm:$0xff]
      %v4551 = vld [vmem:[#allocation2 + $0xb10] sm:$0xff]
      %v4552 = vld [vmem:[#allocation2 + $0xb18] sm:$0xff]
      %v4553 = vld [vmem:[#allocation2 + $0xb20] sm:$0xff]
      %v4554 = vld [vmem:[#allocation2 + $0xb28] sm:$0xff]
      %v4555 = vld [vmem:[#allocation2 + $0xb30] sm:$0xff]
      %v4556 = vld [vmem:[#allocation2 + $0xb38] sm:$0xff]
      %v4557 = vld [vmem:[#allocation2 + $0xb40] sm:$0xff]
      %v4558 = vld [vmem:[#allocation2 + $0xb48] sm:$0xff]
      %v4559 = vld [vmem:[#allocation2 + $0xb50] sm:$0xff]
      %v4560 = vld [vmem:[#allocation2 + $0xb58] sm:$0xff]
      %v4561 = vld [vmem:[#allocation2 + $0xb60] sm:$0xff]
      %v4562 = vld [vmem:[#allocation2 + $0xb68] sm:$0xff]
      %v4563 = vld [vmem:[#allocation2 + $0xb70] sm:$0xff]
      %v4564 = vld [vmem:[#allocation2 + $0xb78] sm:$0xff]
      %v4565 = vld [vmem:[#allocation2 + $0xb80] sm:$0xff]
      %v4566 = vld [vmem:[#allocation2 + $0xb88] sm:$0xff]
      %v4567 = vld [vmem:[#allocation2 + $0xb90] sm:$0xff]
      %v4568 = vld [vmem:[#allocation2 + $0xb98] sm:$0xff]
      %v4569 = vld [vmem:[#allocation2 + $0xba0] sm:$0xff]
      %v4570 = vld [vmem:[#allocation2 + $0xba8] sm:$0xff]
      %v4571 = vld [vmem:[#allocation2 + $0xbb0] sm:$0xff]
      %v4572 = vld [vmem:[#allocation2 + $0xbb8] sm:$0xff]
      %v4573 = vld [vmem:[#allocation2 + $0xbc0] sm:$0xff]
      %v4574 = vld [vmem:[#allocation2 + $0xbc8] sm:$0xff]
      %v4575 = vld [vmem:[#allocation2 + $0xbd0] sm:$0xff]
      %v4576 = vld [vmem:[#allocation2 + $0xbd8] sm:$0xff]
      %v4577 = vld [vmem:[#allocation2 + $0xbe0] sm:$0xff]
      %v4578 = vld [vmem:[#allocation2 + $0xbe8] sm:$0xff]
      %v4579 = vld [vmem:[#allocation2 + $0xbf0] sm:$0xff]
      %v4580 = vld [vmem:[#allocation2 + $0xbf8] sm:$0xff]
      %v4581 = vld [vmem:[#allocation2 + $0xc00] sm:$0xff]
      %v4582 = vld [vmem:[#allocation2 + $0xc08] sm:$0xff]
      %v4583 = vld [vmem:[#allocation2 + $0xc10] sm:$0xff]
      %v4584 = vld [vmem:[#allocation2 + $0xc18] sm:$0xff]
      %v4585 = vld [vmem:[#allocation2 + $0xc20] sm:$0xff]
      %v4586 = vld [vmem:[#allocation2 + $0xc28] sm:$0xff]
      %v4587 = vld [vmem:[#allocation2 + $0xc30] sm:$0xff]
      %v4588 = vld [vmem:[#allocation2 + $0xc38] sm:$0xff]
      %v4589 = vld [vmem:[#allocation2 + $0xc40] sm:$0xff]
      %v4590 = vld [vmem:[#allocation2 + $0xc48] sm:$0xff]
      %v4591 = vld [vmem:[#allocation2 + $0xc50] sm:$0xff]
      %v4592 = vld [vmem:[#allocation2 + $0xc58] sm:$0xff]
      %v4593 = vld [vmem:[#allocation2 + $0xc60] sm:$0xff]
      %v4594 = vld [vmem:[#allocation2 + $0xc68] sm:$0xff]
      %v4595 = vld [vmem:[#allocation2 + $0xc70] sm:$0xff]
      %v4596 = vld [vmem:[#allocation2 + $0xc78] sm:$0xff]
      %v4597 = vld [vmem:[#allocation2 + $0xc80] sm:$0xff]
      %v4598 = vld [vmem:[#allocation2 + $0xc88] sm:$0xff]
      %v4599 = vld [vmem:[#allocation2 + $0xc90] sm:$0xff]
      %v4600 = vld [vmem:[#allocation2 + $0xc98] sm:$0xff]
      %v4601 = vld [vmem:[#allocation2 + $0xca0] sm:$0xff]
      %v4602 = vld [vmem:[#allocation2 + $0xca8] sm:$0xff]
      %v4603 = vld [vmem:[#allocation2 + $0xcb0] sm:$0xff]
      %v4604 = vld [vmem:[#allocation2 + $0xcb8] sm:$0xff]
      %v4605 = vld [vmem:[#allocation2 + $0xcc0] sm:$0xff]
      %v4606 = vld [vmem:[#allocation2 + $0xcc8] sm:$0xff]
      %v4607 = vld [vmem:[#allocation2 + $0xcd0] sm:$0xff]
      %v4608 = vld [vmem:[#allocation2 + $0xcd8] sm:$0xff]
      %v4609 = vld [vmem:[#allocation2 + $0xce0] sm:$0xff]
      %v4610 = vld [vmem:[#allocation2 + $0xce8] sm:$0xff]
      %v4611 = vld [vmem:[#allocation2 + $0xcf0] sm:$0xff]
      %v4612 = vld [vmem:[#allocation2 + $0xcf8] sm:$0xff]
      %v4613 = vld [vmem:[#allocation2 + $0xd00] sm:$0xff]
      %v4614 = vld [vmem:[#allocation2 + $0xd08] sm:$0xff]
      %v4615 = vld [vmem:[#allocation2 + $0xd10] sm:$0xff]
      %v4616 = vld [vmem:[#allocation2 + $0xd18] sm:$0xff]
      %v4617 = vld [vmem:[#allocation2 + $0xd20] sm:$0xff]
      %v4618 = vld [vmem:[#allocation2 + $0xd28] sm:$0xff]
      %v4619 = vld [vmem:[#allocation2 + $0xd30] sm:$0xff]
      %v4620 = vld [vmem:[#allocation2 + $0xd38] sm:$0xff]
      %v4621 = vld [vmem:[#allocation2 + $0xd40] sm:$0xff]
      %v4622 = vld [vmem:[#allocation2 + $0xd48] sm:$0xff]
      %v4623 = vld [vmem:[#allocation2 + $0xd50] sm:$0xff]
      %v4624 = vld [vmem:[#allocation2 + $0xd58] sm:$0xff]
      %v4625 = vld [vmem:[#allocation2 + $0xd60] sm:$0xff]
      %v4626 = vld [vmem:[#allocation2 + $0xd68] sm:$0xff]
      %v4627 = vld [vmem:[#allocation2 + $0xd70] sm:$0xff]
      %v4628 = vld [vmem:[#allocation2 + $0xd78] sm:$0xff]
      %v4629 = vld [vmem:[#allocation2 + $0xd80] sm:$0xff]
      %v4630 = vld [vmem:[#allocation2 + $0xd88] sm:$0xff]
      %v4631 = vld [vmem:[#allocation2 + $0xd90] sm:$0xff]
      %v4632 = vld [vmem:[#allocation2 + $0xd98] sm:$0xff]
      %v4633 = vld [vmem:[#allocation2 + $0xda0] sm:$0xff]
      %v4634 = vld [vmem:[#allocation2 + $0xda8] sm:$0xff]
      %v4635 = vld [vmem:[#allocation2 + $0xdb0] sm:$0xff]
      %v4636 = vld [vmem:[#allocation2 + $0xdb8] sm:$0xff]
      %v4637 = vld [vmem:[#allocation2 + $0xdc0] sm:$0xff]
      %v4638 = vld [vmem:[#allocation2 + $0xdc8] sm:$0xff]
      %v4639 = vld [vmem:[#allocation2 + $0xdd0] sm:$0xff]
      %v4640 = vld [vmem:[#allocation2 + $0xdd8] sm:$0xff]
      %v4641 = vld [vmem:[#allocation2 + $0xde0] sm:$0xff]
      %v4642 = vld [vmem:[#allocation2 + $0xde8] sm:$0xff]
      %v4643 = vld [vmem:[#allocation2 + $0xdf0] sm:$0xff]
      %v4644 = vld [vmem:[#allocation2 + $0xdf8] sm:$0xff]
      %v4645 = vld [vmem:[#allocation2 + $0xe00] sm:$0xff]
      %v4646 = vld [vmem:[#allocation2 + $0xe08] sm:$0xff]
      %v4647 = vld [vmem:[#allocation2 + $0xe10] sm:$0xff]
      %v4648 = vld [vmem:[#allocation2 + $0xe18] sm:$0xff]
      %v4649 = vld [vmem:[#allocation2 + $0xe20] sm:$0xff]
      %v4650 = vld [vmem:[#allocation2 + $0xe28] sm:$0xff]
      %v4651 = vld [vmem:[#allocation2 + $0xe30] sm:$0xff]
      %v4652 = vld [vmem:[#allocation2 + $0xe38] sm:$0xff]
      %v4653 = vld [vmem:[#allocation2 + $0xe40] sm:$0xff]
      %v4654 = vld [vmem:[#allocation2 + $0xe48] sm:$0xff]
      %v4655 = vld [vmem:[#allocation2 + $0xe50] sm:$0xff]
      %v4656 = vld [vmem:[#allocation2 + $0xe58] sm:$0xff]
      %v4657 = vld [vmem:[#allocation2 + $0xe60] sm:$0xff]
      %v4658 = vld [vmem:[#allocation2 + $0xe68] sm:$0xff]
      %v4659 = vld [vmem:[#allocation2 + $0xe70] sm:$0xff]
      %v4660 = vld [vmem:[#allocation2 + $0xe78] sm:$0xff]
      %v4661 = vld [vmem:[#allocation2 + $0xe80] sm:$0xff]
      %v4662 = vld [vmem:[#allocation2 + $0xe88] sm:$0xff]
      %v4663 = vld [vmem:[#allocation2 + $0xe90] sm:$0xff]
      %v4664 = vld [vmem:[#allocation2 + $0xe98] sm:$0xff]
      %v4665 = vld [vmem:[#allocation2 + $0xea0] sm:$0xff]
      %v4666 = vld [vmem:[#allocation2 + $0xea8] sm:$0xff]
      %v4667 = vld [vmem:[#allocation2 + $0xeb0] sm:$0xff]
      %v4668 = vld [vmem:[#allocation2 + $0xeb8] sm:$0xff]
      %v4669 = vld [vmem:[#allocation2 + $0xec0] sm:$0xff]
      %v4670 = vld [vmem:[#allocation2 + $0xec8] sm:$0xff]
      %v4671 = vld [vmem:[#allocation2 + $0xed0] sm:$0xff]
      %v4672 = vld [vmem:[#allocation2 + $0xed8] sm:$0xff]
      %v4673 = vld [vmem:[#allocation2 + $0xee0] sm:$0xff]
      %v4674 = vld [vmem:[#allocation2 + $0xee8] sm:$0xff]
      %v4675 = vld [vmem:[#allocation2 + $0xef0] sm:$0xff]
      %v4676 = vld [vmem:[#allocation2 + $0xef8] sm:$0xff]
      %v4677 = vld [vmem:[#allocation2 + $0xf00] sm:$0xff]
      %v4678 = vld [vmem:[#allocation2 + $0xf08] sm:$0xff]
      %v4679 = vld [vmem:[#allocation2 + $0xf10] sm:$0xff]
      %v4680 = vld [vmem:[#allocation2 + $0xf18] sm:$0xff]
      %v4681 = vld [vmem:[#allocation2 + $0xf20] sm:$0xff]
      %v4682 = vld [vmem:[#allocation2 + $0xf28] sm:$0xff]
      %v4683 = vld [vmem:[#allocation2 + $0xf30] sm:$0xff]
      %v4684 = vld [vmem:[#allocation2 + $0xf38] sm:$0xff]
      %v4685 = vld [vmem:[#allocation2 + $0xf40] sm:$0xff]
      %v4686 = vld [vmem:[#allocation2 + $0xf48] sm:$0xff]
      %v4687 = vld [vmem:[#allocation2 + $0xf50] sm:$0xff]
      %v4688 = vld [vmem:[#allocation2 + $0xf58] sm:$0xff]
      %v4689 = vld [vmem:[#allocation2 + $0xf60] sm:$0xff]
      %v4690 = vld [vmem:[#allocation2 + $0xf68] sm:$0xff]
      %v4691 = vld [vmem:[#allocation2 + $0xf70] sm:$0xff]
      %v4692 = vld [vmem:[#allocation2 + $0xf78] sm:$0xff]
      %v4693 = vld [vmem:[#allocation2 + $0xf80] sm:$0xff]
      %v4694 = vld [vmem:[#allocation2 + $0xf88] sm:$0xff]
      %v4695 = vld [vmem:[#allocation2 + $0xf90] sm:$0xff]
      %v4696 = vld [vmem:[#allocation2 + $0xf98] sm:$0xff]
      %v4697 = vld [vmem:[#allocation2 + $0xfa0] sm:$0xff]
      %v4698 = vld [vmem:[#allocation2 + $0xfa8] sm:$0xff]
      %v4699 = vld [vmem:[#allocation2 + $0xfb0] sm:$0xff]
      %v4700 = vld [vmem:[#allocation2 + $0xfb8] sm:$0xff]
      %v4701 = vld [vmem:[#allocation2 + $0xfc0] sm:$0xff]
      %v4702 = vld [vmem:[#allocation2 + $0xfc8] sm:$0xff]
      %v4703 = vld [vmem:[#allocation2 + $0xfd0] sm:$0xff]
      %v4704 = vld [vmem:[#allocation2 + $0xfd8] sm:$0xff]
      %v4705 = vld [vmem:[#allocation2 + $0xfe0] sm:$0xff]
      %v4706 = vld [vmem:[#allocation2 + $0xfe8] sm:$0xff]
      %v4707 = vld [vmem:[#allocation2 + $0xff0] sm:$0xff]
      %v4708 = vld [vmem:[#allocation2 + $0xff8] sm:$0xff]
      %v4709 = vld [vmem:[#allocation2 + $0x1000] sm:$0xff]
      %v4710 = vld [vmem:[#allocation2 + $0x1008] sm:$0xff]
      %v4711 = vld [vmem:[#allocation2 + $0x1010] sm:$0xff]
      %v4712 = vld [vmem:[#allocation2 + $0x1018] sm:$0xff]
      %v4713 = vld [vmem:[#allocation2 + $0x1020] sm:$0xff]
      %v4714 = vld [vmem:[#allocation2 + $0x1028] sm:$0xff]
      %v4715 = vld [vmem:[#allocation2 + $0x1030] sm:$0xff]
      %v4716 = vld [vmem:[#allocation2 + $0x1038] sm:$0xff]
      %v4717 = vld [vmem:[#allocation2 + $0x1040] sm:$0xff]
      %v4718 = vld [vmem:[#allocation2 + $0x1048] sm:$0xff]
      %v4719 = vld [vmem:[#allocation2 + $0x1050] sm:$0xff]
      %v4720 = vld [vmem:[#allocation2 + $0x1058] sm:$0xff]
      %v4721 = vld [vmem:[#allocation2 + $0x1060] sm:$0xff]
      %v4722 = vld [vmem:[#allocation2 + $0x1068] sm:$0xff]
      %v4723 = vld [vmem:[#allocation2 + $0x1070] sm:$0xff]
      %v4724 = vld [vmem:[#allocation2 + $0x1078] sm:$0xff]
      %v4725 = vld [vmem:[#allocation2 + $0x1080] sm:$0xff]
      %v4726 = vld [vmem:[#allocation2 + $0x1088] sm:$0xff]
      %v4727 = vld [vmem:[#allocation2 + $0x1090] sm:$0xff]
      %v4728 = vld [vmem:[#allocation2 + $0x1098] sm:$0xff]
      %v4729 = vld [vmem:[#allocation2 + $0x10a0] sm:$0xff]
      %v4730 = vld [vmem:[#allocation2 + $0x10a8] sm:$0xff]
      %v4731 = vld [vmem:[#allocation2 + $0x10b0] sm:$0xff]
      %v4732 = vld [vmem:[#allocation2 + $0x10b8] sm:$0xff]
      %v4733 = vld [vmem:[#allocation2 + $0x10c0] sm:$0xff]
      %v4734 = vld [vmem:[#allocation2 + $0x10c8] sm:$0xff]
      %v4735 = vld [vmem:[#allocation2 + $0x10d0] sm:$0xff]
      %v4736 = vld [vmem:[#allocation2 + $0x10d8] sm:$0xff]
      %v4737 = vld [vmem:[#allocation2 + $0x10e0] sm:$0xff]
      %v4738 = vld [vmem:[#allocation2 + $0x10e8] sm:$0xff]
      %v4739 = vld [vmem:[#allocation2 + $0x10f0] sm:$0xff]
      %v4740 = vld [vmem:[#allocation2 + $0x10f8] sm:$0xff]
      %v4741 = vld [vmem:[#allocation2 + $0x1100] sm:$0xff]
      %v4742 = vld [vmem:[#allocation2 + $0x1108] sm:$0xff]
      %v4743 = vld [vmem:[#allocation2 + $0x1110] sm:$0xff]
      %v4744 = vld [vmem:[#allocation2 + $0x1118] sm:$0xff]
      %v4745 = vld [vmem:[#allocation2 + $0x1120] sm:$0xff]
      %v4746 = vld [vmem:[#allocation2 + $0x1128] sm:$0xff]
      %v4747 = vld [vmem:[#allocation2 + $0x1130] sm:$0xff]
      %v4748 = vld [vmem:[#allocation2 + $0x1138] sm:$0xff]
      %v4749 = vld [vmem:[#allocation2 + $0x1140] sm:$0xff]
      %v4750 = vld [vmem:[#allocation2 + $0x1148] sm:$0xff]
      %v4751 = vld [vmem:[#allocation2 + $0x1150] sm:$0xff]
      %v4752 = vld [vmem:[#allocation2 + $0x1158] sm:$0xff]
      %v4753 = vld [vmem:[#allocation2 + $0x1160] sm:$0xff]
      %v4754 = vld [vmem:[#allocation2 + $0x1168] sm:$0xff]
      %v4755 = vld [vmem:[#allocation2 + $0x1170] sm:$0xff]
      %v4756 = vld [vmem:[#allocation2 + $0x1178] sm:$0xff]
      %v4757 = vld [vmem:[#allocation2 + $0x1180] sm:$0xff]
      %v4758 = vld [vmem:[#allocation2 + $0x1188] sm:$0xff]
      %v4759 = vld [vmem:[#allocation2 + $0x1190] sm:$0xff]
      %v4760 = vld [vmem:[#allocation2 + $0x1198] sm:$0xff]
      %v4761 = vld [vmem:[#allocation2 + $0x11a0] sm:$0xff]
      %v4762 = vld [vmem:[#allocation2 + $0x11a8] sm:$0xff]
      %v4763 = vld [vmem:[#allocation2 + $0x11b0] sm:$0xff]
      %v4764 = vld [vmem:[#allocation2 + $0x11b8] sm:$0xff]
      %v4765 = vld [vmem:[#allocation2 + $0x11c0] sm:$0xff]
      %v4766 = vld [vmem:[#allocation2 + $0x11c8] sm:$0xff]
      %v4767 = vld [vmem:[#allocation2 + $0x11d0] sm:$0xff]
      %v4768 = vld [vmem:[#allocation2 + $0x11d8] sm:$0xff]
      %v4769 = vld [vmem:[#allocation2 + $0x11e0] sm:$0xff]
      %v4770 = vld [vmem:[#allocation2 + $0x11e8] sm:$0xff]
      %v4771 = vld [vmem:[#allocation2 + $0x11f0] sm:$0xff]
      %v4772 = vld [vmem:[#allocation2 + $0x11f8] sm:$0xff]
      %v4773 = vld [vmem:[%s1] sm:$0xff]
      %v4774 = vld [vmem:[%s1 + $0x8] sm:$0xff]
      %v4775 = vld [vmem:[%s1 + $0x10] sm:$0xff]
      %v4776 = vld [vmem:[%s1 + $0x18] sm:$0xff]
      %v4777 = vld [vmem:[%s1 + $0x20] sm:$0xff]
      %v4778 = vld [vmem:[%s1 + $0x28] sm:$0xff]
      %v4779 = vld [vmem:[%s1 + $0x30] sm:$0xff]
      %v4780 = vld [vmem:[%s1 + $0x38] sm:$0xff]
      %v4781 = vld [vmem:[%s1 + $0x40] sm:$0xff]
      %v4782 = vld [vmem:[%s1 + $0x48] sm:$0xff]
      %v4783 = vld [vmem:[%s1 + $0x50] sm:$0xff]
      %v4784 = vld [vmem:[%s1 + $0x58] sm:$0xff]
      %v4785 = vld [vmem:[%s1 + $0x60] sm:$0xff]
      %v4786 = vld [vmem:[%s1 + $0x68] sm:$0xff]
      %v4787 = vld [vmem:[%s1 + $0x70] sm:$0xff]
      %v4788 = vld [vmem:[%s1 + $0x78] sm:$0xff]
      %v4789 = vld [vmem:[%s1 + $0x80] sm:$0xff]
      %v4790 = vld [vmem:[%s1 + $0x88] sm:$0xff]
      %v4791 = vld [vmem:[%s1 + $0x90] sm:$0xff]
      %v4792 = vld [vmem:[%s1 + $0x98] sm:$0xff]
      %v4793 = vld [vmem:[%s1 + $0xa0] sm:$0xff]
      %v4794 = vld [vmem:[%s1 + $0xa8] sm:$0xff]
      %v4795 = vld [vmem:[%s1 + $0xb0] sm:$0xff]
      %v4796 = vld [vmem:[%s1 + $0xb8] sm:$0xff]
      %v4797 = vld [vmem:[%s1 + $0xc0] sm:$0xff]
      %v4798 = vld [vmem:[%s1 + $0xc8] sm:$0xff]
      %v4799 = vld [vmem:[%s1 + $0xd0] sm:$0xff]
      %v4800 = vld [vmem:[%s1 + $0xd8] sm:$0xff]
      %v4801 = vld [vmem:[%s1 + $0xe0] sm:$0xff]
      %v4802 = vld [vmem:[%s1 + $0xe8] sm:$0xff]
      %v4803 = vld [vmem:[%s1 + $0xf0] sm:$0xff]
      %v4804 = vld [vmem:[%s1 + $0xf8] sm:$0xff]
      %v4805 = vld [vmem:[%s1 + $0x100] sm:$0xff]
      %v4806 = vld [vmem:[%s1 + $0x108] sm:$0xff]
      %v4807 = vld [vmem:[%s1 + $0x110] sm:$0xff]
      %v4808 = vld [vmem:[%s1 + $0x118] sm:$0xff]
      %v4809 = vld [vmem:[%s1 + $0x120] sm:$0xff]
      %v4810 = vld [vmem:[%s1 + $0x128] sm:$0xff]
      %v4811 = vld [vmem:[%s1 + $0x130] sm:$0xff]
      %v4812 = vld [vmem:[%s1 + $0x138] sm:$0xff]
      %v4813 = vld [vmem:[%s1 + $0x140] sm:$0xff]
      %v4814 = vld [vmem:[%s1 + $0x148] sm:$0xff]
      %v4815 = vld [vmem:[%s1 + $0x150] sm:$0xff]
      %v4816 = vld [vmem:[%s1 + $0x158] sm:$0xff]
      %v4817 = vld [vmem:[%s1 + $0x160] sm:$0xff]
      %v4818 = vld [vmem:[%s1 + $0x168] sm:$0xff]
      %v4819 = vld [vmem:[%s1 + $0x170] sm:$0xff]
      %v4820 = vld [vmem:[%s1 + $0x178] sm:$0xff]
      %v4821 = vld [vmem:[%s1 + $0x180] sm:$0xff]
      %v4822 = vld [vmem:[%s1 + $0x188] sm:$0xff]
      %v4823 = vld [vmem:[%s1 + $0x190] sm:$0xff]
      %v4824 = vld [vmem:[%s1 + $0x198] sm:$0xff]
      %v4825 = vld [vmem:[%s1 + $0x1a0] sm:$0xff]
      %v4826 = vld [vmem:[%s1 + $0x1a8] sm:$0xff]
      %v4827 = vld [vmem:[%s1 + $0x1b0] sm:$0xff]
      %v4828 = vld [vmem:[%s1 + $0x1b8] sm:$0xff]
      %v4829 = vld [vmem:[%s1 + $0x1c0] sm:$0xff]
      %v4830 = vld [vmem:[%s1 + $0x1c8] sm:$0xff]
      %v4831 = vld [vmem:[%s1 + $0x1d0] sm:$0xff]
      %v4832 = vld [vmem:[%s1 + $0x1d8] sm:$0xff]
      %v4833 = vld [vmem:[%s1 + $0x1e0] sm:$0xff]
      %v4834 = vld [vmem:[%s1 + $0x1e8] sm:$0xff]
      %v4835 = vld [vmem:[%s1 + $0x1f0] sm:$0xff]
      %v4836 = vld [vmem:[%s1 + $0x1f8] sm:$0xff]
      %v4837 = vld [vmem:[%s1 + $0x200] sm:$0xff]
      %v4838 = vld [vmem:[%s1 + $0x208] sm:$0xff]
      %v4839 = vld [vmem:[%s1 + $0x210] sm:$0xff]
      %v4840 = vld [vmem:[%s1 + $0x218] sm:$0xff]
      %v4841 = vld [vmem:[%s1 + $0x220] sm:$0xff]
      %v4842 = vld [vmem:[%s1 + $0x228] sm:$0xff]
      %v4843 = vld [vmem:[%s1 + $0x230] sm:$0xff]
      %v4844 = vld [vmem:[%s1 + $0x238] sm:$0xff]
      %v4845 = vld [vmem:[%s1 + $0x240] sm:$0xff]
      %v4846 = vld [vmem:[%s1 + $0x248] sm:$0xff]
      %v4847 = vld [vmem:[%s1 + $0x250] sm:$0xff]
      %v4848 = vld [vmem:[%s1 + $0x258] sm:$0xff]
      %v4849 = vld [vmem:[%s1 + $0x260] sm:$0xff]
      %v4850 = vld [vmem:[%s1 + $0x268] sm:$0xff]
      %v4851 = vld [vmem:[%s1 + $0x270] sm:$0xff]
      %v4852 = vld [vmem:[%s1 + $0x278] sm:$0xff]
      %v4853 = vld [vmem:[%s1 + $0x280] sm:$0xff]
      %v4854 = vld [vmem:[%s1 + $0x288] sm:$0xff]
      %v4855 = vld [vmem:[%s1 + $0x290] sm:$0xff]
      %v4856 = vld [vmem:[%s1 + $0x298] sm:$0xff]
      %v4857 = vld [vmem:[%s1 + $0x2a0] sm:$0xff]
      %v4858 = vld [vmem:[%s1 + $0x2a8] sm:$0xff]
      %v4859 = vld [vmem:[%s1 + $0x2b0] sm:$0xff]
      %v4860 = vld [vmem:[%s1 + $0x2b8] sm:$0xff]
      %v4861 = vld [vmem:[%s1 + $0x2c0] sm:$0xff]
      %v4862 = vld [vmem:[%s1 + $0x2c8] sm:$0xff]
      %v4863 = vld [vmem:[%s1 + $0x2d0] sm:$0xff]
      %v4864 = vld [vmem:[%s1 + $0x2d8] sm:$0xff]
      %v4865 = vld [vmem:[%s1 + $0x2e0] sm:$0xff]
      %v4866 = vld [vmem:[%s1 + $0x2e8] sm:$0xff]
      %v4867 = vld [vmem:[%s1 + $0x2f0] sm:$0xff]
      %v4868 = vld [vmem:[%s1 + $0x2f8] sm:$0xff]
      %v4869 = vld [vmem:[%s1 + $0x300] sm:$0xff]
      %v4870 = vld [vmem:[%s1 + $0x308] sm:$0xff]
      %v4871 = vld [vmem:[%s1 + $0x310] sm:$0xff]
      %v4872 = vld [vmem:[%s1 + $0x318] sm:$0xff]
      %v4873 = vld [vmem:[%s1 + $0x320] sm:$0xff]
      %v4874 = vld [vmem:[%s1 + $0x328] sm:$0xff]
      %v4875 = vld [vmem:[%s1 + $0x330] sm:$0xff]
      %v4876 = vld [vmem:[%s1 + $0x338] sm:$0xff]
      %v4877 = vld [vmem:[%s1 + $0x340] sm:$0xff]
      %v4878 = vld [vmem:[%s1 + $0x348] sm:$0xff]
      %v4879 = vld [vmem:[%s1 + $0x350] sm:$0xff]
      %v4880 = vld [vmem:[%s1 + $0x358] sm:$0xff]
      %v4881 = vld [vmem:[%s1 + $0x360] sm:$0xff]
      %v4882 = vld [vmem:[%s1 + $0x368] sm:$0xff]
      %v4883 = vld [vmem:[%s1 + $0x370] sm:$0xff]
      %v4884 = vld [vmem:[%s1 + $0x378] sm:$0xff]
      %v4885 = vld [vmem:[%s1 + $0x380] sm:$0xff]
      %v4886 = vld [vmem:[%s1 + $0x388] sm:$0xff]
      %v4887 = vld [vmem:[%s1 + $0x390] sm:$0xff]
      %v4888 = vld [vmem:[%s1 + $0x398] sm:$0xff]
      %v4889 = vld [vmem:[%s1 + $0x3a0] sm:$0xff]
      %v4890 = vld [vmem:[%s1 + $0x3a8] sm:$0xff]
      %v4891 = vld [vmem:[%s1 + $0x3b0] sm:$0xff]
      %v4892 = vld [vmem:[%s1 + $0x3b8] sm:$0xff]
      %v4893 = vld [vmem:[%s1 + $0x3c0] sm:$0xff]
      %v4894 = vld [vmem:[%s1 + $0x3c8] sm:$0xff]
      %v4895 = vld [vmem:[%s1 + $0x3d0] sm:$0xff]
      %v4896 = vld [vmem:[%s1 + $0x3d8] sm:$0xff]
      %v4897 = vld [vmem:[%s1 + $0x3e0] sm:$0xff]
      %v4898 = vld [vmem:[%s1 + $0x3e8] sm:$0xff]
      %v4899 = vld [vmem:[%s1 + $0x3f0] sm:$0xff]
      %v4900 = vld [vmem:[%s1 + $0x3f8] sm:$0xff]
      %v4901 = vld [vmem:[%s1 + $0x400] sm:$0xff]
      %v4902 = vld [vmem:[%s1 + $0x408] sm:$0xff]
      %v4903 = vld [vmem:[%s1 + $0x410] sm:$0xff]
      %v4904 = vld [vmem:[%s1 + $0x418] sm:$0xff]
      %v4905 = vld [vmem:[%s1 + $0x420] sm:$0xff]
      %v4906 = vld [vmem:[%s1 + $0x428] sm:$0xff]
      %v4907 = vld [vmem:[%s1 + $0x430] sm:$0xff]
      %v4908 = vld [vmem:[%s1 + $0x438] sm:$0xff]
      %v4909 = vld [vmem:[%s1 + $0x440] sm:$0xff]
      %v4910 = vld [vmem:[%s1 + $0x448] sm:$0xff]
      %v4911 = vld [vmem:[%s1 + $0x450] sm:$0xff]
      %v4912 = vld [vmem:[%s1 + $0x458] sm:$0xff]
      %v4913 = vld [vmem:[%s1 + $0x460] sm:$0xff]
      %v4914 = vld [vmem:[%s1 + $0x468] sm:$0xff]
      %v4915 = vld [vmem:[%s1 + $0x470] sm:$0xff]
      %v4916 = vld [vmem:[%s1 + $0x478] sm:$0xff]
      %v4917 = vld [vmem:[%s1 + $0x480] sm:$0xff]
      %v4918 = vld [vmem:[%s1 + $0x488] sm:$0xff]
      %v4919 = vld [vmem:[%s1 + $0x490] sm:$0xff]
      %v4920 = vld [vmem:[%s1 + $0x498] sm:$0xff]
      %v4921 = vld [vmem:[%s1 + $0x4a0] sm:$0xff]
      %v4922 = vld [vmem:[%s1 + $0x4a8] sm:$0xff]
      %v4923 = vld [vmem:[%s1 + $0x4b0] sm:$0xff]
      %v4924 = vld [vmem:[%s1 + $0x4b8] sm:$0xff]
      %v4925 = vld [vmem:[%s1 + $0x4c0] sm:$0xff]
      %v4926 = vld [vmem:[%s1 + $0x4c8] sm:$0xff]
      %v4927 = vld [vmem:[%s1 + $0x4d0] sm:$0xff]
      %v4928 = vld [vmem:[%s1 + $0x4d8] sm:$0xff]
      %v4929 = vld [vmem:[%s1 + $0x4e0] sm:$0xff]
      %v4930 = vld [vmem:[%s1 + $0x4e8] sm:$0xff]
      %v4931 = vld [vmem:[%s1 + $0x4f0] sm:$0xff]
      %v4932 = vld [vmem:[%s1 + $0x4f8] sm:$0xff]
      %v4933 = vld [vmem:[%s1 + $0x500] sm:$0xff]
      %v4934 = vld [vmem:[%s1 + $0x508] sm:$0xff]
      %v4935 = vld [vmem:[%s1 + $0x510] sm:$0xff]
      %v4936 = vld [vmem:[%s1 + $0x518] sm:$0xff]
      %v4937 = vld [vmem:[%s1 + $0x520] sm:$0xff]
      %v4938 = vld [vmem:[%s1 + $0x528] sm:$0xff]
      %v4939 = vld [vmem:[%s1 + $0x530] sm:$0xff]
      %v4940 = vld [vmem:[%s1 + $0x538] sm:$0xff]
      %v4941 = vld [vmem:[%s1 + $0x540] sm:$0xff]
      %v4942 = vld [vmem:[%s1 + $0x548] sm:$0xff]
      %v4943 = vld [vmem:[%s1 + $0x550] sm:$0xff]
      %v4944 = vld [vmem:[%s1 + $0x558] sm:$0xff]
      %v4945 = vld [vmem:[%s1 + $0x560] sm:$0xff]
      %v4946 = vld [vmem:[%s1 + $0x568] sm:$0xff]
      %v4947 = vld [vmem:[%s1 + $0x570] sm:$0xff]
      %v4948 = vld [vmem:[%s1 + $0x578] sm:$0xff]
      %v4949 = vld [vmem:[%s1 + $0x580] sm:$0xff]
      %v4950 = vld [vmem:[%s1 + $0x588] sm:$0xff]
      %v4951 = vld [vmem:[%s1 + $0x590] sm:$0xff]
      %v4952 = vld [vmem:[%s1 + $0x598] sm:$0xff]
      %v4953 = vld [vmem:[%s1 + $0x5a0] sm:$0xff]
      %v4954 = vld [vmem:[%s1 + $0x5a8] sm:$0xff]
      %v4955 = vld [vmem:[%s1 + $0x5b0] sm:$0xff]
      %v4956 = vld [vmem:[%s1 + $0x5b8] sm:$0xff]
      %v4957 = vld [vmem:[%s1 + $0x5c0] sm:$0xff]
      %v4958 = vld [vmem:[%s1 + $0x5c8] sm:$0xff]
      %v4959 = vld [vmem:[%s1 + $0x5d0] sm:$0xff]
      %v4960 = vld [vmem:[%s1 + $0x5d8] sm:$0xff]
      %v4961 = vld [vmem:[%s1 + $0x5e0] sm:$0xff]
      %v4962 = vld [vmem:[%s1 + $0x5e8] sm:$0xff]
      %v4963 = vld [vmem:[%s1 + $0x5f0] sm:$0xff]
      %v4964 = vld [vmem:[%s1 + $0x5f8] sm:$0xff]
      %v4965 = vld [vmem:[%s1 + $0x600] sm:$0xff]
      %v4966 = vld [vmem:[%s1 + $0x608] sm:$0xff]
      %v4967 = vld [vmem:[%s1 + $0x610] sm:$0xff]
      %v4968 = vld [vmem:[%s1 + $0x618] sm:$0xff]
      %v4969 = vld [vmem:[%s1 + $0x620] sm:$0xff]
      %v4970 = vld [vmem:[%s1 + $0x628] sm:$0xff]
      %v4971 = vld [vmem:[%s1 + $0x630] sm:$0xff]
      %v4972 = vld [vmem:[%s1 + $0x638] sm:$0xff]
      %v4973 = vld [vmem:[%s1 + $0x640] sm:$0xff]
      %v4974 = vld [vmem:[%s1 + $0x648] sm:$0xff]
      %v4975 = vld [vmem:[%s1 + $0x650] sm:$0xff]
      %v4976 = vld [vmem:[%s1 + $0x658] sm:$0xff]
      %v4977 = vld [vmem:[%s1 + $0x660] sm:$0xff]
      %v4978 = vld [vmem:[%s1 + $0x668] sm:$0xff]
      %v4979 = vld [vmem:[%s1 + $0x670] sm:$0xff]
      %v4980 = vld [vmem:[%s1 + $0x678] sm:$0xff]
      %v4981 = vld [vmem:[%s1 + $0x680] sm:$0xff]
      %v4982 = vld [vmem:[%s1 + $0x688] sm:$0xff]
      %v4983 = vld [vmem:[%s1 + $0x690] sm:$0xff]
      %v4984 = vld [vmem:[%s1 + $0x698] sm:$0xff]
      %v4985 = vld [vmem:[%s1 + $0x6a0] sm:$0xff]
      %v4986 = vld [vmem:[%s1 + $0x6a8] sm:$0xff]
      %v4987 = vld [vmem:[%s1 + $0x6b0] sm:$0xff]
      %v4988 = vld [vmem:[%s1 + $0x6b8] sm:$0xff]
      %v4989 = vld [vmem:[%s1 + $0x6c0] sm:$0xff]
      %v4990 = vld [vmem:[%s1 + $0x6c8] sm:$0xff]
      %v4991 = vld [vmem:[%s1 + $0x6d0] sm:$0xff]
      %v4992 = vld [vmem:[%s1 + $0x6d8] sm:$0xff]
      %v4993 = vld [vmem:[%s1 + $0x6e0] sm:$0xff]
      %v4994 = vld [vmem:[%s1 + $0x6e8] sm:$0xff]
      %v4995 = vld [vmem:[%s1 + $0x6f0] sm:$0xff]
      %v4996 = vld [vmem:[%s1 + $0x6f8] sm:$0xff]
      %v4997 = vld [vmem:[%s1 + $0x700] sm:$0xff]
      %v4998 = vld [vmem:[%s1 + $0x708] sm:$0xff]
      %v4999 = vld [vmem:[%s1 + $0x710] sm:$0xff]
      %v5000 = vld [vmem:[%s1 + $0x718] sm:$0xff]
      %v5001 = vld [vmem:[%s1 + $0x720] sm:$0xff]
      %v5002 = vld [vmem:[%s1 + $0x728] sm:$0xff]
      %v5003 = vld [vmem:[%s1 + $0x730] sm:$0xff]
      %v5004 = vld [vmem:[%s1 + $0x738] sm:$0xff]
      %v5005 = vld [vmem:[%s1 + $0x740] sm:$0xff]
      %v5006 = vld [vmem:[%s1 + $0x748] sm:$0xff]
      %v5007 = vld [vmem:[%s1 + $0x750] sm:$0xff]
      %v5008 = vld [vmem:[%s1 + $0x758] sm:$0xff]
      %v5009 = vld [vmem:[%s1 + $0x760] sm:$0xff]
      %v5010 = vld [vmem:[%s1 + $0x768] sm:$0xff]
      %v5011 = vld [vmem:[%s1 + $0x770] sm:$0xff]
      %v5012 = vld [vmem:[%s1 + $0x778] sm:$0xff]
      %v5013 = vld [vmem:[%s1 + $0x780] sm:$0xff]
      %v5014 = vld [vmem:[%s1 + $0x788] sm:$0xff]
      %v5015 = vld [vmem:[%s1 + $0x790] sm:$0xff]
      %v5016 = vld [vmem:[%s1 + $0x798] sm:$0xff]
      %v5017 = vld [vmem:[%s1 + $0x7a0] sm:$0xff]
      %v5018 = vld [vmem:[%s1 + $0x7a8] sm:$0xff]
      %v5019 = vld [vmem:[%s1 + $0x7b0] sm:$0xff]
      %v5020 = vld [vmem:[%s1 + $0x7b8] sm:$0xff]
      %v5021 = vld [vmem:[%s1 + $0x7c0] sm:$0xff]
      %v5022 = vld [vmem:[%s1 + $0x7c8] sm:$0xff]
      %v5023 = vld [vmem:[%s1 + $0x7d0] sm:$0xff]
      %v5024 = vld [vmem:[%s1 + $0x7d8] sm:$0xff]
      %v5025 = vld [vmem:[%s1 + $0x7e0] sm:$0xff]
      %v5026 = vld [vmem:[%s1 + $0x7e8] sm:$0xff]
      %v5027 = vld [vmem:[%s1 + $0x7f0] sm:$0xff]
      %v5028 = vld [vmem:[%s1 + $0x7f8] sm:$0xff]
      %v5029 = vld [vmem:[%s1 + $0x800] sm:$0xff]
      %v5030 = vld [vmem:[%s1 + $0x808] sm:$0xff]
      %v5031 = vld [vmem:[%s1 + $0x810] sm:$0xff]
      %v5032 = vld [vmem:[%s1 + $0x818] sm:$0xff]
      %v5033 = vld [vmem:[%s1 + $0x820] sm:$0xff]
      %v5034 = vld [vmem:[%s1 + $0x828] sm:$0xff]
      %v5035 = vld [vmem:[%s1 + $0x830] sm:$0xff]
      %v5036 = vld [vmem:[%s1 + $0x838] sm:$0xff]
      %v5037 = vld [vmem:[%s1 + $0x840] sm:$0xff]
      %v5038 = vld [vmem:[%s1 + $0x848] sm:$0xff]
      %v5039 = vld [vmem:[%s1 + $0x850] sm:$0xff]
      %v5040 = vld [vmem:[%s1 + $0x858] sm:$0xff]
      %v5041 = vld [vmem:[%s1 + $0x860] sm:$0xff]
      %v5042 = vld [vmem:[%s1 + $0x868] sm:$0xff]
      %v5043 = vld [vmem:[%s1 + $0x870] sm:$0xff]
      %v5044 = vld [vmem:[%s1 + $0x878] sm:$0xff]
      %v5045 = vld [vmem:[%s1 + $0x880] sm:$0xff]
      %v5046 = vld [vmem:[%s1 + $0x888] sm:$0xff]
      %v5047 = vld [vmem:[%s1 + $0x890] sm:$0xff]
      %v5048 = vld [vmem:[%s1 + $0x898] sm:$0xff]
      %v5049 = vld [vmem:[%s1 + $0x8a0] sm:$0xff]
      %v5050 = vld [vmem:[%s1 + $0x8a8] sm:$0xff]
      %v5051 = vld [vmem:[%s1 + $0x8b0] sm:$0xff]
      %v5052 = vld [vmem:[%s1 + $0x8b8] sm:$0xff]
      %v5053 = vld [vmem:[%s1 + $0x8c0] sm:$0xff]
      %v5054 = vld [vmem:[%s1 + $0x8c8] sm:$0xff]
      %v5055 = vld [vmem:[%s1 + $0x8d0] sm:$0xff]
      %v5056 = vld [vmem:[%s1 + $0x8d8] sm:$0xff]
      %v5057 = vld [vmem:[%s1 + $0x8e0] sm:$0xff]
      %v5058 = vld [vmem:[%s1 + $0x8e8] sm:$0xff]
      %v5059 = vld [vmem:[%s1 + $0x8f0] sm:$0xff]
      %v5060 = vld [vmem:[%s1 + $0x8f8] sm:$0xff]
      %v5061 = vld [vmem:[%s1 + $0x900] sm:$0xff]
      %v5062 = vld [vmem:[%s1 + $0x908] sm:$0xff]
      %v5063 = vld [vmem:[%s1 + $0x910] sm:$0xff]
      %v5064 = vld [vmem:[%s1 + $0x918] sm:$0xff]
      %v5065 = vld [vmem:[%s1 + $0x920] sm:$0xff]
      %v5066 = vld [vmem:[%s1 + $0x928] sm:$0xff]
      %v5067 = vld [vmem:[%s1 + $0x930] sm:$0xff]
      %v5068 = vld [vmem:[%s1 + $0x938] sm:$0xff]
      %v5069 = vld [vmem:[%s1 + $0x940] sm:$0xff]
      %v5070 = vld [vmem:[%s1 + $0x948] sm:$0xff]
      %v5071 = vld [vmem:[%s1 + $0x950] sm:$0xff]
      %v5072 = vld [vmem:[%s1 + $0x958] sm:$0xff]
      %v5073 = vld [vmem:[%s1 + $0x960] sm:$0xff]
      %v5074 = vld [vmem:[%s1 + $0x968] sm:$0xff]
      %v5075 = vld [vmem:[%s1 + $0x970] sm:$0xff]
      %v5076 = vld [vmem:[%s1 + $0x978] sm:$0xff]
      %v5077 = vld [vmem:[%s1 + $0x980] sm:$0xff]
      %v5078 = vld [vmem:[%s1 + $0x988] sm:$0xff]
      %v5079 = vld [vmem:[%s1 + $0x990] sm:$0xff]
      %v5080 = vld [vmem:[%s1 + $0x998] sm:$0xff]
      %v5081 = vld [vmem:[%s1 + $0x9a0] sm:$0xff]
      %v5082 = vld [vmem:[%s1 + $0x9a8] sm:$0xff]
      %v5083 = vld [vmem:[%s1 + $0x9b0] sm:$0xff]
      %v5084 = vld [vmem:[%s1 + $0x9b8] sm:$0xff]
      %v5085 = vld [vmem:[%s1 + $0x9c0] sm:$0xff]
      %v5086 = vld [vmem:[%s1 + $0x9c8] sm:$0xff]
      %v5087 = vld [vmem:[%s1 + $0x9d0] sm:$0xff]
      %v5088 = vld [vmem:[%s1 + $0x9d8] sm:$0xff]
      %v5089 = vld [vmem:[%s1 + $0x9e0] sm:$0xff]
      %v5090 = vld [vmem:[%s1 + $0x9e8] sm:$0xff]
      %v5091 = vld [vmem:[%s1 + $0x9f0] sm:$0xff]
      %v5092 = vld [vmem:[%s1 + $0x9f8] sm:$0xff]
      %v5093 = vld [vmem:[%s1 + $0xa00] sm:$0xff]
      %v5094 = vld [vmem:[%s1 + $0xa08] sm:$0xff]
      %v5095 = vld [vmem:[%s1 + $0xa10] sm:$0xff]
      %v5096 = vld [vmem:[%s1 + $0xa18] sm:$0xff]
      %v5097 = vld [vmem:[%s1 + $0xa20] sm:$0xff]
      %v5098 = vld [vmem:[%s1 + $0xa28] sm:$0xff]
      %v5099 = vld [vmem:[%s1 + $0xa30] sm:$0xff]
      %v5100 = vld [vmem:[%s1 + $0xa38] sm:$0xff]
      %v5101 = vld [vmem:[%s1 + $0xa40] sm:$0xff]
      %v5102 = vld [vmem:[%s1 + $0xa48] sm:$0xff]
      %v5103 = vld [vmem:[%s1 + $0xa50] sm:$0xff]
      %v5104 = vld [vmem:[%s1 + $0xa58] sm:$0xff]
      %v5105 = vld [vmem:[%s1 + $0xa60] sm:$0xff]
      %v5106 = vld [vmem:[%s1 + $0xa68] sm:$0xff]
      %v5107 = vld [vmem:[%s1 + $0xa70] sm:$0xff]
      %v5108 = vld [vmem:[%s1 + $0xa78] sm:$0xff]
      %v5109 = vld [vmem:[%s1 + $0xa80] sm:$0xff]
      %v5110 = vld [vmem:[%s1 + $0xa88] sm:$0xff]
      %v5111 = vld [vmem:[%s1 + $0xa90] sm:$0xff]
      %v5112 = vld [vmem:[%s1 + $0xa98] sm:$0xff]
      %v5113 = vld [vmem:[%s1 + $0xaa0] sm:$0xff]
      %v5114 = vld [vmem:[%s1 + $0xaa8] sm:$0xff]
      %v5115 = vld [vmem:[%s1 + $0xab0] sm:$0xff]
      %v5116 = vld [vmem:[%s1 + $0xab8] sm:$0xff]
      %v5117 = vld [vmem:[%s1 + $0xac0] sm:$0xff]
      %v5118 = vld [vmem:[%s1 + $0xac8] sm:$0xff]
      %v5119 = vld [vmem:[%s1 + $0xad0] sm:$0xff]
      %v5120 = vld [vmem:[%s1 + $0xad8] sm:$0xff]
      %v5121 = vld [vmem:[%s1 + $0xae0] sm:$0xff]
      %v5122 = vld [vmem:[%s1 + $0xae8] sm:$0xff]
      %v5123 = vld [vmem:[%s1 + $0xaf0] sm:$0xff]
      %v5124 = vld [vmem:[%s1 + $0xaf8] sm:$0xff]
      %v5125 = vld [vmem:[%s1 + $0xb00] sm:$0xff]
      %v5126 = vld [vmem:[%s1 + $0xb08] sm:$0xff]
      %v5127 = vld [vmem:[%s1 + $0xb10] sm:$0xff]
      %v5128 = vld [vmem:[%s1 + $0xb18] sm:$0xff]
      %v5129 = vld [vmem:[%s1 + $0xb20] sm:$0xff]
      %v5130 = vld [vmem:[%s1 + $0xb28] sm:$0xff]
      %v5131 = vld [vmem:[%s1 + $0xb30] sm:$0xff]
      %v5132 = vld [vmem:[%s1 + $0xb38] sm:$0xff]
      %v5133 = vld [vmem:[%s1 + $0xb40] sm:$0xff]
      %v5134 = vld [vmem:[%s1 + $0xb48] sm:$0xff]
      %v5135 = vld [vmem:[%s1 + $0xb50] sm:$0xff]
      %v5136 = vld [vmem:[%s1 + $0xb58] sm:$0xff]
      %v5137 = vld [vmem:[%s1 + $0xb60] sm:$0xff]
      %v5138 = vld [vmem:[%s1 + $0xb68] sm:$0xff]
      %v5139 = vld [vmem:[%s1 + $0xb70] sm:$0xff]
      %v5140 = vld [vmem:[%s1 + $0xb78] sm:$0xff]
      %v5141 = vld [vmem:[%s1 + $0xb80] sm:$0xff]
      %v5142 = vld [vmem:[%s1 + $0xb88] sm:$0xff]
      %v5143 = vld [vmem:[%s1 + $0xb90] sm:$0xff]
      %v5144 = vld [vmem:[%s1 + $0xb98] sm:$0xff]
      %v5145 = vld [vmem:[%s1 + $0xba0] sm:$0xff]
      %v5146 = vld [vmem:[%s1 + $0xba8] sm:$0xff]
      %v5147 = vld [vmem:[%s1 + $0xbb0] sm:$0xff]
      %v5148 = vld [vmem:[%s1 + $0xbb8] sm:$0xff]
      %v5149 = vld [vmem:[%s1 + $0xbc0] sm:$0xff]
      %v5150 = vld [vmem:[%s1 + $0xbc8] sm:$0xff]
      %v5151 = vld [vmem:[%s1 + $0xbd0] sm:$0xff]
      %v5152 = vld [vmem:[%s1 + $0xbd8] sm:$0xff]
      %v5153 = vld [vmem:[%s1 + $0xbe0] sm:$0xff]
      %v5154 = vld [vmem:[%s1 + $0xbe8] sm:$0xff]
      %v5155 = vld [vmem:[%s1 + $0xbf0] sm:$0xff]
      %v5156 = vld [vmem:[%s1 + $0xbf8] sm:$0xff]
      %v5157 = vld [vmem:[%s1 + $0xc00] sm:$0xff]
      %v5158 = vld [vmem:[%s1 + $0xc08] sm:$0xff]
      %v5159 = vld [vmem:[%s1 + $0xc10] sm:$0xff]
      %v5160 = vld [vmem:[%s1 + $0xc18] sm:$0xff]
      %v5161 = vld [vmem:[%s1 + $0xc20] sm:$0xff]
      %v5162 = vld [vmem:[%s1 + $0xc28] sm:$0xff]
      %v5163 = vld [vmem:[%s1 + $0xc30] sm:$0xff]
      %v5164 = vld [vmem:[%s1 + $0xc38] sm:$0xff]
      %v5165 = vld [vmem:[%s1 + $0xc40] sm:$0xff]
      %v5166 = vld [vmem:[%s1 + $0xc48] sm:$0xff]
      %v5167 = vld [vmem:[%s1 + $0xc50] sm:$0xff]
      %v5168 = vld [vmem:[%s1 + $0xc58] sm:$0xff]
      %v5169 = vld [vmem:[%s1 + $0xc60] sm:$0xff]
      %v5170 = vld [vmem:[%s1 + $0xc68] sm:$0xff]
      %v5171 = vld [vmem:[%s1 + $0xc70] sm:$0xff]
      %v5172 = vld [vmem:[%s1 + $0xc78] sm:$0xff]
      %v5173 = vld [vmem:[%s1 + $0xc80] sm:$0xff]
      %v5174 = vld [vmem:[%s1 + $0xc88] sm:$0xff]
      %v5175 = vld [vmem:[%s1 + $0xc90] sm:$0xff]
      %v5176 = vld [vmem:[%s1 + $0xc98] sm:$0xff]
      %v5177 = vld [vmem:[%s1 + $0xca0] sm:$0xff]
      %v5178 = vld [vmem:[%s1 + $0xca8] sm:$0xff]
      %v5179 = vld [vmem:[%s1 + $0xcb0] sm:$0xff]
      %v5180 = vld [vmem:[%s1 + $0xcb8] sm:$0xff]
      %v5181 = vld [vmem:[%s1 + $0xcc0] sm:$0xff]
      %v5182 = vld [vmem:[%s1 + $0xcc8] sm:$0xff]
      %v5183 = vld [vmem:[%s1 + $0xcd0] sm:$0xff]
      %v5184 = vld [vmem:[%s1 + $0xcd8] sm:$0xff]
      %v5185 = vld [vmem:[%s1 + $0xce0] sm:$0xff]
      %v5186 = vld [vmem:[%s1 + $0xce8] sm:$0xff]
      %v5187 = vld [vmem:[%s1 + $0xcf0] sm:$0xff]
      %v5188 = vld [vmem:[%s1 + $0xcf8] sm:$0xff]
      %v5189 = vld [vmem:[%s1 + $0xd00] sm:$0xff]
      %v5190 = vld [vmem:[%s1 + $0xd08] sm:$0xff]
      %v5191 = vld [vmem:[%s1 + $0xd10] sm:$0xff]
      %v5192 = vld [vmem:[%s1 + $0xd18] sm:$0xff]
      %v5193 = vld [vmem:[%s1 + $0xd20] sm:$0xff]
      %v5194 = vld [vmem:[%s1 + $0xd28] sm:$0xff]
      %v5195 = vld [vmem:[%s1 + $0xd30] sm:$0xff]
      %v5196 = vld [vmem:[%s1 + $0xd38] sm:$0xff]
      %v5197 = vld [vmem:[%s1 + $0xd40] sm:$0xff]
      %v5198 = vld [vmem:[%s1 + $0xd48] sm:$0xff]
      %v5199 = vld [vmem:[%s1 + $0xd50] sm:$0xff]
      %v5200 = vld [vmem:[%s1 + $0xd58] sm:$0xff]
      %v5201 = vld [vmem:[%s1 + $0xd60] sm:$0xff]
      %v5202 = vld [vmem:[%s1 + $0xd68] sm:$0xff]
      %v5203 = vld [vmem:[%s1 + $0xd70] sm:$0xff]
      %v5204 = vld [vmem:[%s1 + $0xd78] sm:$0xff]
      %v5205 = vld [vmem:[%s1 + $0xd80] sm:$0xff]
      %v5206 = vld [vmem:[%s1 + $0xd88] sm:$0xff]
      %v5207 = vld [vmem:[%s1 + $0xd90] sm:$0xff]
      %v5208 = vld [vmem:[%s1 + $0xd98] sm:$0xff]
      %v5209 = vld [vmem:[%s1 + $0xda0] sm:$0xff]
      %v5210 = vld [vmem:[%s1 + $0xda8] sm:$0xff]
      %v5211 = vld [vmem:[%s1 + $0xdb0] sm:$0xff]
      %v5212 = vld [vmem:[%s1 + $0xdb8] sm:$0xff]
      %v5213 = vld [vmem:[%s1 + $0xdc0] sm:$0xff]
      %v5214 = vld [vmem:[%s1 + $0xdc8] sm:$0xff]
      %v5215 = vld [vmem:[%s1 + $0xdd0] sm:$0xff]
      %v5216 = vld [vmem:[%s1 + $0xdd8] sm:$0xff]
      %v5217 = vld [vmem:[%s1 + $0xde0] sm:$0xff]
      %v5218 = vld [vmem:[%s1 + $0xde8] sm:$0xff]
      %v5219 = vld [vmem:[%s1 + $0xdf0] sm:$0xff]
      %v5220 = vld [vmem:[%s1 + $0xdf8] sm:$0xff]
      %v5221 = vld [vmem:[%s1 + $0xe00] sm:$0xff]
      %v5222 = vld [vmem:[%s1 + $0xe08] sm:$0xff]
      %v5223 = vld [vmem:[%s1 + $0xe10] sm:$0xff]
      %v5224 = vld [vmem:[%s1 + $0xe18] sm:$0xff]
      %v5225 = vld [vmem:[%s1 + $0xe20] sm:$0xff]
      %v5226 = vld [vmem:[%s1 + $0xe28] sm:$0xff]
      %v5227 = vld [vmem:[%s1 + $0xe30] sm:$0xff]
      %v5228 = vld [vmem:[%s1 + $0xe38] sm:$0xff]
      %v5229 = vld [vmem:[%s1 + $0xe40] sm:$0xff]
      %v5230 = vld [vmem:[%s1 + $0xe48] sm:$0xff]
      %v5231 = vld [vmem:[%s1 + $0xe50] sm:$0xff]
      %v5232 = vld [vmem:[%s1 + $0xe58] sm:$0xff]
      %v5233 = vld [vmem:[%s1 + $0xe60] sm:$0xff]
      %v5234 = vld [vmem:[%s1 + $0xe68] sm:$0xff]
      %v5235 = vld [vmem:[%s1 + $0xe70] sm:$0xff]
      %v5236 = vld [vmem:[%s1 + $0xe78] sm:$0xff]
      %v5237 = vld [vmem:[%s1 + $0xe80] sm:$0xff]
      %v5238 = vld [vmem:[%s1 + $0xe88] sm:$0xff]
      %v5239 = vld [vmem:[%s1 + $0xe90] sm:$0xff]
      %v5240 = vld [vmem:[%s1 + $0xe98] sm:$0xff]
      %v5241 = vld [vmem:[%s1 + $0xea0] sm:$0xff]
      %v5242 = vld [vmem:[%s1 + $0xea8] sm:$0xff]
      %v5243 = vld [vmem:[%s1 + $0xeb0] sm:$0xff]
      %v5244 = vld [vmem:[%s1 + $0xeb8] sm:$0xff]
      %v5245 = vld [vmem:[%s1 + $0xec0] sm:$0xff]
      %v5246 = vld [vmem:[%s1 + $0xec8] sm:$0xff]
      %v5247 = vld [vmem:[%s1 + $0xed0] sm:$0xff]
      %v5248 = vld [vmem:[%s1 + $0xed8] sm:$0xff]
      %v5249 = vld [vmem:[%s1 + $0xee0] sm:$0xff]
      %v5250 = vld [vmem:[%s1 + $0xee8] sm:$0xff]
      %v5251 = vld [vmem:[%s1 + $0xef0] sm:$0xff]
      %v5252 = vld [vmem:[%s1 + $0xef8] sm:$0xff]
      %v5253 = vld [vmem:[%s1 + $0xf00] sm:$0xff]
      %v5254 = vld [vmem:[%s1 + $0xf08] sm:$0xff]
      %v5255 = vld [vmem:[%s1 + $0xf10] sm:$0xff]
      %v5256 = vld [vmem:[%s1 + $0xf18] sm:$0xff]
      %v5257 = vld [vmem:[%s1 + $0xf20] sm:$0xff]
      %v5258 = vld [vmem:[%s1 + $0xf28] sm:$0xff]
      %v5259 = vld [vmem:[%s1 + $0xf30] sm:$0xff]
      %v5260 = vld [vmem:[%s1 + $0xf38] sm:$0xff]
      %v5261 = vld [vmem:[%s1 + $0xf40] sm:$0xff]
      %v5262 = vld [vmem:[%s1 + $0xf48] sm:$0xff]
      %v5263 = vld [vmem:[%s1 + $0xf50] sm:$0xff]
      %v5264 = vld [vmem:[%s1 + $0xf58] sm:$0xff]
      %v5265 = vld [vmem:[%s1 + $0xf60] sm:$0xff]
      %v5266 = vld [vmem:[%s1 + $0xf68] sm:$0xff]
      %v5267 = vld [vmem:[%s1 + $0xf70] sm:$0xff]
      %v5268 = vld [vmem:[%s1 + $0xf78] sm:$0xff]
      %v5269 = vld [vmem:[%s1 + $0xf80] sm:$0xff]
      %v5270 = vld [vmem:[%s1 + $0xf88] sm:$0xff]
      %v5271 = vld [vmem:[%s1 + $0xf90] sm:$0xff]
      %v5272 = vld [vmem:[%s1 + $0xf98] sm:$0xff]
      %v5273 = vld [vmem:[%s1 + $0xfa0] sm:$0xff]
      %v5274 = vld [vmem:[%s1 + $0xfa8] sm:$0xff]
      %v5275 = vld [vmem:[%s1 + $0xfb0] sm:$0xff]
      %v5276 = vld [vmem:[%s1 + $0xfb8] sm:$0xff]
      %v5277 = vld [vmem:[%s1 + $0xfc0] sm:$0xff]
      %v5278 = vld [vmem:[%s1 + $0xfc8] sm:$0xff]
      %v5279 = vld [vmem:[%s1 + $0xfd0] sm:$0xff]
      %v5280 = vld [vmem:[%s1 + $0xfd8] sm:$0xff]
      %v5281 = vld [vmem:[%s1 + $0xfe0] sm:$0xff]
      %v5282 = vld [vmem:[%s1 + $0xfe8] sm:$0xff]
      %v5283 = vld [vmem:[%s1 + $0xff0] sm:$0xff]
      %v5284 = vld [vmem:[%s1 + $0xff8] sm:$0xff]
      %v5285 = vld [vmem:[%s1 + $0x1000] sm:$0xff]
      %v5286 = vld [vmem:[%s1 + $0x1008] sm:$0xff]
      %v5287 = vld [vmem:[%s1 + $0x1010] sm:$0xff]
      %v5288 = vld [vmem:[%s1 + $0x1018] sm:$0xff]
      %v5289 = vld [vmem:[%s1 + $0x1020] sm:$0xff]
      %v5290 = vld [vmem:[%s1 + $0x1028] sm:$0xff]
      %v5291 = vld [vmem:[%s1 + $0x1030] sm:$0xff]
      %v5292 = vld [vmem:[%s1 + $0x1038] sm:$0xff]
      %v5293 = vld [vmem:[%s1 + $0x1040] sm:$0xff]
      %v5294 = vld [vmem:[%s1 + $0x1048] sm:$0xff]
      %v5295 = vld [vmem:[%s1 + $0x1050] sm:$0xff]
      %v5296 = vld [vmem:[%s1 + $0x1058] sm:$0xff]
      %v5297 = vld [vmem:[%s1 + $0x1060] sm:$0xff]
      %v5298 = vld [vmem:[%s1 + $0x1068] sm:$0xff]
      %v5299 = vld [vmem:[%s1 + $0x1070] sm:$0xff]
      %v5300 = vld [vmem:[%s1 + $0x1078] sm:$0xff]
      %v5301 = vld [vmem:[%s1 + $0x1080] sm:$0xff]
      %v5302 = vld [vmem:[%s1 + $0x1088] sm:$0xff]
      %v5303 = vld [vmem:[%s1 + $0x1090] sm:$0xff]
      %v5304 = vld [vmem:[%s1 + $0x1098] sm:$0xff]
      %v5305 = vld [vmem:[%s1 + $0x10a0] sm:$0xff]
      %v5306 = vld [vmem:[%s1 + $0x10a8] sm:$0xff]
      %v5307 = vld [vmem:[%s1 + $0x10b0] sm:$0xff]
      %v5308 = vld [vmem:[%s1 + $0x10b8] sm:$0xff]
      %v5309 = vld [vmem:[%s1 + $0x10c0] sm:$0xff]
      %v5310 = vld [vmem:[%s1 + $0x10c8] sm:$0xff]
      %v5311 = vld [vmem:[%s1 + $0x10d0] sm:$0xff]
      %v5312 = vld [vmem:[%s1 + $0x10d8] sm:$0xff]
      %v5313 = vld [vmem:[%s1 + $0x10e0] sm:$0xff]
      %v5314 = vld [vmem:[%s1 + $0x10e8] sm:$0xff]
      %v5315 = vld [vmem:[%s1 + $0x10f0] sm:$0xff]
      %v5316 = vld [vmem:[%s1 + $0x10f8] sm:$0xff]
      %v5317 = vld [vmem:[%s1 + $0x1100] sm:$0xff]
      %v5318 = vld [vmem:[%s1 + $0x1108] sm:$0xff]
      %v5319 = vld [vmem:[%s1 + $0x1110] sm:$0xff]
      %v5320 = vld [vmem:[%s1 + $0x1118] sm:$0xff]
      %v5321 = vld [vmem:[%s1 + $0x1120] sm:$0xff]
      %v5322 = vld [vmem:[%s1 + $0x1128] sm:$0xff]
      %v5323 = vld [vmem:[%s1 + $0x1130] sm:$0xff]
      %v5324 = vld [vmem:[%s1 + $0x1138] sm:$0xff]
      %v5325 = vld [vmem:[%s1 + $0x1140] sm:$0xff]
      %v5326 = vld [vmem:[%s1 + $0x1148] sm:$0xff]
      %v5327 = vld [vmem:[%s1 + $0x1150] sm:$0xff]
      %v5328 = vld [vmem:[%s1 + $0x1158] sm:$0xff]
      %v5329 = vld [vmem:[%s1 + $0x1160] sm:$0xff]
      %v5330 = vld [vmem:[%s1 + $0x1168] sm:$0xff]
      %v5331 = vld [vmem:[%s1 + $0x1170] sm:$0xff]
      %v5332 = vld [vmem:[%s1 + $0x1178] sm:$0xff]
      %v5333 = vld [vmem:[%s1 + $0x1180] sm:$0xff]
      %v5334 = vld [vmem:[%s1 + $0x1188] sm:$0xff]
      %v5335 = vld [vmem:[%s1 + $0x1190] sm:$0xff]
      %v5336 = vld [vmem:[%s1 + $0x1198] sm:$0xff]
      %v5337 = vld [vmem:[%s1 + $0x11a0] sm:$0xff]
      %v5338 = vld [vmem:[%s1 + $0x11a8] sm:$0xff]
      %v5339 = vld [vmem:[%s1 + $0x11b0] sm:$0xff]
      %v5340 = vld [vmem:[%s1 + $0x11b8] sm:$0xff]
      %v5341 = vld [vmem:[%s1 + $0x11c0] sm:$0xff]
      %v5342 = vld [vmem:[%s1 + $0x11c8] sm:$0xff]
      %v5343 = vld [vmem:[%s1 + $0x11d0] sm:$0xff]
      %v5344 = vld [vmem:[%s1 + $0x11d8] sm:$0xff]
      %v5345 = vld [vmem:[%s1 + $0x11e0] sm:$0xff]
      %v5346 = vld [vmem:[%s1 + $0x11e8] sm:$0xff]
      %v5347 = vld [vmem:[%s1 + $0x11f0] sm:$0xff]
      %v5348 = vld [vmem:[%s1 + $0x11f8] sm:$0xff]
      %5349 = vmatprep.subr.mxu0 0.0
      %5350 = vmatpush1.msra.mxu0 %v4773
      %5351 = vmatprep.subr.mxu0 0.0
      %5352 = vmatpush1.msra.mxu0 %v4774
      %5353 = vmatprep.subr.mxu0 0.0
      %5354 = vmatpush1.msra.mxu0 %v4775
      %5355 = vmatprep.subr.mxu0 0.0
      %5356 = vmatpush1.msra.mxu0 %v4776
      %5357 = vmatprep.subr.mxu0 0.0
      %5358 = vmatpush1.msra.mxu0 %v4777
      %5359 = vmatprep.subr.mxu0 0.0
      %5360 = vmatpush1.msra.mxu0 %v4778
      %5361 = vmatprep.subr.mxu0 0.0
      %5362 = vmatpush1.msra.mxu0 %v4779
      %5363 = vmatprep.subr.mxu0 0.0
      %5364 = vmatpush1.msra.mxu0 %v4780
      %5365 = vmatprep.subr.mxu0 0.0
      %5366 = vmatpush1.msra.mxu0 %v4781
      %5367 = vmatprep.subr.mxu0 0.0
      %5368 = vmatpush1.msra.mxu0 %v4782
      %5369 = vmatprep.subr.mxu0 0.0
      %5370 = vmatpush1.msra.mxu0 %v4783
      %5371 = vmatprep.subr.mxu0 0.0
      %5372 = vmatpush1.msra.mxu0 %v4784
      %5373 = vmatprep.subr.mxu0 0.0
      %5374 = vmatpush1.msra.mxu0 %v4785
      %5375 = vmatprep.subr.mxu0 0.0
      %5376 = vmatpush1.msra.mxu0 %v4786
      %5377 = vmatprep.subr.mxu0 0.0
      %5378 = vmatpush1.msra.mxu0 %v4787
      %5379 = vmatprep.subr.mxu0 0.0
      %5380 = vmatpush1.msra.mxu0 %v4788
      %5381 = vmatprep.subr.mxu0 0.0
      %5382 = vmatpush1.msra.mxu0 %v4789
      %5383 = vmatprep.subr.mxu0 0.0
      %5384 = vmatpush1.msra.mxu0 %v4790
      %5385 = vmatprep.subr.mxu0 0.0
      %5386 = vmatpush1.msra.mxu0 %v4791
      %5387 = vmatprep.subr.mxu0 0.0
      %5388 = vmatpush1.msra.mxu0 %v4792
      %5389 = vmatprep.subr.mxu0 0.0
      %5390 = vmatpush1.msra.mxu0 %v4793
      %5391 = vmatprep.subr.mxu0 0.0
      %5392 = vmatpush1.msra.mxu0 %v4794
      %5393 = vmatprep.subr.mxu0 0.0
      %5394 = vmatpush1.msra.mxu0 %v4795
      %5395 = vmatprep.subr.mxu0 0.0
      %5396 = vmatpush1.msra.mxu0 %v4796
      %5397 = vmatprep.subr.mxu0 0.0
      %5398 = vmatpush1.msra.mxu0 %v4797
      %5399 = vmatprep.subr.mxu0 0.0
      %5400 = vmatpush1.msra.mxu0 %v4798
      %5401 = vmatprep.subr.mxu0 0.0
      %5402 = vmatpush1.msra.mxu0 %v4799
      %5403 = vmatprep.subr.mxu0 0.0
      %5404 = vmatpush1.msra.mxu0 %v4800
      %5405 = vmatprep.subr.mxu0 0.0
      %5406 = vmatpush1.msra.mxu0 %v4801
      %5407 = vmatprep.subr.mxu0 0.0
      %5408 = vmatpush1.msra.mxu0 %v4802
      %5409 = vmatprep.subr.mxu0 0.0
      %5410 = vmatpush1.msra.mxu0 %v4803
      %5411 = vmatprep.subr.mxu0 0.0
      %5412 = vmatpush1.msra.mxu0 %v4804
      %5413 = vmatprep.mubr.f32.mxu0 %v4198
      %5414 = vmatmul.mubr.f32.gmra.mrb[0].mxu0 %v4197
      %v5415 = vpop.f32.mrb[0].mxu0
      %v5416 = vadd.f32 0.0, %v5415
      %v5417 = vpop.f32.mrb[0].mxu0
      %5418 = vmatprep.mubr.f32.mxu0 %v4234
      %5419 = vmatmul.mubr.f32.gmra.mrb[0].mxu0 %v4233
      %v5420 = vpop.f32.mrb[0].mxu0
      %v5421 = vadd.f32 0.0, %v5420
      %v5422 = vpop.f32.mrb[0].mxu0
      %5423 = vmatprep.mubr.f32.mxu0 %v4270
      %5424 = vmatmul.mubr.f32.gmra.mrb[0].mxu0 %v4269
      %v5425 = vpop.f32.mrb[0].mxu0
      %v5426 = vadd.f32 0.0, %v5425
      %v5427 = vpop.f32.mrb[0].mxu0
      %5428 = vmatprep.mubr.f32.mxu0 %v4306
      %5429 = vmatmul.mubr.f32.gmra.mrb[0].mxu0 %v4305
      %v5430 = vpop.f32.mrb[0].mxu0
      %v5431 = vadd.f32 0.0, %v5430
      %v5432 = vpop.f32.mrb[0].mxu0
      %5433 = vmatprep.mubr.f32.mxu0 %v4342
      %5434 = vmatmul.mubr.f32.gmra.mrb[0].mxu0 %v4341
      %v5435 = vpop.f32.mrb[0].mxu0
      %v5436 = vadd.f32 0.0, %v5435
      %v5437 = vpop.f32.mrb[0].mxu0
      %5438 = vmatprep.mubr.f32.mxu0 %v4378
      %5439 = vmatmul.mubr.f32.gmra.mrb[0].mxu0 %v4377
      %v5440 = vpop.f32.mrb[0].mxu0
      %v5441 = vadd.f32 0.0, %v5440
      %v5442 = vpop.f32.mrb[0].mxu0
      %5443 = vmatprep.mubr.f32.mxu0 %v4414
      %5444 = vmatmul.mubr.f32.gmra.mrb[0].mxu0 %v4413
      %v5445 = vpop.f32.mrb[0].mxu0
      %v5446 = vadd.f32 0.0, %v5445
      %v5447 = vpop.f32.mrb[0].mxu0
      %5448 = vmatprep.mubr.f32.mxu0 %v4450
      %5449 = vmatmul.mubr.f32.gmra.mrb[0].mxu0 %v4449
      %v5450 = vpop.f32.mrb[0].mxu0
      %v5451 = vadd.f32 0.0, %v5450
      %v5452 = vpop.f32.mrb[0].mxu0
      %5453 = vmatprep.mubr.f32.mxu0 %v4486
      %5454 = vmatmul.mubr.f32.gmra.mrb[0].mxu0 %v4485
      %v5455 = vpop.f32.mrb[0].mxu0
      %v5456 = vadd.f32 0.0, %v5455
      %v5457 = vpop.f32.mrb[0].mxu0
      %5458 = vmatprep.mubr.f32.mxu0 %v4522
      %5459 = vmatmul.mubr.f32.gmra.mrb[0].mxu0 %v4521
      %v5460 = vpop.f32.mrb[0].mxu0
      %v5461 = vadd.f32 0.0, %v5460
      %v5462 = vpop.f32.mrb[0].mxu0
      %5463 = vmatprep.mubr.f32.mxu0 %v4558
      %5464 = vmatmul.mubr.f32.gmra.mrb[0].mxu0 %v4557
      %v5465 = vpop.f32.mrb[0].mxu0
      %v5466 = vadd.f32 0.0, %v5465
      %v5467 = vpop.f32.mrb[0].mxu0
      %5468 = vmatprep.mubr.f32.mxu0 %v4594
      %5469 = vmatmul.mubr.f32.gmra.mrb[0].mxu0 %v4593
      %v5470 = vpop.f32.mrb[0].mxu0
      %v5471 = vadd.f32 0.0, %v5470
      %v5472 = vpop.f32.mrb[0].mxu0
      %5473 = vmatprep.mubr.f32.mxu0 %v4630
      %5474 = vmatmul.mubr.f32.gmra.mrb[0].mxu0 %v4629
      %v5475 = vpop.f32.mrb[0].mxu0
      %v5476 = vadd.f32 0.0, %v5475
      %v5477 = vpop.f32.mrb[0].mxu0
      %5478 = vmatprep.mubr.f32.mxu0 %v4666
      %5479 = vmatmul.mubr.f32.gmra.mrb[0].mxu0 %v4665
      %v5480 = vpop.f32.mrb[0].mxu0
      %v5481 = vadd.f32 0.0, %v5480
      %v5482 = vpop.f32.mrb[0].mxu0
      %5483 = vmatprep.mubr.f32.mxu0 %v4702
      %5484 = vmatmul.mubr.f32.gmra.mrb[0].mxu0 %v4701
      %v5485 = vpop.f32.mrb[0].mxu0
      %v5486 = vadd.f32 0.0, %v5485
      %v5487 = vpop.f32.mrb[0].mxu0
      %5488 = vmatprep.mubr.f32.mxu0 %v4738
      %5489 = vmatmul.mubr.f32.gmra.mrb[0].mxu0 %v4737
      %v5490 = vpop.f32.mrb[0].mxu0
      %v5491 = vadd.f32 0.0, %v5490
      %v5492 = vpop.f32.mrb[0].mxu0
      %5493 = vdwg.mxu0
      %5494 = vmatprep.subr.mxu0 0.0
      %5495 = vmatpush1.msra.mxu0 %v4805
      %5496 = vmatprep.subr.mxu0 0.0
      %5497 = vmatpush1.msra.mxu0 %v4806
      %5498 = vmatprep.subr.mxu0 0.0
      %5499 = vmatpush1.msra.mxu0 %v4807
      %5500 = vmatprep.subr.mxu0 0.0
      %5501 = vmatpush1.msra.mxu0 %v4808
      %5502 = vmatprep.subr.mxu0 0.0
      %5503 = vmatpush1.msra.mxu0 %v4809
      %5504 = vmatprep.subr.mxu0 0.0
      %5505 = vmatpush1.msra.mxu0 %v4810
      %5506 = vmatprep.subr.mxu0 0.0
      %5507 = vmatpush1.msra.mxu0 %v4811
      %5508 = vmatprep.subr.mxu0 0.0
      %5509 = vmatpush1.msra.mxu0 %v4812
      %5510 = vmatprep.subr.mxu0 0.0
      %5511 = vmatpush1.msra.mxu0 %v4813
      %5512 = vmatprep.subr.mxu0 0.0
      %5513 = vmatpush1.msra.mxu0 %v4814
      %5514 = vmatprep.subr.mxu0 0.0
      %5515 = vmatpush1.msra.mxu0 %v4815
      %5516 = vmatprep.subr.mxu0 0.0
      %5517 = vmatpush1.msra.mxu0 %v4816
      %5518 = vmatprep.subr.mxu0 0.0
      %5519 = vmatpush1.msra.mxu0 %v4817
      %5520 = vmatprep.subr.mxu0 0.0
      %5521 = vmatpush1.msra.mxu0 %v4818
      %5522 = vmatprep.subr.mxu0 0.0
      %5523 = vmatpush1.msra.mxu0 %v4819
      %5524 = vmatprep.subr.mxu0 0.0
      %5525 = vmatpush1.msra.mxu0 %v4820
      %5526 = vmatprep.subr.mxu0 0.0
      %5527 = vmatpush1.msra.mxu0 %v4821
      %5528 = vmatprep.subr.mxu0 0.0
      %5529 = vmatpush1.msra.mxu0 %v4822
      %5530 = vmatprep.subr.mxu0 0.0
      %5531 = vmatpush1.msra.mxu0 %v4823
      %5532 = vmatprep.subr.mxu0 0.0
      %5533 = vmatpush1.msra.mxu0 %v4824
      %5534 = vmatprep.subr.mxu0 0.0
      %5535 = vmatpush1.msra.mxu0 %v4825
      %5536 = vmatprep.subr.mxu0 0.0
      %5537 = vmatpush1.msra.mxu0 %v4826
      %5538 = vmatprep.subr.mxu0 0.0
      %5539 = vmatpush1.msra.mxu0 %v4827
      %5540 = vmatprep.subr.mxu0 0.0
      %5541 = vmatpush1.msra.mxu0 %v4828
      %5542 = vmatprep.subr.mxu0 0.0
      %5543 = vmatpush1.msra.mxu0 %v4829
      %5544 = vmatprep.subr.mxu0 0.0
      %5545 = vmatpush1.msra.mxu0 %v4830
      %5546 = vmatprep.subr.mxu0 0.0
      %5547 = vmatpush1.msra.mxu0 %v4831
      %5548 = vmatprep.subr.mxu0 0.0
      %5549 = vmatpush1.msra.mxu0 %v4832
      %5550 = vmatprep.subr.mxu0 0.0
      %5551 = vmatpush1.msra.mxu0 %v4833
      %5552 = vmatprep.subr.mxu0 0.0
      %5553 = vmatpush1.msra.mxu0 %v4834
      %5554 = vmatprep.subr.mxu0 0.0
      %5555 = vmatpush1.msra.mxu0 %v4835
      %5556 = vmatprep.subr.mxu0 0.0
      %5557 = vmatpush1.msra.mxu0 %v4836
      %5558 = vmatprep.mubr.f32.mxu0 %v4200
      %5559 = vmatmul.mubr.f32.gmra.mrb[0].mxu0 %v4199
      %v5560 = vpop.f32.mrb[0].mxu0
      %v5561 = vadd.f32 %v5416, %v5560
      %v5562 = vpop.f32.mrb[0].mxu0
      %5563 = vmatprep.mubr.f32.mxu0 %v4236
      %5564 = vmatmul.mubr.f32.gmra.mrb[0].mxu0 %v4235
      %v5565 = vpop.f32.mrb[0].mxu0
      %v5566 = vadd.f32 %v5421, %v5565
      %v5567 = vpop.f32.mrb[0].mxu0
      %5568 = vmatprep.mubr.f32.mxu0 %v4272
      %5569 = vmatmul.mubr.f32.gmra.mrb[0].mxu0 %v4271
      %v5570 = vpop.f32.mrb[0].mxu0
      %v5571 = vadd.f32 %v5426, %v5570
      %v5572 = vpop.f32.mrb[0].mxu0
      %5573 = vmatprep.mubr.f32.mxu0 %v4308
      %5574 = vmatmul.mubr.f32.gmra.mrb[0].mxu0 %v4307
      %v5575 = vpop.f32.mrb[0].mxu0
      %v5576 = vadd.f32 %v5431, %v5575
      %v5577 = vpop.f32.mrb[0].mxu0
      %5578 = vmatprep.mubr.f32.mxu0 %v4344
      %5579 = vmatmul.mubr.f32.gmra.mrb[0].mxu0 %v4343
      %v5580 = vpop.f32.mrb[0].mxu0
      %v5581 = vadd.f32 %v5436, %v5580
      %v5582 = vpop.f32.mrb[0].mxu0
      %5583 = vmatprep.mubr.f32.mxu0 %v4380
      %5584 = vmatmul.mubr.f32.gmra.mrb[0].mxu0 %v4379
      %v5585 = vpop.f32.mrb[0].mxu0
      %v5586 = vadd.f32 %v5441, %v5585
      %v5587 = vpop.f32.mrb[0].mxu0
      %5588 = vmatprep.mubr.f32.mxu0 %v4416
      %5589 = vmatmul.mubr.f32.gmra.mrb[0].mxu0 %v4415
      %v5590 = vpop.f32.mrb[0].mxu0
      %v5591 = vadd.f32 %v5446, %v5590
      %v5592 = vpop.f32.mrb[0].mxu0
      %5593 = vmatprep.mubr.f32.mxu0 %v4452
      %5594 = vmatmul.mubr.f32.gmra.mrb[0].mxu0 %v4451
      %v5595 = vpop.f32.mrb[0].mxu0
      %v5596 = vadd.f32 %v5451, %v5595
      %v5597 = vpop.f32.mrb[0].mxu0
      %5598 = vmatprep.mubr.f32.mxu0 %v4488
      %5599 = vmatmul.mubr.f32.gmra.mrb[0].mxu0 %v4487
      %v5600 = vpop.f32.mrb[0].mxu0
      %v5601 = vadd.f32 %v5456, %v5600
      %v5602 = vpop.f32.mrb[0].mxu0
      %5603 = vmatprep.mubr.f32.mxu0 %v4524
      %5604 = vmatmul.mubr.f32.gmra.mrb[0].mxu0 %v4523
      %v5605 = vpop.f32.mrb[0].mxu0
      %v5606 = vadd.f32 %v5461, %v5605
      %v5607 = vpop.f32.mrb[0].mxu0
      %5608 = vmatprep.mubr.f32.mxu0 %v4560
      %5609 = vmatmul.mubr.f32.gmra.mrb[0].mxu0 %v4559
      %v5610 = vpop.f32.mrb[0].mxu0
      %v5611 = vadd.f32 %v5466, %v5610
      %v5612 = vpop.f32.mrb[0].mxu0
      %5613 = vmatprep.mubr.f32.mxu0 %v4596
      %5614 = vmatmul.mubr.f32.gmra.mrb[0].mxu0 %v4595
      %v5615 = vpop.f32.mrb[0].mxu0
      %v5616 = vadd.f32 %v5471, %v5615
      %v5617 = vpop.f32.mrb[0].mxu0
      %5618 = vmatprep.mubr.f32.mxu0 %v4632
      %5619 = vmatmul.mubr.f32.gmra.mrb[0].mxu0 %v4631
      %v5620 = vpop.f32.mrb[0].mxu0
      %v5621 = vadd.f32 %v5476, %v5620
      %v5622 = vpop.f32.mrb[0].mxu0
      %5623 = vmatprep.mubr.f32.mxu0 %v4668
      %5624 = vmatmul.mubr.f32.gmra.mrb[0].mxu0 %v4667
      %v5625 = vpop.f32.mrb[0].mxu0
      %v5626 = vadd.f32 %v5481, %v5625
      %v5627 = vpop.f32.mrb[0].mxu0
      %5628 = vmatprep.mubr.f32.mxu0 %v4704
      %5629 = vmatmul.mubr.f32.gmra.mrb[0].mxu0 %v4703
      %v5630 = vpop.f32.mrb[0].mxu0
      %v5631 = vadd.f32 %v5486, %v5630
      %v5632 = vpop.f32.mrb[0].mxu0
      %5633 = vmatprep.mubr.f32.mxu0 %v4740
      %5634 = vmatmul.mubr.f32.gmra.mrb[0].mxu0 %v4739
      %v5635 = vpop.f32.mrb[0].mxu0
      %v5636 = vadd.f32 %v5491, %v5635
      %v5637 = vpop.f32.mrb[0].mxu0
      %5638 = vdwg.mxu0
      %5639 = vmatprep.subr.mxu0 0.0
      %5640 = vmatpush1.msra.mxu0 %v4837
      %5641 = vmatprep.subr.mxu0 0.0
      %5642 = vmatpush1.msra.mxu0 %v4838
      %5643 = vmatprep.subr.mxu0 0.0
      %5644 = vmatpush1.msra.mxu0 %v4839
      %5645 = vmatprep.subr.mxu0 0.0
      %5646 = vmatpush1.msra.mxu0 %v4840
      %5647 = vmatprep.subr.mxu0 0.0
      %5648 = vmatpush1.msra.mxu0 %v4841
      %5649 = vmatprep.subr.mxu0 0.0
      %5650 = vmatpush1.msra.mxu0 %v4842
      %5651 = vmatprep.subr.mxu0 0.0
      %5652 = vmatpush1.msra.mxu0 %v4843
      %5653 = vmatprep.subr.mxu0 0.0
      %5654 = vmatpush1.msra.mxu0 %v4844
      %5655 = vmatprep.subr.mxu0 0.0
      %5656 = vmatpush1.msra.mxu0 %v4845
      %5657 = vmatprep.subr.mxu0 0.0
      %5658 = vmatpush1.msra.mxu0 %v4846
      %5659 = vmatprep.subr.mxu0 0.0
      %5660 = vmatpush1.msra.mxu0 %v4847
      %5661 = vmatprep.subr.mxu0 0.0
      %5662 = vmatpush1.msra.mxu0 %v4848
      %5663 = vmatprep.subr.mxu0 0.0
      %5664 = vmatpush1.msra.mxu0 %v4849
      %5665 = vmatprep.subr.mxu0 0.0
      %5666 = vmatpush1.msra.mxu0 %v4850
      %5667 = vmatprep.subr.mxu0 0.0
      %5668 = vmatpush1.msra.mxu0 %v4851
      %5669 = vmatprep.subr.mxu0 0.0
      %5670 = vmatpush1.msra.mxu0 %v4852
      %5671 = vmatprep.subr.mxu0 0.0
      %5672 = vmatpush1.msra.mxu0 %v4853
      %5673 = vmatprep.subr.mxu0 0.0
      %5674 = vmatpush1.msra.mxu0 %v4854
      %5675 = vmatprep.subr.mxu0 0.0
      %5676 = vmatpush1.msra.mxu0 %v4855
      %5677 = vmatprep.subr.mxu0 0.0
      %5678 = vmatpush1.msra.mxu0 %v4856
      %5679 = vmatprep.subr.mxu0 0.0
      %5680 = vmatpush1.msra.mxu0 %v4857
      %5681 = vmatprep.subr.mxu0 0.0
      %5682 = vmatpush1.msra.mxu0 %v4858
      %5683 = vmatprep.subr.mxu0 0.0
      %5684 = vmatpush1.msra.mxu0 %v4859
      %5685 = vmatprep.subr.mxu0 0.0
      %5686 = vmatpush1.msra.mxu0 %v4860
      %5687 = vmatprep.subr.mxu0 0.0
      %5688 = vmatpush1.msra.mxu0 %v4861
      %5689 = vmatprep.subr.mxu0 0.0
      %5690 = vmatpush1.msra.mxu0 %v4862
      %5691 = vmatprep.subr.mxu0 0.0
      %5692 = vmatpush1.msra.mxu0 %v4863
      %5693 = vmatprep.subr.mxu0 0.0
      %5694 = vmatpush1.msra.mxu0 %v4864
      %5695 = vmatprep.subr.mxu0 0.0
      %5696 = vmatpush1.msra.mxu0 %v4865
      %5697 = vmatprep.subr.mxu0 0.0
      %5698 = vmatpush1.msra.mxu0 %v4866
      %5699 = vmatprep.subr.mxu0 0.0
      %5700 = vmatpush1.msra.mxu0 %v4867
      %5701 = vmatprep.subr.mxu0 0.0
      %5702 = vmatpush1.msra.mxu0 %v4868
      %5703 = vmatprep.mubr.f32.mxu0 %v4202
      %5704 = vmatmul.mubr.f32.gmra.mrb[0].mxu0 %v4201
      %v5705 = vpop.f32.mrb[0].mxu0
      %v5706 = vadd.f32 %v5561, %v5705
      %v5707 = vpop.f32.mrb[0].mxu0
      %5708 = vmatprep.mubr.f32.mxu0 %v4238
      %5709 = vmatmul.mubr.f32.gmra.mrb[0].mxu0 %v4237
      %v5710 = vpop.f32.mrb[0].mxu0
      %v5711 = vadd.f32 %v5566, %v5710
      %v5712 = vpop.f32.mrb[0].mxu0
      %5713 = vmatprep.mubr.f32.mxu0 %v4274
      %5714 = vmatmul.mubr.f32.gmra.mrb[0].mxu0 %v4273
      %v5715 = vpop.f32.mrb[0].mxu0
      %v5716 = vadd.f32 %v5571, %v5715
      %v5717 = vpop.f32.mrb[0].mxu0
      %5718 = vmatprep.mubr.f32.mxu0 %v4310
      %5719 = vmatmul.mubr.f32.gmra.mrb[0].mxu0 %v4309
      %v5720 = vpop.f32.mrb[0].mxu0
      %v5721 = vadd.f32 %v5576, %v5720
      %v5722 = vpop.f32.mrb[0].mxu0
      %5723 = vmatprep.mubr.f32.mxu0 %v4346
      %5724 = vmatmul.mubr.f32.gmra.mrb[0].mxu0 %v4345
      %v5725 = vpop.f32.mrb[0].mxu0
      %v5726 = vadd.f32 %v5581, %v5725
      %v5727 = vpop.f32.mrb[0].mxu0
      %5728 = vmatprep.mubr.f32.mxu0 %v4382
      %5729 = vmatmul.mubr.f32.gmra.mrb[0].mxu0 %v4381
      %v5730 = vpop.f32.mrb[0].mxu0
      %v5731 = vadd.f32 %v5586, %v5730
      %v5732 = vpop.f32.mrb[0].mxu0
      %5733 = vmatprep.mubr.f32.mxu0 %v4418
      %5734 = vmatmul.mubr.f32.gmra.mrb[0].mxu0 %v4417
      %v5735 = vpop.f32.mrb[0].mxu0
      %v5736 = vadd.f32 %v5591, %v5735
      %v5737 = vpop.f32.mrb[0].mxu0
      %5738 = vmatprep.mubr.f32.mxu0 %v4454
      %5739 = vmatmul.mubr.f32.gmra.mrb[0].mxu0 %v4453
      %v5740 = vpop.f32.mrb[0].mxu0
      %v5741 = vadd.f32 %v5596, %v5740
      %v5742 = vpop.f32.mrb[0].mxu0
      %5743 = vmatprep.mubr.f32.mxu0 %v4490
      %5744 = vmatmul.mubr.f32.gmra.mrb[0].mxu0 %v4489
      %v5745 = vpop.f32.mrb[0].mxu0
      %v5746 = vadd.f32 %v5601, %v5745
      %v5747 = vpop.f32.mrb[0].mxu0
      %5748 = vmatprep.mubr.f32.mxu0 %v4526
      %5749 = vmatmul.mubr.f32.gmra.mrb[0].mxu0 %v4525
      %v5750 = vpop.f32.mrb[0].mxu0
      %v5751 = vadd.f32 %v5606, %v5750
      %v5752 = vpop.f32.mrb[0].mxu0
      %5753 = vmatprep.mubr.f32.mxu0 %v4562
      %5754 = vmatmul.mubr.f32.gmra.mrb[0].mxu0 %v4561
      %v5755 = vpop.f32.mrb[0].mxu0
      %v5756 = vadd.f32 %v5611, %v5755
      %v5757 = vpop.f32.mrb[0].mxu0
      %5758 = vmatprep.mubr.f32.mxu0 %v4598
      %5759 = vmatmul.mubr.f32.gmra.mrb[0].mxu0 %v4597
      %v5760 = vpop.f32.mrb[0].mxu0
      %v5761 = vadd.f32 %v5616, %v5760
      %v5762 = vpop.f32.mrb[0].mxu0
      %5763 = vmatprep.mubr.f32.mxu0 %v4634
      %5764 = vmatmul.mubr.f32.gmra.mrb[0].mxu0 %v4633
      %v5765 = vpop.f32.mrb[0].mxu0
      %v5766 = vadd.f32 %v5621, %v5765
      %v5767 = vpop.f32.mrb[0].mxu0
      %5768 = vmatprep.mubr.f32.mxu0 %v4670
      %5769 = vmatmul.mubr.f32.gmra.mrb[0].mxu0 %v4669
      %v5770 = vpop.f32.mrb[0].mxu0
      %v5771 = vadd.f32 %v5626, %v5770
      %v5772 = vpop.f32.mrb[0].mxu0
      %5773 = vmatprep.mubr.f32.mxu0 %v4706
      %5774 = vmatmul.mubr.f32.gmra.mrb[0].mxu0 %v4705
      %v5775 = vpop.f32.mrb[0].mxu0
      %v5776 = vadd.f32 %v5631, %v5775
      %v5777 = vpop.f32.mrb[0].mxu0
      %5778 = vmatprep.mubr.f32.mxu0 %v4742
      %5779 = vmatmul.mubr.f32.gmra.mrb[0].mxu0 %v4741
      %v5780 = vpop.f32.mrb[0].mxu0
      %v5781 = vadd.f32 %v5636, %v5780
      %v5782 = vpop.f32.mrb[0].mxu0
      %5783 = vdwg.mxu0
      %5784 = vmatprep.subr.mxu0 0.0
      %5785 = vmatpush1.msra.mxu0 %v4869
      %5786 = vmatprep.subr.mxu0 0.0
      %5787 = vmatpush1.msra.mxu0 %v4870
      %5788 = vmatprep.subr.mxu0 0.0
      %5789 = vmatpush1.msra.mxu0 %v4871
      %5790 = vmatprep.subr.mxu0 0.0
      %5791 = vmatpush1.msra.mxu0 %v4872
      %5792 = vmatprep.subr.mxu0 0.0
      %5793 = vmatpush1.msra.mxu0 %v4873
      %5794 = vmatprep.subr.mxu0 0.0
      %5795 = vmatpush1.msra.mxu0 %v4874
      %5796 = vmatprep.subr.mxu0 0.0
      %5797 = vmatpush1.msra.mxu0 %v4875
      %5798 = vmatprep.subr.mxu0 0.0
      %5799 = vmatpush1.msra.mxu0 %v4876
      %5800 = vmatprep.subr.mxu0 0.0
      %5801 = vmatpush1.msra.mxu0 %v4877
      %5802 = vmatprep.subr.mxu0 0.0
      %5803 = vmatpush1.msra.mxu0 %v4878
      %5804 = vmatprep.subr.mxu0 0.0
      %5805 = vmatpush1.msra.mxu0 %v4879
      %5806 = vmatprep.subr.mxu0 0.0
      %5807 = vmatpush1.msra.mxu0 %v4880
      %5808 = vmatprep.subr.mxu0 0.0
      %5809 = vmatpush1.msra.mxu0 %v4881
      %5810 = vmatprep.subr.mxu0 0.0
      %5811 = vmatpush1.msra.mxu0 %v4882
      %5812 = vmatprep.subr.mxu0 0.0
      %5813 = vmatpush1.msra.mxu0 %v4883
      %5814 = vmatprep.subr.mxu0 0.0
      %5815 = vmatpush1.msra.mxu0 %v4884
      %5816 = vmatprep.subr.mxu0 0.0
      %5817 = vmatpush1.msra.mxu0 %v4885
      %5818 = vmatprep.subr.mxu0 0.0
      %5819 = vmatpush1.msra.mxu0 %v4886
      %5820 = vmatprep.subr.mxu0 0.0
      %5821 = vmatpush1.msra.mxu0 %v4887
      %5822 = vmatprep.subr.mxu0 0.0
      %5823 = vmatpush1.msra.mxu0 %v4888
      %5824 = vmatprep.subr.mxu0 0.0
      %5825 = vmatpush1.msra.mxu0 %v4889
      %5826 = vmatprep.subr.mxu0 0.0
      %5827 = vmatpush1.msra.mxu0 %v4890
      %5828 = vmatprep.subr.mxu0 0.0
      %5829 = vmatpush1.msra.mxu0 %v4891
      %5830 = vmatprep.subr.mxu0 0.0
      %5831 = vmatpush1.msra.mxu0 %v4892
      %5832 = vmatprep.subr.mxu0 0.0
      %5833 = vmatpush1.msra.mxu0 %v4893
      %5834 = vmatprep.subr.mxu0 0.0
      %5835 = vmatpush1.msra.mxu0 %v4894
      %5836 = vmatprep.subr.mxu0 0.0
      %5837 = vmatpush1.msra.mxu0 %v4895
      %5838 = vmatprep.subr.mxu0 0.0
      %5839 = vmatpush1.msra.mxu0 %v4896
      %5840 = vmatprep.subr.mxu0 0.0
      %5841 = vmatpush1.msra.mxu0 %v4897
      %5842 = vmatprep.subr.mxu0 0.0
      %5843 = vmatpush1.msra.mxu0 %v4898
      %5844 = vmatprep.subr.mxu0 0.0
      %5845 = vmatpush1.msra.mxu0 %v4899
      %5846 = vmatprep.subr.mxu0 0.0
      %5847 = vmatpush1.msra.mxu0 %v4900
      %5848 = vmatprep.mubr.f32.mxu0 %v4204
      %5849 = vmatmul.mubr.f32.gmra.mrb[0].mxu0 %v4203
      %v5850 = vpop.f32.mrb[0].mxu0
      %v5851 = vadd.f32 %v5706, %v5850
      %v5852 = vpop.f32.mrb[0].mxu0
      %5853 = vmatprep.mubr.f32.mxu0 %v4240
      %5854 = vmatmul.mubr.f32.gmra.mrb[0].mxu0 %v4239
      %v5855 = vpop.f32.mrb[0].mxu0
      %v5856 = vadd.f32 %v5711, %v5855
      %v5857 = vpop.f32.mrb[0].mxu0
      %5858 = vmatprep.mubr.f32.mxu0 %v4276
      %5859 = vmatmul.mubr.f32.gmra.mrb[0].mxu0 %v4275
      %v5860 = vpop.f32.mrb[0].mxu0
      %v5861 = vadd.f32 %v5716, %v5860
      %v5862 = vpop.f32.mrb[0].mxu0
      %5863 = vmatprep.mubr.f32.mxu0 %v4312
      %5864 = vmatmul.mubr.f32.gmra.mrb[0].mxu0 %v4311
      %v5865 = vpop.f32.mrb[0].mxu0
      %v5866 = vadd.f32 %v5721, %v5865
      %v5867 = vpop.f32.mrb[0].mxu0
      %5868 = vmatprep.mubr.f32.mxu0 %v4348
      %5869 = vmatmul.mubr.f32.gmra.mrb[0].mxu0 %v4347
      %v5870 = vpop.f32.mrb[0].mxu0
      %v5871 = vadd.f32 %v5726, %v5870
      %v5872 = vpop.f32.mrb[0].mxu0
      %5873 = vmatprep.mubr.f32.mxu0 %v4384
      %5874 = vmatmul.mubr.f32.gmra.mrb[0].mxu0 %v4383
      %v5875 = vpop.f32.mrb[0].mxu0
      %v5876 = vadd.f32 %v5731, %v5875
      %v5877 = vpop.f32.mrb[0].mxu0
      %5878 = vmatprep.mubr.f32.mxu0 %v4420
      %5879 = vmatmul.mubr.f32.gmra.mrb[0].mxu0 %v4419
      %v5880 = vpop.f32.mrb[0].mxu0
      %v5881 = vadd.f32 %v5736, %v5880
      %v5882 = vpop.f32.mrb[0].mxu0
      %5883 = vmatprep.mubr.f32.mxu0 %v4456
      %5884 = vmatmul.mubr.f32.gmra.mrb[0].mxu0 %v4455
      %v5885 = vpop.f32.mrb[0].mxu0
      %v5886 = vadd.f32 %v5741, %v5885
      %v5887 = vpop.f32.mrb[0].mxu0
      %5888 = vmatprep.mubr.f32.mxu0 %v4492
      %5889 = vmatmul.mubr.f32.gmra.mrb[0].mxu0 %v4491
      %v5890 = vpop.f32.mrb[0].mxu0
      %v5891 = vadd.f32 %v5746, %v5890
      %v5892 = vpop.f32.mrb[0].mxu0
      %5893 = vmatprep.mubr.f32.mxu0 %v4528
      %5894 = vmatmul.mubr.f32.gmra.mrb[0].mxu0 %v4527
      %v5895 = vpop.f32.mrb[0].mxu0
      %v5896 = vadd.f32 %v5751, %v5895
      %v5897 = vpop.f32.mrb[0].mxu0
      %5898 = vmatprep.mubr.f32.mxu0 %v4564
      %5899 = vmatmul.mubr.f32.gmra.mrb[0].mxu0 %v4563
      %v5900 = vpop.f32.mrb[0].mxu0
      %v5901 = vadd.f32 %v5756, %v5900
      %v5902 = vpop.f32.mrb[0].mxu0
      %5903 = vmatprep.mubr.f32.mxu0 %v4600
      %5904 = vmatmul.mubr.f32.gmra.mrb[0].mxu0 %v4599
      %v5905 = vpop.f32.mrb[0].mxu0
      %v5906 = vadd.f32 %v5761, %v5905
      %v5907 = vpop.f32.mrb[0].mxu0
      %5908 = vmatprep.mubr.f32.mxu0 %v4636
      %5909 = vmatmul.mubr.f32.gmra.mrb[0].mxu0 %v4635
      %v5910 = vpop.f32.mrb[0].mxu0
      %v5911 = vadd.f32 %v5766, %v5910
      %v5912 = vpop.f32.mrb[0].mxu0
      %5913 = vmatprep.mubr.f32.mxu0 %v4672
      %5914 = vmatmul.mubr.f32.gmra.mrb[0].mxu0 %v4671
      %v5915 = vpop.f32.mrb[0].mxu0
      %v5916 = vadd.f32 %v5771, %v5915
      %v5917 = vpop.f32.mrb[0].mxu0
      %5918 = vmatprep.mubr.f32.mxu0 %v4708
      %5919 = vmatmul.mubr.f32.gmra.mrb[0].mxu0 %v4707
      %v5920 = vpop.f32.mrb[0].mxu0
      %v5921 = vadd.f32 %v5776, %v5920
      %v5922 = vpop.f32.mrb[0].mxu0
      %5923 = vmatprep.mubr.f32.mxu0 %v4744
      %5924 = vmatmul.mubr.f32.gmra.mrb[0].mxu0 %v4743
      %v5925 = vpop.f32.mrb[0].mxu0
      %v5926 = vadd.f32 %v5781, %v5925
      %v5927 = vpop.f32.mrb[0].mxu0
      %5928 = vdwg.mxu0
      %5929 = vmatprep.subr.mxu0 0.0
      %5930 = vmatpush1.msra.mxu0 %v4901
      %5931 = vmatprep.subr.mxu0 0.0
      %5932 = vmatpush1.msra.mxu0 %v4902
      %5933 = vmatprep.subr.mxu0 0.0
      %5934 = vmatpush1.msra.mxu0 %v4903
      %5935 = vmatprep.subr.mxu0 0.0
      %5936 = vmatpush1.msra.mxu0 %v4904
      %5937 = vmatprep.subr.mxu0 0.0
      %5938 = vmatpush1.msra.mxu0 %v4905
      %5939 = vmatprep.subr.mxu0 0.0
      %5940 = vmatpush1.msra.mxu0 %v4906
      %5941 = vmatprep.subr.mxu0 0.0
      %5942 = vmatpush1.msra.mxu0 %v4907
      %5943 = vmatprep.subr.mxu0 0.0
      %5944 = vmatpush1.msra.mxu0 %v4908
      %5945 = vmatprep.subr.mxu0 0.0
      %5946 = vmatpush1.msra.mxu0 %v4909
      %5947 = vmatprep.subr.mxu0 0.0
      %5948 = vmatpush1.msra.mxu0 %v4910
      %5949 = vmatprep.subr.mxu0 0.0
      %5950 = vmatpush1.msra.mxu0 %v4911
      %5951 = vmatprep.subr.mxu0 0.0
      %5952 = vmatpush1.msra.mxu0 %v4912
      %5953 = vmatprep.subr.mxu0 0.0
      %5954 = vmatpush1.msra.mxu0 %v4913
      %5955 = vmatprep.subr.mxu0 0.0
      %5956 = vmatpush1.msra.mxu0 %v4914
      %5957 = vmatprep.subr.mxu0 0.0
      %5958 = vmatpush1.msra.mxu0 %v4915
      %5959 = vmatprep.subr.mxu0 0.0
      %5960 = vmatpush1.msra.mxu0 %v4916
      %5961 = vmatprep.subr.mxu0 0.0
      %5962 = vmatpush1.msra.mxu0 %v4917
      %5963 = vmatprep.subr.mxu0 0.0
      %5964 = vmatpush1.msra.mxu0 %v4918
      %5965 = vmatprep.subr.mxu0 0.0
      %5966 = vmatpush1.msra.mxu0 %v4919
      %5967 = vmatprep.subr.mxu0 0.0
      %5968 = vmatpush1.msra.mxu0 %v4920
      %5969 = vmatprep.subr.mxu0 0.0
      %5970 = vmatpush1.msra.mxu0 %v4921
      %5971 = vmatprep.subr.mxu0 0.0
      %5972 = vmatpush1.msra.mxu0 %v4922
      %5973 = vmatprep.subr.mxu0 0.0
      %5974 = vmatpush1.msra.mxu0 %v4923
      %5975 = vmatprep.subr.mxu0 0.0
      %5976 = vmatpush1.msra.mxu0 %v4924
      %5977 = vmatprep.subr.mxu0 0.0
      %5978 = vmatpush1.msra.mxu0 %v4925
      %5979 = vmatprep.subr.mxu0 0.0
      %5980 = vmatpush1.msra.mxu0 %v4926
      %5981 = vmatprep.subr.mxu0 0.0
      %5982 = vmatpush1.msra.mxu0 %v4927
      %5983 = vmatprep.subr.mxu0 0.0
      %5984 = vmatpush1.msra.mxu0 %v4928
      %5985 = vmatprep.subr.mxu0 0.0
      %5986 = vmatpush1.msra.mxu0 %v4929
      %5987 = vmatprep.subr.mxu0 0.0
      %5988 = vmatpush1.msra.mxu0 %v4930
      %5989 = vmatprep.subr.mxu0 0.0
      %5990 = vmatpush1.msra.mxu0 %v4931
      %5991 = vmatprep.subr.mxu0 0.0
      %5992 = vmatpush1.msra.mxu0 %v4932
      %5993 = vmatprep.mubr.f32.mxu0 %v4206
      %5994 = vmatmul.mubr.f32.gmra.mrb[0].mxu0 %v4205
      %v5995 = vpop.f32.mrb[0].mxu0
      %v5996 = vadd.f32 %v5851, %v5995
      %v5997 = vpop.f32.mrb[0].mxu0
      %5998 = vmatprep.mubr.f32.mxu0 %v4242
      %5999 = vmatmul.mubr.f32.gmra.mrb[0].mxu0 %v4241
      %v6000 = vpop.f32.mrb[0].mxu0
      %v6001 = vadd.f32 %v5856, %v6000
      %v6002 = vpop.f32.mrb[0].mxu0
      %6003 = vmatprep.mubr.f32.mxu0 %v4278
      %6004 = vmatmul.mubr.f32.gmra.mrb[0].mxu0 %v4277
      %v6005 = vpop.f32.mrb[0].mxu0
      %v6006 = vadd.f32 %v5861, %v6005
      %v6007 = vpop.f32.mrb[0].mxu0
      %6008 = vmatprep.mubr.f32.mxu0 %v4314
      %6009 = vmatmul.mubr.f32.gmra.mrb[0].mxu0 %v4313
      %v6010 = vpop.f32.mrb[0].mxu0
      %v6011 = vadd.f32 %v5866, %v6010
      %v6012 = vpop.f32.mrb[0].mxu0
      %6013 = vmatprep.mubr.f32.mxu0 %v4350
      %6014 = vmatmul.mubr.f32.gmra.mrb[0].mxu0 %v4349
      %v6015 = vpop.f32.mrb[0].mxu0
      %v6016 = vadd.f32 %v5871, %v6015
      %v6017 = vpop.f32.mrb[0].mxu0
      %6018 = vmatprep.mubr.f32.mxu0 %v4386
      %6019 = vmatmul.mubr.f32.gmra.mrb[0].mxu0 %v4385
      %v6020 = vpop.f32.mrb[0].mxu0
      %v6021 = vadd.f32 %v5876, %v6020
      %v6022 = vpop.f32.mrb[0].mxu0
      %6023 = vmatprep.mubr.f32.mxu0 %v4422
      %6024 = vmatmul.mubr.f32.gmra.mrb[0].mxu0 %v4421
      %v6025 = vpop.f32.mrb[0].mxu0
      %v6026 = vadd.f32 %v5881, %v6025
      %v6027 = vpop.f32.mrb[0].mxu0
      %6028 = vmatprep.mubr.f32.mxu0 %v4458
      %6029 = vmatmul.mubr.f32.gmra.mrb[0].mxu0 %v4457
      %v6030 = vpop.f32.mrb[0].mxu0
      %v6031 = vadd.f32 %v5886, %v6030
      %v6032 = vpop.f32.mrb[0].mxu0
      %6033 = vmatprep.mubr.f32.mxu0 %v4494
      %6034 = vmatmul.mubr.f32.gmra.mrb[0].mxu0 %v4493
      %v6035 = vpop.f32.mrb[0].mxu0
      %v6036 = vadd.f32 %v5891, %v6035
      %v6037 = vpop.f32.mrb[0].mxu0
      %6038 = vmatprep.mubr.f32.mxu0 %v4530
      %6039 = vmatmul.mubr.f32.gmra.mrb[0].mxu0 %v4529
      %v6040 = vpop.f32.mrb[0].mxu0
      %v6041 = vadd.f32 %v5896, %v6040
      %v6042 = vpop.f32.mrb[0].mxu0
      %6043 = vmatprep.mubr.f32.mxu0 %v4566
      %6044 = vmatmul.mubr.f32.gmra.mrb[0].mxu0 %v4565
      %v6045 = vpop.f32.mrb[0].mxu0
      %v6046 = vadd.f32 %v5901, %v6045
      %v6047 = vpop.f32.mrb[0].mxu0
      %6048 = vmatprep.mubr.f32.mxu0 %v4602
      %6049 = vmatmul.mubr.f32.gmra.mrb[0].mxu0 %v4601
      %v6050 = vpop.f32.mrb[0].mxu0
      %v6051 = vadd.f32 %v5906, %v6050
      %v6052 = vpop.f32.mrb[0].mxu0
      %6053 = vmatprep.mubr.f32.mxu0 %v4638
      %6054 = vmatmul.mubr.f32.gmra.mrb[0].mxu0 %v4637
      %v6055 = vpop.f32.mrb[0].mxu0
      %v6056 = vadd.f32 %v5911, %v6055
      %v6057 = vpop.f32.mrb[0].mxu0
      %6058 = vmatprep.mubr.f32.mxu0 %v4674
      %6059 = vmatmul.mubr.f32.gmra.mrb[0].mxu0 %v4673
      %v6060 = vpop.f32.mrb[0].mxu0
      %v6061 = vadd.f32 %v5916, %v6060
      %v6062 = vpop.f32.mrb[0].mxu0
      %6063 = vmatprep.mubr.f32.mxu0 %v4710
      %6064 = vmatmul.mubr.f32.gmra.mrb[0].mxu0 %v4709
      %v6065 = vpop.f32.mrb[0].mxu0
      %v6066 = vadd.f32 %v5921, %v6065
      %v6067 = vpop.f32.mrb[0].mxu0
      %6068 = vmatprep.mubr.f32.mxu0 %v4746
      %6069 = vmatmul.mubr.f32.gmra.mrb[0].mxu0 %v4745
      %v6070 = vpop.f32.mrb[0].mxu0
      %v6071 = vadd.f32 %v5926, %v6070
      %v6072 = vpop.f32.mrb[0].mxu0
      %6073 = vdwg.mxu0
      %6074 = vmatprep.subr.mxu0 0.0
      %6075 = vmatpush1.msra.mxu0 %v4933
      %6076 = vmatprep.subr.mxu0 0.0
      %6077 = vmatpush1.msra.mxu0 %v4934
      %6078 = vmatprep.subr.mxu0 0.0
      %6079 = vmatpush1.msra.mxu0 %v4935
      %6080 = vmatprep.subr.mxu0 0.0
      %6081 = vmatpush1.msra.mxu0 %v4936
      %6082 = vmatprep.subr.mxu0 0.0
      %6083 = vmatpush1.msra.mxu0 %v4937
      %6084 = vmatprep.subr.mxu0 0.0
      %6085 = vmatpush1.msra.mxu0 %v4938
      %6086 = vmatprep.subr.mxu0 0.0
      %6087 = vmatpush1.msra.mxu0 %v4939
      %6088 = vmatprep.subr.mxu0 0.0
      %6089 = vmatpush1.msra.mxu0 %v4940
      %6090 = vmatprep.subr.mxu0 0.0
      %6091 = vmatpush1.msra.mxu0 %v4941
      %6092 = vmatprep.subr.mxu0 0.0
      %6093 = vmatpush1.msra.mxu0 %v4942
      %6094 = vmatprep.subr.mxu0 0.0
      %6095 = vmatpush1.msra.mxu0 %v4943
      %6096 = vmatprep.subr.mxu0 0.0
      %6097 = vmatpush1.msra.mxu0 %v4944
      %6098 = vmatprep.subr.mxu0 0.0
      %6099 = vmatpush1.msra.mxu0 %v4945
      %6100 = vmatprep.subr.mxu0 0.0
      %6101 = vmatpush1.msra.mxu0 %v4946
      %6102 = vmatprep.subr.mxu0 0.0
      %6103 = vmatpush1.msra.mxu0 %v4947
      %6104 = vmatprep.subr.mxu0 0.0
      %6105 = vmatpush1.msra.mxu0 %v4948
      %6106 = vmatprep.subr.mxu0 0.0
      %6107 = vmatpush1.msra.mxu0 %v4949
      %6108 = vmatprep.subr.mxu0 0.0
      %6109 = vmatpush1.msra.mxu0 %v4950
      %6110 = vmatprep.subr.mxu0 0.0
      %6111 = vmatpush1.msra.mxu0 %v4951
      %6112 = vmatprep.subr.mxu0 0.0
      %6113 = vmatpush1.msra.mxu0 %v4952
      %6114 = vmatprep.subr.mxu0 0.0
      %6115 = vmatpush1.msra.mxu0 %v4953
      %6116 = vmatprep.subr.mxu0 0.0
      %6117 = vmatpush1.msra.mxu0 %v4954
      %6118 = vmatprep.subr.mxu0 0.0
      %6119 = vmatpush1.msra.mxu0 %v4955
      %6120 = vmatprep.subr.mxu0 0.0
      %6121 = vmatpush1.msra.mxu0 %v4956
      %6122 = vmatprep.subr.mxu0 0.0
      %6123 = vmatpush1.msra.mxu0 %v4957
      %6124 = vmatprep.subr.mxu0 0.0
      %6125 = vmatpush1.msra.mxu0 %v4958
      %6126 = vmatprep.subr.mxu0 0.0
      %6127 = vmatpush1.msra.mxu0 %v4959
      %6128 = vmatprep.subr.mxu0 0.0
      %6129 = vmatpush1.msra.mxu0 %v4960
      %6130 = vmatprep.subr.mxu0 0.0
      %6131 = vmatpush1.msra.mxu0 %v4961
      %6132 = vmatprep.subr.mxu0 0.0
      %6133 = vmatpush1.msra.mxu0 %v4962
      %6134 = vmatprep.subr.mxu0 0.0
      %6135 = vmatpush1.msra.mxu0 %v4963
      %6136 = vmatprep.subr.mxu0 0.0
      %6137 = vmatpush1.msra.mxu0 %v4964
      %6138 = vmatprep.mubr.f32.mxu0 %v4208
      %6139 = vmatmul.mubr.f32.gmra.mrb[0].mxu0 %v4207
      %v6140 = vpop.f32.mrb[0].mxu0
      %v6141 = vadd.f32 %v5996, %v6140
      %v6142 = vpop.f32.mrb[0].mxu0
      %6143 = vmatprep.mubr.f32.mxu0 %v4244
      %6144 = vmatmul.mubr.f32.gmra.mrb[0].mxu0 %v4243
      %v6145 = vpop.f32.mrb[0].mxu0
      %v6146 = vadd.f32 %v6001, %v6145
      %v6147 = vpop.f32.mrb[0].mxu0
      %6148 = vmatprep.mubr.f32.mxu0 %v4280
      %6149 = vmatmul.mubr.f32.gmra.mrb[0].mxu0 %v4279
      %v6150 = vpop.f32.mrb[0].mxu0
      %v6151 = vadd.f32 %v6006, %v6150
      %v6152 = vpop.f32.mrb[0].mxu0
      %6153 = vmatprep.mubr.f32.mxu0 %v4316
      %6154 = vmatmul.mubr.f32.gmra.mrb[0].mxu0 %v4315
      %v6155 = vpop.f32.mrb[0].mxu0
      %v6156 = vadd.f32 %v6011, %v6155
      %v6157 = vpop.f32.mrb[0].mxu0
      %6158 = vmatprep.mubr.f32.mxu0 %v4352
      %6159 = vmatmul.mubr.f32.gmra.mrb[0].mxu0 %v4351
      %v6160 = vpop.f32.mrb[0].mxu0
      %v6161 = vadd.f32 %v6016, %v6160
      %v6162 = vpop.f32.mrb[0].mxu0
      %6163 = vmatprep.mubr.f32.mxu0 %v4388
      %6164 = vmatmul.mubr.f32.gmra.mrb[0].mxu0 %v4387
      %v6165 = vpop.f32.mrb[0].mxu0
      %v6166 = vadd.f32 %v6021, %v6165
      %v6167 = vpop.f32.mrb[0].mxu0
      %6168 = vmatprep.mubr.f32.mxu0 %v4424
      %6169 = vmatmul.mubr.f32.gmra.mrb[0].mxu0 %v4423
      %v6170 = vpop.f32.mrb[0].mxu0
      %v6171 = vadd.f32 %v6026, %v6170
      %v6172 = vpop.f32.mrb[0].mxu0
      %6173 = vmatprep.mubr.f32.mxu0 %v4460
      %6174 = vmatmul.mubr.f32.gmra.mrb[0].mxu0 %v4459
      %v6175 = vpop.f32.mrb[0].mxu0
      %v6176 = vadd.f32 %v6031, %v6175
      %v6177 = vpop.f32.mrb[0].mxu0
      %6178 = vmatprep.mubr.f32.mxu0 %v4496
      %6179 = vmatmul.mubr.f32.gmra.mrb[0].mxu0 %v4495
      %v6180 = vpop.f32.mrb[0].mxu0
      %v6181 = vadd.f32 %v6036, %v6180
      %v6182 = vpop.f32.mrb[0].mxu0
      %6183 = vmatprep.mubr.f32.mxu0 %v4532
      %6184 = vmatmul.mubr.f32.gmra.mrb[0].mxu0 %v4531
      %v6185 = vpop.f32.mrb[0].mxu0
      %v6186 = vadd.f32 %v6041, %v6185
      %v6187 = vpop.f32.mrb[0].mxu0
      %6188 = vmatprep.mubr.f32.mxu0 %v4568
      %6189 = vmatmul.mubr.f32.gmra.mrb[0].mxu0 %v4567
      %v6190 = vpop.f32.mrb[0].mxu0
      %v6191 = vadd.f32 %v6046, %v6190
      %v6192 = vpop.f32.mrb[0].mxu0
      %6193 = vmatprep.mubr.f32.mxu0 %v4604
      %6194 = vmatmul.mubr.f32.gmra.mrb[0].mxu0 %v4603
      %v6195 = vpop.f32.mrb[0].mxu0
      %v6196 = vadd.f32 %v6051, %v6195
      %v6197 = vpop.f32.mrb[0].mxu0
      %6198 = vmatprep.mubr.f32.mxu0 %v4640
      %6199 = vmatmul.mubr.f32.gmra.mrb[0].mxu0 %v4639
      %v6200 = vpop.f32.mrb[0].mxu0
      %v6201 = vadd.f32 %v6056, %v6200
      %v6202 = vpop.f32.mrb[0].mxu0
      %6203 = vmatprep.mubr.f32.mxu0 %v4676
      %6204 = vmatmul.mubr.f32.gmra.mrb[0].mxu0 %v4675
      %v6205 = vpop.f32.mrb[0].mxu0
      %v6206 = vadd.f32 %v6061, %v6205
      %v6207 = vpop.f32.mrb[0].mxu0
      %6208 = vmatprep.mubr.f32.mxu0 %v4712
      %6209 = vmatmul.mubr.f32.gmra.mrb[0].mxu0 %v4711
      %v6210 = vpop.f32.mrb[0].mxu0
      %v6211 = vadd.f32 %v6066, %v6210
      %v6212 = vpop.f32.mrb[0].mxu0
      %6213 = vmatprep.mubr.f32.mxu0 %v4748
      %6214 = vmatmul.mubr.f32.gmra.mrb[0].mxu0 %v4747
      %v6215 = vpop.f32.mrb[0].mxu0
      %v6216 = vadd.f32 %v6071, %v6215
      %v6217 = vpop.f32.mrb[0].mxu0
      %6218 = vdwg.mxu0
      %6219 = vmatprep.subr.mxu0 0.0
      %6220 = vmatpush1.msra.mxu0 %v4965
      %6221 = vmatprep.subr.mxu0 0.0
      %6222 = vmatpush1.msra.mxu0 %v4966
      %6223 = vmatprep.subr.mxu0 0.0
      %6224 = vmatpush1.msra.mxu0 %v4967
      %6225 = vmatprep.subr.mxu0 0.0
      %6226 = vmatpush1.msra.mxu0 %v4968
      %6227 = vmatprep.subr.mxu0 0.0
      %6228 = vmatpush1.msra.mxu0 %v4969
      %6229 = vmatprep.subr.mxu0 0.0
      %6230 = vmatpush1.msra.mxu0 %v4970
      %6231 = vmatprep.subr.mxu0 0.0
      %6232 = vmatpush1.msra.mxu0 %v4971
      %6233 = vmatprep.subr.mxu0 0.0
      %6234 = vmatpush1.msra.mxu0 %v4972
      %6235 = vmatprep.subr.mxu0 0.0
      %6236 = vmatpush1.msra.mxu0 %v4973
      %6237 = vmatprep.subr.mxu0 0.0
      %6238 = vmatpush1.msra.mxu0 %v4974
      %6239 = vmatprep.subr.mxu0 0.0
      %6240 = vmatpush1.msra.mxu0 %v4975
      %6241 = vmatprep.subr.mxu0 0.0
      %6242 = vmatpush1.msra.mxu0 %v4976
      %6243 = vmatprep.subr.mxu0 0.0
      %6244 = vmatpush1.msra.mxu0 %v4977
      %6245 = vmatprep.subr.mxu0 0.0
      %6246 = vmatpush1.msra.mxu0 %v4978
      %6247 = vmatprep.subr.mxu0 0.0
      %6248 = vmatpush1.msra.mxu0 %v4979
      %6249 = vmatprep.subr.mxu0 0.0
      %6250 = vmatpush1.msra.mxu0 %v4980
      %6251 = vmatprep.subr.mxu0 0.0
      %6252 = vmatpush1.msra.mxu0 %v4981
      %6253 = vmatprep.subr.mxu0 0.0
      %6254 = vmatpush1.msra.mxu0 %v4982
      %6255 = vmatprep.subr.mxu0 0.0
      %6256 = vmatpush1.msra.mxu0 %v4983
      %6257 = vmatprep.subr.mxu0 0.0
      %6258 = vmatpush1.msra.mxu0 %v4984
      %6259 = vmatprep.subr.mxu0 0.0
      %6260 = vmatpush1.msra.mxu0 %v4985
      %6261 = vmatprep.subr.mxu0 0.0
      %6262 = vmatpush1.msra.mxu0 %v4986
      %6263 = vmatprep.subr.mxu0 0.0
      %6264 = vmatpush1.msra.mxu0 %v4987
      %6265 = vmatprep.subr.mxu0 0.0
      %6266 = vmatpush1.msra.mxu0 %v4988
      %6267 = vmatprep.subr.mxu0 0.0
      %6268 = vmatpush1.msra.mxu0 %v4989
      %6269 = vmatprep.subr.mxu0 0.0
      %6270 = vmatpush1.msra.mxu0 %v4990
      %6271 = vmatprep.subr.mxu0 0.0
      %6272 = vmatpush1.msra.mxu0 %v4991
      %6273 = vmatprep.subr.mxu0 0.0
      %6274 = vmatpush1.msra.mxu0 %v4992
      %6275 = vmatprep.subr.mxu0 0.0
      %6276 = vmatpush1.msra.mxu0 %v4993
      %6277 = vmatprep.subr.mxu0 0.0
      %6278 = vmatpush1.msra.mxu0 %v4994
      %6279 = vmatprep.subr.mxu0 0.0
      %6280 = vmatpush1.msra.mxu0 %v4995
      %6281 = vmatprep.subr.mxu0 0.0
      %6282 = vmatpush1.msra.mxu0 %v4996
      %6283 = vmatprep.mubr.f32.mxu0 %v4210
      %6284 = vmatmul.mubr.f32.gmra.mrb[0].mxu0 %v4209
      %v6285 = vpop.f32.mrb[0].mxu0
      %v6286 = vadd.f32 %v6141, %v6285
      %v6287 = vpop.f32.mrb[0].mxu0
      %6288 = vmatprep.mubr.f32.mxu0 %v4246
      %6289 = vmatmul.mubr.f32.gmra.mrb[0].mxu0 %v4245
      %v6290 = vpop.f32.mrb[0].mxu0
      %v6291 = vadd.f32 %v6146, %v6290
      %v6292 = vpop.f32.mrb[0].mxu0
      %6293 = vmatprep.mubr.f32.mxu0 %v4282
      %6294 = vmatmul.mubr.f32.gmra.mrb[0].mxu0 %v4281
      %v6295 = vpop.f32.mrb[0].mxu0
      %v6296 = vadd.f32 %v6151, %v6295
      %v6297 = vpop.f32.mrb[0].mxu0
      %6298 = vmatprep.mubr.f32.mxu0 %v4318
      %6299 = vmatmul.mubr.f32.gmra.mrb[0].mxu0 %v4317
      %v6300 = vpop.f32.mrb[0].mxu0
      %v6301 = vadd.f32 %v6156, %v6300
      %v6302 = vpop.f32.mrb[0].mxu0
      %6303 = vmatprep.mubr.f32.mxu0 %v4354
      %6304 = vmatmul.mubr.f32.gmra.mrb[0].mxu0 %v4353
      %v6305 = vpop.f32.mrb[0].mxu0
      %v6306 = vadd.f32 %v6161, %v6305
      %v6307 = vpop.f32.mrb[0].mxu0
      %6308 = vmatprep.mubr.f32.mxu0 %v4390
      %6309 = vmatmul.mubr.f32.gmra.mrb[0].mxu0 %v4389
      %v6310 = vpop.f32.mrb[0].mxu0
      %v6311 = vadd.f32 %v6166, %v6310
      %v6312 = vpop.f32.mrb[0].mxu0
      %6313 = vmatprep.mubr.f32.mxu0 %v4426
      %6314 = vmatmul.mubr.f32.gmra.mrb[0].mxu0 %v4425
      %v6315 = vpop.f32.mrb[0].mxu0
      %v6316 = vadd.f32 %v6171, %v6315
      %v6317 = vpop.f32.mrb[0].mxu0
      %6318 = vmatprep.mubr.f32.mxu0 %v4462
      %6319 = vmatmul.mubr.f32.gmra.mrb[0].mxu0 %v4461
      %v6320 = vpop.f32.mrb[0].mxu0
      %v6321 = vadd.f32 %v6176, %v6320
      %v6322 = vpop.f32.mrb[0].mxu0
      %6323 = vmatprep.mubr.f32.mxu0 %v4498
      %6324 = vmatmul.mubr.f32.gmra.mrb[0].mxu0 %v4497
      %v6325 = vpop.f32.mrb[0].mxu0
      %v6326 = vadd.f32 %v6181, %v6325
      %v6327 = vpop.f32.mrb[0].mxu0
      %6328 = vmatprep.mubr.f32.mxu0 %v4534
      %6329 = vmatmul.mubr.f32.gmra.mrb[0].mxu0 %v4533
      %v6330 = vpop.f32.mrb[0].mxu0
      %v6331 = vadd.f32 %v6186, %v6330
      %v6332 = vpop.f32.mrb[0].mxu0
      %6333 = vmatprep.mubr.f32.mxu0 %v4570
      %6334 = vmatmul.mubr.f32.gmra.mrb[0].mxu0 %v4569
      %v6335 = vpop.f32.mrb[0].mxu0
      %v6336 = vadd.f32 %v6191, %v6335
      %v6337 = vpop.f32.mrb[0].mxu0
      %6338 = vmatprep.mubr.f32.mxu0 %v4606
      %6339 = vmatmul.mubr.f32.gmra.mrb[0].mxu0 %v4605
      %v6340 = vpop.f32.mrb[0].mxu0
      %v6341 = vadd.f32 %v6196, %v6340
      %v6342 = vpop.f32.mrb[0].mxu0
      %6343 = vmatprep.mubr.f32.mxu0 %v4642
      %6344 = vmatmul.mubr.f32.gmra.mrb[0].mxu0 %v4641
      %v6345 = vpop.f32.mrb[0].mxu0
      %v6346 = vadd.f32 %v6201, %v6345
      %v6347 = vpop.f32.mrb[0].mxu0
      %6348 = vmatprep.mubr.f32.mxu0 %v4678
      %6349 = vmatmul.mubr.f32.gmra.mrb[0].mxu0 %v4677
      %v6350 = vpop.f32.mrb[0].mxu0
      %v6351 = vadd.f32 %v6206, %v6350
      %v6352 = vpop.f32.mrb[0].mxu0
      %6353 = vmatprep.mubr.f32.mxu0 %v4714
      %6354 = vmatmul.mubr.f32.gmra.mrb[0].mxu0 %v4713
      %v6355 = vpop.f32.mrb[0].mxu0
      %v6356 = vadd.f32 %v6211, %v6355
      %v6357 = vpop.f32.mrb[0].mxu0
      %6358 = vmatprep.mubr.f32.mxu0 %v4750
      %6359 = vmatmul.mubr.f32.gmra.mrb[0].mxu0 %v4749
      %v6360 = vpop.f32.mrb[0].mxu0
      %v6361 = vadd.f32 %v6216, %v6360
      %v6362 = vpop.f32.mrb[0].mxu0
      %6363 = vdwg.mxu0
      %6364 = vmatprep.subr.mxu0 0.0
      %6365 = vmatpush1.msra.mxu0 %v4997
      %6366 = vmatprep.subr.mxu0 0.0
      %6367 = vmatpush1.msra.mxu0 %v4998
      %6368 = vmatprep.subr.mxu0 0.0
      %6369 = vmatpush1.msra.mxu0 %v4999
      %6370 = vmatprep.subr.mxu0 0.0
      %6371 = vmatpush1.msra.mxu0 %v5000
      %6372 = vmatprep.subr.mxu0 0.0
      %6373 = vmatpush1.msra.mxu0 %v5001
      %6374 = vmatprep.subr.mxu0 0.0
      %6375 = vmatpush1.msra.mxu0 %v5002
      %6376 = vmatprep.subr.mxu0 0.0
      %6377 = vmatpush1.msra.mxu0 %v5003
      %6378 = vmatprep.subr.mxu0 0.0
      %6379 = vmatpush1.msra.mxu0 %v5004
      %6380 = vmatprep.subr.mxu0 0.0
      %6381 = vmatpush1.msra.mxu0 %v5005
      %6382 = vmatprep.subr.mxu0 0.0
      %6383 = vmatpush1.msra.mxu0 %v5006
      %6384 = vmatprep.subr.mxu0 0.0
      %6385 = vmatpush1.msra.mxu0 %v5007
      %6386 = vmatprep.subr.mxu0 0.0
      %6387 = vmatpush1.msra.mxu0 %v5008
      %6388 = vmatprep.subr.mxu0 0.0
      %6389 = vmatpush1.msra.mxu0 %v5009
      %6390 = vmatprep.subr.mxu0 0.0
      %6391 = vmatpush1.msra.mxu0 %v5010
      %6392 = vmatprep.subr.mxu0 0.0
      %6393 = vmatpush1.msra.mxu0 %v5011
      %6394 = vmatprep.subr.mxu0 0.0
      %6395 = vmatpush1.msra.mxu0 %v5012
      %6396 = vmatprep.subr.mxu0 0.0
      %6397 = vmatpush1.msra.mxu0 %v5013
      %6398 = vmatprep.subr.mxu0 0.0
      %6399 = vmatpush1.msra.mxu0 %v5014
      %6400 = vmatprep.subr.mxu0 0.0
      %6401 = vmatpush1.msra.mxu0 %v5015
      %6402 = vmatprep.subr.mxu0 0.0
      %6403 = vmatpush1.msra.mxu0 %v5016
      %6404 = vmatprep.subr.mxu0 0.0
      %6405 = vmatpush1.msra.mxu0 %v5017
      %6406 = vmatprep.subr.mxu0 0.0
      %6407 = vmatpush1.msra.mxu0 %v5018
      %6408 = vmatprep.subr.mxu0 0.0
      %6409 = vmatpush1.msra.mxu0 %v5019
      %6410 = vmatprep.subr.mxu0 0.0
      %6411 = vmatpush1.msra.mxu0 %v5020
      %6412 = vmatprep.subr.mxu0 0.0
      %6413 = vmatpush1.msra.mxu0 %v5021
      %6414 = vmatprep.subr.mxu0 0.0
      %6415 = vmatpush1.msra.mxu0 %v5022
      %6416 = vmatprep.subr.mxu0 0.0
      %6417 = vmatpush1.msra.mxu0 %v5023
      %6418 = vmatprep.subr.mxu0 0.0
      %6419 = vmatpush1.msra.mxu0 %v5024
      %6420 = vmatprep.subr.mxu0 0.0
      %6421 = vmatpush1.msra.mxu0 %v5025
      %6422 = vmatprep.subr.mxu0 0.0
      %6423 = vmatpush1.msra.mxu0 %v5026
      %6424 = vmatprep.subr.mxu0 0.0
      %6425 = vmatpush1.msra.mxu0 %v5027
      %6426 = vmatprep.subr.mxu0 0.0
      %6427 = vmatpush1.msra.mxu0 %v5028
      %6428 = vmatprep.mubr.f32.mxu0 %v4212
      %6429 = vmatmul.mubr.f32.gmra.mrb[0].mxu0 %v4211
      %v6430 = vpop.f32.mrb[0].mxu0
      %v6431 = vadd.f32 %v6286, %v6430
      %v6432 = vpop.f32.mrb[0].mxu0
      %6433 = vmatprep.mubr.f32.mxu0 %v4248
      %6434 = vmatmul.mubr.f32.gmra.mrb[0].mxu0 %v4247
      %v6435 = vpop.f32.mrb[0].mxu0
      %v6436 = vadd.f32 %v6291, %v6435
      %v6437 = vpop.f32.mrb[0].mxu0
      %6438 = vmatprep.mubr.f32.mxu0 %v4284
      %6439 = vmatmul.mubr.f32.gmra.mrb[0].mxu0 %v4283
      %v6440 = vpop.f32.mrb[0].mxu0
      %v6441 = vadd.f32 %v6296, %v6440
      %v6442 = vpop.f32.mrb[0].mxu0
      %6443 = vmatprep.mubr.f32.mxu0 %v4320
      %6444 = vmatmul.mubr.f32.gmra.mrb[0].mxu0 %v4319
      %v6445 = vpop.f32.mrb[0].mxu0
      %v6446 = vadd.f32 %v6301, %v6445
      %v6447 = vpop.f32.mrb[0].mxu0
      %6448 = vmatprep.mubr.f32.mxu0 %v4356
      %6449 = vmatmul.mubr.f32.gmra.mrb[0].mxu0 %v4355
      %v6450 = vpop.f32.mrb[0].mxu0
      %v6451 = vadd.f32 %v6306, %v6450
      %v6452 = vpop.f32.mrb[0].mxu0
      %6453 = vmatprep.mubr.f32.mxu0 %v4392
      %6454 = vmatmul.mubr.f32.gmra.mrb[0].mxu0 %v4391
      %v6455 = vpop.f32.mrb[0].mxu0
      %v6456 = vadd.f32 %v6311, %v6455
      %v6457 = vpop.f32.mrb[0].mxu0
      %6458 = vmatprep.mubr.f32.mxu0 %v4428
      %6459 = vmatmul.mubr.f32.gmra.mrb[0].mxu0 %v4427
      %v6460 = vpop.f32.mrb[0].mxu0
      %v6461 = vadd.f32 %v6316, %v6460
      %v6462 = vpop.f32.mrb[0].mxu0
      %6463 = vmatprep.mubr.f32.mxu0 %v4464
      %6464 = vmatmul.mubr.f32.gmra.mrb[0].mxu0 %v4463
      %v6465 = vpop.f32.mrb[0].mxu0
      %v6466 = vadd.f32 %v6321, %v6465
      %v6467 = vpop.f32.mrb[0].mxu0
      %6468 = vmatprep.mubr.f32.mxu0 %v4500
      %6469 = vmatmul.mubr.f32.gmra.mrb[0].mxu0 %v4499
      %v6470 = vpop.f32.mrb[0].mxu0
      %v6471 = vadd.f32 %v6326, %v6470
      %v6472 = vpop.f32.mrb[0].mxu0
      %6473 = vmatprep.mubr.f32.mxu0 %v4536
      %6474 = vmatmul.mubr.f32.gmra.mrb[0].mxu0 %v4535
      %v6475 = vpop.f32.mrb[0].mxu0
      %v6476 = vadd.f32 %v6331, %v6475
      %v6477 = vpop.f32.mrb[0].mxu0
      %6478 = vmatprep.mubr.f32.mxu0 %v4572
      %6479 = vmatmul.mubr.f32.gmra.mrb[0].mxu0 %v4571
      %v6480 = vpop.f32.mrb[0].mxu0
      %v6481 = vadd.f32 %v6336, %v6480
      %v6482 = vpop.f32.mrb[0].mxu0
      %6483 = vmatprep.mubr.f32.mxu0 %v4608
      %6484 = vmatmul.mubr.f32.gmra.mrb[0].mxu0 %v4607
      %v6485 = vpop.f32.mrb[0].mxu0
      %v6486 = vadd.f32 %v6341, %v6485
      %v6487 = vpop.f32.mrb[0].mxu0
      %6488 = vmatprep.mubr.f32.mxu0 %v4644
      %6489 = vmatmul.mubr.f32.gmra.mrb[0].mxu0 %v4643
      %v6490 = vpop.f32.mrb[0].mxu0
      %v6491 = vadd.f32 %v6346, %v6490
      %v6492 = vpop.f32.mrb[0].mxu0
      %6493 = vmatprep.mubr.f32.mxu0 %v4680
      %6494 = vmatmul.mubr.f32.gmra.mrb[0].mxu0 %v4679
      %v6495 = vpop.f32.mrb[0].mxu0
      %v6496 = vadd.f32 %v6351, %v6495
      %v6497 = vpop.f32.mrb[0].mxu0
      %6498 = vmatprep.mubr.f32.mxu0 %v4716
      %6499 = vmatmul.mubr.f32.gmra.mrb[0].mxu0 %v4715
      %v6500 = vpop.f32.mrb[0].mxu0
      %v6501 = vadd.f32 %v6356, %v6500
      %v6502 = vpop.f32.mrb[0].mxu0
      %6503 = vmatprep.mubr.f32.mxu0 %v4752
      %6504 = vmatmul.mubr.f32.gmra.mrb[0].mxu0 %v4751
      %v6505 = vpop.f32.mrb[0].mxu0
      %v6506 = vadd.f32 %v6361, %v6505
      %v6507 = vpop.f32.mrb[0].mxu0
      %6508 = vdwg.mxu0
      %6509 = vmatprep.subr.mxu0 0.0
      %6510 = vmatpush1.msra.mxu0 %v5029
      %6511 = vmatprep.subr.mxu0 0.0
      %6512 = vmatpush1.msra.mxu0 %v5030
      %6513 = vmatprep.subr.mxu0 0.0
      %6514 = vmatpush1.msra.mxu0 %v5031
      %6515 = vmatprep.subr.mxu0 0.0
      %6516 = vmatpush1.msra.mxu0 %v5032
      %6517 = vmatprep.subr.mxu0 0.0
      %6518 = vmatpush1.msra.mxu0 %v5033
      %6519 = vmatprep.subr.mxu0 0.0
      %6520 = vmatpush1.msra.mxu0 %v5034
      %6521 = vmatprep.subr.mxu0 0.0
      %6522 = vmatpush1.msra.mxu0 %v5035
      %6523 = vmatprep.subr.mxu0 0.0
      %6524 = vmatpush1.msra.mxu0 %v5036
      %6525 = vmatprep.subr.mxu0 0.0
      %6526 = vmatpush1.msra.mxu0 %v5037
      %6527 = vmatprep.subr.mxu0 0.0
      %6528 = vmatpush1.msra.mxu0 %v5038
      %6529 = vmatprep.subr.mxu0 0.0
      %6530 = vmatpush1.msra.mxu0 %v5039
      %6531 = vmatprep.subr.mxu0 0.0
      %6532 = vmatpush1.msra.mxu0 %v5040
      %6533 = vmatprep.subr.mxu0 0.0
      %6534 = vmatpush1.msra.mxu0 %v5041
      %6535 = vmatprep.subr.mxu0 0.0
      %6536 = vmatpush1.msra.mxu0 %v5042
      %6537 = vmatprep.subr.mxu0 0.0
      %6538 = vmatpush1.msra.mxu0 %v5043
      %6539 = vmatprep.subr.mxu0 0.0
      %6540 = vmatpush1.msra.mxu0 %v5044
      %6541 = vmatprep.subr.mxu0 0.0
      %6542 = vmatpush1.msra.mxu0 %v5045
      %6543 = vmatprep.subr.mxu0 0.0
      %6544 = vmatpush1.msra.mxu0 %v5046
      %6545 = vmatprep.subr.mxu0 0.0
      %6546 = vmatpush1.msra.mxu0 %v5047
      %6547 = vmatprep.subr.mxu0 0.0
      %6548 = vmatpush1.msra.mxu0 %v5048
      %6549 = vmatprep.subr.mxu0 0.0
      %6550 = vmatpush1.msra.mxu0 %v5049
      %6551 = vmatprep.subr.mxu0 0.0
      %6552 = vmatpush1.msra.mxu0 %v5050
      %6553 = vmatprep.subr.mxu0 0.0
      %6554 = vmatpush1.msra.mxu0 %v5051
      %6555 = vmatprep.subr.mxu0 0.0
      %6556 = vmatpush1.msra.mxu0 %v5052
      %6557 = vmatprep.subr.mxu0 0.0
      %6558 = vmatpush1.msra.mxu0 %v5053
      %6559 = vmatprep.subr.mxu0 0.0
      %6560 = vmatpush1.msra.mxu0 %v5054
      %6561 = vmatprep.subr.mxu0 0.0
      %6562 = vmatpush1.msra.mxu0 %v5055
      %6563 = vmatprep.subr.mxu0 0.0
      %6564 = vmatpush1.msra.mxu0 %v5056
      %6565 = vmatprep.subr.mxu0 0.0
      %6566 = vmatpush1.msra.mxu0 %v5057
      %6567 = vmatprep.subr.mxu0 0.0
      %6568 = vmatpush1.msra.mxu0 %v5058
      %6569 = vmatprep.subr.mxu0 0.0
      %6570 = vmatpush1.msra.mxu0 %v5059
      %6571 = vmatprep.subr.mxu0 0.0
      %6572 = vmatpush1.msra.mxu0 %v5060
      %6573 = vmatprep.mubr.f32.mxu0 %v4214
      %6574 = vmatmul.mubr.f32.gmra.mrb[0].mxu0 %v4213
      %v6575 = vpop.f32.mrb[0].mxu0
      %v6576 = vadd.f32 %v6431, %v6575
      %v6577 = vpop.f32.mrb[0].mxu0
      %6578 = vmatprep.mubr.f32.mxu0 %v4250
      %6579 = vmatmul.mubr.f32.gmra.mrb[0].mxu0 %v4249
      %v6580 = vpop.f32.mrb[0].mxu0
      %v6581 = vadd.f32 %v6436, %v6580
      %v6582 = vpop.f32.mrb[0].mxu0
      %6583 = vmatprep.mubr.f32.mxu0 %v4286
      %6584 = vmatmul.mubr.f32.gmra.mrb[0].mxu0 %v4285
      %v6585 = vpop.f32.mrb[0].mxu0
      %v6586 = vadd.f32 %v6441, %v6585
      %v6587 = vpop.f32.mrb[0].mxu0
      %6588 = vmatprep.mubr.f32.mxu0 %v4322
      %6589 = vmatmul.mubr.f32.gmra.mrb[0].mxu0 %v4321
      %v6590 = vpop.f32.mrb[0].mxu0
      %v6591 = vadd.f32 %v6446, %v6590
      %v6592 = vpop.f32.mrb[0].mxu0
      %6593 = vmatprep.mubr.f32.mxu0 %v4358
      %6594 = vmatmul.mubr.f32.gmra.mrb[0].mxu0 %v4357
      %v6595 = vpop.f32.mrb[0].mxu0
      %v6596 = vadd.f32 %v6451, %v6595
      %v6597 = vpop.f32.mrb[0].mxu0
      %6598 = vmatprep.mubr.f32.mxu0 %v4394
      %6599 = vmatmul.mubr.f32.gmra.mrb[0].mxu0 %v4393
      %v6600 = vpop.f32.mrb[0].mxu0
      %v6601 = vadd.f32 %v6456, %v6600
      %v6602 = vpop.f32.mrb[0].mxu0
      %6603 = vmatprep.mubr.f32.mxu0 %v4430
      %6604 = vmatmul.mubr.f32.gmra.mrb[0].mxu0 %v4429
      %v6605 = vpop.f32.mrb[0].mxu0
      %v6606 = vadd.f32 %v6461, %v6605
      %v6607 = vpop.f32.mrb[0].mxu0
      %6608 = vmatprep.mubr.f32.mxu0 %v4466
      %6609 = vmatmul.mubr.f32.gmra.mrb[0].mxu0 %v4465
      %v6610 = vpop.f32.mrb[0].mxu0
      %v6611 = vadd.f32 %v6466, %v6610
      %v6612 = vpop.f32.mrb[0].mxu0
      %6613 = vmatprep.mubr.f32.mxu0 %v4502
      %6614 = vmatmul.mubr.f32.gmra.mrb[0].mxu0 %v4501
      %v6615 = vpop.f32.mrb[0].mxu0
      %v6616 = vadd.f32 %v6471, %v6615
      %v6617 = vpop.f32.mrb[0].mxu0
      %6618 = vmatprep.mubr.f32.mxu0 %v4538
      %6619 = vmatmul.mubr.f32.gmra.mrb[0].mxu0 %v4537
      %v6620 = vpop.f32.mrb[0].mxu0
      %v6621 = vadd.f32 %v6476, %v6620
      %v6622 = vpop.f32.mrb[0].mxu0
      %6623 = vmatprep.mubr.f32.mxu0 %v4574
      %6624 = vmatmul.mubr.f32.gmra.mrb[0].mxu0 %v4573
      %v6625 = vpop.f32.mrb[0].mxu0
      %v6626 = vadd.f32 %v6481, %v6625
      %v6627 = vpop.f32.mrb[0].mxu0
      %6628 = vmatprep.mubr.f32.mxu0 %v4610
      %6629 = vmatmul.mubr.f32.gmra.mrb[0].mxu0 %v4609
      %v6630 = vpop.f32.mrb[0].mxu0
      %v6631 = vadd.f32 %v6486, %v6630
      %v6632 = vpop.f32.mrb[0].mxu0
      %6633 = vmatprep.mubr.f32.mxu0 %v4646
      %6634 = vmatmul.mubr.f32.gmra.mrb[0].mxu0 %v4645
      %v6635 = vpop.f32.mrb[0].mxu0
      %v6636 = vadd.f32 %v6491, %v6635
      %v6637 = vpop.f32.mrb[0].mxu0
      %6638 = vmatprep.mubr.f32.mxu0 %v4682
      %6639 = vmatmul.mubr.f32.gmra.mrb[0].mxu0 %v4681
      %v6640 = vpop.f32.mrb[0].mxu0
      %v6641 = vadd.f32 %v6496, %v6640
      %v6642 = vpop.f32.mrb[0].mxu0
      %6643 = vmatprep.mubr.f32.mxu0 %v4718
      %6644 = vmatmul.mubr.f32.gmra.mrb[0].mxu0 %v4717
      %v6645 = vpop.f32.mrb[0].mxu0
      %v6646 = vadd.f32 %v6501, %v6645
      %v6647 = vpop.f32.mrb[0].mxu0
      %6648 = vmatprep.mubr.f32.mxu0 %v4754
      %6649 = vmatmul.mubr.f32.gmra.mrb[0].mxu0 %v4753
      %v6650 = vpop.f32.mrb[0].mxu0
      %v6651 = vadd.f32 %v6506, %v6650
      %v6652 = vpop.f32.mrb[0].mxu0
      %6653 = vdwg.mxu0
      %6654 = vmatprep.subr.mxu0 0.0
      %6655 = vmatpush1.msra.mxu0 %v5061
      %6656 = vmatprep.subr.mxu0 0.0
      %6657 = vmatpush1.msra.mxu0 %v5062
      %6658 = vmatprep.subr.mxu0 0.0
      %6659 = vmatpush1.msra.mxu0 %v5063
      %6660 = vmatprep.subr.mxu0 0.0
      %6661 = vmatpush1.msra.mxu0 %v5064
      %6662 = vmatprep.subr.mxu0 0.0
      %6663 = vmatpush1.msra.mxu0 %v5065
      %6664 = vmatprep.subr.mxu0 0.0
      %6665 = vmatpush1.msra.mxu0 %v5066
      %6666 = vmatprep.subr.mxu0 0.0
      %6667 = vmatpush1.msra.mxu0 %v5067
      %6668 = vmatprep.subr.mxu0 0.0
      %6669 = vmatpush1.msra.mxu0 %v5068
      %6670 = vmatprep.subr.mxu0 0.0
      %6671 = vmatpush1.msra.mxu0 %v5069
      %6672 = vmatprep.subr.mxu0 0.0
      %6673 = vmatpush1.msra.mxu0 %v5070
      %6674 = vmatprep.subr.mxu0 0.0
      %6675 = vmatpush1.msra.mxu0 %v5071
      %6676 = vmatprep.subr.mxu0 0.0
      %6677 = vmatpush1.msra.mxu0 %v5072
      %6678 = vmatprep.subr.mxu0 0.0
      %6679 = vmatpush1.msra.mxu0 %v5073
      %6680 = vmatprep.subr.mxu0 0.0
      %6681 = vmatpush1.msra.mxu0 %v5074
      %6682 = vmatprep.subr.mxu0 0.0
      %6683 = vmatpush1.msra.mxu0 %v5075
      %6684 = vmatprep.subr.mxu0 0.0
      %6685 = vmatpush1.msra.mxu0 %v5076
      %6686 = vmatprep.subr.mxu0 0.0
      %6687 = vmatpush1.msra.mxu0 %v5077
      %6688 = vmatprep.subr.mxu0 0.0
      %6689 = vmatpush1.msra.mxu0 %v5078
      %6690 = vmatprep.subr.mxu0 0.0
      %6691 = vmatpush1.msra.mxu0 %v5079
      %6692 = vmatprep.subr.mxu0 0.0
      %6693 = vmatpush1.msra.mxu0 %v5080
      %6694 = vmatprep.subr.mxu0 0.0
      %6695 = vmatpush1.msra.mxu0 %v5081
      %6696 = vmatprep.subr.mxu0 0.0
      %6697 = vmatpush1.msra.mxu0 %v5082
      %6698 = vmatprep.subr.mxu0 0.0
      %6699 = vmatpush1.msra.mxu0 %v5083
      %6700 = vmatprep.subr.mxu0 0.0
      %6701 = vmatpush1.msra.mxu0 %v5084
      %6702 = vmatprep.subr.mxu0 0.0
      %6703 = vmatpush1.msra.mxu0 %v5085
      %6704 = vmatprep.subr.mxu0 0.0
      %6705 = vmatpush1.msra.mxu0 %v5086
      %6706 = vmatprep.subr.mxu0 0.0
      %6707 = vmatpush1.msra.mxu0 %v5087
      %6708 = vmatprep.subr.mxu0 0.0
      %6709 = vmatpush1.msra.mxu0 %v5088
      %6710 = vmatprep.subr.mxu0 0.0
      %6711 = vmatpush1.msra.mxu0 %v5089
      %6712 = vmatprep.subr.mxu0 0.0
      %6713 = vmatpush1.msra.mxu0 %v5090
      %6714 = vmatprep.subr.mxu0 0.0
      %6715 = vmatpush1.msra.mxu0 %v5091
      %6716 = vmatprep.subr.mxu0 0.0
      %6717 = vmatpush1.msra.mxu0 %v5092
      %6718 = vmatprep.mubr.f32.mxu0 %v4216
      %6719 = vmatmul.mubr.f32.gmra.mrb[0].mxu0 %v4215
      %v6720 = vpop.f32.mrb[0].mxu0
      %v6721 = vadd.f32 %v6576, %v6720
      %v6722 = vpop.f32.mrb[0].mxu0
      %6723 = vmatprep.mubr.f32.mxu0 %v4252
      %6724 = vmatmul.mubr.f32.gmra.mrb[0].mxu0 %v4251
      %v6725 = vpop.f32.mrb[0].mxu0
      %v6726 = vadd.f32 %v6581, %v6725
      %v6727 = vpop.f32.mrb[0].mxu0
      %6728 = vmatprep.mubr.f32.mxu0 %v4288
      %6729 = vmatmul.mubr.f32.gmra.mrb[0].mxu0 %v4287
      %v6730 = vpop.f32.mrb[0].mxu0
      %v6731 = vadd.f32 %v6586, %v6730
      %v6732 = vpop.f32.mrb[0].mxu0
      %6733 = vmatprep.mubr.f32.mxu0 %v4324
      %6734 = vmatmul.mubr.f32.gmra.mrb[0].mxu0 %v4323
      %v6735 = vpop.f32.mrb[0].mxu0
      %v6736 = vadd.f32 %v6591, %v6735
      %v6737 = vpop.f32.mrb[0].mxu0
      %6738 = vmatprep.mubr.f32.mxu0 %v4360
      %6739 = vmatmul.mubr.f32.gmra.mrb[0].mxu0 %v4359
      %v6740 = vpop.f32.mrb[0].mxu0
      %v6741 = vadd.f32 %v6596, %v6740
      %v6742 = vpop.f32.mrb[0].mxu0
      %6743 = vmatprep.mubr.f32.mxu0 %v4396
      %6744 = vmatmul.mubr.f32.gmra.mrb[0].mxu0 %v4395
      %v6745 = vpop.f32.mrb[0].mxu0
      %v6746 = vadd.f32 %v6601, %v6745
      %v6747 = vpop.f32.mrb[0].mxu0
      %6748 = vmatprep.mubr.f32.mxu0 %v4432
      %6749 = vmatmul.mubr.f32.gmra.mrb[0].mxu0 %v4431
      %v6750 = vpop.f32.mrb[0].mxu0
      %v6751 = vadd.f32 %v6606, %v6750
      %v6752 = vpop.f32.mrb[0].mxu0
      %6753 = vmatprep.mubr.f32.mxu0 %v4468
      %6754 = vmatmul.mubr.f32.gmra.mrb[0].mxu0 %v4467
      %v6755 = vpop.f32.mrb[0].mxu0
      %v6756 = vadd.f32 %v6611, %v6755
      %v6757 = vpop.f32.mrb[0].mxu0
      %6758 = vmatprep.mubr.f32.mxu0 %v4504
      %6759 = vmatmul.mubr.f32.gmra.mrb[0].mxu0 %v4503
      %v6760 = vpop.f32.mrb[0].mxu0
      %v6761 = vadd.f32 %v6616, %v6760
      %v6762 = vpop.f32.mrb[0].mxu0
      %6763 = vmatprep.mubr.f32.mxu0 %v4540
      %6764 = vmatmul.mubr.f32.gmra.mrb[0].mxu0 %v4539
      %v6765 = vpop.f32.mrb[0].mxu0
      %v6766 = vadd.f32 %v6621, %v6765
      %v6767 = vpop.f32.mrb[0].mxu0
      %6768 = vmatprep.mubr.f32.mxu0 %v4576
      %6769 = vmatmul.mubr.f32.gmra.mrb[0].mxu0 %v4575
      %v6770 = vpop.f32.mrb[0].mxu0
      %v6771 = vadd.f32 %v6626, %v6770
      %v6772 = vpop.f32.mrb[0].mxu0
      %6773 = vmatprep.mubr.f32.mxu0 %v4612
      %6774 = vmatmul.mubr.f32.gmra.mrb[0].mxu0 %v4611
      %v6775 = vpop.f32.mrb[0].mxu0
      %v6776 = vadd.f32 %v6631, %v6775
      %v6777 = vpop.f32.mrb[0].mxu0
      %6778 = vmatprep.mubr.f32.mxu0 %v4648
      %6779 = vmatmul.mubr.f32.gmra.mrb[0].mxu0 %v4647
      %v6780 = vpop.f32.mrb[0].mxu0
      %v6781 = vadd.f32 %v6636, %v6780
      %v6782 = vpop.f32.mrb[0].mxu0
      %6783 = vmatprep.mubr.f32.mxu0 %v4684
      %6784 = vmatmul.mubr.f32.gmra.mrb[0].mxu0 %v4683
      %v6785 = vpop.f32.mrb[0].mxu0
      %v6786 = vadd.f32 %v6641, %v6785
      %v6787 = vpop.f32.mrb[0].mxu0
      %6788 = vmatprep.mubr.f32.mxu0 %v4720
      %6789 = vmatmul.mubr.f32.gmra.mrb[0].mxu0 %v4719
      %v6790 = vpop.f32.mrb[0].mxu0
      %v6791 = vadd.f32 %v6646, %v6790
      %v6792 = vpop.f32.mrb[0].mxu0
      %6793 = vmatprep.mubr.f32.mxu0 %v4756
      %6794 = vmatmul.mubr.f32.gmra.mrb[0].mxu0 %v4755
      %v6795 = vpop.f32.mrb[0].mxu0
      %v6796 = vadd.f32 %v6651, %v6795
      %v6797 = vpop.f32.mrb[0].mxu0
      %6798 = vdwg.mxu0
      %6799 = vmatprep.subr.mxu0 0.0
      %6800 = vmatpush1.msra.mxu0 %v5093
      %6801 = vmatprep.subr.mxu0 0.0
      %6802 = vmatpush1.msra.mxu0 %v5094
      %6803 = vmatprep.subr.mxu0 0.0
      %6804 = vmatpush1.msra.mxu0 %v5095
      %6805 = vmatprep.subr.mxu0 0.0
      %6806 = vmatpush1.msra.mxu0 %v5096
      %6807 = vmatprep.subr.mxu0 0.0
      %6808 = vmatpush1.msra.mxu0 %v5097
      %6809 = vmatprep.subr.mxu0 0.0
      %6810 = vmatpush1.msra.mxu0 %v5098
      %6811 = vmatprep.subr.mxu0 0.0
      %6812 = vmatpush1.msra.mxu0 %v5099
      %6813 = vmatprep.subr.mxu0 0.0
      %6814 = vmatpush1.msra.mxu0 %v5100
      %6815 = vmatprep.subr.mxu0 0.0
      %6816 = vmatpush1.msra.mxu0 %v5101
      %6817 = vmatprep.subr.mxu0 0.0
      %6818 = vmatpush1.msra.mxu0 %v5102
      %6819 = vmatprep.subr.mxu0 0.0
      %6820 = vmatpush1.msra.mxu0 %v5103
      %6821 = vmatprep.subr.mxu0 0.0
      %6822 = vmatpush1.msra.mxu0 %v5104
      %6823 = vmatprep.subr.mxu0 0.0
      %6824 = vmatpush1.msra.mxu0 %v5105
      %6825 = vmatprep.subr.mxu0 0.0
      %6826 = vmatpush1.msra.mxu0 %v5106
      %6827 = vmatprep.subr.mxu0 0.0
      %6828 = vmatpush1.msra.mxu0 %v5107
      %6829 = vmatprep.subr.mxu0 0.0
      %6830 = vmatpush1.msra.mxu0 %v5108
      %6831 = vmatprep.subr.mxu0 0.0
      %6832 = vmatpush1.msra.mxu0 %v5109
      %6833 = vmatprep.subr.mxu0 0.0
      %6834 = vmatpush1.msra.mxu0 %v5110
      %6835 = vmatprep.subr.mxu0 0.0
      %6836 = vmatpush1.msra.mxu0 %v5111
      %6837 = vmatprep.subr.mxu0 0.0
      %6838 = vmatpush1.msra.mxu0 %v5112
      %6839 = vmatprep.subr.mxu0 0.0
      %6840 = vmatpush1.msra.mxu0 %v5113
      %6841 = vmatprep.subr.mxu0 0.0
      %6842 = vmatpush1.msra.mxu0 %v5114
      %6843 = vmatprep.subr.mxu0 0.0
      %6844 = vmatpush1.msra.mxu0 %v5115
      %6845 = vmatprep.subr.mxu0 0.0
      %6846 = vmatpush1.msra.mxu0 %v5116
      %6847 = vmatprep.subr.mxu0 0.0
      %6848 = vmatpush1.msra.mxu0 %v5117
      %6849 = vmatprep.subr.mxu0 0.0
      %6850 = vmatpush1.msra.mxu0 %v5118
      %6851 = vmatprep.subr.mxu0 0.0
      %6852 = vmatpush1.msra.mxu0 %v5119
      %6853 = vmatprep.subr.mxu0 0.0
      %6854 = vmatpush1.msra.mxu0 %v5120
      %6855 = vmatprep.subr.mxu0 0.0
      %6856 = vmatpush1.msra.mxu0 %v5121
      %6857 = vmatprep.subr.mxu0 0.0
      %6858 = vmatpush1.msra.mxu0 %v5122
      %6859 = vmatprep.subr.mxu0 0.0
      %6860 = vmatpush1.msra.mxu0 %v5123
      %6861 = vmatprep.subr.mxu0 0.0
      %6862 = vmatpush1.msra.mxu0 %v5124
      %6863 = vmatprep.mubr.f32.mxu0 %v4218
      %6864 = vmatmul.mubr.f32.gmra.mrb[0].mxu0 %v4217
      %v6865 = vpop.f32.mrb[0].mxu0
      %v6866 = vadd.f32 %v6721, %v6865
      %v6867 = vpop.f32.mrb[0].mxu0
      %6868 = vmatprep.mubr.f32.mxu0 %v4254
      %6869 = vmatmul.mubr.f32.gmra.mrb[0].mxu0 %v4253
      %v6870 = vpop.f32.mrb[0].mxu0
      %v6871 = vadd.f32 %v6726, %v6870
      %v6872 = vpop.f32.mrb[0].mxu0
      %6873 = vmatprep.mubr.f32.mxu0 %v4290
      %6874 = vmatmul.mubr.f32.gmra.mrb[0].mxu0 %v4289
      %v6875 = vpop.f32.mrb[0].mxu0
      %v6876 = vadd.f32 %v6731, %v6875
      %v6877 = vpop.f32.mrb[0].mxu0
      %6878 = vmatprep.mubr.f32.mxu0 %v4326
      %6879 = vmatmul.mubr.f32.gmra.mrb[0].mxu0 %v4325
      %v6880 = vpop.f32.mrb[0].mxu0
      %v6881 = vadd.f32 %v6736, %v6880
      %v6882 = vpop.f32.mrb[0].mxu0
      %6883 = vmatprep.mubr.f32.mxu0 %v4362
      %6884 = vmatmul.mubr.f32.gmra.mrb[0].mxu0 %v4361
      %v6885 = vpop.f32.mrb[0].mxu0
      %v6886 = vadd.f32 %v6741, %v6885
      %v6887 = vpop.f32.mrb[0].mxu0
      %6888 = vmatprep.mubr.f32.mxu0 %v4398
      %6889 = vmatmul.mubr.f32.gmra.mrb[0].mxu0 %v4397
      %v6890 = vpop.f32.mrb[0].mxu0
      %v6891 = vadd.f32 %v6746, %v6890
      %v6892 = vpop.f32.mrb[0].mxu0
      %6893 = vmatprep.mubr.f32.mxu0 %v4434
      %6894 = vmatmul.mubr.f32.gmra.mrb[0].mxu0 %v4433
      %v6895 = vpop.f32.mrb[0].mxu0
      %v6896 = vadd.f32 %v6751, %v6895
      %v6897 = vpop.f32.mrb[0].mxu0
      %6898 = vmatprep.mubr.f32.mxu0 %v4470
      %6899 = vmatmul.mubr.f32.gmra.mrb[0].mxu0 %v4469
      %v6900 = vpop.f32.mrb[0].mxu0
      %v6901 = vadd.f32 %v6756, %v6900
      %v6902 = vpop.f32.mrb[0].mxu0
      %6903 = vmatprep.mubr.f32.mxu0 %v4506
      %6904 = vmatmul.mubr.f32.gmra.mrb[0].mxu0 %v4505
      %v6905 = vpop.f32.mrb[0].mxu0
      %v6906 = vadd.f32 %v6761, %v6905
      %v6907 = vpop.f32.mrb[0].mxu0
      %6908 = vmatprep.mubr.f32.mxu0 %v4542
      %6909 = vmatmul.mubr.f32.gmra.mrb[0].mxu0 %v4541
      %v6910 = vpop.f32.mrb[0].mxu0
      %v6911 = vadd.f32 %v6766, %v6910
      %v6912 = vpop.f32.mrb[0].mxu0
      %6913 = vmatprep.mubr.f32.mxu0 %v4578
      %6914 = vmatmul.mubr.f32.gmra.mrb[0].mxu0 %v4577
      %v6915 = vpop.f32.mrb[0].mxu0
      %v6916 = vadd.f32 %v6771, %v6915
      %v6917 = vpop.f32.mrb[0].mxu0
      %6918 = vmatprep.mubr.f32.mxu0 %v4614
      %6919 = vmatmul.mubr.f32.gmra.mrb[0].mxu0 %v4613
      %v6920 = vpop.f32.mrb[0].mxu0
      %v6921 = vadd.f32 %v6776, %v6920
      %v6922 = vpop.f32.mrb[0].mxu0
      %6923 = vmatprep.mubr.f32.mxu0 %v4650
      %6924 = vmatmul.mubr.f32.gmra.mrb[0].mxu0 %v4649
      %v6925 = vpop.f32.mrb[0].mxu0
      %v6926 = vadd.f32 %v6781, %v6925
      %v6927 = vpop.f32.mrb[0].mxu0
      %6928 = vmatprep.mubr.f32.mxu0 %v4686
      %6929 = vmatmul.mubr.f32.gmra.mrb[0].mxu0 %v4685
      %v6930 = vpop.f32.mrb[0].mxu0
      %v6931 = vadd.f32 %v6786, %v6930
      %v6932 = vpop.f32.mrb[0].mxu0
      %6933 = vmatprep.mubr.f32.mxu0 %v4722
      %6934 = vmatmul.mubr.f32.gmra.mrb[0].mxu0 %v4721
      %v6935 = vpop.f32.mrb[0].mxu0
      %v6936 = vadd.f32 %v6791, %v6935
      %v6937 = vpop.f32.mrb[0].mxu0
      %6938 = vmatprep.mubr.f32.mxu0 %v4758
      %6939 = vmatmul.mubr.f32.gmra.mrb[0].mxu0 %v4757
      %v6940 = vpop.f32.mrb[0].mxu0
      %v6941 = vadd.f32 %v6796, %v6940
      %v6942 = vpop.f32.mrb[0].mxu0
      %6943 = vdwg.mxu0
      %6944 = vmatprep.subr.mxu0 0.0
      %6945 = vmatpush1.msra.mxu0 %v5125
      %6946 = vmatprep.subr.mxu0 0.0
      %6947 = vmatpush1.msra.mxu0 %v5126
      %6948 = vmatprep.subr.mxu0 0.0
      %6949 = vmatpush1.msra.mxu0 %v5127
      %6950 = vmatprep.subr.mxu0 0.0
      %6951 = vmatpush1.msra.mxu0 %v5128
      %6952 = vmatprep.subr.mxu0 0.0
      %6953 = vmatpush1.msra.mxu0 %v5129
      %6954 = vmatprep.subr.mxu0 0.0
      %6955 = vmatpush1.msra.mxu0 %v5130
      %6956 = vmatprep.subr.mxu0 0.0
      %6957 = vmatpush1.msra.mxu0 %v5131
      %6958 = vmatprep.subr.mxu0 0.0
      %6959 = vmatpush1.msra.mxu0 %v5132
      %6960 = vmatprep.subr.mxu0 0.0
      %6961 = vmatpush1.msra.mxu0 %v5133
      %6962 = vmatprep.subr.mxu0 0.0
      %6963 = vmatpush1.msra.mxu0 %v5134
      %6964 = vmatprep.subr.mxu0 0.0
      %6965 = vmatpush1.msra.mxu0 %v5135
      %6966 = vmatprep.subr.mxu0 0.0
      %6967 = vmatpush1.msra.mxu0 %v5136
      %6968 = vmatprep.subr.mxu0 0.0
      %6969 = vmatpush1.msra.mxu0 %v5137
      %6970 = vmatprep.subr.mxu0 0.0
      %6971 = vmatpush1.msra.mxu0 %v5138
      %6972 = vmatprep.subr.mxu0 0.0
      %6973 = vmatpush1.msra.mxu0 %v5139
      %6974 = vmatprep.subr.mxu0 0.0
      %6975 = vmatpush1.msra.mxu0 %v5140
      %6976 = vmatprep.subr.mxu0 0.0
      %6977 = vmatpush1.msra.mxu0 %v5141
      %6978 = vmatprep.subr.mxu0 0.0
      %6979 = vmatpush1.msra.mxu0 %v5142
      %6980 = vmatprep.subr.mxu0 0.0
      %6981 = vmatpush1.msra.mxu0 %v5143
      %6982 = vmatprep.subr.mxu0 0.0
      %6983 = vmatpush1.msra.mxu0 %v5144
      %6984 = vmatprep.subr.mxu0 0.0
      %6985 = vmatpush1.msra.mxu0 %v5145
      %6986 = vmatprep.subr.mxu0 0.0
      %6987 = vmatpush1.msra.mxu0 %v5146
      %6988 = vmatprep.subr.mxu0 0.0
      %6989 = vmatpush1.msra.mxu0 %v5147
      %6990 = vmatprep.subr.mxu0 0.0
      %6991 = vmatpush1.msra.mxu0 %v5148
      %6992 = vmatprep.subr.mxu0 0.0
      %6993 = vmatpush1.msra.mxu0 %v5149
      %6994 = vmatprep.subr.mxu0 0.0
      %6995 = vmatpush1.msra.mxu0 %v5150
      %6996 = vmatprep.subr.mxu0 0.0
      %6997 = vmatpush1.msra.mxu0 %v5151
      %6998 = vmatprep.subr.mxu0 0.0
      %6999 = vmatpush1.msra.mxu0 %v5152
      %7000 = vmatprep.subr.mxu0 0.0
      %7001 = vmatpush1.msra.mxu0 %v5153
      %7002 = vmatprep.subr.mxu0 0.0
      %7003 = vmatpush1.msra.mxu0 %v5154
      %7004 = vmatprep.subr.mxu0 0.0
      %7005 = vmatpush1.msra.mxu0 %v5155
      %7006 = vmatprep.subr.mxu0 0.0
      %7007 = vmatpush1.msra.mxu0 %v5156
      %7008 = vmatprep.mubr.f32.mxu0 %v4220
      %7009 = vmatmul.mubr.f32.gmra.mrb[0].mxu0 %v4219
      %v7010 = vpop.f32.mrb[0].mxu0
      %v7011 = vadd.f32 %v6866, %v7010
      %v7012 = vpop.f32.mrb[0].mxu0
      %7013 = vmatprep.mubr.f32.mxu0 %v4256
      %7014 = vmatmul.mubr.f32.gmra.mrb[0].mxu0 %v4255
      %v7015 = vpop.f32.mrb[0].mxu0
      %v7016 = vadd.f32 %v6871, %v7015
      %v7017 = vpop.f32.mrb[0].mxu0
      %7018 = vmatprep.mubr.f32.mxu0 %v4292
      %7019 = vmatmul.mubr.f32.gmra.mrb[0].mxu0 %v4291
      %v7020 = vpop.f32.mrb[0].mxu0
      %v7021 = vadd.f32 %v6876, %v7020
      %v7022 = vpop.f32.mrb[0].mxu0
      %7023 = vmatprep.mubr.f32.mxu0 %v4328
      %7024 = vmatmul.mubr.f32.gmra.mrb[0].mxu0 %v4327
      %v7025 = vpop.f32.mrb[0].mxu0
      %v7026 = vadd.f32 %v6881, %v7025
      %v7027 = vpop.f32.mrb[0].mxu0
      %7028 = vmatprep.mubr.f32.mxu0 %v4364
      %7029 = vmatmul.mubr.f32.gmra.mrb[0].mxu0 %v4363
      %v7030 = vpop.f32.mrb[0].mxu0
      %v7031 = vadd.f32 %v6886, %v7030
      %v7032 = vpop.f32.mrb[0].mxu0
      %7033 = vmatprep.mubr.f32.mxu0 %v4400
      %7034 = vmatmul.mubr.f32.gmra.mrb[0].mxu0 %v4399
      %v7035 = vpop.f32.mrb[0].mxu0
      %v7036 = vadd.f32 %v6891, %v7035
      %v7037 = vpop.f32.mrb[0].mxu0
      %7038 = vmatprep.mubr.f32.mxu0 %v4436
      %7039 = vmatmul.mubr.f32.gmra.mrb[0].mxu0 %v4435
      %v7040 = vpop.f32.mrb[0].mxu0
      %v7041 = vadd.f32 %v6896, %v7040
      %v7042 = vpop.f32.mrb[0].mxu0
      %7043 = vmatprep.mubr.f32.mxu0 %v4472
      %7044 = vmatmul.mubr.f32.gmra.mrb[0].mxu0 %v4471
      %v7045 = vpop.f32.mrb[0].mxu0
      %v7046 = vadd.f32 %v6901, %v7045
      %v7047 = vpop.f32.mrb[0].mxu0
      %7048 = vmatprep.mubr.f32.mxu0 %v4508
      %7049 = vmatmul.mubr.f32.gmra.mrb[0].mxu0 %v4507
      %v7050 = vpop.f32.mrb[0].mxu0
      %v7051 = vadd.f32 %v6906, %v7050
      %v7052 = vpop.f32.mrb[0].mxu0
      %7053 = vmatprep.mubr.f32.mxu0 %v4544
      %7054 = vmatmul.mubr.f32.gmra.mrb[0].mxu0 %v4543
      %v7055 = vpop.f32.mrb[0].mxu0
      %v7056 = vadd.f32 %v6911, %v7055
      %v7057 = vpop.f32.mrb[0].mxu0
      %7058 = vmatprep.mubr.f32.mxu0 %v4580
      %7059 = vmatmul.mubr.f32.gmra.mrb[0].mxu0 %v4579
      %v7060 = vpop.f32.mrb[0].mxu0
      %v7061 = vadd.f32 %v6916, %v7060
      %v7062 = vpop.f32.mrb[0].mxu0
      %7063 = vmatprep.mubr.f32.mxu0 %v4616
      %7064 = vmatmul.mubr.f32.gmra.mrb[0].mxu0 %v4615
      %v7065 = vpop.f32.mrb[0].mxu0
      %v7066 = vadd.f32 %v6921, %v7065
      %v7067 = vpop.f32.mrb[0].mxu0
      %7068 = vmatprep.mubr.f32.mxu0 %v4652
      %7069 = vmatmul.mubr.f32.gmra.mrb[0].mxu0 %v4651
      %v7070 = vpop.f32.mrb[0].mxu0
      %v7071 = vadd.f32 %v6926, %v7070
      %v7072 = vpop.f32.mrb[0].mxu0
      %7073 = vmatprep.mubr.f32.mxu0 %v4688
      %7074 = vmatmul.mubr.f32.gmra.mrb[0].mxu0 %v4687
      %v7075 = vpop.f32.mrb[0].mxu0
      %v7076 = vadd.f32 %v6931, %v7075
      %v7077 = vpop.f32.mrb[0].mxu0
      %7078 = vmatprep.mubr.f32.mxu0 %v4724
      %7079 = vmatmul.mubr.f32.gmra.mrb[0].mxu0 %v4723
      %v7080 = vpop.f32.mrb[0].mxu0
      %v7081 = vadd.f32 %v6936, %v7080
      %v7082 = vpop.f32.mrb[0].mxu0
      %7083 = vmatprep.mubr.f32.mxu0 %v4760
      %7084 = vmatmul.mubr.f32.gmra.mrb[0].mxu0 %v4759
      %v7085 = vpop.f32.mrb[0].mxu0
      %v7086 = vadd.f32 %v6941, %v7085
      %v7087 = vpop.f32.mrb[0].mxu0
      %7088 = vdwg.mxu0
      %7089 = vmatprep.subr.mxu0 0.0
      %7090 = vmatpush1.msra.mxu0 %v5157
      %7091 = vmatprep.subr.mxu0 0.0
      %7092 = vmatpush1.msra.mxu0 %v5158
      %7093 = vmatprep.subr.mxu0 0.0
      %7094 = vmatpush1.msra.mxu0 %v5159
      %7095 = vmatprep.subr.mxu0 0.0
      %7096 = vmatpush1.msra.mxu0 %v5160
      %7097 = vmatprep.subr.mxu0 0.0
      %7098 = vmatpush1.msra.mxu0 %v5161
      %7099 = vmatprep.subr.mxu0 0.0
      %7100 = vmatpush1.msra.mxu0 %v5162
      %7101 = vmatprep.subr.mxu0 0.0
      %7102 = vmatpush1.msra.mxu0 %v5163
      %7103 = vmatprep.subr.mxu0 0.0
      %7104 = vmatpush1.msra.mxu0 %v5164
      %7105 = vmatprep.subr.mxu0 0.0
      %7106 = vmatpush1.msra.mxu0 %v5165
      %7107 = vmatprep.subr.mxu0 0.0
      %7108 = vmatpush1.msra.mxu0 %v5166
      %7109 = vmatprep.subr.mxu0 0.0
      %7110 = vmatpush1.msra.mxu0 %v5167
      %7111 = vmatprep.subr.mxu0 0.0
      %7112 = vmatpush1.msra.mxu0 %v5168
      %7113 = vmatprep.subr.mxu0 0.0
      %7114 = vmatpush1.msra.mxu0 %v5169
      %7115 = vmatprep.subr.mxu0 0.0
      %7116 = vmatpush1.msra.mxu0 %v5170
      %7117 = vmatprep.subr.mxu0 0.0
      %7118 = vmatpush1.msra.mxu0 %v5171
      %7119 = vmatprep.subr.mxu0 0.0
      %7120 = vmatpush1.msra.mxu0 %v5172
      %7121 = vmatprep.subr.mxu0 0.0
      %7122 = vmatpush1.msra.mxu0 %v5173
      %7123 = vmatprep.subr.mxu0 0.0
      %7124 = vmatpush1.msra.mxu0 %v5174
      %7125 = vmatprep.subr.mxu0 0.0
      %7126 = vmatpush1.msra.mxu0 %v5175
      %7127 = vmatprep.subr.mxu0 0.0
      %7128 = vmatpush1.msra.mxu0 %v5176
      %7129 = vmatprep.subr.mxu0 0.0
      %7130 = vmatpush1.msra.mxu0 %v5177
      %7131 = vmatprep.subr.mxu0 0.0
      %7132 = vmatpush1.msra.mxu0 %v5178
      %7133 = vmatprep.subr.mxu0 0.0
      %7134 = vmatpush1.msra.mxu0 %v5179
      %7135 = vmatprep.subr.mxu0 0.0
      %7136 = vmatpush1.msra.mxu0 %v5180
      %7137 = vmatprep.subr.mxu0 0.0
      %7138 = vmatpush1.msra.mxu0 %v5181
      %7139 = vmatprep.subr.mxu0 0.0
      %7140 = vmatpush1.msra.mxu0 %v5182
      %7141 = vmatprep.subr.mxu0 0.0
      %7142 = vmatpush1.msra.mxu0 %v5183
      %7143 = vmatprep.subr.mxu0 0.0
      %7144 = vmatpush1.msra.mxu0 %v5184
      %7145 = vmatprep.subr.mxu0 0.0
      %7146 = vmatpush1.msra.mxu0 %v5185
      %7147 = vmatprep.subr.mxu0 0.0
      %7148 = vmatpush1.msra.mxu0 %v5186
      %7149 = vmatprep.subr.mxu0 0.0
      %7150 = vmatpush1.msra.mxu0 %v5187
      %7151 = vmatprep.subr.mxu0 0.0
      %7152 = vmatpush1.msra.mxu0 %v5188
      %7153 = vmatprep.mubr.f32.mxu0 %v4222
      %7154 = vmatmul.mubr.f32.gmra.mrb[0].mxu0 %v4221
      %v7155 = vpop.f32.mrb[0].mxu0
      %v7156 = vadd.f32 %v7011, %v7155
      %v7157 = vpop.f32.mrb[0].mxu0
      %7158 = vmatprep.mubr.f32.mxu0 %v4258
      %7159 = vmatmul.mubr.f32.gmra.mrb[0].mxu0 %v4257
      %v7160 = vpop.f32.mrb[0].mxu0
      %v7161 = vadd.f32 %v7016, %v7160
      %v7162 = vpop.f32.mrb[0].mxu0
      %7163 = vmatprep.mubr.f32.mxu0 %v4294
      %7164 = vmatmul.mubr.f32.gmra.mrb[0].mxu0 %v4293
      %v7165 = vpop.f32.mrb[0].mxu0
      %v7166 = vadd.f32 %v7021, %v7165
      %v7167 = vpop.f32.mrb[0].mxu0
      %7168 = vmatprep.mubr.f32.mxu0 %v4330
      %7169 = vmatmul.mubr.f32.gmra.mrb[0].mxu0 %v4329
      %v7170 = vpop.f32.mrb[0].mxu0
      %v7171 = vadd.f32 %v7026, %v7170
      %v7172 = vpop.f32.mrb[0].mxu0
      %7173 = vmatprep.mubr.f32.mxu0 %v4366
      %7174 = vmatmul.mubr.f32.gmra.mrb[0].mxu0 %v4365
      %v7175 = vpop.f32.mrb[0].mxu0
      %v7176 = vadd.f32 %v7031, %v7175
      %v7177 = vpop.f32.mrb[0].mxu0
      %7178 = vmatprep.mubr.f32.mxu0 %v4402
      %7179 = vmatmul.mubr.f32.gmra.mrb[0].mxu0 %v4401
      %v7180 = vpop.f32.mrb[0].mxu0
      %v7181 = vadd.f32 %v7036, %v7180
      %v7182 = vpop.f32.mrb[0].mxu0
      %7183 = vmatprep.mubr.f32.mxu0 %v4438
      %7184 = vmatmul.mubr.f32.gmra.mrb[0].mxu0 %v4437
      %v7185 = vpop.f32.mrb[0].mxu0
      %v7186 = vadd.f32 %v7041, %v7185
      %v7187 = vpop.f32.mrb[0].mxu0
      %7188 = vmatprep.mubr.f32.mxu0 %v4474
      %7189 = vmatmul.mubr.f32.gmra.mrb[0].mxu0 %v4473
      %v7190 = vpop.f32.mrb[0].mxu0
      %v7191 = vadd.f32 %v7046, %v7190
      %v7192 = vpop.f32.mrb[0].mxu0
      %7193 = vmatprep.mubr.f32.mxu0 %v4510
      %7194 = vmatmul.mubr.f32.gmra.mrb[0].mxu0 %v4509
      %v7195 = vpop.f32.mrb[0].mxu0
      %v7196 = vadd.f32 %v7051, %v7195
      %v7197 = vpop.f32.mrb[0].mxu0
      %7198 = vmatprep.mubr.f32.mxu0 %v4546
      %7199 = vmatmul.mubr.f32.gmra.mrb[0].mxu0 %v4545
      %v7200 = vpop.f32.mrb[0].mxu0
      %v7201 = vadd.f32 %v7056, %v7200
      %v7202 = vpop.f32.mrb[0].mxu0
      %7203 = vmatprep.mubr.f32.mxu0 %v4582
      %7204 = vmatmul.mubr.f32.gmra.mrb[0].mxu0 %v4581
      %v7205 = vpop.f32.mrb[0].mxu0
      %v7206 = vadd.f32 %v7061, %v7205
      %v7207 = vpop.f32.mrb[0].mxu0
      %7208 = vmatprep.mubr.f32.mxu0 %v4618
      %7209 = vmatmul.mubr.f32.gmra.mrb[0].mxu0 %v4617
      %v7210 = vpop.f32.mrb[0].mxu0
      %v7211 = vadd.f32 %v7066, %v7210
      %v7212 = vpop.f32.mrb[0].mxu0
      %7213 = vmatprep.mubr.f32.mxu0 %v4654
      %7214 = vmatmul.mubr.f32.gmra.mrb[0].mxu0 %v4653
      %v7215 = vpop.f32.mrb[0].mxu0
      %v7216 = vadd.f32 %v7071, %v7215
      %v7217 = vpop.f32.mrb[0].mxu0
      %7218 = vmatprep.mubr.f32.mxu0 %v4690
      %7219 = vmatmul.mubr.f32.gmra.mrb[0].mxu0 %v4689
      %v7220 = vpop.f32.mrb[0].mxu0
      %v7221 = vadd.f32 %v7076, %v7220
      %v7222 = vpop.f32.mrb[0].mxu0
      %7223 = vmatprep.mubr.f32.mxu0 %v4726
      %7224 = vmatmul.mubr.f32.gmra.mrb[0].mxu0 %v4725
      %v7225 = vpop.f32.mrb[0].mxu0
      %v7226 = vadd.f32 %v7081, %v7225
      %v7227 = vpop.f32.mrb[0].mxu0
      %7228 = vmatprep.mubr.f32.mxu0 %v4762
      %7229 = vmatmul.mubr.f32.gmra.mrb[0].mxu0 %v4761
      %v7230 = vpop.f32.mrb[0].mxu0
      %v7231 = vadd.f32 %v7086, %v7230
      %v7232 = vpop.f32.mrb[0].mxu0
      %7233 = vdwg.mxu0
      %7234 = vmatprep.subr.mxu0 0.0
      %7235 = vmatpush1.msra.mxu0 %v5189
      %7236 = vmatprep.subr.mxu0 0.0
      %7237 = vmatpush1.msra.mxu0 %v5190
      %7238 = vmatprep.subr.mxu0 0.0
      %7239 = vmatpush1.msra.mxu0 %v5191
      %7240 = vmatprep.subr.mxu0 0.0
      %7241 = vmatpush1.msra.mxu0 %v5192
      %7242 = vmatprep.subr.mxu0 0.0
      %7243 = vmatpush1.msra.mxu0 %v5193
      %7244 = vmatprep.subr.mxu0 0.0
      %7245 = vmatpush1.msra.mxu0 %v5194
      %7246 = vmatprep.subr.mxu0 0.0
      %7247 = vmatpush1.msra.mxu0 %v5195
      %7248 = vmatprep.subr.mxu0 0.0
      %7249 = vmatpush1.msra.mxu0 %v5196
      %7250 = vmatprep.subr.mxu0 0.0
      %7251 = vmatpush1.msra.mxu0 %v5197
      %7252 = vmatprep.subr.mxu0 0.0
      %7253 = vmatpush1.msra.mxu0 %v5198
      %7254 = vmatprep.subr.mxu0 0.0
      %7255 = vmatpush1.msra.mxu0 %v5199
      %7256 = vmatprep.subr.mxu0 0.0
      %7257 = vmatpush1.msra.mxu0 %v5200
      %7258 = vmatprep.subr.mxu0 0.0
      %7259 = vmatpush1.msra.mxu0 %v5201
      %7260 = vmatprep.subr.mxu0 0.0
      %7261 = vmatpush1.msra.mxu0 %v5202
      %7262 = vmatprep.subr.mxu0 0.0
      %7263 = vmatpush1.msra.mxu0 %v5203
      %7264 = vmatprep.subr.mxu0 0.0
      %7265 = vmatpush1.msra.mxu0 %v5204
      %7266 = vmatprep.subr.mxu0 0.0
      %7267 = vmatpush1.msra.mxu0 %v5205
      %7268 = vmatprep.subr.mxu0 0.0
      %7269 = vmatpush1.msra.mxu0 %v5206
      %7270 = vmatprep.subr.mxu0 0.0
      %7271 = vmatpush1.msra.mxu0 %v5207
      %7272 = vmatprep.subr.mxu0 0.0
      %7273 = vmatpush1.msra.mxu0 %v5208
      %7274 = vmatprep.subr.mxu0 0.0
      %7275 = vmatpush1.msra.mxu0 %v5209
      %7276 = vmatprep.subr.mxu0 0.0
      %7277 = vmatpush1.msra.mxu0 %v5210
      %7278 = vmatprep.subr.mxu0 0.0
      %7279 = vmatpush1.msra.mxu0 %v5211
      %7280 = vmatprep.subr.mxu0 0.0
      %7281 = vmatpush1.msra.mxu0 %v5212
      %7282 = vmatprep.subr.mxu0 0.0
      %7283 = vmatpush1.msra.mxu0 %v5213
      %7284 = vmatprep.subr.mxu0 0.0
      %7285 = vmatpush1.msra.mxu0 %v5214
      %7286 = vmatprep.subr.mxu0 0.0
      %7287 = vmatpush1.msra.mxu0 %v5215
      %7288 = vmatprep.subr.mxu0 0.0
      %7289 = vmatpush1.msra.mxu0 %v5216
      %7290 = vmatprep.subr.mxu0 0.0
      %7291 = vmatpush1.msra.mxu0 %v5217
      %7292 = vmatprep.subr.mxu0 0.0
      %7293 = vmatpush1.msra.mxu0 %v5218
      %7294 = vmatprep.subr.mxu0 0.0
      %7295 = vmatpush1.msra.mxu0 %v5219
      %7296 = vmatprep.subr.mxu0 0.0
      %7297 = vmatpush1.msra.mxu0 %v5220
      %7298 = vmatprep.mubr.f32.mxu0 %v4224
      %7299 = vmatmul.mubr.f32.gmra.mrb[0].mxu0 %v4223
      %v7300 = vpop.f32.mrb[0].mxu0
      %v7301 = vadd.f32 %v7156, %v7300
      %v7302 = vpop.f32.mrb[0].mxu0
      %7303 = vmatprep.mubr.f32.mxu0 %v4260
      %7304 = vmatmul.mubr.f32.gmra.mrb[0].mxu0 %v4259
      %v7305 = vpop.f32.mrb[0].mxu0
      %v7306 = vadd.f32 %v7161, %v7305
      %v7307 = vpop.f32.mrb[0].mxu0
      %7308 = vmatprep.mubr.f32.mxu0 %v4296
      %7309 = vmatmul.mubr.f32.gmra.mrb[0].mxu0 %v4295
      %v7310 = vpop.f32.mrb[0].mxu0
      %v7311 = vadd.f32 %v7166, %v7310
      %v7312 = vpop.f32.mrb[0].mxu0
      %7313 = vmatprep.mubr.f32.mxu0 %v4332
      %7314 = vmatmul.mubr.f32.gmra.mrb[0].mxu0 %v4331
      %v7315 = vpop.f32.mrb[0].mxu0
      %v7316 = vadd.f32 %v7171, %v7315
      %v7317 = vpop.f32.mrb[0].mxu0
      %7318 = vmatprep.mubr.f32.mxu0 %v4368
      %7319 = vmatmul.mubr.f32.gmra.mrb[0].mxu0 %v4367
      %v7320 = vpop.f32.mrb[0].mxu0
      %v7321 = vadd.f32 %v7176, %v7320
      %v7322 = vpop.f32.mrb[0].mxu0
      %7323 = vmatprep.mubr.f32.mxu0 %v4404
      %7324 = vmatmul.mubr.f32.gmra.mrb[0].mxu0 %v4403
      %v7325 = vpop.f32.mrb[0].mxu0
      %v7326 = vadd.f32 %v7181, %v7325
      %v7327 = vpop.f32.mrb[0].mxu0
      %7328 = vmatprep.mubr.f32.mxu0 %v4440
      %7329 = vmatmul.mubr.f32.gmra.mrb[0].mxu0 %v4439
      %v7330 = vpop.f32.mrb[0].mxu0
      %v7331 = vadd.f32 %v7186, %v7330
      %v7332 = vpop.f32.mrb[0].mxu0
      %7333 = vmatprep.mubr.f32.mxu0 %v4476
      %7334 = vmatmul.mubr.f32.gmra.mrb[0].mxu0 %v4475
      %v7335 = vpop.f32.mrb[0].mxu0
      %v7336 = vadd.f32 %v7191, %v7335
      %v7337 = vpop.f32.mrb[0].mxu0
      %7338 = vmatprep.mubr.f32.mxu0 %v4512
      %7339 = vmatmul.mubr.f32.gmra.mrb[0].mxu0 %v4511
      %v7340 = vpop.f32.mrb[0].mxu0
      %v7341 = vadd.f32 %v7196, %v7340
      %v7342 = vpop.f32.mrb[0].mxu0
      %7343 = vmatprep.mubr.f32.mxu0 %v4548
      %7344 = vmatmul.mubr.f32.gmra.mrb[0].mxu0 %v4547
      %v7345 = vpop.f32.mrb[0].mxu0
      %v7346 = vadd.f32 %v7201, %v7345
      %v7347 = vpop.f32.mrb[0].mxu0
      %7348 = vmatprep.mubr.f32.mxu0 %v4584
      %7349 = vmatmul.mubr.f32.gmra.mrb[0].mxu0 %v4583
      %v7350 = vpop.f32.mrb[0].mxu0
      %v7351 = vadd.f32 %v7206, %v7350
      %v7352 = vpop.f32.mrb[0].mxu0
      %7353 = vmatprep.mubr.f32.mxu0 %v4620
      %7354 = vmatmul.mubr.f32.gmra.mrb[0].mxu0 %v4619
      %v7355 = vpop.f32.mrb[0].mxu0
      %v7356 = vadd.f32 %v7211, %v7355
      %v7357 = vpop.f32.mrb[0].mxu0
      %7358 = vmatprep.mubr.f32.mxu0 %v4656
      %7359 = vmatmul.mubr.f32.gmra.mrb[0].mxu0 %v4655
      %v7360 = vpop.f32.mrb[0].mxu0
      %v7361 = vadd.f32 %v7216, %v7360
      %v7362 = vpop.f32.mrb[0].mxu0
      %7363 = vmatprep.mubr.f32.mxu0 %v4692
      %7364 = vmatmul.mubr.f32.gmra.mrb[0].mxu0 %v4691
      %v7365 = vpop.f32.mrb[0].mxu0
      %v7366 = vadd.f32 %v7221, %v7365
      %v7367 = vpop.f32.mrb[0].mxu0
      %7368 = vmatprep.mubr.f32.mxu0 %v4728
      %7369 = vmatmul.mubr.f32.gmra.mrb[0].mxu0 %v4727
      %v7370 = vpop.f32.mrb[0].mxu0
      %v7371 = vadd.f32 %v7226, %v7370
      %v7372 = vpop.f32.mrb[0].mxu0
      %7373 = vmatprep.mubr.f32.mxu0 %v4764
      %7374 = vmatmul.mubr.f32.gmra.mrb[0].mxu0 %v4763
      %v7375 = vpop.f32.mrb[0].mxu0
      %v7376 = vadd.f32 %v7231, %v7375
      %v7377 = vpop.f32.mrb[0].mxu0
      %7378 = vdwg.mxu0
      %7379 = vmatprep.subr.mxu0 0.0
      %7380 = vmatpush1.msra.mxu0 %v5221
      %7381 = vmatprep.subr.mxu0 0.0
      %7382 = vmatpush1.msra.mxu0 %v5222
      %7383 = vmatprep.subr.mxu0 0.0
      %7384 = vmatpush1.msra.mxu0 %v5223
      %7385 = vmatprep.subr.mxu0 0.0
      %7386 = vmatpush1.msra.mxu0 %v5224
      %7387 = vmatprep.subr.mxu0 0.0
      %7388 = vmatpush1.msra.mxu0 %v5225
      %7389 = vmatprep.subr.mxu0 0.0
      %7390 = vmatpush1.msra.mxu0 %v5226
      %7391 = vmatprep.subr.mxu0 0.0
      %7392 = vmatpush1.msra.mxu0 %v5227
      %7393 = vmatprep.subr.mxu0 0.0
      %7394 = vmatpush1.msra.mxu0 %v5228
      %7395 = vmatprep.subr.mxu0 0.0
      %7396 = vmatpush1.msra.mxu0 %v5229
      %7397 = vmatprep.subr.mxu0 0.0
      %7398 = vmatpush1.msra.mxu0 %v5230
      %7399 = vmatprep.subr.mxu0 0.0
      %7400 = vmatpush1.msra.mxu0 %v5231
      %7401 = vmatprep.subr.mxu0 0.0
      %7402 = vmatpush1.msra.mxu0 %v5232
      %7403 = vmatprep.subr.mxu0 0.0
      %7404 = vmatpush1.msra.mxu0 %v5233
      %7405 = vmatprep.subr.mxu0 0.0
      %7406 = vmatpush1.msra.mxu0 %v5234
      %7407 = vmatprep.subr.mxu0 0.0
      %7408 = vmatpush1.msra.mxu0 %v5235
      %7409 = vmatprep.subr.mxu0 0.0
      %7410 = vmatpush1.msra.mxu0 %v5236
      %7411 = vmatprep.subr.mxu0 0.0
      %7412 = vmatpush1.msra.mxu0 %v5237
      %7413 = vmatprep.subr.mxu0 0.0
      %7414 = vmatpush1.msra.mxu0 %v5238
      %7415 = vmatprep.subr.mxu0 0.0
      %7416 = vmatpush1.msra.mxu0 %v5239
      %7417 = vmatprep.subr.mxu0 0.0
      %7418 = vmatpush1.msra.mxu0 %v5240
      %7419 = vmatprep.subr.mxu0 0.0
      %7420 = vmatpush1.msra.mxu0 %v5241
      %7421 = vmatprep.subr.mxu0 0.0
      %7422 = vmatpush1.msra.mxu0 %v5242
      %7423 = vmatprep.subr.mxu0 0.0
      %7424 = vmatpush1.msra.mxu0 %v5243
      %7425 = vmatprep.subr.mxu0 0.0
      %7426 = vmatpush1.msra.mxu0 %v5244
      %7427 = vmatprep.subr.mxu0 0.0
      %7428 = vmatpush1.msra.mxu0 %v5245
      %7429 = vmatprep.subr.mxu0 0.0
      %7430 = vmatpush1.msra.mxu0 %v5246
      %7431 = vmatprep.subr.mxu0 0.0
      %7432 = vmatpush1.msra.mxu0 %v5247
      %7433 = vmatprep.subr.mxu0 0.0
      %7434 = vmatpush1.msra.mxu0 %v5248
      %7435 = vmatprep.subr.mxu0 0.0
      %7436 = vmatpush1.msra.mxu0 %v5249
      %7437 = vmatprep.subr.mxu0 0.0
      %7438 = vmatpush1.msra.mxu0 %v5250
      %7439 = vmatprep.subr.mxu0 0.0
      %7440 = vmatpush1.msra.mxu0 %v5251
      %7441 = vmatprep.subr.mxu0 0.0
      %7442 = vmatpush1.msra.mxu0 %v5252
      %7443 = vmatprep.mubr.f32.mxu0 %v4226
      %7444 = vmatmul.mubr.f32.gmra.mrb[0].mxu0 %v4225
      %v7445 = vpop.f32.mrb[0].mxu0
      %v7446 = vadd.f32 %v7301, %v7445
      %v7447 = vpop.f32.mrb[0].mxu0
      %7448 = vmatprep.mubr.f32.mxu0 %v4262
      %7449 = vmatmul.mubr.f32.gmra.mrb[0].mxu0 %v4261
      %v7450 = vpop.f32.mrb[0].mxu0
      %v7451 = vadd.f32 %v7306, %v7450
      %v7452 = vpop.f32.mrb[0].mxu0
      %7453 = vmatprep.mubr.f32.mxu0 %v4298
      %7454 = vmatmul.mubr.f32.gmra.mrb[0].mxu0 %v4297
      %v7455 = vpop.f32.mrb[0].mxu0
      %v7456 = vadd.f32 %v7311, %v7455
      %v7457 = vpop.f32.mrb[0].mxu0
      %7458 = vmatprep.mubr.f32.mxu0 %v4334
      %7459 = vmatmul.mubr.f32.gmra.mrb[0].mxu0 %v4333
      %v7460 = vpop.f32.mrb[0].mxu0
      %v7461 = vadd.f32 %v7316, %v7460
      %v7462 = vpop.f32.mrb[0].mxu0
      %7463 = vmatprep.mubr.f32.mxu0 %v4370
      %7464 = vmatmul.mubr.f32.gmra.mrb[0].mxu0 %v4369
      %v7465 = vpop.f32.mrb[0].mxu0
      %v7466 = vadd.f32 %v7321, %v7465
      %v7467 = vpop.f32.mrb[0].mxu0
      %7468 = vmatprep.mubr.f32.mxu0 %v4406
      %7469 = vmatmul.mubr.f32.gmra.mrb[0].mxu0 %v4405
      %v7470 = vpop.f32.mrb[0].mxu0
      %v7471 = vadd.f32 %v7326, %v7470
      %v7472 = vpop.f32.mrb[0].mxu0
      %7473 = vmatprep.mubr.f32.mxu0 %v4442
      %7474 = vmatmul.mubr.f32.gmra.mrb[0].mxu0 %v4441
      %v7475 = vpop.f32.mrb[0].mxu0
      %v7476 = vadd.f32 %v7331, %v7475
      %v7477 = vpop.f32.mrb[0].mxu0
      %7478 = vmatprep.mubr.f32.mxu0 %v4478
      %7479 = vmatmul.mubr.f32.gmra.mrb[0].mxu0 %v4477
      %v7480 = vpop.f32.mrb[0].mxu0
      %v7481 = vadd.f32 %v7336, %v7480
      %v7482 = vpop.f32.mrb[0].mxu0
      %7483 = vmatprep.mubr.f32.mxu0 %v4514
      %7484 = vmatmul.mubr.f32.gmra.mrb[0].mxu0 %v4513
      %v7485 = vpop.f32.mrb[0].mxu0
      %v7486 = vadd.f32 %v7341, %v7485
      %v7487 = vpop.f32.mrb[0].mxu0
      %7488 = vmatprep.mubr.f32.mxu0 %v4550
      %7489 = vmatmul.mubr.f32.gmra.mrb[0].mxu0 %v4549
      %v7490 = vpop.f32.mrb[0].mxu0
      %v7491 = vadd.f32 %v7346, %v7490
      %v7492 = vpop.f32.mrb[0].mxu0
      %7493 = vmatprep.mubr.f32.mxu0 %v4586
      %7494 = vmatmul.mubr.f32.gmra.mrb[0].mxu0 %v4585
      %v7495 = vpop.f32.mrb[0].mxu0
      %v7496 = vadd.f32 %v7351, %v7495
      %v7497 = vpop.f32.mrb[0].mxu0
      %7498 = vmatprep.mubr.f32.mxu0 %v4622
      %7499 = vmatmul.mubr.f32.gmra.mrb[0].mxu0 %v4621
      %v7500 = vpop.f32.mrb[0].mxu0
      %v7501 = vadd.f32 %v7356, %v7500
      %v7502 = vpop.f32.mrb[0].mxu0
      %7503 = vmatprep.mubr.f32.mxu0 %v4658
      %7504 = vmatmul.mubr.f32.gmra.mrb[0].mxu0 %v4657
      %v7505 = vpop.f32.mrb[0].mxu0
      %v7506 = vadd.f32 %v7361, %v7505
      %v7507 = vpop.f32.mrb[0].mxu0
      %7508 = vmatprep.mubr.f32.mxu0 %v4694
      %7509 = vmatmul.mubr.f32.gmra.mrb[0].mxu0 %v4693
      %v7510 = vpop.f32.mrb[0].mxu0
      %v7511 = vadd.f32 %v7366, %v7510
      %v7512 = vpop.f32.mrb[0].mxu0
      %7513 = vmatprep.mubr.f32.mxu0 %v4730
      %7514 = vmatmul.mubr.f32.gmra.mrb[0].mxu0 %v4729
      %v7515 = vpop.f32.mrb[0].mxu0
      %v7516 = vadd.f32 %v7371, %v7515
      %v7517 = vpop.f32.mrb[0].mxu0
      %7518 = vmatprep.mubr.f32.mxu0 %v4766
      %7519 = vmatmul.mubr.f32.gmra.mrb[0].mxu0 %v4765
      %v7520 = vpop.f32.mrb[0].mxu0
      %v7521 = vadd.f32 %v7376, %v7520
      %v7522 = vpop.f32.mrb[0].mxu0
      %7523 = vdwg.mxu0
      %7524 = vmatprep.subr.mxu0 0.0
      %7525 = vmatpush1.msra.mxu0 %v5253
      %7526 = vmatprep.subr.mxu0 0.0
      %7527 = vmatpush1.msra.mxu0 %v5254
      %7528 = vmatprep.subr.mxu0 0.0
      %7529 = vmatpush1.msra.mxu0 %v5255
      %7530 = vmatprep.subr.mxu0 0.0
      %7531 = vmatpush1.msra.mxu0 %v5256
      %7532 = vmatprep.subr.mxu0 0.0
      %7533 = vmatpush1.msra.mxu0 %v5257
      %7534 = vmatprep.subr.mxu0 0.0
      %7535 = vmatpush1.msra.mxu0 %v5258
      %7536 = vmatprep.subr.mxu0 0.0
      %7537 = vmatpush1.msra.mxu0 %v5259
      %7538 = vmatprep.subr.mxu0 0.0
      %7539 = vmatpush1.msra.mxu0 %v5260
      %7540 = vmatprep.subr.mxu0 0.0
      %7541 = vmatpush1.msra.mxu0 %v5261
      %7542 = vmatprep.subr.mxu0 0.0
      %7543 = vmatpush1.msra.mxu0 %v5262
      %7544 = vmatprep.subr.mxu0 0.0
      %7545 = vmatpush1.msra.mxu0 %v5263
      %7546 = vmatprep.subr.mxu0 0.0
      %7547 = vmatpush1.msra.mxu0 %v5264
      %7548 = vmatprep.subr.mxu0 0.0
      %7549 = vmatpush1.msra.mxu0 %v5265
      %7550 = vmatprep.subr.mxu0 0.0
      %7551 = vmatpush1.msra.mxu0 %v5266
      %7552 = vmatprep.subr.mxu0 0.0
      %7553 = vmatpush1.msra.mxu0 %v5267
      %7554 = vmatprep.subr.mxu0 0.0
      %7555 = vmatpush1.msra.mxu0 %v5268
      %7556 = vmatprep.subr.mxu0 0.0
      %7557 = vmatpush1.msra.mxu0 %v5269
      %7558 = vmatprep.subr.mxu0 0.0
      %7559 = vmatpush1.msra.mxu0 %v5270
      %7560 = vmatprep.subr.mxu0 0.0
      %7561 = vmatpush1.msra.mxu0 %v5271
      %7562 = vmatprep.subr.mxu0 0.0
      %7563 = vmatpush1.msra.mxu0 %v5272
      %7564 = vmatprep.subr.mxu0 0.0
      %7565 = vmatpush1.msra.mxu0 %v5273
      %7566 = vmatprep.subr.mxu0 0.0
      %7567 = vmatpush1.msra.mxu0 %v5274
      %7568 = vmatprep.subr.mxu0 0.0
      %7569 = vmatpush1.msra.mxu0 %v5275
      %7570 = vmatprep.subr.mxu0 0.0
      %7571 = vmatpush1.msra.mxu0 %v5276
      %7572 = vmatprep.subr.mxu0 0.0
      %7573 = vmatpush1.msra.mxu0 %v5277
      %7574 = vmatprep.subr.mxu0 0.0
      %7575 = vmatpush1.msra.mxu0 %v5278
      %7576 = vmatprep.subr.mxu0 0.0
      %7577 = vmatpush1.msra.mxu0 %v5279
      %7578 = vmatprep.subr.mxu0 0.0
      %7579 = vmatpush1.msra.mxu0 %v5280
      %7580 = vmatprep.subr.mxu0 0.0
      %7581 = vmatpush1.msra.mxu0 %v5281
      %7582 = vmatprep.subr.mxu0 0.0
      %7583 = vmatpush1.msra.mxu0 %v5282
      %7584 = vmatprep.subr.mxu0 0.0
      %7585 = vmatpush1.msra.mxu0 %v5283
      %7586 = vmatprep.subr.mxu0 0.0
      %7587 = vmatpush1.msra.mxu0 %v5284
      %7588 = vmatprep.mubr.f32.mxu0 %v4228
      %7589 = vmatmul.mubr.f32.gmra.mrb[0].mxu0 %v4227
      %v7590 = vpop.f32.mrb[0].mxu0
      %v7591 = vadd.f32 %v7446, %v7590
      %v7592 = vpop.f32.mrb[0].mxu0
      %7593 = vmatprep.mubr.f32.mxu0 %v4264
      %7594 = vmatmul.mubr.f32.gmra.mrb[0].mxu0 %v4263
      %v7595 = vpop.f32.mrb[0].mxu0
      %v7596 = vadd.f32 %v7451, %v7595
      %v7597 = vpop.f32.mrb[0].mxu0
      %7598 = vmatprep.mubr.f32.mxu0 %v4300
      %7599 = vmatmul.mubr.f32.gmra.mrb[0].mxu0 %v4299
      %v7600 = vpop.f32.mrb[0].mxu0
      %v7601 = vadd.f32 %v7456, %v7600
      %v7602 = vpop.f32.mrb[0].mxu0
      %7603 = vmatprep.mubr.f32.mxu0 %v4336
      %7604 = vmatmul.mubr.f32.gmra.mrb[0].mxu0 %v4335
      %v7605 = vpop.f32.mrb[0].mxu0
      %v7606 = vadd.f32 %v7461, %v7605
      %v7607 = vpop.f32.mrb[0].mxu0
      %7608 = vmatprep.mubr.f32.mxu0 %v4372
      %7609 = vmatmul.mubr.f32.gmra.mrb[0].mxu0 %v4371
      %v7610 = vpop.f32.mrb[0].mxu0
      %v7611 = vadd.f32 %v7466, %v7610
      %v7612 = vpop.f32.mrb[0].mxu0
      %7613 = vmatprep.mubr.f32.mxu0 %v4408
      %7614 = vmatmul.mubr.f32.gmra.mrb[0].mxu0 %v4407
      %v7615 = vpop.f32.mrb[0].mxu0
      %v7616 = vadd.f32 %v7471, %v7615
      %v7617 = vpop.f32.mrb[0].mxu0
      %7618 = vmatprep.mubr.f32.mxu0 %v4444
      %7619 = vmatmul.mubr.f32.gmra.mrb[0].mxu0 %v4443
      %v7620 = vpop.f32.mrb[0].mxu0
      %v7621 = vadd.f32 %v7476, %v7620
      %v7622 = vpop.f32.mrb[0].mxu0
      %7623 = vmatprep.mubr.f32.mxu0 %v4480
      %7624 = vmatmul.mubr.f32.gmra.mrb[0].mxu0 %v4479
      %v7625 = vpop.f32.mrb[0].mxu0
      %v7626 = vadd.f32 %v7481, %v7625
      %v7627 = vpop.f32.mrb[0].mxu0
      %7628 = vmatprep.mubr.f32.mxu0 %v4516
      %7629 = vmatmul.mubr.f32.gmra.mrb[0].mxu0 %v4515
      %v7630 = vpop.f32.mrb[0].mxu0
      %v7631 = vadd.f32 %v7486, %v7630
      %v7632 = vpop.f32.mrb[0].mxu0
      %7633 = vmatprep.mubr.f32.mxu0 %v4552
      %7634 = vmatmul.mubr.f32.gmra.mrb[0].mxu0 %v4551
      %v7635 = vpop.f32.mrb[0].mxu0
      %v7636 = vadd.f32 %v7491, %v7635
      %v7637 = vpop.f32.mrb[0].mxu0
      %7638 = vmatprep.mubr.f32.mxu0 %v4588
      %7639 = vmatmul.mubr.f32.gmra.mrb[0].mxu0 %v4587
      %v7640 = vpop.f32.mrb[0].mxu0
      %v7641 = vadd.f32 %v7496, %v7640
      %v7642 = vpop.f32.mrb[0].mxu0
      %7643 = vmatprep.mubr.f32.mxu0 %v4624
      %7644 = vmatmul.mubr.f32.gmra.mrb[0].mxu0 %v4623
      %v7645 = vpop.f32.mrb[0].mxu0
      %v7646 = vadd.f32 %v7501, %v7645
      %v7647 = vpop.f32.mrb[0].mxu0
      %7648 = vmatprep.mubr.f32.mxu0 %v4660
      %7649 = vmatmul.mubr.f32.gmra.mrb[0].mxu0 %v4659
      %v7650 = vpop.f32.mrb[0].mxu0
      %v7651 = vadd.f32 %v7506, %v7650
      %v7652 = vpop.f32.mrb[0].mxu0
      %7653 = vmatprep.mubr.f32.mxu0 %v4696
      %7654 = vmatmul.mubr.f32.gmra.mrb[0].mxu0 %v4695
      %v7655 = vpop.f32.mrb[0].mxu0
      %v7656 = vadd.f32 %v7511, %v7655
      %v7657 = vpop.f32.mrb[0].mxu0
      %7658 = vmatprep.mubr.f32.mxu0 %v4732
      %7659 = vmatmul.mubr.f32.gmra.mrb[0].mxu0 %v4731
      %v7660 = vpop.f32.mrb[0].mxu0
      %v7661 = vadd.f32 %v7516, %v7660
      %v7662 = vpop.f32.mrb[0].mxu0
      %7663 = vmatprep.mubr.f32.mxu0 %v4768
      %7664 = vmatmul.mubr.f32.gmra.mrb[0].mxu0 %v4767
      %v7665 = vpop.f32.mrb[0].mxu0
      %v7666 = vadd.f32 %v7521, %v7665
      %v7667 = vpop.f32.mrb[0].mxu0
      %7668 = vdwg.mxu0
      %7669 = vmatprep.subr.mxu0 0.0
      %7670 = vmatpush1.msra.mxu0 %v5285
      %7671 = vmatprep.subr.mxu0 0.0
      %7672 = vmatpush1.msra.mxu0 %v5286
      %7673 = vmatprep.subr.mxu0 0.0
      %7674 = vmatpush1.msra.mxu0 %v5287
      %7675 = vmatprep.subr.mxu0 0.0
      %7676 = vmatpush1.msra.mxu0 %v5288
      %7677 = vmatprep.subr.mxu0 0.0
      %7678 = vmatpush1.msra.mxu0 %v5289
      %7679 = vmatprep.subr.mxu0 0.0
      %7680 = vmatpush1.msra.mxu0 %v5290
      %7681 = vmatprep.subr.mxu0 0.0
      %7682 = vmatpush1.msra.mxu0 %v5291
      %7683 = vmatprep.subr.mxu0 0.0
      %7684 = vmatpush1.msra.mxu0 %v5292
      %7685 = vmatprep.subr.mxu0 0.0
      %7686 = vmatpush1.msra.mxu0 %v5293
      %7687 = vmatprep.subr.mxu0 0.0
      %7688 = vmatpush1.msra.mxu0 %v5294
      %7689 = vmatprep.subr.mxu0 0.0
      %7690 = vmatpush1.msra.mxu0 %v5295
      %7691 = vmatprep.subr.mxu0 0.0
      %7692 = vmatpush1.msra.mxu0 %v5296
      %7693 = vmatprep.subr.mxu0 0.0
      %7694 = vmatpush1.msra.mxu0 %v5297
      %7695 = vmatprep.subr.mxu0 0.0
      %7696 = vmatpush1.msra.mxu0 %v5298
      %7697 = vmatprep.subr.mxu0 0.0
      %7698 = vmatpush1.msra.mxu0 %v5299
      %7699 = vmatprep.subr.mxu0 0.0
      %7700 = vmatpush1.msra.mxu0 %v5300
      %7701 = vmatprep.subr.mxu0 0.0
      %7702 = vmatpush1.msra.mxu0 %v5301
      %7703 = vmatprep.subr.mxu0 0.0
      %7704 = vmatpush1.msra.mxu0 %v5302
      %7705 = vmatprep.subr.mxu0 0.0
      %7706 = vmatpush1.msra.mxu0 %v5303
      %7707 = vmatprep.subr.mxu0 0.0
      %7708 = vmatpush1.msra.mxu0 %v5304
      %7709 = vmatprep.subr.mxu0 0.0
      %7710 = vmatpush1.msra.mxu0 %v5305
      %7711 = vmatprep.subr.mxu0 0.0
      %7712 = vmatpush1.msra.mxu0 %v5306
      %7713 = vmatprep.subr.mxu0 0.0
      %7714 = vmatpush1.msra.mxu0 %v5307
      %7715 = vmatprep.subr.mxu0 0.0
      %7716 = vmatpush1.msra.mxu0 %v5308
      %7717 = vmatprep.subr.mxu0 0.0
      %7718 = vmatpush1.msra.mxu0 %v5309
      %7719 = vmatprep.subr.mxu0 0.0
      %7720 = vmatpush1.msra.mxu0 %v5310
      %7721 = vmatprep.subr.mxu0 0.0
      %7722 = vmatpush1.msra.mxu0 %v5311
      %7723 = vmatprep.subr.mxu0 0.0
      %7724 = vmatpush1.msra.mxu0 %v5312
      %7725 = vmatprep.subr.mxu0 0.0
      %7726 = vmatpush1.msra.mxu0 %v5313
      %7727 = vmatprep.subr.mxu0 0.0
      %7728 = vmatpush1.msra.mxu0 %v5314
      %7729 = vmatprep.subr.mxu0 0.0
      %7730 = vmatpush1.msra.mxu0 %v5315
      %7731 = vmatprep.subr.mxu0 0.0
      %7732 = vmatpush1.msra.mxu0 %v5316
      %7733 = vmatprep.mubr.f32.mxu0 %v4230
      %7734 = vmatmul.mubr.f32.gmra.mrb[0].mxu0 %v4229
      %v7735 = vpop.f32.mrb[0].mxu0
      %v7736 = vadd.f32 %v7591, %v7735
      %v7737 = vpop.f32.mrb[0].mxu0
      %7738 = vmatprep.mubr.f32.mxu0 %v4266
      %7739 = vmatmul.mubr.f32.gmra.mrb[0].mxu0 %v4265
      %v7740 = vpop.f32.mrb[0].mxu0
      %v7741 = vadd.f32 %v7596, %v7740
      %v7742 = vpop.f32.mrb[0].mxu0
      %7743 = vmatprep.mubr.f32.mxu0 %v4302
      %7744 = vmatmul.mubr.f32.gmra.mrb[0].mxu0 %v4301
      %v7745 = vpop.f32.mrb[0].mxu0
      %v7746 = vadd.f32 %v7601, %v7745
      %v7747 = vpop.f32.mrb[0].mxu0
      %7748 = vmatprep.mubr.f32.mxu0 %v4338
      %7749 = vmatmul.mubr.f32.gmra.mrb[0].mxu0 %v4337
      %v7750 = vpop.f32.mrb[0].mxu0
      %v7751 = vadd.f32 %v7606, %v7750
      %v7752 = vpop.f32.mrb[0].mxu0
      %7753 = vmatprep.mubr.f32.mxu0 %v4374
      %7754 = vmatmul.mubr.f32.gmra.mrb[0].mxu0 %v4373
      %v7755 = vpop.f32.mrb[0].mxu0
      %v7756 = vadd.f32 %v7611, %v7755
      %v7757 = vpop.f32.mrb[0].mxu0
      %7758 = vmatprep.mubr.f32.mxu0 %v4410
      %7759 = vmatmul.mubr.f32.gmra.mrb[0].mxu0 %v4409
      %v7760 = vpop.f32.mrb[0].mxu0
      %v7761 = vadd.f32 %v7616, %v7760
      %v7762 = vpop.f32.mrb[0].mxu0
      %7763 = vmatprep.mubr.f32.mxu0 %v4446
      %7764 = vmatmul.mubr.f32.gmra.mrb[0].mxu0 %v4445
      %v7765 = vpop.f32.mrb[0].mxu0
      %v7766 = vadd.f32 %v7621, %v7765
      %v7767 = vpop.f32.mrb[0].mxu0
      %7768 = vmatprep.mubr.f32.mxu0 %v4482
      %7769 = vmatmul.mubr.f32.gmra.mrb[0].mxu0 %v4481
      %v7770 = vpop.f32.mrb[0].mxu0
      %v7771 = vadd.f32 %v7626, %v7770
      %v7772 = vpop.f32.mrb[0].mxu0
      %7773 = vmatprep.mubr.f32.mxu0 %v4518
      %7774 = vmatmul.mubr.f32.gmra.mrb[0].mxu0 %v4517
      %v7775 = vpop.f32.mrb[0].mxu0
      %v7776 = vadd.f32 %v7631, %v7775
      %v7777 = vpop.f32.mrb[0].mxu0
      %7778 = vmatprep.mubr.f32.mxu0 %v4554
      %7779 = vmatmul.mubr.f32.gmra.mrb[0].mxu0 %v4553
      %v7780 = vpop.f32.mrb[0].mxu0
      %v7781 = vadd.f32 %v7636, %v7780
      %v7782 = vpop.f32.mrb[0].mxu0
      %7783 = vmatprep.mubr.f32.mxu0 %v4590
      %7784 = vmatmul.mubr.f32.gmra.mrb[0].mxu0 %v4589
      %v7785 = vpop.f32.mrb[0].mxu0
      %v7786 = vadd.f32 %v7641, %v7785
      %v7787 = vpop.f32.mrb[0].mxu0
      %7788 = vmatprep.mubr.f32.mxu0 %v4626
      %7789 = vmatmul.mubr.f32.gmra.mrb[0].mxu0 %v4625
      %v7790 = vpop.f32.mrb[0].mxu0
      %v7791 = vadd.f32 %v7646, %v7790
      %v7792 = vpop.f32.mrb[0].mxu0
      %7793 = vmatprep.mubr.f32.mxu0 %v4662
      %7794 = vmatmul.mubr.f32.gmra.mrb[0].mxu0 %v4661
      %v7795 = vpop.f32.mrb[0].mxu0
      %v7796 = vadd.f32 %v7651, %v7795
      %v7797 = vpop.f32.mrb[0].mxu0
      %7798 = vmatprep.mubr.f32.mxu0 %v4698
      %7799 = vmatmul.mubr.f32.gmra.mrb[0].mxu0 %v4697
      %v7800 = vpop.f32.mrb[0].mxu0
      %v7801 = vadd.f32 %v7656, %v7800
      %v7802 = vpop.f32.mrb[0].mxu0
      %7803 = vmatprep.mubr.f32.mxu0 %v4734
      %7804 = vmatmul.mubr.f32.gmra.mrb[0].mxu0 %v4733
      %v7805 = vpop.f32.mrb[0].mxu0
      %v7806 = vadd.f32 %v7661, %v7805
      %v7807 = vpop.f32.mrb[0].mxu0
      %7808 = vmatprep.mubr.f32.mxu0 %v4770
      %7809 = vmatmul.mubr.f32.gmra.mrb[0].mxu0 %v4769
      %v7810 = vpop.f32.mrb[0].mxu0
      %v7811 = vadd.f32 %v7666, %v7810
      %v7812 = vpop.f32.mrb[0].mxu0
      %7813 = vdwg.mxu0
      %7814 = vmatprep.subr.mxu0 0.0
      %7815 = vmatpush1.msra.mxu0 %v5317
      %7816 = vmatprep.subr.mxu0 0.0
      %7817 = vmatpush1.msra.mxu0 %v5318
      %7818 = vmatprep.subr.mxu0 0.0
      %7819 = vmatpush1.msra.mxu0 %v5319
      %7820 = vmatprep.subr.mxu0 0.0
      %7821 = vmatpush1.msra.mxu0 %v5320
      %7822 = vmatprep.subr.mxu0 0.0
      %7823 = vmatpush1.msra.mxu0 %v5321
      %7824 = vmatprep.subr.mxu0 0.0
      %7825 = vmatpush1.msra.mxu0 %v5322
      %7826 = vmatprep.subr.mxu0 0.0
      %7827 = vmatpush1.msra.mxu0 %v5323
      %7828 = vmatprep.subr.mxu0 0.0
      %7829 = vmatpush1.msra.mxu0 %v5324
      %7830 = vmatprep.subr.mxu0 0.0
      %7831 = vmatpush1.msra.mxu0 %v5325
      %7832 = vmatprep.subr.mxu0 0.0
      %7833 = vmatpush1.msra.mxu0 %v5326
      %7834 = vmatprep.subr.mxu0 0.0
      %7835 = vmatpush1.msra.mxu0 %v5327
      %7836 = vmatprep.subr.mxu0 0.0
      %7837 = vmatpush1.msra.mxu0 %v5328
      %7838 = vmatprep.subr.mxu0 0.0
      %7839 = vmatpush1.msra.mxu0 %v5329
      %7840 = vmatprep.subr.mxu0 0.0
      %7841 = vmatpush1.msra.mxu0 %v5330
      %7842 = vmatprep.subr.mxu0 0.0
      %7843 = vmatpush1.msra.mxu0 %v5331
      %7844 = vmatprep.subr.mxu0 0.0
      %7845 = vmatpush1.msra.mxu0 %v5332
      %7846 = vmatprep.subr.mxu0 0.0
      %7847 = vmatpush1.msra.mxu0 %v5333
      %7848 = vmatprep.subr.mxu0 0.0
      %7849 = vmatpush1.msra.mxu0 %v5334
      %7850 = vmatprep.subr.mxu0 0.0
      %7851 = vmatpush1.msra.mxu0 %v5335
      %7852 = vmatprep.subr.mxu0 0.0
      %7853 = vmatpush1.msra.mxu0 %v5336
      %7854 = vmatprep.subr.mxu0 0.0
      %7855 = vmatpush1.msra.mxu0 %v5337
      %7856 = vmatprep.subr.mxu0 0.0
      %7857 = vmatpush1.msra.mxu0 %v5338
      %7858 = vmatprep.subr.mxu0 0.0
      %7859 = vmatpush1.msra.mxu0 %v5339
      %7860 = vmatprep.subr.mxu0 0.0
      %7861 = vmatpush1.msra.mxu0 %v5340
      %7862 = vmatprep.subr.mxu0 0.0
      %7863 = vmatpush1.msra.mxu0 %v5341
      %7864 = vmatprep.subr.mxu0 0.0
      %7865 = vmatpush1.msra.mxu0 %v5342
      %7866 = vmatprep.subr.mxu0 0.0
      %7867 = vmatpush1.msra.mxu0 %v5343
      %7868 = vmatprep.subr.mxu0 0.0
      %7869 = vmatpush1.msra.mxu0 %v5344
      %7870 = vmatprep.subr.mxu0 0.0
      %7871 = vmatpush1.msra.mxu0 %v5345
      %7872 = vmatprep.subr.mxu0 0.0
      %7873 = vmatpush1.msra.mxu0 %v5346
      %7874 = vmatprep.subr.mxu0 0.0
      %7875 = vmatpush1.msra.mxu0 %v5347
      %7876 = vmatprep.subr.mxu0 0.0
      %7877 = vmatpush1.msra.mxu0 %v5348
      %7878 = vmatprep.mubr.f32.mxu0 %v4232
      %7879 = vmatmul.mubr.f32.gmra.mrb[0].mxu0 %v4231
      %v7880 = vpop.f32.mrb[0].mxu0
      %v7881 = vadd.f32 %v7736, %v7880
      %v7882 = vpop.f32.mrb[0].mxu0
      %7883 = vmatprep.mubr.f32.mxu0 %v4268
      %7884 = vmatmul.mubr.f32.gmra.mrb[0].mxu0 %v4267
      %v7885 = vpop.f32.mrb[0].mxu0
      %v7886 = vadd.f32 %v7741, %v7885
      %v7887 = vpop.f32.mrb[0].mxu0
      %7888 = vmatprep.mubr.f32.mxu0 %v4304
      %7889 = vmatmul.mubr.f32.gmra.mrb[0].mxu0 %v4303
      %v7890 = vpop.f32.mrb[0].mxu0
      %v7891 = vadd.f32 %v7746, %v7890
      %v7892 = vpop.f32.mrb[0].mxu0
      %7893 = vmatprep.mubr.f32.mxu0 %v4340
      %7894 = vmatmul.mubr.f32.gmra.mrb[0].mxu0 %v4339
      %v7895 = vpop.f32.mrb[0].mxu0
      %v7896 = vadd.f32 %v7751, %v7895
      %v7897 = vpop.f32.mrb[0].mxu0
      %7898 = vmatprep.mubr.f32.mxu0 %v4376
      %7899 = vmatmul.mubr.f32.gmra.mrb[0].mxu0 %v4375
      %v7900 = vpop.f32.mrb[0].mxu0
      %v7901 = vadd.f32 %v7756, %v7900
      %v7902 = vpop.f32.mrb[0].mxu0
      %7903 = vmatprep.mubr.f32.mxu0 %v4412
      %7904 = vmatmul.mubr.f32.gmra.mrb[0].mxu0 %v4411
      %v7905 = vpop.f32.mrb[0].mxu0
      %v7906 = vadd.f32 %v7761, %v7905
      %v7907 = vpop.f32.mrb[0].mxu0
      %7908 = vmatprep.mubr.f32.mxu0 %v4448
      %7909 = vmatmul.mubr.f32.gmra.mrb[0].mxu0 %v4447
      %v7910 = vpop.f32.mrb[0].mxu0
      %v7911 = vadd.f32 %v7766, %v7910
      %v7912 = vpop.f32.mrb[0].mxu0
      %7913 = vmatprep.mubr.f32.mxu0 %v4484
      %7914 = vmatmul.mubr.f32.gmra.mrb[0].mxu0 %v4483
      %v7915 = vpop.f32.mrb[0].mxu0
      %v7916 = vadd.f32 %v7771, %v7915
      %v7917 = vpop.f32.mrb[0].mxu0
      %7918 = vmatprep.mubr.f32.mxu0 %v4520
      %7919 = vmatmul.mubr.f32.gmra.mrb[0].mxu0 %v4519
      %v7920 = vpop.f32.mrb[0].mxu0
      %v7921 = vadd.f32 %v7776, %v7920
      %v7922 = vpop.f32.mrb[0].mxu0
      %7923 = vmatprep.mubr.f32.mxu0 %v4556
      %7924 = vmatmul.mubr.f32.gmra.mrb[0].mxu0 %v4555
      %v7925 = vpop.f32.mrb[0].mxu0
      %v7926 = vadd.f32 %v7781, %v7925
      %v7927 = vpop.f32.mrb[0].mxu0
      %7928 = vmatprep.mubr.f32.mxu0 %v4592
      %7929 = vmatmul.mubr.f32.gmra.mrb[0].mxu0 %v4591
      %v7930 = vpop.f32.mrb[0].mxu0
      %v7931 = vadd.f32 %v7786, %v7930
      %v7932 = vpop.f32.mrb[0].mxu0
      %7933 = vmatprep.mubr.f32.mxu0 %v4628
      %7934 = vmatmul.mubr.f32.gmra.mrb[0].mxu0 %v4627
      %v7935 = vpop.f32.mrb[0].mxu0
      %v7936 = vadd.f32 %v7791, %v7935
      %v7937 = vpop.f32.mrb[0].mxu0
      %7938 = vmatprep.mubr.f32.mxu0 %v4664
      %7939 = vmatmul.mubr.f32.gmra.mrb[0].mxu0 %v4663
      %v7940 = vpop.f32.mrb[0].mxu0
      %v7941 = vadd.f32 %v7796, %v7940
      %v7942 = vpop.f32.mrb[0].mxu0
      %7943 = vmatprep.mubr.f32.mxu0 %v4700
      %7944 = vmatmul.mubr.f32.gmra.mrb[0].mxu0 %v4699
      %v7945 = vpop.f32.mrb[0].mxu0
      %v7946 = vadd.f32 %v7801, %v7945
      %v7947 = vpop.f32.mrb[0].mxu0
      %7948 = vmatprep.mubr.f32.mxu0 %v4736
      %7949 = vmatmul.mubr.f32.gmra.mrb[0].mxu0 %v4735
      %v7950 = vpop.f32.mrb[0].mxu0
      %v7951 = vadd.f32 %v7806, %v7950
      %v7952 = vpop.f32.mrb[0].mxu0
      %7953 = vmatprep.mubr.f32.mxu0 %v4772
      %7954 = vmatmul.mubr.f32.gmra.mrb[0].mxu0 %v4771
      %v7955 = vpop.f32.mrb[0].mxu0
      %v7956 = vadd.f32 %v7811, %v7955
      %v7957 = vpop.f32.mrb[0].mxu0
      %7958 = vdwg.mxu0
      %7959 = vst [vmem:[%s145] sm:$0xff] %v7881
      %7960 = vst [vmem:[%s145 + $0x8] sm:$0xff] %v7886
      %7961 = vst [vmem:[%s145 + $0x10] sm:$0xff] %v7891
      %7962 = vst [vmem:[%s145 + $0x18] sm:$0xff] %v7896
      %7963 = vst [vmem:[%s145 + $0x20] sm:$0xff] %v7901
      %7964 = vst [vmem:[%s145 + $0x28] sm:$0xff] %v7906
      %7965 = vst [vmem:[%s145 + $0x30] sm:$0xff] %v7911
      %7966 = vst [vmem:[%s145 + $0x38] sm:$0xff] %v7916
      %7967 = vst [vmem:[%s145 + $0x40] sm:$0xff] %v7921
      %7968 = vst [vmem:[%s145 + $0x48] sm:$0xff] %v7926
      %7969 = vst [vmem:[%s145 + $0x50] sm:$0xff] %v7931
      %7970 = vst [vmem:[%s145 + $0x58] sm:$0xff] %v7936
      %7971 = vst [vmem:[%s145 + $0x60] sm:$0xff] %v7941
      %7972 = vst [vmem:[%s145 + $0x68] sm:$0xff] %v7946
      %7973 = vst [vmem:[%s145 + $0x70] sm:$0xff] %v7951
      %7974 = vst [vmem:[%s145 + $0x78] sm:$0xff] %v7956
      %s7975 = smul.u32 16, %s13
      %p7976 = scmp.lt.s32.totalorder %s7975, 31
      %s7977 = scalar_select %p7976, %s7975, 31
      %s7978 = smul.addr %s7977, 8
      %s7979 = scalar_lea.vmem %s2, %s7978
      // Predicated region
      $region29: #{node_encoder.1} parent=27 // pred_check
        %p7980 = pneg %p78
      $region30: #{node_encoder.1} parent=27 // pred_check_branch
        %7982 = sbr.rel (%p7980) target = $region32
      $region31: #{node_encoder.1} parent=27 // pred_region
        %s7983 = smul.u32 16, %s13
      $region32: #{node_encoder.1} parent=27 // pred_fallthru
        _
    $region28: #{node_encoder.1} parent=5 // pred_fallthru
      _
    %p7984 = scmp.le.s32.totalorder 2, %s8
    // Predicated region
    $region33: #{node_encoder.1} parent=5 // pred_check
      %p7985 = pneg %p7984
    $region34: #{node_encoder.1} parent=5 // pred_check_branch
      %7987 = sbr.rel (%p7985) target = $region36
    $region35: #{node_encoder.1} parent=5 // pred_region
      %s7988 = ssub.s32 %s8, 2
      // Predicated region
      $region37: #{node_encoder.1} parent=35 // pred_check
        %p7989 = pneg %p84
      $region38: #{node_encoder.1} parent=35 // pred_check_branch
        %7991 = sbr.rel (%p7989) target = $region40
      $region39: #{node_encoder.1} parent=35 // pred_region
        %s7992 = smul.u32 16, %s14
        %p7993 = scmp.lt.s32.totalorder %s7992, 31
        %s7994 = scalar_select %p7993, %s7992, 31
        %s7995 = smul.addr %s7994, 8
        %s7996 = scalar_lea.vmem %s2, %s7995
      $region40: #{node_encoder.1} parent=35 // pred_fallthru
        _
    $region36: #{node_encoder.1} parent=5 // pred_fallthru
      _
  $region6: #{node_encoder.1} parent=0 // loop_footer
    %s12 = sadd.s32 1, %s8
  $region7: #{node_encoder.1} parent=0 // loop_footer_branch
    %7 = sbr.rel target = $region3
  $region8: #{node_encoder.1} parent=0 // loop_exit
    _

</llo_original>
